<compile_context>
chip_gen: v5e
topology: v5e:2x2
jax: 0.10.0
libtpu: 0.0.40
codegen_flags: <defaults>
</compile_context>

<pallas_src>
import functools
import math

import jax
import jax.numpy as jnp
from jax import lax
from jax.experimental import pallas as pl
from jax.experimental.pallas import tpu as pltpu

LN_EPS = 1e-5  # PyTorch nn.LayerNorm default


def _layernorm_f32(x, gamma, beta):
    """LayerNorm over the last dim, computed in f32."""
    xf = x.astype(jnp.float32)
    mean = jnp.mean(xf, axis=-1, keepdims=True)
    var = jnp.mean(jnp.square(xf - mean), axis=-1, keepdims=True)
    return (xf - mean) * lax.rsqrt(var + LN_EPS) * gamma.astype(jnp.float32) \
        + beta.astype(jnp.float32)


# ---------------------------------------------------------------------------
# Kernel 1: token embedding (one-hot matmul gather) + positional embedding
# ---------------------------------------------------------------------------
def _embed_kernel(idx_ref, tok_ref, pos_ref, o_ref):
    # idx_ref: (1, T, 1) int32   tok_ref: (V, C)   pos_ref: (T, C)   o_ref: (1, T, C)
    ids = idx_ref[0]                                     # (T, 1) int32
    T = ids.shape[0]
    V = tok_ref.shape[0]
    iota_v = lax.broadcasted_iota(jnp.int32, (T, V), 1)  # (T, V)
    one_hot = (iota_v == ids).astype(tok_ref.dtype)      # exact row selector
    emb = jnp.dot(one_hot, tok_ref[...], preferred_element_type=jnp.float32)
    o_ref[0] = (emb + pos_ref[...].astype(jnp.float32)).astype(o_ref.dtype)


def _embed(idx, tok_emb, pos_emb):
    B, T = idx.shape
    V, C = tok_emb.shape
    idx3 = idx.reshape(B, T, 1).astype(jnp.int32)
    return pl.pallas_call(
        _embed_kernel,
        out_shape=jax.ShapeDtypeStruct((B, T, C), tok_emb.dtype),
        grid_spec=pltpu.PrefetchScalarGridSpec(
            num_scalar_prefetch=0,
            grid=(B,),
            in_specs=[
                pl.BlockSpec((1, T, 1), lambda b: (b, 0, 0)),
                pl.BlockSpec((V, C), lambda b: (0, 0)),
                pl.BlockSpec((T, C), lambda b: (0, 0)),
            ],
            out_specs=pl.BlockSpec((1, T, C), lambda b: (b, 0, 0)),
        ),
        compiler_params=pltpu.CompilerParams(dimension_semantics=("parallel",)),
    )(idx3, tok_emb, pos_emb[:T])


# ---------------------------------------------------------------------------
# Kernel 2: one fused ReformerBlock (LN -> attention -> +res -> LN -> FFN -> +res)
# ---------------------------------------------------------------------------
def _reformer_block_kernel(x_ref,
                           g1_ref, be1_ref,
                           wq_ref, bq_ref, wk_ref, bk_ref, wv_ref, bv_ref,
                           g2_ref, be2_ref,
                           w1_ref, bf1_ref, w2_ref, bf2_ref,
                           o_ref):
    x = x_ref[0].astype(jnp.float32)                     # (T, C)
    C = x.shape[-1]

    # ---- norm1 + dense single-head attention -------------------------------
    xn = _layernorm_f32(x, g1_ref[...], be1_ref[...])    # (T, C) f32
    xn_mm = xn.astype(wq_ref.dtype)                      # feed MXU in weight dtype
    q = jnp.dot(xn_mm, wq_ref[...], preferred_element_type=jnp.float32) \
        + bq_ref[...].astype(jnp.float32)
    k = jnp.dot(xn_mm, wk_ref[...], preferred_element_type=jnp.float32) \
        + bk_ref[...].astype(jnp.float32)
    v = jnp.dot(xn_mm, wv_ref[...], preferred_element_type=jnp.float32) \
        + bv_ref[...].astype(jnp.float32)

    # scores = q @ k^T / sqrt(C)  (contraction on feature dim, no explicit transpose)
    scores = lax.dot_general(q, k, (((1,), (1,)), ((), ())),
                             preferred_element_type=jnp.float32)
    scores = scores * (1.0 / math.sqrt(C))
    scores = scores - jnp.max(scores, axis=-1, keepdims=True)
    e = jnp.exp(scores)
    attn = e / jnp.sum(e, axis=-1, keepdims=True)        # (T, T)
    attn_out = jnp.dot(attn, v, preferred_element_type=jnp.float32)

    y = attn_out + x                                     # residual 1

    # ---- norm2 + feed-forward (dropout is identity at inference) -----------
    yn = _layernorm_f32(y, g2_ref[...], be2_ref[...])
    yn_mm = yn.astype(w1_ref.dtype)
    h = jnp.dot(yn_mm, w1_ref[...], preferred_element_type=jnp.float32) \
        + bf1_ref[...].astype(jnp.float32)
    h = jnp.maximum(h, 0.0)                              # ReLU
    ff = jnp.dot(h.astype(w2_ref.dtype), w2_ref[...],
                 preferred_element_type=jnp.float32) \
        + bf2_ref[...].astype(jnp.float32)

    # NOTE: the module adds the *post-norm2* value as the second residual.
    o_ref[0] = (ff + yn).astype(o_ref.dtype)


def _reformer_block(x, p):
    B, T, C = x.shape
    H = p["w1"].shape[1]
    flops = int(B * (6 * T * C * C + 4 * T * T * C + 4 * T * C * H))
    bytes_accessed = int(4 * (2 * B * T * C + 3 * C * C + 2 * C * H + 8 * C))
    ce = pl.CostEstimate(flops=flops,
                         transcendentals=int(B * T * T),
                         bytes_accessed=bytes_accessed)

    def wspec(shape):
        return pl.BlockSpec(shape, lambda b: (0, 0))

    return pl.pallas_call(
        _reformer_block_kernel,
        out_shape=jax.ShapeDtypeStruct((B, T, C), x.dtype),
        grid_spec=pltpu.PrefetchScalarGridSpec(
            num_scalar_prefetch=0,
            grid=(B,),
            in_specs=[
                pl.BlockSpec((1, T, C), lambda b: (b, 0, 0)),   # x batch slab
                wspec((1, C)), wspec((1, C)),                   # norm1 gamma/beta
                wspec((C, C)), wspec((1, C)),                   # Wq, bq
                wspec((C, C)), wspec((1, C)),                   # Wk, bk
                wspec((C, C)), wspec((1, C)),                   # Wv, bv
                wspec((1, C)), wspec((1, C)),                   # norm2 gamma/beta
                wspec((C, H)), wspec((1, H)),                   # fc1
                wspec((H, C)), wspec((1, C)),                   # fc2
            ],
            out_specs=pl.BlockSpec((1, T, C), lambda b: (b, 0, 0)),
        ),
        compiler_params=pltpu.CompilerParams(dimension_semantics=("parallel",)),
        cost_estimate=ce,
    )(x,
      p["g1"], p["b1"],
      p["wq"], p["bq"], p["wk"], p["bk"], p["wv"], p["bv"],
      p["g2"], p["b2"],
      p["w1"], p["bf1"], p["w2"], p["bf2"])


# ---------------------------------------------------------------------------
# Kernel 3: final LayerNorm + LM head
# ---------------------------------------------------------------------------
def _head_kernel(x_ref, g_ref, b_ref, wh_ref, bh_ref, o_ref):
    x = x_ref[0].astype(jnp.float32)
    xn = _layernorm_f32(x, g_ref[...], b_ref[...])
    logits = jnp.dot(xn.astype(wh_ref.dtype), wh_ref[...],
                     preferred_element_type=jnp.float32) \
        + bh_ref[...].astype(jnp.float32)
    o_ref[0] = logits.astype(o_ref.dtype)


def _head(x, g, b, wh, bh):
    B, T, C = x.shape
    V = wh.shape[1]
    return pl.pallas_call(
        _head_kernel,
        out_shape=jax.ShapeDtypeStruct((B, T, V), x.dtype),
        grid_spec=pltpu.PrefetchScalarGridSpec(
            num_scalar_prefetch=0,
            grid=(B,),
            in_specs=[
                pl.BlockSpec((1, T, C), lambda b: (b, 0, 0)),
                pl.BlockSpec((1, C), lambda b: (0, 0)),
                pl.BlockSpec((1, C), lambda b: (0, 0)),
                pl.BlockSpec((C, V), lambda b: (0, 0)),
                pl.BlockSpec((1, V), lambda b: (0, 0)),
            ],
            out_specs=pl.BlockSpec((1, T, V), lambda b: (b, 0, 0)),
        ),
        compiler_params=pltpu.CompilerParams(dimension_semantics=("parallel",)),
    )(x, g, b, wh, bh)


# ---------------------------------------------------------------------------
# Full model forward
# ---------------------------------------------------------------------------
@jax.jit
def reformer_lm(idx, params, targets=None):
    x = _embed(idx, params["tok_emb"], params["pos_emb"])
    for p in params["layers"]:
        x = _reformer_block(x, p)
    logits = _head(x, params["gf"], params["bf"], params["wh"], params["bh"])
    loss = None
    if targets is not None:
        # TODO(synk): scalar cross-entropy stays in plain JAX (no Pallas win).
        logp = jax.nn.log_softmax(logits.astype(jnp.float32), axis=-1)
        nll = -jnp.take_along_axis(logp, targets[..., None], axis=-1)[..., 0]
        loss = jnp.mean(nll)
    return logits, loss


# ---------------------------------------------------------------------------
# Pure-JAX reference (mirrors the PyTorch forward exactly)
# ---------------------------------------------------------------------------
def _reference(idx, params):
    mm = functools.partial(jnp.matmul, precision=jax.lax.Precision.HIGHEST)

    def ln(z, g, b):
        m = jnp.mean(z, axis=-1, keepdims=True)
        v = jnp.mean(jnp.square(z - m), axis=-1, keepdims=True)
        return (z - m) * lax.rsqrt(v + LN_EPS) * g + b

    T = idx.shape[1]
    x = params["tok_emb"][idx] + params["pos_emb"][None, :T, :]
    C = x.shape[-1]
    for p in params["layers"]:
        y = ln(x, p["g1"], p["b1"])
        q = mm(y, p["wq"]) + p["bq"]
        k = mm(y, p["wk"]) + p["bk"]
        v = mm(y, p["wv"]) + p["bv"]
        att = jax.nn.softmax(
            mm(q, jnp.swapaxes(k, -1, -2)) * (1.0 / math.sqrt(C)), axis=-1)
        y = mm(att, v) + x
        y = ln(y, p["g2"], p["b2"])
        x = mm(jnp.maximum(mm(y, p["w1"]) + p["bf1"], 0.0), p["w2"]) + p["bf2"] + y
    x = ln(x, params["gf"], params["bf"])
    return mm(x, params["wh"]) + params["bh"]


# ---------------------------------------------------------------------------
# Parameter construction
# ---------------------------------------------------------------------------
def init_params(key, vocab_size, n_embd, block_size, n_layer):
    hidden = 4 * n_embd
    keys = jax.random.split(key, 3 + n_layer)

    def linear(k, fan_in, fan_out):
        kw, kb = jax.random.split(k)
        w = jax.random.normal(kw, (fan_in, fan_out), jnp.float32) / jnp.sqrt(fan_in)
        b = jax.random.normal(kb, (1, fan_out), jnp.float32) * 0.02
        return w, b

    tok_emb = jax.random.normal(keys[0], (vocab_size, n_embd), jnp.float32) * 0.02
    pos_emb = jax.random.normal(keys[1], (block_size, n_embd), jnp.float32) * 0.02

    layers = []
    for i in range(n_layer):
        kk = jax.random.split(keys[2 + i], 5)
        wq, bq = linear(kk[0], n_embd, n_embd)
        wk, bk = linear(kk[1], n_embd, n_embd)
        wv, bv = linear(kk[2], n_embd, n_embd)
        w1, bf1 = linear(kk[3], n_embd, hidden)
        w2, bf2 = linear(kk[4], hidden, n_embd)
        layers.append(dict(
            g1=jnp.ones((1, n_embd), jnp.float32), b1=jnp.zeros((1, n_embd), jnp.float32),
            wq=wq, bq=bq, wk=wk, bk=bk, wv=wv, bv=bv,
            g2=jnp.ones((1, n_embd), jnp.float32), b2=jnp.zeros((1, n_embd), jnp.float32),
            w1=w1, bf1=bf1, w2=w2, bf2=bf2))

    wh, bh = linear(keys[2 + n_layer], n_embd, vocab_size)
    return dict(tok_emb=tok_emb, pos_emb=pos_emb, layers=layers,
                gf=jnp.ones((1, n_embd), jnp.float32),
                bf=jnp.zeros((1, n_embd), jnp.float32),
                wh=wh, bh=bh)


if __name__ == "__main__":
    key = jax.random.PRNGKey(0)
    k_params, k_idx = jax.random.split(key)

    # Small but lane-dense configuration (all 128-multiples for TPU tiles).
    vocab_size = 256          # byte-level vocab (lane-dense head)
    n_embd = 128
    block_size = 128
    n_layer = 2
    n_buckets, n_hashes = 8, 4   # LSH config — dead code in the reference forward
    B, T = 2, block_size

    params = init_params(k_params, vocab_size, n_embd, block_size, n_layer)
    idx = jax.random.randint(k_idx, (B, T), 0, vocab_size, dtype=jnp.int32)

    logits, _ = reformer_lm(idx, params)
    logits = jax.block_until_ready(logits)

    ref = _reference(idx, params)
    assert logits.shape == (B, T, vocab_size)
    max_err = float(jnp.max(jnp.abs(logits - ref)))
    assert jnp.allclose(logits, ref, atol=1e-3, rtol=1e-3), f"mismatch: {max_err}"

    print("KERNEL_OK")
</pallas_src>

<mosaic_0001>
module attributes {stable_mosaic.version = 11 : i64} {
  func.func @_embed_kernel(%arg0: i32, %arg1: memref<1x128x1xi32, #tpu.memory_space<vmem>>, %arg2: memref<256x128xf32, #tpu.memory_space<vmem>>, %arg3: memref<128x128xf32, #tpu.memory_space<vmem>>, %arg4: memref<1x128x128xf32, #tpu.memory_space<vmem>>) attributes {dimension_semantics = [#tpu.dimension_semantics<parallel>], iteration_bounds = array<i64: 2>, scalar_prefetch = 0 : i64, scratch_operands = 0 : i64, tpu.core_type = #tpu.core_type<tc>, window_params = [{transform_indices = @transform_0, window_bounds = array<i64: 1, 128, 1>}, {pipeline_mode = #tpu.pipeline_mode<synchronous>, transform_indices = @transform_1, window_bounds = array<i64: 256, 128>}, {pipeline_mode = #tpu.pipeline_mode<synchronous>, transform_indices = @transform_2, window_bounds = array<i64: 128, 128>}, {transform_indices = @transform_3, window_bounds = array<i64: 1, 128, 128>}]} {
    %c0 = arith.constant 0 : index
    %c0_0 = arith.constant 0 : index
    %c0_1 = arith.constant 0 : index
    %0 = vector.load %arg1[%c0, %c0_0, %c0_1] : memref<1x128x1xi32, #tpu.memory_space<vmem>>, vector<1x128x1xi32>
    %1 = vector.shape_cast %0 : vector<1x128x1xi32> to vector<128x1xi32>
    %2 = tpu.iota {dimensions = array<i32: 1>} : vector<128x256xi32>
    %3 = vector.broadcast %1 : vector<128x1xi32> to vector<128x256xi32>
    %4 = arith.cmpi eq, %2, %3 : vector<128x256xi32>
    %5 = arith.extui %4 : vector<128x256xi1> to vector<128x256xi32>
    %6 = arith.sitofp %5 : vector<128x256xi32> to vector<128x256xf32>
    %c0_2 = arith.constant 0 : index
    %c0_3 = arith.constant 0 : index
    %7 = vector.load %arg2[%c0_2, %c0_3] : memref<256x128xf32, #tpu.memory_space<vmem>>, vector<256x128xf32>
    %cst = arith.constant dense<0.000000e+00> : vector<128x128xf32>
    %8 = tpu.matmul %6, %7, %cst {dimension_numbers = #tpu.dot_dimension_numbers<[1], [0], [0], [1], [0, 0, 1, 1], [], []>} : vector<128x256xf32>, vector<256x128xf32>, vector<128x128xf32> -> vector<128x128xf32>
    %c0_4 = arith.constant 0 : index
    %c0_5 = arith.constant 0 : index
    %9 = vector.load %arg3[%c0_4, %c0_5] : memref<128x128xf32, #tpu.memory_space<vmem>>, vector<128x128xf32>
    %10 = arith.addf %8, %9 : vector<128x128xf32>
    %c0_6 = arith.constant 0 : index
    %c0_7 = arith.constant 0 : index
    %c0_8 = arith.constant 0 : index
    %11 = vector.load %arg4[%c0_6, %c0_7, %c0_8] : memref<1x128x128xf32, #tpu.memory_space<vmem>>, vector<1x128x128xf32>
    %12 = vector.shape_cast %11 : vector<1x128x128xf32> to vector<128x128xf32>
    %13 = vector.shape_cast %10 : vector<128x128xf32> to vector<1x128x128xf32>
    tpu.vector_store %arg4[%c0_6, %c0_7, %c0_8], %13 {strides = array<i32>} : memref<1x128x128xf32, #tpu.memory_space<vmem>>, vector<1x128x128xf32>,
    return
  }
  func.func @transform_0(%arg0: i32) -> (i32, i32, i32) {
    %c0_i32 = arith.constant 0 : i32
    %c0_i32_0 = arith.constant 0 : i32
    %c0_i32_1 = arith.constant 0 : i32
    return %arg0, %c0_i32, %c0_i32_0 : i32, i32, i32
  }
  func.func @transform_1(%arg0: i32) -> (i32, i32) {
    %c0_i32 = arith.constant 0 : i32
    %c0_i32_0 = arith.constant 0 : i32
    %c0_i32_1 = arith.constant 0 : i32
    return %c0_i32, %c0_i32_0 : i32, i32
  }
  func.func @transform_2(%arg0: i32) -> (i32, i32) {
    %c0_i32 = arith.constant 0 : i32
    %c0_i32_0 = arith.constant 0 : i32
    %c0_i32_1 = arith.constant 0 : i32
    return %c0_i32, %c0_i32_0 : i32, i32
  }
  func.func @transform_3(%arg0: i32) -> (i32, i32, i32) {
    %c0_i32 = arith.constant 0 : i32
    %c0_i32_0 = arith.constant 0 : i32
    %c0_i32_1 = arith.constant 0 : i32
    return %arg0, %c0_i32, %c0_i32_0 : i32, i32, i32
  }
}

module attributes {stable_mosaic.version = 11 : i64} {
  func.func @_reformer_block_kernel(%arg0: i32, %arg1: memref<1x128x128xf32, #tpu.memory_space<vmem>>, %arg2: memref<1x128xf32, #tpu.memory_space<vmem>>, %arg3: memref<1x128xf32, #tpu.memory_space<vmem>>, %arg4: memref<128x128xf32, #tpu.memory_space<vmem>>, %arg5: memref<1x128xf32, #tpu.memory_space<vmem>>, %arg6: memref<128x128xf32, #tpu.memory_space<vmem>>, %arg7: memref<1x128xf32, #tpu.memory_space<vmem>>, %arg8: memref<128x128xf32, #tpu.memory_space<vmem>>, %arg9: memref<1x128xf32, #tpu.memory_space<vmem>>, %arg10: memref<1x128xf32, #tpu.memory_space<vmem>>, %arg11: memref<1x128xf32, #tpu.memory_space<vmem>>, %arg12: memref<128x512xf32, #tpu.memory_space<vmem>>, %arg13: memref<1x512xf32, #tpu.memory_space<vmem>>, %arg14: memref<512x128xf32, #tpu.memory_space<vmem>>, %arg15: memref<1x128xf32, #tpu.memory_space<vmem>>, %arg16: memref<1x128x128xf32, #tpu.memory_space<vmem>>) attributes {dimension_semantics = [#tpu.dimension_semantics<parallel>], iteration_bounds = array<i64: 2>, scalar_prefetch = 0 : i64, scratch_operands = 0 : i64, tpu.core_type = #tpu.core_type<tc>, window_params = [{transform_indices = @transform_0, window_bounds = array<i64: 1, 128, 128>}, {pipeline_mode = #tpu.pipeline_mode<synchronous>, transform_indices = @transform_1, window_bounds = array<i64: 1, 128>}, {pipeline_mode = #tpu.pipeline_mode<synchronous>, transform_indices = @transform_2, window_bounds = array<i64: 1, 128>}, {pipeline_mode = #tpu.pipeline_mode<synchronous>, transform_indices = @transform_3, window_bounds = array<i64: 128, 128>}, {pipeline_mode = #tpu.pipeline_mode<synchronous>, transform_indices = @transform_4, window_bounds = array<i64: 1, 128>}, {pipeline_mode = #tpu.pipeline_mode<synchronous>, transform_indices = @transform_5, window_bounds = array<i64: 128, 128>}, {pipeline_mode = #tpu.pipeline_mode<synchronous>, transform_indices = @transform_6, window_bounds = array<i64: 1, 128>}, {pipeline_mode = #tpu.pipeline_mode<synchronous>, transform_indices = @transform_7, window_bounds = array<i64: 128, 128>}, {pipeline_mode = #tpu.pipeline_mode<synchronous>, transform_indices = @transform_8, window_bounds = array<i64: 1, 128>}, {pipeline_mode = #tpu.pipeline_mode<synchronous>, transform_indices = @transform_9, window_bounds = array<i64: 1, 128>}, {pipeline_mode = #tpu.pipeline_mode<synchronous>, transform_indices = @transform_10, window_bounds = array<i64: 1, 128>}, {pipeline_mode = #tpu.pipeline_mode<synchronous>, transform_indices = @transform_11, window_bounds = array<i64: 128, 512>}, {pipeline_mode = #tpu.pipeline_mode<synchronous>, transform_indices = @transform_12, window_bounds = array<i64: 1, 512>}, {pipeline_mode = #tpu.pipeline_mode<synchronous>, transform_indices = @transform_13, window_bounds = array<i64: 512, 128>}, {pipeline_mode = #tpu.pipeline_mode<synchronous>, transform_indices = @transform_14, window_bounds = array<i64: 1, 128>}, {transform_indices = @transform_15, window_bounds = array<i64: 1, 128, 128>}]} {
    %c0 = arith.constant 0 : index
    %c0_0 = arith.constant 0 : index
    %c0_1 = arith.constant 0 : index
    %0 = vector.load %arg1[%c0, %c0_0, %c0_1] : memref<1x128x128xf32, #tpu.memory_space<vmem>>, vector<1x128x128xf32>
    %1 = vector.shape_cast %0 : vector<1x128x128xf32> to vector<128x128xf32>
    %c0_2 = arith.constant 0 : index
    %c0_3 = arith.constant 0 : index
    %2 = vector.load %arg2[%c0_2, %c0_3] : memref<1x128xf32, #tpu.memory_space<vmem>>, vector<1x128xf32>
    %c0_4 = arith.constant 0 : index
    %c0_5 = arith.constant 0 : index
    %3 = vector.load %arg3[%c0_4, %c0_5] : memref<1x128xf32, #tpu.memory_space<vmem>>, vector<1x128xf32>
    %cst = arith.constant dense<0.000000e+00> : vector<128xf32>
    %4 = vector.multi_reduction <add>, %1, %cst [1] : vector<128x128xf32> to vector<128xf32>
    %5 = vector.shape_cast %4 : vector<128xf32> to vector<128x1xf32>
    %cst_6 = arith.constant 1.280000e+02 : f32
    %6 = vector.broadcast %cst_6 : f32 to vector<128x1xf32>
    %7 = arith.divf %5, %6 : vector<128x1xf32>
    %8 = vector.broadcast %7 : vector<128x1xf32> to vector<128x128xf32>
    %9 = arith.subf %1, %8 : vector<128x128xf32>
    %10 = arith.mulf %9, %9 : vector<128x128xf32>
    %cst_7 = arith.constant dense<0.000000e+00> : vector<128xf32>
    %11 = vector.multi_reduction <add>, %10, %cst_7 [1] : vector<128x128xf32> to vector<128xf32>
    %12 = vector.shape_cast %11 : vector<128xf32> to vector<128x1xf32>
    %cst_8 = arith.constant 1.280000e+02 : f32
    %13 = vector.broadcast %cst_8 : f32 to vector<128x1xf32>
    %14 = arith.divf %12, %13 : vector<128x1xf32>
    %15 = vector.broadcast %7 : vector<128x1xf32> to vector<128x128xf32>
    %16 = arith.subf %1, %15 : vector<128x128xf32>
    %cst_9 = arith.constant 9.99999974E-6 : f32
    %17 = vector.broadcast %cst_9 : f32 to vector<128x1xf32>
    %18 = arith.addf %14, %17 : vector<128x1xf32>
    %19 = math.rsqrt %18 : vector<128x1xf32>
    %20 = vector.broadcast %19 : vector<128x1xf32> to vector<128x128xf32>
    %21 = arith.mulf %16, %20 : vector<128x128xf32>
    %22 = vector.broadcast %2 : vector<1x128xf32> to vector<128x128xf32>
    %23 = arith.mulf %21, %22 : vector<128x128xf32>
    %24 = vector.broadcast %3 : vector<1x128xf32> to vector<128x128xf32>
    %25 = arith.addf %23, %24 : vector<128x128xf32>
    %c0_10 = arith.constant 0 : index
    %c0_11 = arith.constant 0 : index
    %26 = vector.load %arg4[%c0_10, %c0_11] : memref<128x128xf32, #tpu.memory_space<vmem>>, vector<128x128xf32>
    %cst_12 = arith.constant dense<0.000000e+00> : vector<128x128xf32>
    %27 = tpu.matmul %25, %26, %cst_12 {dimension_numbers = #tpu.dot_dimension_numbers<[1], [0], [0], [1], [0, 0, 1, 1], [], []>} : vector<128x128xf32>, vector<128x128xf32>, vector<128x128xf32> -> vector<128x128xf32>
    %c0_13 = arith.constant 0 : index
    %c0_14 = arith.constant 0 : index
    %28 = vector.load %arg5[%c0_13, %c0_14] : memref<1x128xf32, #tpu.memory_space<vmem>>, vector<1x128xf32>
    %29 = vector.broadcast %28 : vector<1x128xf32> to vector<128x128xf32>
    %30 = arith.addf %27, %29 : vector<128x128xf32>
    %c0_15 = arith.constant 0 : index
    %c0_16 = arith.constant 0 : index
    %31 = vector.load %arg6[%c0_15, %c0_16] : memref<128x128xf32, #tpu.memory_space<vmem>>, vector<128x128xf32>
    %cst_17 = arith.constant dense<0.000000e+00> : vector<128x128xf32>
    %32 = tpu.matmul %25, %31, %cst_17 {dimension_numbers = #tpu.dot_dimension_numbers<[1], [0], [0], [1], [0, 0, 1, 1], [], []>} : vector<128x128xf32>, vector<128x128xf32>, vector<128x128xf32> -> vector<128x128xf32>
    %c0_18 = arith.constant 0 : index
    %c0_19 = arith.constant 0 : index
    %33 = vector.load %arg7[%c0_18, %c0_19] : memref<1x128xf32, #tpu.memory_space<vmem>>, vector<1x128xf32>
    %34 = vector.broadcast %33 : vector<1x128xf32> to vector<128x128xf32>
    %35 = arith.addf %32, %34 : vector<128x128xf32>
    %c0_20 = arith.constant 0 : index
    %c0_21 = arith.constant 0 : index
    %36 = vector.load %arg8[%c0_20, %c0_21] : memref<128x128xf32, #tpu.memory_space<vmem>>, vector<128x128xf32>
    %cst_22 = arith.constant dense<0.000000e+00> : vector<128x128xf32>
    %37 = tpu.matmul %25, %36, %cst_22 {dimension_numbers = #tpu.dot_dimension_numbers<[1], [0], [0], [1], [0, 0, 1, 1], [], []>} : vector<128x128xf32>, vector<128x128xf32>, vector<128x128xf32> -> vector<128x128xf32>
    %c0_23 = arith.constant 0 : index
    %c0_24 = arith.constant 0 : index
    %38 = vector.load %arg9[%c0_23, %c0_24] : memref<1x128xf32, #tpu.memory_space<vmem>>, vector<1x128xf32>
    %39 = vector.broadcast %38 : vector<1x128xf32> to vector<128x128xf32>
    %40 = arith.addf %37, %39 : vector<128x128xf32>
    %cst_25 = arith.constant dense<0.000000e+00> : vector<128x128xf32>
    %41 = tpu.matmul %30, %35, %cst_25 {dimension_numbers = #tpu.dot_dimension_numbers<[1], [1], [0], [0], [0, 0, 1, 0], [], []>} : vector<128x128xf32>, vector<128x128xf32>, vector<128x128xf32> -> vector<128x128xf32>
    %cst_26 = arith.constant 0.0883883461 : f32
    %42 = vector.broadcast %cst_26 : f32 to vector<128x128xf32>
    %43 = arith.mulf %41, %42 : vector<128x128xf32>
    %cst_27 = arith.constant dense<0xFF800000> : vector<128xf32>
    %44 = vector.multi_reduction <maximumf>, %43, %cst_27 [1] : vector<128x128xf32> to vector<128xf32>
    %45 = vector.shape_cast %44 : vector<128xf32> to vector<128x1xf32>
    %46 = vector.broadcast %45 : vector<128x1xf32> to vector<128x128xf32>
    %47 = arith.subf %43, %46 : vector<128x128xf32>
    %48 = math.exp %47 : vector<128x128xf32>
    %cst_28 = arith.constant dense<0.000000e+00> : vector<128xf32>
    %49 = vector.multi_reduction <add>, %48, %cst_28 [1] : vector<128x128xf32> to vector<128xf32>
    %50 = vector.shape_cast %49 : vector<128xf32> to vector<128x1xf32>
    %51 = vector.broadcast %50 : vector<128x1xf32> to vector<128x128xf32>
    %52 = arith.divf %48, %51 : vector<128x128xf32>
    %cst_29 = arith.constant dense<0.000000e+00> : vector<128x128xf32>
    %53 = tpu.matmul %52, %40, %cst_29 {dimension_numbers = #tpu.dot_dimension_numbers<[1], [0], [0], [1], [0, 0, 1, 1], [], []>} : vector<128x128xf32>, vector<128x128xf32>, vector<128x128xf32> -> vector<128x128xf32>
    %54 = arith.addf %53, %1 : vector<128x128xf32>
    %c0_30 = arith.constant 0 : index
    %c0_31 = arith.constant 0 : index
    %55 = vector.load %arg10[%c0_30, %c0_31] : memref<1x128xf32, #tpu.memory_space<vmem>>, vector<1x128xf32>
    %c0_32 = arith.constant 0 : index
    %c0_33 = arith.constant 0 : index
    %56 = vector.load %arg11[%c0_32, %c0_33] : memref<1x128xf32, #tpu.memory_space<vmem>>, vector<1x128xf32>
    %cst_34 = arith.constant dense<0.000000e+00> : vector<128xf32>
    %57 = vector.multi_reduction <add>, %54, %cst_34 [1] : vector<128x128xf32> to vector<128xf32>
    %58 = vector.shape_cast %57 : vector<128xf32> to vector<128x1xf32>
    %cst_35 = arith.constant 1.280000e+02 : f32
    %59 = vector.broadcast %cst_35 : f32 to vector<128x1xf32>
    %60 = arith.divf %58, %59 : vector<128x1xf32>
    %61 = vector.broadcast %60 : vector<128x1xf32> to vector<128x128xf32>
    %62 = arith.subf %54, %61 : vector<128x128xf32>
    %63 = arith.mulf %62, %62 : vector<128x128xf32>
    %cst_36 = arith.constant dense<0.000000e+00> : vector<128xf32>
    %64 = vector.multi_reduction <add>, %63, %cst_36 [1] : vector<128x128xf32> to vector<128xf32>
    %65 = vector.shape_cast %64 : vector<128xf32> to vector<128x1xf32>
    %cst_37 = arith.constant 1.280000e+02 : f32
    %66 = vector.broadcast %cst_37 : f32 to vector<128x1xf32>
    %67 = arith.divf %65, %66 : vector<128x1xf32>
    %68 = vector.broadcast %60 : vector<128x1xf32> to vector<128x128xf32>
    %69 = arith.subf %54, %68 : vector<128x128xf32>
    %cst_38 = arith.constant 9.99999974E-6 : f32
    %70 = vector.broadcast %cst_38 : f32 to vector<128x1xf32>
    %71 = arith.addf %67, %70 : vector<128x1xf32>
    %72 = math.rsqrt %71 : vector<128x1xf32>
    %73 = vector.broadcast %72 : vector<128x1xf32> to vector<128x128xf32>
    %74 = arith.mulf %69, %73 : vector<128x128xf32>
    %75 = vector.broadcast %55 : vector<1x128xf32> to vector<128x128xf32>
    %76 = arith.mulf %74, %75 : vector<128x128xf32>
    %77 = vector.broadcast %56 : vector<1x128xf32> to vector<128x128xf32>
    %78 = arith.addf %76, %77 : vector<128x128xf32>
    %c0_39 = arith.constant 0 : index
    %c0_40 = arith.constant 0 : index
    %79 = vector.load %arg12[%c0_39, %c0_40] : memref<128x512xf32, #tpu.memory_space<vmem>>, vector<128x512xf32>
    %cst_41 = arith.constant dense<0.000000e+00> : vector<128x512xf32>
    %80 = tpu.matmul %78, %79, %cst_41 {dimension_numbers = #tpu.dot_dimension_numbers<[1], [0], [0], [1], [0, 0, 1, 1], [], []>} : vector<128x128xf32>, vector<128x512xf32>, vector<128x512xf32> -> vector<128x512xf32>
    %c0_42 = arith.constant 0 : index
    %c0_43 = arith.constant 0 : index
    %81 = vector.load %arg13[%c0_42, %c0_43] : memref<1x512xf32, #tpu.memory_space<vmem>>, vector<1x512xf32>
    %82 = vector.broadcast %81 : vector<1x512xf32> to vector<128x512xf32>
    %83 = arith.addf %80, %82 : vector<128x512xf32>
    %cst_44 = arith.constant 0.000000e+00 : f32
    %84 = vector.broadcast %cst_44 : f32 to vector<128x512xf32>
    %85 = arith.maximumf %83, %84 : vector<128x512xf32>
    %c0_45 = arith.constant 0 : index
    %c0_46 = arith.constant 0 : index
    %86 = vector.load %arg14[%c0_45, %c0_46] : memref<512x128xf32, #tpu.memory_space<vmem>>, vector<512x128xf32>
    %cst_47 = arith.constant dense<0.000000e+00> : vector<128x128xf32>
    %87 = tpu.matmul %85, %86, %cst_47 {dimension_numbers = #tpu.dot_dimension_numbers<[1], [0], [0], [1], [0, 0, 1, 1], [], []>} : vector<128x512xf32>, vector<512x128xf32>, vector<128x128xf32> -> vector<128x128xf32>
    %c0_48 = arith.constant 0 : index
    %c0_49 = arith.constant 0 : index
    %88 = vector.load %arg15[%c0_48, %c0_49] : memref<1x128xf32, #tpu.memory_space<vmem>>, vector<1x128xf32>
    %89 = vector.broadcast %88 : vector<1x128xf32> to vector<128x128xf32>
    %90 = arith.addf %87, %89 : vector<128x128xf32>
    %91 = arith.addf %90, %78 : vector<128x128xf32>
    %c0_50 = arith.constant 0 : index
    %c0_51 = arith.constant 0 : index
    %c0_52 = arith.constant 0 : index
    %92 = vector.load %arg16[%c0_50, %c0_51, %c0_52] : memref<1x128x128xf32, #tpu.memory_space<vmem>>, vector<1x128x128xf32>
    %93 = vector.shape_cast %92 : vector<1x128x128xf32> to vector<128x128xf32>
    %94 = vector.shape_cast %91 : vector<128x128xf32> to vector<1x128x128xf32>
    tpu.vector_store %arg16[%c0_50, %c0_51, %c0_52], %94 {strides = array<i32>} : memref<1x128x128xf32, #tpu.memory_space<vmem>>, vector<1x128x128xf32>,
    return
  }
  func.func @transform_0(%arg0: i32) -> (i32, i32, i32) {
    %c0_i32 = arith.constant 0 : i32
    %c0_i32_0 = arith.constant 0 : i32
    %c0_i32_1 = arith.constant 0 : i32
    return %arg0, %c0_i32, %c0_i32_0 : i32, i32, i32
  }
  func.func @transform_1(%arg0: i32) -> (i32, i32) {
    %c0_i32 = arith.constant 0 : i32
    %c0_i32_0 = arith.constant 0 : i32
    %c0_i32_1 = arith.constant 0 : i32
    return %c0_i32, %c0_i32_0 : i32, i32
  }
  func.func @transform_2(%arg0: i32) -> (i32, i32) {
    %c0_i32 = arith.constant 0 : i32
    %c0_i32_0 = arith.constant 0 : i32
    %c0_i32_1 = arith.constant 0 : i32
    return %c0_i32, %c0_i32_0 : i32, i32
  }
  func.func @transform_3(%arg0: i32) -> (i32, i32) {
    %c0_i32 = arith.constant 0 : i32
    %c0_i32_0 = arith.constant 0 : i32
    %c0_i32_1 = arith.constant 0 : i32
    return %c0_i32, %c0_i32_0 : i32, i32
  }
  func.func @transform_4(%arg0: i32) -> (i32, i32) {
    %c0_i32 = arith.constant 0 : i32
    %c0_i32_0 = arith.constant 0 : i32
    %c0_i32_1 = arith.constant 0 : i32
    return %c0_i32, %c0_i32_0 : i32, i32
  }
  func.func @transform_5(%arg0: i32) -> (i32, i32) {
    %c0_i32 = arith.constant 0 : i32
    %c0_i32_0 = arith.constant 0 : i32
    %c0_i32_1 = arith.constant 0 : i32
    return %c0_i32, %c0_i32_0 : i32, i32
  }
  func.func @transform_6(%arg0: i32) -> (i32, i32) {
    %c0_i32 = arith.constant 0 : i32
    %c0_i32_0 = arith.constant 0 : i32
    %c0_i32_1 = arith.constant 0 : i32
    return %c0_i32, %c0_i32_0 : i32, i32
  }
  func.func @transform_7(%arg0: i32) -> (i32, i32) {
    %c0_i32 = arith.constant 0 : i32
    %c0_i32_0 = arith.constant 0 : i32
    %c0_i32_1 = arith.constant 0 : i32
    return %c0_i32, %c0_i32_0 : i32, i32
  }
  func.func @transform_8(%arg0: i32) -> (i32, i32) {
    %c0_i32 = arith.constant 0 : i32
    %c0_i32_0 = arith.constant 0 : i32
    %c0_i32_1 = arith.constant 0 : i32
    return %c0_i32, %c0_i32_0 : i32, i32
  }
  func.func @transform_9(%arg0: i32) -> (i32, i32) {
    %c0_i32 = arith.constant 0 : i32
    %c0_i32_0 = arith.constant 0 : i32
    %c0_i32_1 = arith.constant 0 : i32
    return %c0_i32, %c0_i32_0 : i32, i32
  }
  func.func @transform_10(%arg0: i32) -> (i32, i32) {
    %c0_i32 = arith.constant 0 : i32
    %c0_i32_0 = arith.constant 0 : i32
    %c0_i32_1 = arith.constant 0 : i32
    return %c0_i32, %c0_i32_0 : i32, i32
  }
  func.func @transform_11(%arg0: i32) -> (i32, i32) {
    %c0_i32 = arith.constant 0 : i32
    %c0_i32_0 = arith.constant 0 : i32
    %c0_i32_1 = arith.constant 0 : i32
    return %c0_i32, %c0_i32_0 : i32, i32
  }
  func.func @transform_12(%arg0: i32) -> (i32, i32) {
    %c0_i32 = arith.constant 0 : i32
    %c0_i32_0 = arith.constant 0 : i32
    %c0_i32_1 = arith.constant 0 : i32
    return %c0_i32, %c0_i32_0 : i32, i32
  }
  func.func @transform_13(%arg0: i32) -> (i32, i32) {
    %c0_i32 = arith.constant 0 : i32
    %c0_i32_0 = arith.constant 0 : i32
    %c0_i32_1 = arith.constant 0 : i32
    return %c0_i32, %c0_i32_0 : i32, i32
  }
  func.func @transform_14(%arg0: i32) -> (i32, i32) {
    %c0_i32 = arith.constant 0 : i32
    %c0_i32_0 = arith.constant 0 : i32
    %c0_i32_1 = arith.constant 0 : i32
    return %c0_i32, %c0_i32_0 : i32, i32
  }
  func.func @transform_15(%arg0: i32) -> (i32, i32, i32) {
    %c0_i32 = arith.constant 0 : i32
    %c0_i32_0 = arith.constant 0 : i32
    %c0_i32_1 = arith.constant 0 : i32
    return %arg0, %c0_i32, %c0_i32_0 : i32, i32, i32
  }
}

module attributes {stable_mosaic.version = 11 : i64} {
  func.func @_reformer_block_kernel(%arg0: i32, %arg1: memref<1x128x128xf32, #tpu.memory_space<vmem>>, %arg2: memref<1x128xf32, #tpu.memory_space<vmem>>, %arg3: memref<1x128xf32, #tpu.memory_space<vmem>>, %arg4: memref<128x128xf32, #tpu.memory_space<vmem>>, %arg5: memref<1x128xf32, #tpu.memory_space<vmem>>, %arg6: memref<128x128xf32, #tpu.memory_space<vmem>>, %arg7: memref<1x128xf32, #tpu.memory_space<vmem>>, %arg8: memref<128x128xf32, #tpu.memory_space<vmem>>, %arg9: memref<1x128xf32, #tpu.memory_space<vmem>>, %arg10: memref<1x128xf32, #tpu.memory_space<vmem>>, %arg11: memref<1x128xf32, #tpu.memory_space<vmem>>, %arg12: memref<128x512xf32, #tpu.memory_space<vmem>>, %arg13: memref<1x512xf32, #tpu.memory_space<vmem>>, %arg14: memref<512x128xf32, #tpu.memory_space<vmem>>, %arg15: memref<1x128xf32, #tpu.memory_space<vmem>>, %arg16: memref<1x128x128xf32, #tpu.memory_space<vmem>>) attributes {dimension_semantics = [#tpu.dimension_semantics<parallel>], iteration_bounds = array<i64: 2>, scalar_prefetch = 0 : i64, scratch_operands = 0 : i64, tpu.core_type = #tpu.core_type<tc>, window_params = [{transform_indices = @transform_0, window_bounds = array<i64: 1, 128, 128>}, {pipeline_mode = #tpu.pipeline_mode<synchronous>, transform_indices = @transform_1, window_bounds = array<i64: 1, 128>}, {pipeline_mode = #tpu.pipeline_mode<synchronous>, transform_indices = @transform_2, window_bounds = array<i64: 1, 128>}, {pipeline_mode = #tpu.pipeline_mode<synchronous>, transform_indices = @transform_3, window_bounds = array<i64: 128, 128>}, {pipeline_mode = #tpu.pipeline_mode<synchronous>, transform_indices = @transform_4, window_bounds = array<i64: 1, 128>}, {pipeline_mode = #tpu.pipeline_mode<synchronous>, transform_indices = @transform_5, window_bounds = array<i64: 128, 128>}, {pipeline_mode = #tpu.pipeline_mode<synchronous>, transform_indices = @transform_6, window_bounds = array<i64: 1, 128>}, {pipeline_mode = #tpu.pipeline_mode<synchronous>, transform_indices = @transform_7, window_bounds = array<i64: 128, 128>}, {pipeline_mode = #tpu.pipeline_mode<synchronous>, transform_indices = @transform_8, window_bounds = array<i64: 1, 128>}, {pipeline_mode = #tpu.pipeline_mode<synchronous>, transform_indices = @transform_9, window_bounds = array<i64: 1, 128>}, {pipeline_mode = #tpu.pipeline_mode<synchronous>, transform_indices = @transform_10, window_bounds = array<i64: 1, 128>}, {pipeline_mode = #tpu.pipeline_mode<synchronous>, transform_indices = @transform_11, window_bounds = array<i64: 128, 512>}, {pipeline_mode = #tpu.pipeline_mode<synchronous>, transform_indices = @transform_12, window_bounds = array<i64: 1, 512>}, {pipeline_mode = #tpu.pipeline_mode<synchronous>, transform_indices = @transform_13, window_bounds = array<i64: 512, 128>}, {pipeline_mode = #tpu.pipeline_mode<synchronous>, transform_indices = @transform_14, window_bounds = array<i64: 1, 128>}, {transform_indices = @transform_15, window_bounds = array<i64: 1, 128, 128>}]} {
    %c0 = arith.constant 0 : index
    %c0_0 = arith.constant 0 : index
    %c0_1 = arith.constant 0 : index
    %0 = vector.load %arg1[%c0, %c0_0, %c0_1] : memref<1x128x128xf32, #tpu.memory_space<vmem>>, vector<1x128x128xf32>
    %1 = vector.shape_cast %0 : vector<1x128x128xf32> to vector<128x128xf32>
    %c0_2 = arith.constant 0 : index
    %c0_3 = arith.constant 0 : index
    %2 = vector.load %arg2[%c0_2, %c0_3] : memref<1x128xf32, #tpu.memory_space<vmem>>, vector<1x128xf32>
    %c0_4 = arith.constant 0 : index
    %c0_5 = arith.constant 0 : index
    %3 = vector.load %arg3[%c0_4, %c0_5] : memref<1x128xf32, #tpu.memory_space<vmem>>, vector<1x128xf32>
    %cst = arith.constant dense<0.000000e+00> : vector<128xf32>
    %4 = vector.multi_reduction <add>, %1, %cst [1] : vector<128x128xf32> to vector<128xf32>
    %5 = vector.shape_cast %4 : vector<128xf32> to vector<128x1xf32>
    %cst_6 = arith.constant 1.280000e+02 : f32
    %6 = vector.broadcast %cst_6 : f32 to vector<128x1xf32>
    %7 = arith.divf %5, %6 : vector<128x1xf32>
    %8 = vector.broadcast %7 : vector<128x1xf32> to vector<128x128xf32>
    %9 = arith.subf %1, %8 : vector<128x128xf32>
    %10 = arith.mulf %9, %9 : vector<128x128xf32>
    %cst_7 = arith.constant dense<0.000000e+00> : vector<128xf32>
    %11 = vector.multi_reduction <add>, %10, %cst_7 [1] : vector<128x128xf32> to vector<128xf32>
    %12 = vector.shape_cast %11 : vector<128xf32> to vector<128x1xf32>
    %cst_8 = arith.constant 1.280000e+02 : f32
    %13 = vector.broadcast %cst_8 : f32 to vector<128x1xf32>
    %14 = arith.divf %12, %13 : vector<128x1xf32>
    %15 = vector.broadcast %7 : vector<128x1xf32> to vector<128x128xf32>
    %16 = arith.subf %1, %15 : vector<128x128xf32>
    %cst_9 = arith.constant 9.99999974E-6 : f32
    %17 = vector.broadcast %cst_9 : f32 to vector<128x1xf32>
    %18 = arith.addf %14, %17 : vector<128x1xf32>
    %19 = math.rsqrt %18 : vector<128x1xf32>
    %20 = vector.broadcast %19 : vector<128x1xf32> to vector<128x128xf32>
    %21 = arith.mulf %16, %20 : vector<128x128xf32>
    %22 = vector.broadcast %2 : vector<1x128xf32> to vector<128x128xf32>
    %23 = arith.mulf %21, %22 : vector<128x128xf32>
    %24 = vector.broadcast %3 : vector<1x128xf32> to vector<128x128xf32>
    %25 = arith.addf %23, %24 : vector<128x128xf32>
    %c0_10 = arith.constant 0 : index
    %c0_11 = arith.constant 0 : index
    %26 = vector.load %arg4[%c0_10, %c0_11] : memref<128x128xf32, #tpu.memory_space<vmem>>, vector<128x128xf32>
    %cst_12 = arith.constant dense<0.000000e+00> : vector<128x128xf32>
    %27 = tpu.matmul %25, %26, %cst_12 {dimension_numbers = #tpu.dot_dimension_numbers<[1], [0], [0], [1], [0, 0, 1, 1], [], []>} : vector<128x128xf32>, vector<128x128xf32>, vector<128x128xf32> -> vector<128x128xf32>
    %c0_13 = arith.constant 0 : index
    %c0_14 = arith.constant 0 : index
    %28 = vector.load %arg5[%c0_13, %c0_14] : memref<1x128xf32, #tpu.memory_space<vmem>>, vector<1x128xf32>
    %29 = vector.broadcast %28 : vector<1x128xf32> to vector<128x128xf32>
    %30 = arith.addf %27, %29 : vector<128x128xf32>
    %c0_15 = arith.constant 0 : index
    %c0_16 = arith.constant 0 : index
    %31 = vector.load %arg6[%c0_15, %c0_16] : memref<128x128xf32, #tpu.memory_space<vmem>>, vector<128x128xf32>
    %cst_17 = arith.constant dense<0.000000e+00> : vector<128x128xf32>
    %32 = tpu.matmul %25, %31, %cst_17 {dimension_numbers = #tpu.dot_dimension_numbers<[1], [0], [0], [1], [0, 0, 1, 1], [], []>} : vector<128x128xf32>, vector<128x128xf32>, vector<128x128xf32> -> vector<128x128xf32>
    %c0_18 = arith.constant 0 : index
    %c0_19 = arith.constant 0 : index
    %33 = vector.load %arg7[%c0_18, %c0_19] : memref<1x128xf32, #tpu.memory_space<vmem>>, vector<1x128xf32>
    %34 = vector.broadcast %33 : vector<1x128xf32> to vector<128x128xf32>
    %35 = arith.addf %32, %34 : vector<128x128xf32>
    %c0_20 = arith.constant 0 : index
    %c0_21 = arith.constant 0 : index
    %36 = vector.load %arg8[%c0_20, %c0_21] : memref<128x128xf32, #tpu.memory_space<vmem>>, vector<128x128xf32>
    %cst_22 = arith.constant dense<0.000000e+00> : vector<128x128xf32>
    %37 = tpu.matmul %25, %36, %cst_22 {dimension_numbers = #tpu.dot_dimension_numbers<[1], [0], [0], [1], [0, 0, 1, 1], [], []>} : vector<128x128xf32>, vector<128x128xf32>, vector<128x128xf32> -> vector<128x128xf32>
    %c0_23 = arith.constant 0 : index
    %c0_24 = arith.constant 0 : index
    %38 = vector.load %arg9[%c0_23, %c0_24] : memref<1x128xf32, #tpu.memory_space<vmem>>, vector<1x128xf32>
    %39 = vector.broadcast %38 : vector<1x128xf32> to vector<128x128xf32>
    %40 = arith.addf %37, %39 : vector<128x128xf32>
    %cst_25 = arith.constant dense<0.000000e+00> : vector<128x128xf32>
    %41 = tpu.matmul %30, %35, %cst_25 {dimension_numbers = #tpu.dot_dimension_numbers<[1], [1], [0], [0], [0, 0, 1, 0], [], []>} : vector<128x128xf32>, vector<128x128xf32>, vector<128x128xf32> -> vector<128x128xf32>
    %cst_26 = arith.constant 0.0883883461 : f32
    %42 = vector.broadcast %cst_26 : f32 to vector<128x128xf32>
    %43 = arith.mulf %41, %42 : vector<128x128xf32>
    %cst_27 = arith.constant dense<0xFF800000> : vector<128xf32>
    %44 = vector.multi_reduction <maximumf>, %43, %cst_27 [1] : vector<128x128xf32> to vector<128xf32>
    %45 = vector.shape_cast %44 : vector<128xf32> to vector<128x1xf32>
    %46 = vector.broadcast %45 : vector<128x1xf32> to vector<128x128xf32>
    %47 = arith.subf %43, %46 : vector<128x128xf32>
    %48 = math.exp %47 : vector<128x128xf32>
    %cst_28 = arith.constant dense<0.000000e+00> : vector<128xf32>
    %49 = vector.multi_reduction <add>, %48, %cst_28 [1] : vector<128x128xf32> to vector<128xf32>
    %50 = vector.shape_cast %49 : vector<128xf32> to vector<128x1xf32>
    %51 = vector.broadcast %50 : vector<128x1xf32> to vector<128x128xf32>
    %52 = arith.divf %48, %51 : vector<128x128xf32>
    %cst_29 = arith.constant dense<0.000000e+00> : vector<128x128xf32>
    %53 = tpu.matmul %52, %40, %cst_29 {dimension_numbers = #tpu.dot_dimension_numbers<[1], [0], [0], [1], [0, 0, 1, 1], [], []>} : vector<128x128xf32>, vector<128x128xf32>, vector<128x128xf32> -> vector<128x128xf32>
    %54 = arith.addf %53, %1 : vector<128x128xf32>
    %c0_30 = arith.constant 0 : index
    %c0_31 = arith.constant 0 : index
    %55 = vector.load %arg10[%c0_30, %c0_31] : memref<1x128xf32, #tpu.memory_space<vmem>>, vector<1x128xf32>
    %c0_32 = arith.constant 0 : index
    %c0_33 = arith.constant 0 : index
    %56 = vector.load %arg11[%c0_32, %c0_33] : memref<1x128xf32, #tpu.memory_space<vmem>>, vector<1x128xf32>
    %cst_34 = arith.constant dense<0.000000e+00> : vector<128xf32>
    %57 = vector.multi_reduction <add>, %54, %cst_34 [1] : vector<128x128xf32> to vector<128xf32>
    %58 = vector.shape_cast %57 : vector<128xf32> to vector<128x1xf32>
    %cst_35 = arith.constant 1.280000e+02 : f32
    %59 = vector.broadcast %cst_35 : f32 to vector<128x1xf32>
    %60 = arith.divf %58, %59 : vector<128x1xf32>
    %61 = vector.broadcast %60 : vector<128x1xf32> to vector<128x128xf32>
    %62 = arith.subf %54, %61 : vector<128x128xf32>
    %63 = arith.mulf %62, %62 : vector<128x128xf32>
    %cst_36 = arith.constant dense<0.000000e+00> : vector<128xf32>
    %64 = vector.multi_reduction <add>, %63, %cst_36 [1] : vector<128x128xf32> to vector<128xf32>
    %65 = vector.shape_cast %64 : vector<128xf32> to vector<128x1xf32>
    %cst_37 = arith.constant 1.280000e+02 : f32
    %66 = vector.broadcast %cst_37 : f32 to vector<128x1xf32>
    %67 = arith.divf %65, %66 : vector<128x1xf32>
    %68 = vector.broadcast %60 : vector<128x1xf32> to vector<128x128xf32>
    %69 = arith.subf %54, %68 : vector<128x128xf32>
    %cst_38 = arith.constant 9.99999974E-6 : f32
    %70 = vector.broadcast %cst_38 : f32 to vector<128x1xf32>
    %71 = arith.addf %67, %70 : vector<128x1xf32>
    %72 = math.rsqrt %71 : vector<128x1xf32>
    %73 = vector.broadcast %72 : vector<128x1xf32> to vector<128x128xf32>
    %74 = arith.mulf %69, %73 : vector<128x128xf32>
    %75 = vector.broadcast %55 : vector<1x128xf32> to vector<128x128xf32>
    %76 = arith.mulf %74, %75 : vector<128x128xf32>
    %77 = vector.broadcast %56 : vector<1x128xf32> to vector<128x128xf32>
    %78 = arith.addf %76, %77 : vector<128x128xf32>
    %c0_39 = arith.constant 0 : index
    %c0_40 = arith.constant 0 : index
    %79 = vector.load %arg12[%c0_39, %c0_40] : memref<128x512xf32, #tpu.memory_space<vmem>>, vector<128x512xf32>
    %cst_41 = arith.constant dense<0.000000e+00> : vector<128x512xf32>
    %80 = tpu.matmul %78, %79, %cst_41 {dimension_numbers = #tpu.dot_dimension_numbers<[1], [0], [0], [1], [0, 0, 1, 1], [], []>} : vector<128x128xf32>, vector<128x512xf32>, vector<128x512xf32> -> vector<128x512xf32>
    %c0_42 = arith.constant 0 : index
    %c0_43 = arith.constant 0 : index
    %81 = vector.load %arg13[%c0_42, %c0_43] : memref<1x512xf32, #tpu.memory_space<vmem>>, vector<1x512xf32>
    %82 = vector.broadcast %81 : vector<1x512xf32> to vector<128x512xf32>
    %83 = arith.addf %80, %82 : vector<128x512xf32>
    %cst_44 = arith.constant 0.000000e+00 : f32
    %84 = vector.broadcast %cst_44 : f32 to vector<128x512xf32>
    %85 = arith.maximumf %83, %84 : vector<128x512xf32>
    %c0_45 = arith.constant 0 : index
    %c0_46 = arith.constant 0 : index
    %86 = vector.load %arg14[%c0_45, %c0_46] : memref<512x128xf32, #tpu.memory_space<vmem>>, vector<512x128xf32>
    %cst_47 = arith.constant dense<0.000000e+00> : vector<128x128xf32>
    %87 = tpu.matmul %85, %86, %cst_47 {dimension_numbers = #tpu.dot_dimension_numbers<[1], [0], [0], [1], [0, 0, 1, 1], [], []>} : vector<128x512xf32>, vector<512x128xf32>, vector<128x128xf32> -> vector<128x128xf32>
    %c0_48 = arith.constant 0 : index
    %c0_49 = arith.constant 0 : index
    %88 = vector.load %arg15[%c0_48, %c0_49] : memref<1x128xf32, #tpu.memory_space<vmem>>, vector<1x128xf32>
    %89 = vector.broadcast %88 : vector<1x128xf32> to vector<128x128xf32>
    %90 = arith.addf %87, %89 : vector<128x128xf32>
    %91 = arith.addf %90, %78 : vector<128x128xf32>
    %c0_50 = arith.constant 0 : index
    %c0_51 = arith.constant 0 : index
    %c0_52 = arith.constant 0 : index
    %92 = vector.load %arg16[%c0_50, %c0_51, %c0_52] : memref<1x128x128xf32, #tpu.memory_space<vmem>>, vector<1x128x128xf32>
    %93 = vector.shape_cast %92 : vector<1x128x128xf32> to vector<128x128xf32>
    %94 = vector.shape_cast %91 : vector<128x128xf32> to vector<1x128x128xf32>
    tpu.vector_store %arg16[%c0_50, %c0_51, %c0_52], %94 {strides = array<i32>} : memref<1x128x128xf32, #tpu.memory_space<vmem>>, vector<1x128x128xf32>,
    return
  }
  func.func @transform_0(%arg0: i32) -> (i32, i32, i32) {
    %c0_i32 = arith.constant 0 : i32
    %c0_i32_0 = arith.constant 0 : i32
    %c0_i32_1 = arith.constant 0 : i32
    return %arg0, %c0_i32, %c0_i32_0 : i32, i32, i32
  }
  func.func @transform_1(%arg0: i32) -> (i32, i32) {
    %c0_i32 = arith.constant 0 : i32
    %c0_i32_0 = arith.constant 0 : i32
    %c0_i32_1 = arith.constant 0 : i32
    return %c0_i32, %c0_i32_0 : i32, i32
  }
  func.func @transform_2(%arg0: i32) -> (i32, i32) {
    %c0_i32 = arith.constant 0 : i32
    %c0_i32_0 = arith.constant 0 : i32
    %c0_i32_1 = arith.constant 0 : i32
    return %c0_i32, %c0_i32_0 : i32, i32
  }
  func.func @transform_3(%arg0: i32) -> (i32, i32) {
    %c0_i32 = arith.constant 0 : i32
    %c0_i32_0 = arith.constant 0 : i32
    %c0_i32_1 = arith.constant 0 : i32
    return %c0_i32, %c0_i32_0 : i32, i32
  }
  func.func @transform_4(%arg0: i32) -> (i32, i32) {
    %c0_i32 = arith.constant 0 : i32
    %c0_i32_0 = arith.constant 0 : i32
    %c0_i32_1 = arith.constant 0 : i32
    return %c0_i32, %c0_i32_0 : i32, i32
  }
  func.func @transform_5(%arg0: i32) -> (i32, i32) {
    %c0_i32 = arith.constant 0 : i32
    %c0_i32_0 = arith.constant 0 : i32
    %c0_i32_1 = arith.constant 0 : i32
    return %c0_i32, %c0_i32_0 : i32, i32
  }
  func.func @transform_6(%arg0: i32) -> (i32, i32) {
    %c0_i32 = arith.constant 0 : i32
    %c0_i32_0 = arith.constant 0 : i32
    %c0_i32_1 = arith.constant 0 : i32
    return %c0_i32, %c0_i32_0 : i32, i32
  }
  func.func @transform_7(%arg0: i32) -> (i32, i32) {
    %c0_i32 = arith.constant 0 : i32
    %c0_i32_0 = arith.constant 0 : i32
    %c0_i32_1 = arith.constant 0 : i32
    return %c0_i32, %c0_i32_0 : i32, i32
  }
  func.func @transform_8(%arg0: i32) -> (i32, i32) {
    %c0_i32 = arith.constant 0 : i32
    %c0_i32_0 = arith.constant 0 : i32
    %c0_i32_1 = arith.constant 0 : i32
    return %c0_i32, %c0_i32_0 : i32, i32
  }
  func.func @transform_9(%arg0: i32) -> (i32, i32) {
    %c0_i32 = arith.constant 0 : i32
    %c0_i32_0 = arith.constant 0 : i32
    %c0_i32_1 = arith.constant 0 : i32
    return %c0_i32, %c0_i32_0 : i32, i32
  }
  func.func @transform_10(%arg0: i32) -> (i32, i32) {
    %c0_i32 = arith.constant 0 : i32
    %c0_i32_0 = arith.constant 0 : i32
    %c0_i32_1 = arith.constant 0 : i32
    return %c0_i32, %c0_i32_0 : i32, i32
  }
  func.func @transform_11(%arg0: i32) -> (i32, i32) {
    %c0_i32 = arith.constant 0 : i32
    %c0_i32_0 = arith.constant 0 : i32
    %c0_i32_1 = arith.constant 0 : i32
    return %c0_i32, %c0_i32_0 : i32, i32
  }
  func.func @transform_12(%arg0: i32) -> (i32, i32) {
    %c0_i32 = arith.constant 0 : i32
    %c0_i32_0 = arith.constant 0 : i32
    %c0_i32_1 = arith.constant 0 : i32
    return %c0_i32, %c0_i32_0 : i32, i32
  }
  func.func @transform_13(%arg0: i32) -> (i32, i32) {
    %c0_i32 = arith.constant 0 : i32
    %c0_i32_0 = arith.constant 0 : i32
    %c0_i32_1 = arith.constant 0 : i32
    return %c0_i32, %c0_i32_0 : i32, i32
  }
  func.func @transform_14(%arg0: i32) -> (i32, i32) {
    %c0_i32 = arith.constant 0 : i32
    %c0_i32_0 = arith.constant 0 : i32
    %c0_i32_1 = arith.constant 0 : i32
    return %c0_i32, %c0_i32_0 : i32, i32
  }
  func.func @transform_15(%arg0: i32) -> (i32, i32, i32) {
    %c0_i32 = arith.constant 0 : i32
    %c0_i32_0 = arith.constant 0 : i32
    %c0_i32_1 = arith.constant 0 : i32
    return %arg0, %c0_i32, %c0_i32_0 : i32, i32, i32
  }
}

module attributes {stable_mosaic.version = 11 : i64} {
  func.func @_head_kernel(%arg0: i32, %arg1: memref<1x128x128xf32, #tpu.memory_space<vmem>>, %arg2: memref<1x128xf32, #tpu.memory_space<vmem>>, %arg3: memref<1x128xf32, #tpu.memory_space<vmem>>, %arg4: memref<128x256xf32, #tpu.memory_space<vmem>>, %arg5: memref<1x256xf32, #tpu.memory_space<vmem>>, %arg6: memref<1x128x256xf32, #tpu.memory_space<vmem>>) attributes {dimension_semantics = [#tpu.dimension_semantics<parallel>], iteration_bounds = array<i64: 2>, scalar_prefetch = 0 : i64, scratch_operands = 0 : i64, tpu.core_type = #tpu.core_type<tc>, window_params = [{transform_indices = @transform_0, window_bounds = array<i64: 1, 128, 128>}, {pipeline_mode = #tpu.pipeline_mode<synchronous>, transform_indices = @transform_1, window_bounds = array<i64: 1, 128>}, {pipeline_mode = #tpu.pipeline_mode<synchronous>, transform_indices = @transform_2, window_bounds = array<i64: 1, 128>}, {pipeline_mode = #tpu.pipeline_mode<synchronous>, transform_indices = @transform_3, window_bounds = array<i64: 128, 256>}, {pipeline_mode = #tpu.pipeline_mode<synchronous>, transform_indices = @transform_4, window_bounds = array<i64: 1, 256>}, {transform_indices = @transform_5, window_bounds = array<i64: 1, 128, 256>}]} {
    %c0 = arith.constant 0 : index
    %c0_0 = arith.constant 0 : index
    %c0_1 = arith.constant 0 : index
    %0 = vector.load %arg1[%c0, %c0_0, %c0_1] : memref<1x128x128xf32, #tpu.memory_space<vmem>>, vector<1x128x128xf32>
    %1 = vector.shape_cast %0 : vector<1x128x128xf32> to vector<128x128xf32>
    %c0_2 = arith.constant 0 : index
    %c0_3 = arith.constant 0 : index
    %2 = vector.load %arg2[%c0_2, %c0_3] : memref<1x128xf32, #tpu.memory_space<vmem>>, vector<1x128xf32>
    %c0_4 = arith.constant 0 : index
    %c0_5 = arith.constant 0 : index
    %3 = vector.load %arg3[%c0_4, %c0_5] : memref<1x128xf32, #tpu.memory_space<vmem>>, vector<1x128xf32>
    %cst = arith.constant dense<0.000000e+00> : vector<128xf32>
    %4 = vector.multi_reduction <add>, %1, %cst [1] : vector<128x128xf32> to vector<128xf32>
    %5 = vector.shape_cast %4 : vector<128xf32> to vector<128x1xf32>
    %cst_6 = arith.constant 1.280000e+02 : f32
    %6 = vector.broadcast %cst_6 : f32 to vector<128x1xf32>
    %7 = arith.divf %5, %6 : vector<128x1xf32>
    %8 = vector.broadcast %7 : vector<128x1xf32> to vector<128x128xf32>
    %9 = arith.subf %1, %8 : vector<128x128xf32>
    %10 = arith.mulf %9, %9 : vector<128x128xf32>
    %cst_7 = arith.constant dense<0.000000e+00> : vector<128xf32>
    %11 = vector.multi_reduction <add>, %10, %cst_7 [1] : vector<128x128xf32> to vector<128xf32>
    %12 = vector.shape_cast %11 : vector<128xf32> to vector<128x1xf32>
    %cst_8 = arith.constant 1.280000e+02 : f32
    %13 = vector.broadcast %cst_8 : f32 to vector<128x1xf32>
    %14 = arith.divf %12, %13 : vector<128x1xf32>
    %15 = vector.broadcast %7 : vector<128x1xf32> to vector<128x128xf32>
    %16 = arith.subf %1, %15 : vector<128x128xf32>
    %cst_9 = arith.constant 9.99999974E-6 : f32
    %17 = vector.broadcast %cst_9 : f32 to vector<128x1xf32>
    %18 = arith.addf %14, %17 : vector<128x1xf32>
    %19 = math.rsqrt %18 : vector<128x1xf32>
    %20 = vector.broadcast %19 : vector<128x1xf32> to vector<128x128xf32>
    %21 = arith.mulf %16, %20 : vector<128x128xf32>
    %22 = vector.broadcast %2 : vector<1x128xf32> to vector<128x128xf32>
    %23 = arith.mulf %21, %22 : vector<128x128xf32>
    %24 = vector.broadcast %3 : vector<1x128xf32> to vector<128x128xf32>
    %25 = arith.addf %23, %24 : vector<128x128xf32>
    %c0_10 = arith.constant 0 : index
    %c0_11 = arith.constant 0 : index
    %26 = vector.load %arg4[%c0_10, %c0_11] : memref<128x256xf32, #tpu.memory_space<vmem>>, vector<128x256xf32>
    %cst_12 = arith.constant dense<0.000000e+00> : vector<128x256xf32>
    %27 = tpu.matmul %25, %26, %cst_12 {dimension_numbers = #tpu.dot_dimension_numbers<[1], [0], [0], [1], [0, 0, 1, 1], [], []>} : vector<128x128xf32>, vector<128x256xf32>, vector<128x256xf32> -> vector<128x256xf32>
    %c0_13 = arith.constant 0 : index
    %c0_14 = arith.constant 0 : index
    %28 = vector.load %arg5[%c0_13, %c0_14] : memref<1x256xf32, #tpu.memory_space<vmem>>, vector<1x256xf32>
    %29 = vector.broadcast %28 : vector<1x256xf32> to vector<128x256xf32>
    %30 = arith.addf %27, %29 : vector<128x256xf32>
    %c0_15 = arith.constant 0 : index
    %c0_16 = arith.constant 0 : index
    %c0_17 = arith.constant 0 : index
    %31 = vector.load %arg6[%c0_15, %c0_16, %c0_17] : memref<1x128x256xf32, #tpu.memory_space<vmem>>, vector<1x128x256xf32>
    %32 = vector.shape_cast %31 : vector<1x128x256xf32> to vector<128x256xf32>
    %33 = vector.shape_cast %30 : vector<128x256xf32> to vector<1x128x256xf32>
    tpu.vector_store %arg6[%c0_15, %c0_16, %c0_17], %33 {strides = array<i32>} : memref<1x128x256xf32, #tpu.memory_space<vmem>>, vector<1x128x256xf32>,
    return
  }
  func.func @transform_0(%arg0: i32) -> (i32, i32, i32) {
    %c0_i32 = arith.constant 0 : i32
    %c0_i32_0 = arith.constant 0 : i32
    %c0_i32_1 = arith.constant 0 : i32
    return %arg0, %c0_i32, %c0_i32_0 : i32, i32, i32
  }
  func.func @transform_1(%arg0: i32) -> (i32, i32) {
    %c0_i32 = arith.constant 0 : i32
    %c0_i32_0 = arith.constant 0 : i32
    %c0_i32_1 = arith.constant 0 : i32
    return %c0_i32, %c0_i32_0 : i32, i32
  }
  func.func @transform_2(%arg0: i32) -> (i32, i32) {
    %c0_i32 = arith.constant 0 : i32
    %c0_i32_0 = arith.constant 0 : i32
    %c0_i32_1 = arith.constant 0 : i32
    return %c0_i32, %c0_i32_0 : i32, i32
  }
  func.func @transform_3(%arg0: i32) -> (i32, i32) {
    %c0_i32 = arith.constant 0 : i32
    %c0_i32_0 = arith.constant 0 : i32
    %c0_i32_1 = arith.constant 0 : i32
    return %c0_i32, %c0_i32_0 : i32, i32
  }
  func.func @transform_4(%arg0: i32) -> (i32, i32) {
    %c0_i32 = arith.constant 0 : i32
    %c0_i32_0 = arith.constant 0 : i32
    %c0_i32_1 = arith.constant 0 : i32
    return %c0_i32, %c0_i32_0 : i32, i32
  }
  func.func @transform_5(%arg0: i32) -> (i32, i32, i32) {
    %c0_i32 = arith.constant 0 : i32
    %c0_i32_0 = arith.constant 0 : i32
    %c0_i32_1 = arith.constant 0 : i32
    return %arg0, %c0_i32, %c0_i32_0 : i32, i32, i32
  }
}

</mosaic_0001>

<llo_original>
// kernel: reformer_lm.4
$region0: #{reformer_lm.4}
  #allocation0 [shape = 'u32[]', space=smem, size = 0x4, offset = 0x4, fixed_abs, tag = 'smem constant byte address 0x4 - core index']
  #allocation1 [shape = 'u32[72,128]{1,0:T(1,128)}', space=vmem, size = 0x9000, scoped, tag = 'internal scratch']
  %s0 = inlined_call_operand.vmem [shape: s32[2,128,1], index: 0, kind: input, shape index: {}]
  %s1 = inlined_call_operand.hbm [shape: f32[256,128], index: 1, kind: input, shape index: {}]
  %s2 = inlined_call_operand.hbm [shape: f32[128,128], index: 2, kind: input, shape index: {}]
  %s3 = inlined_call_operand.vmem [shape: f32[2,128,128], index: 3, kind: output, shape index: {}]
  %s4 = sld [smem:[#allocation0]]
  $region53: #{reformer_lm.4} parent=0
    _
  %s6 = ssub.s32 1, %s4
  %s7 = scalar_select 0, %s6, %s4
  $region1: #{reformer_lm.4} parent=0
    #allocation2 [shape = 'u8[131072]{0}', space=vmem, size = 0x20000, scoped, tag = 'input window, operand 1, single buffered']
    #allocation3 [shape = 's32[2]{0}', space=sflag, size = 0x8, scoped, tag = 'scoped memory for reformer_lm.4']
    #allocation4 [shape = 'u8[65536]{0}', space=vmem, size = 0x10000, scoped, tag = 'input window, operand 2, single buffered']
    #allocation5 [shape = 's32[1]{0}', space=sflag, size = 0x4, scoped, tag = 'scoped memory for reformer_lm.4']
    %8 = vsyncpa [#allocation3], 0
    %9 = vsyncpa [#allocation5], 0
    loop: start=0, step=1, limit=4
    $region2: #{reformer_lm.4} parent=1 // loop_pre_header
      _
    $region3: #{reformer_lm.4} parent=1 // loop_header
      %s11 = sphi 0, %s15
      %p12 = scmp.ge.s32.totalorder %s11, 4
      %s21 = sphi 0, %s23
      %s24 = sphi 0, %s21
      %s25 = sphi 0, %s24
      %s41 = sphi 0, %s25
      %s45 = sphi 0, %s45
      %s47 = sphi 0, %s45
      %s48 = sphi 0, %s47
      %s62 = sphi 0, %s48
      %s66 = sphi 0, %s66
      %s68 = sphi 0, %s66
      %s69 = sphi 0, %s68
      %s83 = sphi 0, %s69
      %s89 = sphi 0, %s91
      %s92 = sphi 0, %s89
      %s93 = sphi 0, %s92
      %s109 = sphi 0, %s93
    $region4: #{reformer_lm.4} parent=1 // loop_header_branch
      %14 = sbr.rel (%p12) target = $region8
    $region5: #{reformer_lm.4} parent=1 // loop_body
      %s16 = ssub.s32 %s11, 1
      %s17 = ssub.s32 %s11, 2
      %s18 = sadd.s32 %s11, 1
      %s19 = ssub.s32 %s11, %s18
      %p20 = scmp.eq.s32.totalorder %s19, 0
      %s22 = sadd.s32 %s21, 1
      %s23 = scalar_select %p20, %s21, %s22
      %p26 = pneg %p20
      %p27 = scmp.eq.s32.totalorder %s11, 1
      %p28 = por %p26, %p27
      %p29 = scmp.ne.s32.totalorder %s21, %s24
      %p30 = scmp.eq.s32.totalorder %s11, 0
      %p31 = por %p29, %p30
      %p32 = scmp.ne.s32.totalorder %s21, %s24
      %p33 = scmp.eq.s32.totalorder %s16, 1
      %p34 = por %p32, %p33
      %p35 = scmp.ne.s32.totalorder %s24, %s25
      %p36 = scmp.eq.s32.totalorder %s16, 0
      %p37 = por %p35, %p36
      %p38 = scmp.ne.s32.totalorder %s24, %s25
      %p39 = scmp.eq.s32.totalorder %s17, 1
      %p40 = por %p38, %p39
      %p42 = scmp.ne.s32.totalorder %s25, %s41
      %p43 = scmp.eq.s32.totalorder %s17, 0
      %p44 = por %p42, %p43
      %s46 = sadd.s32 %s45, 1
      %p49 = scmp.eq.s32.totalorder %s11, 1
      %p50 = scmp.ne.s32.totalorder %s45, %s47
      %p51 = scmp.eq.s32.totalorder %s11, 0
      %p52 = por %p50, %p51
      %p53 = scmp.ne.s32.totalorder %s45, %s47
      %p54 = scmp.eq.s32.totalorder %s16, 1
      %p55 = por %p53, %p54
      %p56 = scmp.ne.s32.totalorder %s47, %s48
      %p57 = scmp.eq.s32.totalorder %s16, 0
      %p58 = por %p56, %p57
      %p59 = scmp.ne.s32.totalorder %s47, %s48
      %p60 = scmp.eq.s32.totalorder %s17, 1
      %p61 = por %p59, %p60
      %p63 = scmp.ne.s32.totalorder %s48, %s62
      %p64 = scmp.eq.s32.totalorder %s17, 0
      %p65 = por %p63, %p64
      %s67 = sadd.s32 %s66, 1
      %p70 = scmp.eq.s32.totalorder %s11, 1
      %p71 = scmp.ne.s32.totalorder %s66, %s68
      %p72 = scmp.eq.s32.totalorder %s11, 0
      %p73 = por %p71, %p72
      %p74 = scmp.ne.s32.totalorder %s66, %s68
      %p75 = scmp.eq.s32.totalorder %s16, 1
      %p76 = por %p74, %p75
      %p77 = scmp.ne.s32.totalorder %s68, %s69
      %p78 = scmp.eq.s32.totalorder %s16, 0
      %p79 = por %p77, %p78
      %p80 = scmp.ne.s32.totalorder %s68, %s69
      %p81 = scmp.eq.s32.totalorder %s17, 1
      %p82 = por %p80, %p81
      %p84 = scmp.ne.s32.totalorder %s69, %s83
      %p85 = scmp.eq.s32.totalorder %s17, 0
      %p86 = por %p84, %p85
      %s87 = ssub.s32 %s11, %s18
      %p88 = scmp.eq.s32.totalorder %s87, 0
      %s90 = sadd.s32 %s89, 1
      %s91 = scalar_select %p88, %s89, %s90
      %p94 = pneg %p88
      %p95 = scmp.eq.s32.totalorder %s11, 1
      %p96 = por %p94, %p95
      %p97 = scmp.ne.s32.totalorder %s89, %s92
      %p98 = scmp.eq.s32.totalorder %s11, 0
      %p99 = por %p97, %p98
      %p100 = scmp.ne.s32.totalorder %s89, %s92
      %p101 = scmp.eq.s32.totalorder %s16, 1
      %p102 = por %p100, %p101
      %p103 = scmp.ne.s32.totalorder %s92, %s93
      %p104 = scmp.eq.s32.totalorder %s16, 0
      %p105 = por %p103, %p104
      %p106 = scmp.ne.s32.totalorder %s92, %s93
      %p107 = scmp.eq.s32.totalorder %s17, 1
      %p108 = por %p106, %p107
      %p110 = scmp.ne.s32.totalorder %s93, %s109
      %p111 = scmp.eq.s32.totalorder %s17, 0
      %p112 = por %p110, %p111
      %p113 = scmp.le.s32.totalorder 1, %s11
      %p114 = scmp.lt.s32.totalorder %s11, 3
      %p115 = pnand %p113, %p114
      %p116 = pneg %p115
      // Predicated region
      $region9: #{reformer_lm.4} parent=5 // pred_check
        _
      $region10: #{reformer_lm.4} parent=5 // pred_check_branch
        %118 = sbr.rel (%p115) target = $region12
      $region11: #{reformer_lm.4} parent=5 // pred_region
        %s119 = ssub.s32 %s11, 1
        // Predicated region
        $region13: #{reformer_lm.4} parent=11 // pred_check
          %p120 = pneg %p58
        $region14: #{reformer_lm.4} parent=11 // pred_check_branch
          %122 = sbr.rel (%p120) target = $region16
        $region15: #{reformer_lm.4} parent=11 // pred_region
          %124 = vsyncadd [#allocation3], 0
          %s125 = sshll.u32 %s1, 4
          %s126 = int_to_ptr.hbm [resolvable:$true] %s125
          %s127 = sshll.u32 [#allocation2], 4
          %s128 = int_to_ptr.vmem [resolvable:$true] %s127
          %133 = dma.hbm_to_vmem [thread:$0]  %s126, 4096, %s128, [#allocation3], 128, 128, 8
        $region16: #{reformer_lm.4} parent=11 // pred_fallthru
          _
        // Predicated region
        $region17: #{reformer_lm.4} parent=11 // pred_check
          %p134 = pneg %p79
        $region18: #{reformer_lm.4} parent=11 // pred_check_branch
          %136 = sbr.rel (%p134) target = $region20
        $region19: #{reformer_lm.4} parent=11 // pred_region
          %138 = vsyncadd [#allocation5], 0
          %s139 = sshll.u32 %s2, 4
          %s140 = int_to_ptr.hbm [resolvable:$true] %s139
          %s141 = sshll.u32 [#allocation4], 4
          %s142 = int_to_ptr.vmem [resolvable:$true] %s141
          %147 = dma.hbm_to_vmem [thread:$0]  %s140, 2048, %s142, [#allocation5], 128, 128, 8
        $region20: #{reformer_lm.4} parent=11 // pred_fallthru
          _
      $region12: #{reformer_lm.4} parent=5 // pred_fallthru
        _
      %p148 = scmp.lt.s32.totalorder %s11, 2
      // Predicated region
      $region21: #{reformer_lm.4} parent=5 // pred_check
        %p149 = pneg %p148
      $region22: #{reformer_lm.4} parent=5 // pred_check_branch
        %151 = sbr.rel (%p149) target = $region24
      $region23: #{reformer_lm.4} parent=5 // pred_region
        // Predicated region
        $region25: #{reformer_lm.4} parent=23 // pred_check
          %p152 = pneg %p31
        $region26: #{reformer_lm.4} parent=23 // pred_check_branch
          %154 = sbr.rel (%p152) target = $region28
        $region27: #{reformer_lm.4} parent=23 // pred_region
          %p155 = scmp.lt.s32.totalorder %s11, 1
          %s156 = scalar_select %p155, %s11, 1
          %s157 = smul.addr %s156, 16
          %s158 = smul.addr %s157, 8
          %s159 = scalar_lea.vmem %s0, %s158
        $region28: #{reformer_lm.4} parent=23 // pred_fallthru
          _
      $region24: #{reformer_lm.4} parent=5 // pred_fallthru
        _
      %p160 = scmp.le.s32.totalorder 1, %s11
      %p161 = scmp.lt.s32.totalorder %s11, 3
      %p162 = pnand %p160, %p161
      %p163 = pneg %p162
      // Predicated region
      $region29: #{reformer_lm.4} parent=5 // pred_check
        _
      $region30: #{reformer_lm.4} parent=5 // pred_check_branch
        %165 = sbr.rel (%p162) target = $region32
      $region31: #{reformer_lm.4} parent=5 // pred_region
        %s166 = ssub.s32 %s11, 1
        // Predicated region
        $region33: #{reformer_lm.4} parent=31 // pred_check
          %p167 = pneg %p58
        $region34: #{reformer_lm.4} parent=31 // pred_check_branch
          %169 = sbr.rel (%p167) target = $region36
        $region35: #{reformer_lm.4} parent=31 // pred_region
          %171 = dma.done [#allocation3], 4096
        $region36: #{reformer_lm.4} parent=31 // pred_fallthru
          _
        // Predicated region
        $region37: #{reformer_lm.4} parent=31 // pred_check
          %p172 = pneg %p79
        $region38: #{reformer_lm.4} parent=31 // pred_check_branch
          %174 = sbr.rel (%p172) target = $region40
        $region39: #{reformer_lm.4} parent=31 // pred_region
          %176 = dma.done [#allocation5], 2048
        $region40: #{reformer_lm.4} parent=31 // pred_fallthru
          _
        %p177 = scmp.lt.s32.totalorder %s16, 1
        %s178 = scalar_select %p177, %s16, 1
        %s179 = smul.addr %s178, 16
        %s180 = smul.addr %s179, 8
        %s181 = scalar_lea.vmem %s0, %s180
        %p182 = pneg %p37
        %p183 = pneg %p34
        %p184 = pneg %p58
        %p185 = pneg %p55
        %p186 = pneg %p79
        %p187 = pneg %p76
        %p188 = pneg %p105
        %p189 = pneg %p102
        %p190 = scmp.lt.s32.totalorder %s16, 1
        %s191 = scalar_select %p190, %s16, 1
        %s192 = smul.addr %s191, 16
        %s193 = smul.addr %s192, 8
        %s194 = scalar_lea.vmem %s3, %s193
        %p195 = scmp.lt.s32.totalorder %s16, 1
        %s196 = scalar_select %p195, %s16, 1
        %s197 = smul.addr %s196, 16
        %s198 = smul.addr %s197, 8
        %s199 = scalar_lea.vmem %s0, %s198
        %p200 = scmp.lt.s32.totalorder %s16, 1
        %s201 = scalar_select %p200, %s16, 1
        %s202 = smul.addr %s201, 16
        %s203 = smul.addr %s202, 8
        %s204 = scalar_lea.vmem %s3, %s203
        %v205 = vld [vmem:[%s199] sm:$0xff]
        %v206 = vld [vmem:[%s199 + $0x8] sm:$0xff]
        %v207 = vld [vmem:[%s199 + $0x10] sm:$0xff]
        %v208 = vld [vmem:[%s199 + $0x18] sm:$0xff]
        %v209 = vld [vmem:[%s199 + $0x20] sm:$0xff]
        %v210 = vld [vmem:[%s199 + $0x28] sm:$0xff]
        %v211 = vld [vmem:[%s199 + $0x30] sm:$0xff]
        %v212 = vld [vmem:[%s199 + $0x38] sm:$0xff]
        %v213 = vld [vmem:[%s199 + $0x40] sm:$0xff]
        %v214 = vld [vmem:[%s199 + $0x48] sm:$0xff]
        %v215 = vld [vmem:[%s199 + $0x50] sm:$0xff]
        %v216 = vld [vmem:[%s199 + $0x58] sm:$0xff]
        %v217 = vld [vmem:[%s199 + $0x60] sm:$0xff]
        %v218 = vld [vmem:[%s199 + $0x68] sm:$0xff]
        %v219 = vld [vmem:[%s199 + $0x70] sm:$0xff]
        %v220 = vld [vmem:[%s199 + $0x78] sm:$0xff]
        %v221 = vlaneseq
        %v222 = vand.u32 %v221, 127
        %v223 = vadd.s32 %v222, 128
        %224 = vset.pattern.permute.xlu0 0
        %225 = vperm.xlu0 %224, %v205
        %v226 = vpop.permute.xlu0 %225
        %227 = vset.pattern.permute.xlu0 0
        %228 = vperm.xlu0 %227, %v206
        %v229 = vpop.permute.xlu0 %228
        %230 = vset.pattern.permute.xlu0 0
        %231 = vperm.xlu0 %230, %v207
        %v232 = vpop.permute.xlu0 %231
        %233 = vset.pattern.permute.xlu0 0
        %234 = vperm.xlu0 %233, %v208
        %v235 = vpop.permute.xlu0 %234
        %236 = vset.pattern.permute.xlu0 0
        %237 = vperm.xlu0 %236, %v209
        %v238 = vpop.permute.xlu0 %237
        %239 = vset.pattern.permute.xlu0 0
        %240 = vperm.xlu0 %239, %v210
        %v241 = vpop.permute.xlu0 %240
        %242 = vset.pattern.permute.xlu0 0
        %243 = vperm.xlu0 %242, %v211
        %v244 = vpop.permute.xlu0 %243
        %245 = vset.pattern.permute.xlu0 0
        %246 = vperm.xlu0 %245, %v212
        %v247 = vpop.permute.xlu0 %246
        %248 = vset.pattern.permute.xlu0 0
        %249 = vperm.xlu0 %248, %v213
        %v250 = vpop.permute.xlu0 %249
        %251 = vset.pattern.permute.xlu0 0
        %252 = vperm.xlu0 %251, %v214
        %v253 = vpop.permute.xlu0 %252
        %254 = vset.pattern.permute.xlu0 0
        %255 = vperm.xlu0 %254, %v215
        %v256 = vpop.permute.xlu0 %255
        %257 = vset.pattern.permute.xlu0 0
        %258 = vperm.xlu0 %257, %v216
        %v259 = vpop.permute.xlu0 %258
        %260 = vset.pattern.permute.xlu0 0
        %261 = vperm.xlu0 %260, %v217
        %v262 = vpop.permute.xlu0 %261
        %263 = vset.pattern.permute.xlu0 0
        %264 = vperm.xlu0 %263, %v218
        %v265 = vpop.permute.xlu0 %264
        %266 = vset.pattern.permute.xlu0 0
        %267 = vperm.xlu0 %266, %v219
        %v268 = vpop.permute.xlu0 %267
        %269 = vset.pattern.permute.xlu0 0
        %270 = vperm.xlu0 %269, %v220
        %v271 = vpop.permute.xlu0 %270
        %vm272 = vcmp.eq.s32.totalorder %v222, %v226
        %vm273 = vcmp.eq.s32.totalorder %v223, %v226
        %vm274 = vcmp.eq.s32.totalorder %v222, %v229
        %vm275 = vcmp.eq.s32.totalorder %v223, %v229
        %vm276 = vcmp.eq.s32.totalorder %v222, %v232
        %vm277 = vcmp.eq.s32.totalorder %v223, %v232
        %vm278 = vcmp.eq.s32.totalorder %v222, %v235
        %vm279 = vcmp.eq.s32.totalorder %v223, %v235
        %vm280 = vcmp.eq.s32.totalorder %v222, %v238
        %vm281 = vcmp.eq.s32.totalorder %v223, %v238
        %vm282 = vcmp.eq.s32.totalorder %v222, %v241
        %vm283 = vcmp.eq.s32.totalorder %v223, %v241
        %vm284 = vcmp.eq.s32.totalorder %v222, %v244
        %vm285 = vcmp.eq.s32.totalorder %v223, %v244
        %vm286 = vcmp.eq.s32.totalorder %v222, %v247
        %vm287 = vcmp.eq.s32.totalorder %v223, %v247
        %vm288 = vcmp.eq.s32.totalorder %v222, %v250
        %vm289 = vcmp.eq.s32.totalorder %v223, %v250
        %vm290 = vcmp.eq.s32.totalorder %v222, %v253
        %vm291 = vcmp.eq.s32.totalorder %v223, %v253
        %vm292 = vcmp.eq.s32.totalorder %v222, %v256
        %vm293 = vcmp.eq.s32.totalorder %v223, %v256
        %vm294 = vcmp.eq.s32.totalorder %v222, %v259
        %vm295 = vcmp.eq.s32.totalorder %v223, %v259
        %vm296 = vcmp.eq.s32.totalorder %v222, %v262
        %vm297 = vcmp.eq.s32.totalorder %v223, %v262
        %vm298 = vcmp.eq.s32.totalorder %v222, %v265
        %vm299 = vcmp.eq.s32.totalorder %v223, %v265
        %vm300 = vcmp.eq.s32.totalorder %v222, %v268
        %vm301 = vcmp.eq.s32.totalorder %v223, %v268
        %vm302 = vcmp.eq.s32.totalorder %v222, %v271
        %vm303 = vcmp.eq.s32.totalorder %v223, %v271
        %v304 = vsel %vm272, 1, 0
        %v305 = vsel %vm273, 1, 0
        %v306 = vsel %vm274, 1, 0
        %v307 = vsel %vm275, 1, 0
        %v308 = vsel %vm276, 1, 0
        %v309 = vsel %vm277, 1, 0
        %v310 = vsel %vm278, 1, 0
        %v311 = vsel %vm279, 1, 0
        %v312 = vsel %vm280, 1, 0
        %v313 = vsel %vm281, 1, 0
        %v314 = vsel %vm282, 1, 0
        %v315 = vsel %vm283, 1, 0
        %v316 = vsel %vm284, 1, 0
        %v317 = vsel %vm285, 1, 0
        %v318 = vsel %vm286, 1, 0
        %v319 = vsel %vm287, 1, 0
        %v320 = vsel %vm288, 1, 0
        %v321 = vsel %vm289, 1, 0
        %v322 = vsel %vm290, 1, 0
        %v323 = vsel %vm291, 1, 0
        %v324 = vsel %vm292, 1, 0
        %v325 = vsel %vm293, 1, 0
        %v326 = vsel %vm294, 1, 0
        %v327 = vsel %vm295, 1, 0
        %v328 = vsel %vm296, 1, 0
        %v329 = vsel %vm297, 1, 0
        %v330 = vsel %vm298, 1, 0
        %v331 = vsel %vm299, 1, 0
        %v332 = vsel %vm300, 1, 0
        %v333 = vsel %vm301, 1, 0
        %v334 = vsel %vm302, 1, 0
        %v335 = vsel %vm303, 1, 0
        %v336 = vcvt.s32.f32 %v304
        %v337 = vcvt.s32.f32 %v305
        %v338 = vcvt.s32.f32 %v306
        %v339 = vcvt.s32.f32 %v307
        %v340 = vcvt.s32.f32 %v308
        %v341 = vcvt.s32.f32 %v309
        %v342 = vcvt.s32.f32 %v310
        %v343 = vcvt.s32.f32 %v311
        %v344 = vcvt.s32.f32 %v312
        %v345 = vcvt.s32.f32 %v313
        %v346 = vcvt.s32.f32 %v314
        %v347 = vcvt.s32.f32 %v315
        %v348 = vcvt.s32.f32 %v316
        %v349 = vcvt.s32.f32 %v317
        %v350 = vcvt.s32.f32 %v318
        %v351 = vcvt.s32.f32 %v319
        %v352 = vcvt.s32.f32 %v320
        %v353 = vcvt.s32.f32 %v321
        %v354 = vcvt.s32.f32 %v322
        %v355 = vcvt.s32.f32 %v323
        %v356 = vcvt.s32.f32 %v324
        %v357 = vcvt.s32.f32 %v325
        %v358 = vcvt.s32.f32 %v326
        %v359 = vcvt.s32.f32 %v327
        %v360 = vcvt.s32.f32 %v328
        %v361 = vcvt.s32.f32 %v329
        %v362 = vcvt.s32.f32 %v330
        %v363 = vcvt.s32.f32 %v331
        %v364 = vcvt.s32.f32 %v332
        %v365 = vcvt.s32.f32 %v333
        %v366 = vcvt.s32.f32 %v334
        %v367 = vcvt.s32.f32 %v335
        %v368 = vld [vmem:[#allocation2] sm:$0xff]
        %v369 = vld [vmem:[#allocation2 + $0x8] sm:$0xff]
        %v370 = vld [vmem:[#allocation2 + $0x10] sm:$0xff]
        %v371 = vld [vmem:[#allocation2 + $0x18] sm:$0xff]
        %v372 = vld [vmem:[#allocation2 + $0x20] sm:$0xff]
        %v373 = vld [vmem:[#allocation2 + $0x28] sm:$0xff]
        %v374 = vld [vmem:[#allocation2 + $0x30] sm:$0xff]
        %v375 = vld [vmem:[#allocation2 + $0x38] sm:$0xff]
        %v376 = vld [vmem:[#allocation2 + $0x40] sm:$0xff]
        %v377 = vld [vmem:[#allocation2 + $0x48] sm:$0xff]
        %v378 = vld [vmem:[#allocation2 + $0x50] sm:$0xff]
        %v379 = vld [vmem:[#allocation2 + $0x58] sm:$0xff]
        %v380 = vld [vmem:[#allocation2 + $0x60] sm:$0xff]
        %v381 = vld [vmem:[#allocation2 + $0x68] sm:$0xff]
        %v382 = vld [vmem:[#allocation2 + $0x70] sm:$0xff]
        %v383 = vld [vmem:[#allocation2 + $0x78] sm:$0xff]
        %v384 = vld [vmem:[#allocation2 + $0x80] sm:$0xff]
        %v385 = vld [vmem:[#allocation2 + $0x88] sm:$0xff]
        %v386 = vld [vmem:[#allocation2 + $0x90] sm:$0xff]
        %v387 = vld [vmem:[#allocation2 + $0x98] sm:$0xff]
        %v388 = vld [vmem:[#allocation2 + $0xa0] sm:$0xff]
        %v389 = vld [vmem:[#allocation2 + $0xa8] sm:$0xff]
        %v390 = vld [vmem:[#allocation2 + $0xb0] sm:$0xff]
        %v391 = vld [vmem:[#allocation2 + $0xb8] sm:$0xff]
        %v392 = vld [vmem:[#allocation2 + $0xc0] sm:$0xff]
        %v393 = vld [vmem:[#allocation2 + $0xc8] sm:$0xff]
        %v394 = vld [vmem:[#allocation2 + $0xd0] sm:$0xff]
        %v395 = vld [vmem:[#allocation2 + $0xd8] sm:$0xff]
        %v396 = vld [vmem:[#allocation2 + $0xe0] sm:$0xff]
        %v397 = vld [vmem:[#allocation2 + $0xe8] sm:$0xff]
        %v398 = vld [vmem:[#allocation2 + $0xf0] sm:$0xff]
        %v399 = vld [vmem:[#allocation2 + $0xf8] sm:$0xff]
        %v400 = vld [vmem:[#allocation4] sm:$0xff]
        %v401 = vld [vmem:[#allocation4 + $0x8] sm:$0xff]
        %v402 = vld [vmem:[#allocation4 + $0x10] sm:$0xff]
        %v403 = vld [vmem:[#allocation4 + $0x18] sm:$0xff]
        %v404 = vld [vmem:[#allocation4 + $0x20] sm:$0xff]
        %v405 = vld [vmem:[#allocation4 + $0x28] sm:$0xff]
        %v406 = vld [vmem:[#allocation4 + $0x30] sm:$0xff]
        %v407 = vld [vmem:[#allocation4 + $0x38] sm:$0xff]
        %v408 = vld [vmem:[#allocation4 + $0x40] sm:$0xff]
        %v409 = vld [vmem:[#allocation4 + $0x48] sm:$0xff]
        %v410 = vld [vmem:[#allocation4 + $0x50] sm:$0xff]
        %v411 = vld [vmem:[#allocation4 + $0x58] sm:$0xff]
        %v412 = vld [vmem:[#allocation4 + $0x60] sm:$0xff]
        %v413 = vld [vmem:[#allocation4 + $0x68] sm:$0xff]
        %v414 = vld [vmem:[#allocation4 + $0x70] sm:$0xff]
        %v415 = vld [vmem:[#allocation4 + $0x78] sm:$0xff]
        %416 = vmatpush.msra.mxu0 %v383
        %417 = vmatpush.msra.mxu0 %v382
        %418 = vmatpush.msra.mxu0 %v381
        %419 = vmatpush.msra.mxu0 %v380
        %420 = vmatpush.msra.mxu0 %v379
        %421 = vmatpush.msra.mxu0 %v378
        %422 = vmatpush.msra.mxu0 %v377
        %423 = vmatpush.msra.mxu0 %v376
        %424 = vmatpush.msra.mxu0 %v375
        %425 = vmatpush.msra.mxu0 %v374
        %426 = vmatpush.msra.mxu0 %v373
        %427 = vmatpush.msra.mxu0 %v372
        %428 = vmatpush.msra.mxu0 %v371
        %429 = vmatpush.msra.mxu0 %v370
        %430 = vmatpush.msra.mxu0 %v369
        %431 = vmatpush.msra.mxu0 %v368
        %432 = vmatmul.f32.gmra.mxu0 %v336
        %v433 = vpop.f32.mrf.mxu0
        %v434 = vadd.f32 %v400, %v433
        %435 = vmatmul.f32.gmra.mxu0 %v338
        %v436 = vpop.f32.mrf.mxu0
        %v437 = vadd.f32 %v401, %v436
        %438 = vmatmul.f32.gmra.mxu0 %v340
        %v439 = vpop.f32.mrf.mxu0
        %v440 = vadd.f32 %v402, %v439
        %441 = vmatmul.f32.gmra.mxu0 %v342
        %v442 = vpop.f32.mrf.mxu0
        %v443 = vadd.f32 %v403, %v442
        %444 = vmatmul.f32.gmra.mxu0 %v344
        %v445 = vpop.f32.mrf.mxu0
        %v446 = vadd.f32 %v404, %v445
        %447 = vmatmul.f32.gmra.mxu0 %v346
        %v448 = vpop.f32.mrf.mxu0
        %v449 = vadd.f32 %v405, %v448
        %450 = vmatmul.f32.gmra.mxu0 %v348
        %v451 = vpop.f32.mrf.mxu0
        %v452 = vadd.f32 %v406, %v451
        %453 = vmatmul.f32.gmra.mxu0 %v350
        %v454 = vpop.f32.mrf.mxu0
        %v455 = vadd.f32 %v407, %v454
        %456 = vmatmul.f32.gmra.mxu0 %v352
        %v457 = vpop.f32.mrf.mxu0
        %v458 = vadd.f32 %v408, %v457
        %459 = vmatmul.f32.gmra.mxu0 %v354
        %v460 = vpop.f32.mrf.mxu0
        %v461 = vadd.f32 %v409, %v460
        %462 = vmatmul.f32.gmra.mxu0 %v356
        %v463 = vpop.f32.mrf.mxu0
        %v464 = vadd.f32 %v410, %v463
        %465 = vmatmul.f32.gmra.mxu0 %v358
        %v466 = vpop.f32.mrf.mxu0
        %v467 = vadd.f32 %v411, %v466
        %468 = vmatmul.f32.gmra.mxu0 %v360
        %v469 = vpop.f32.mrf.mxu0
        %v470 = vadd.f32 %v412, %v469
        %471 = vmatmul.f32.gmra.mxu0 %v362
        %v472 = vpop.f32.mrf.mxu0
        %v473 = vadd.f32 %v413, %v472
        %474 = vmatmul.f32.gmra.mxu0 %v364
        %v475 = vpop.f32.mrf.mxu0
        %v476 = vadd.f32 %v414, %v475
        %477 = vmatmul.f32.gmra.mxu0 %v366
        %v478 = vpop.f32.mrf.mxu0
        %v479 = vadd.f32 %v415, %v478
        %480 = vdwg.mxu0
        %481 = vmatpush.msra.mxu0 %v399
        %482 = vmatpush.msra.mxu0 %v398
        %483 = vmatpush.msra.mxu0 %v397
        %484 = vmatpush.msra.mxu0 %v396
        %485 = vmatpush.msra.mxu0 %v395
        %486 = vmatpush.msra.mxu0 %v394
        %487 = vmatpush.msra.mxu0 %v393
        %488 = vmatpush.msra.mxu0 %v392
        %489 = vmatpush.msra.mxu0 %v391
        %490 = vmatpush.msra.mxu0 %v390
        %491 = vmatpush.msra.mxu0 %v389
        %492 = vmatpush.msra.mxu0 %v388
        %493 = vmatpush.msra.mxu0 %v387
        %494 = vmatpush.msra.mxu0 %v386
        %495 = vmatpush.msra.mxu0 %v385
        %496 = vmatpush.msra.mxu0 %v384
        %497 = vmatmul.f32.gmra.mxu0 %v337
        %v498 = vpop.f32.mrf.mxu0
        %v499 = vadd.f32 %v434, %v498
        %500 = vmatmul.f32.gmra.mxu0 %v339
        %v501 = vpop.f32.mrf.mxu0
        %v502 = vadd.f32 %v437, %v501
        %503 = vmatmul.f32.gmra.mxu0 %v341
        %v504 = vpop.f32.mrf.mxu0
        %v505 = vadd.f32 %v440, %v504
        %506 = vmatmul.f32.gmra.mxu0 %v343
        %v507 = vpop.f32.mrf.mxu0
        %v508 = vadd.f32 %v443, %v507
        %509 = vmatmul.f32.gmra.mxu0 %v345
        %v510 = vpop.f32.mrf.mxu0
        %v511 = vadd.f32 %v446, %v510
        %512 = vmatmul.f32.gmra.mxu0 %v347
        %v513 = vpop.f32.mrf.mxu0
        %v514 = vadd.f32 %v449, %v513
        %515 = vmatmul.f32.gmra.mxu0 %v349
        %v516 = vpop.f32.mrf.mxu0
        %v517 = vadd.f32 %v452, %v516
        %518 = vmatmul.f32.gmra.mxu0 %v351
        %v519 = vpop.f32.mrf.mxu0
        %v520 = vadd.f32 %v455, %v519
        %521 = vmatmul.f32.gmra.mxu0 %v353
        %v522 = vpop.f32.mrf.mxu0
        %v523 = vadd.f32 %v458, %v522
        %524 = vmatmul.f32.gmra.mxu0 %v355
        %v525 = vpop.f32.mrf.mxu0
        %v526 = vadd.f32 %v461, %v525
        %527 = vmatmul.f32.gmra.mxu0 %v357
        %v528 = vpop.f32.mrf.mxu0
        %v529 = vadd.f32 %v464, %v528
        %530 = vmatmul.f32.gmra.mxu0 %v359
        %v531 = vpop.f32.mrf.mxu0
        %v532 = vadd.f32 %v467, %v531
        %533 = vmatmul.f32.gmra.mxu0 %v361
        %v534 = vpop.f32.mrf.mxu0
        %v535 = vadd.f32 %v470, %v534
        %536 = vmatmul.f32.gmra.mxu0 %v363
        %v537 = vpop.f32.mrf.mxu0
        %v538 = vadd.f32 %v473, %v537
        %539 = vmatmul.f32.gmra.mxu0 %v365
        %v540 = vpop.f32.mrf.mxu0
        %v541 = vadd.f32 %v476, %v540
        %542 = vmatmul.f32.gmra.mxu0 %v367
        %v543 = vpop.f32.mrf.mxu0
        %v544 = vadd.f32 %v479, %v543
        %545 = vdwg.mxu0
        %546 = vst [vmem:[%s204] sm:$0xff] %v499
        %547 = vst [vmem:[%s204 + $0x8] sm:$0xff] %v502
        %548 = vst [vmem:[%s204 + $0x10] sm:$0xff] %v505
        %549 = vst [vmem:[%s204 + $0x18] sm:$0xff] %v508
        %550 = vst [vmem:[%s204 + $0x20] sm:$0xff] %v511
        %551 = vst [vmem:[%s204 + $0x28] sm:$0xff] %v514
        %552 = vst [vmem:[%s204 + $0x30] sm:$0xff] %v517
        %553 = vst [vmem:[%s204 + $0x38] sm:$0xff] %v520
        %554 = vst [vmem:[%s204 + $0x40] sm:$0xff] %v523
        %555 = vst [vmem:[%s204 + $0x48] sm:$0xff] %v526
        %556 = vst [vmem:[%s204 + $0x50] sm:$0xff] %v529
        %557 = vst [vmem:[%s204 + $0x58] sm:$0xff] %v532
        %558 = vst [vmem:[%s204 + $0x60] sm:$0xff] %v535
        %559 = vst [vmem:[%s204 + $0x68] sm:$0xff] %v538
        %560 = vst [vmem:[%s204 + $0x70] sm:$0xff] %v541
        %561 = vst [vmem:[%s204 + $0x78] sm:$0xff] %v544
        %p562 = scmp.lt.s32.totalorder %s16, 1
        %s563 = scalar_select %p562, %s16, 1
        %s564 = smul.addr %s563, 16
        %s565 = smul.addr %s564, 8
        %s566 = scalar_lea.vmem %s3, %s565
        // Predicated region
        $region41: #{reformer_lm.4} parent=31 // pred_check
          %p567 = pneg %p102
        $region42: #{reformer_lm.4} parent=31 // pred_check_branch
          %569 = sbr.rel (%p567) target = $region44
        $region43: #{reformer_lm.4} parent=31 // pred_region
          _
        $region44: #{reformer_lm.4} parent=31 // pred_fallthru
          _
      $region32: #{reformer_lm.4} parent=5 // pred_fallthru
        _
      %p570 = scmp.le.s32.totalorder 2, %s11
      // Predicated region
      $region45: #{reformer_lm.4} parent=5 // pred_check
        %p571 = pneg %p570
      $region46: #{reformer_lm.4} parent=5 // pred_check_branch
        %573 = sbr.rel (%p571) target = $region48
      $region47: #{reformer_lm.4} parent=5 // pred_region
        %s574 = ssub.s32 %s11, 2
        // Predicated region
        $region49: #{reformer_lm.4} parent=47 // pred_check
          %p575 = pneg %p108
        $region50: #{reformer_lm.4} parent=47 // pred_check_branch
          %577 = sbr.rel (%p575) target = $region52
        $region51: #{reformer_lm.4} parent=47 // pred_region
          %p578 = scmp.lt.s32.totalorder %s17, 1
          %s579 = scalar_select %p578, %s17, 1
          %s580 = smul.addr %s579, 16
          %s581 = smul.addr %s580, 8
          %s582 = scalar_lea.vmem %s3, %s581
        $region52: #{reformer_lm.4} parent=47 // pred_fallthru
          _
      $region48: #{reformer_lm.4} parent=5 // pred_fallthru
        _
    $region6: #{reformer_lm.4} parent=1 // loop_footer
      %s15 = sadd.s32 1, %s11
    $region7: #{reformer_lm.4} parent=1 // loop_footer_branch
      %10 = sbr.rel target = $region3
    $region8: #{reformer_lm.4} parent=1 // loop_exit
      _
    %583 = vsyncpa [#allocation3], 1
    %s584 = scalar_lea.sflag [#allocation3], 1
    %585 = vsyncpa %s584, 1
    %586 = vsyncpa [#allocation5], 1

// kernel: reformer_lm.7
$region0: #{reformer_lm.7}
  #allocation0 [shape = 'u32[]', space=smem, size = 0x4, offset = 0x4, fixed_abs, tag = 'smem constant byte address 0x4 - core index']
  #allocation1 [shape = 'u32[72,128]{1,0:T(1,128)}', space=vmem, size = 0x9000, scoped, tag = 'internal scratch']
  %s0 = inlined_call_operand.vmem [shape: f32[2,128,128], index: 0, kind: input, shape index: {}]
  %s1 = inlined_call_operand.vmem [shape: f32[1,128], index: 1, kind: input, shape index: {}]
  %s2 = inlined_call_operand.vmem [shape: f32[1,128], index: 2, kind: input, shape index: {}]
  %s3 = inlined_call_operand.vmem [shape: f32[128,256], index: 3, kind: input, shape index: {}]
  %s4 = inlined_call_operand.vmem [shape: f32[1,256], index: 4, kind: input, shape index: {}]
  %s5 = inlined_call_operand.hbm [shape: f32[2,128,256], index: 5, kind: output, shape index: {}]
  %s6 = sld [smem:[#allocation0]]
  $region53: #{reformer_lm.7} parent=0
    _
  %s8 = ssub.s32 1, %s6
  %s9 = scalar_select 0, %s8, %s6
  $region1: #{reformer_lm.7} parent=0
    #allocation2 [shape = 'u8[262144]{0}', space=vmem, size = 0x40000, scoped, tag = 'output window, operand 0']
    #allocation3 [shape = 's32[2]{0}', space=sflag, size = 0x8, scoped, tag = 'scoped memory for reformer_lm.7']
    %10 = vsyncpa [#allocation3], 0
    %s11 = scalar_lea.sflag [#allocation3], 1
    %12 = vsyncpa %s11, 0
    loop: start=0, step=1, limit=4
    $region2: #{reformer_lm.7} parent=1 // loop_pre_header
      _
    $region3: #{reformer_lm.7} parent=1 // loop_header
      %s14 = sphi 0, %s18
      %p15 = scmp.ge.s32.totalorder %s14, 4
      %s24 = sphi 0, %s26
      %s27 = sphi 0, %s24
      %s28 = sphi 0, %s27
      %s44 = sphi 0, %s28
      %s48 = sphi 0, %s48
      %s50 = sphi 0, %s48
      %s51 = sphi 0, %s50
      %s65 = sphi 0, %s51
      %s69 = sphi 0, %s69
      %s71 = sphi 0, %s69
      %s72 = sphi 0, %s71
      %s86 = sphi 0, %s72
      %s90 = sphi 0, %s90
      %s92 = sphi 0, %s90
      %s93 = sphi 0, %s92
      %s107 = sphi 0, %s93
      %s111 = sphi 0, %s111
      %s113 = sphi 0, %s111
      %s114 = sphi 0, %s113
      %s128 = sphi 0, %s114
      %s134 = sphi 0, %s136
      %s137 = sphi 0, %s134
      %s138 = sphi 0, %s137
      %s154 = sphi 0, %s138
    $region4: #{reformer_lm.7} parent=1 // loop_header_branch
      %17 = sbr.rel (%p15) target = $region8
    $region5: #{reformer_lm.7} parent=1 // loop_body
      %s19 = ssub.s32 %s14, 1
      %s20 = ssub.s32 %s14, 2
      %s21 = sadd.s32 %s14, 1
      %s22 = ssub.s32 %s14, %s21
      %p23 = scmp.eq.s32.totalorder %s22, 0
      %s25 = sadd.s32 %s24, 1
      %s26 = scalar_select %p23, %s24, %s25
      %p29 = pneg %p23
      %p30 = scmp.eq.s32.totalorder %s14, 1
      %p31 = por %p29, %p30
      %p32 = scmp.ne.s32.totalorder %s24, %s27
      %p33 = scmp.eq.s32.totalorder %s14, 0
      %p34 = por %p32, %p33
      %p35 = scmp.ne.s32.totalorder %s24, %s27
      %p36 = scmp.eq.s32.totalorder %s19, 1
      %p37 = por %p35, %p36
      %p38 = scmp.ne.s32.totalorder %s27, %s28
      %p39 = scmp.eq.s32.totalorder %s19, 0
      %p40 = por %p38, %p39
      %p41 = scmp.ne.s32.totalorder %s27, %s28
      %p42 = scmp.eq.s32.totalorder %s20, 1
      %p43 = por %p41, %p42
      %p45 = scmp.ne.s32.totalorder %s28, %s44
      %p46 = scmp.eq.s32.totalorder %s20, 0
      %p47 = por %p45, %p46
      %s49 = sadd.s32 %s48, 1
      %p52 = scmp.eq.s32.totalorder %s14, 1
      %p53 = scmp.ne.s32.totalorder %s48, %s50
      %p54 = scmp.eq.s32.totalorder %s14, 0
      %p55 = por %p53, %p54
      %p56 = scmp.ne.s32.totalorder %s48, %s50
      %p57 = scmp.eq.s32.totalorder %s19, 1
      %p58 = por %p56, %p57
      %p59 = scmp.ne.s32.totalorder %s50, %s51
      %p60 = scmp.eq.s32.totalorder %s19, 0
      %p61 = por %p59, %p60
      %p62 = scmp.ne.s32.totalorder %s50, %s51
      %p63 = scmp.eq.s32.totalorder %s20, 1
      %p64 = por %p62, %p63
      %p66 = scmp.ne.s32.totalorder %s51, %s65
      %p67 = scmp.eq.s32.totalorder %s20, 0
      %p68 = por %p66, %p67
      %s70 = sadd.s32 %s69, 1
      %p73 = scmp.eq.s32.totalorder %s14, 1
      %p74 = scmp.ne.s32.totalorder %s69, %s71
      %p75 = scmp.eq.s32.totalorder %s14, 0
      %p76 = por %p74, %p75
      %p77 = scmp.ne.s32.totalorder %s69, %s71
      %p78 = scmp.eq.s32.totalorder %s19, 1
      %p79 = por %p77, %p78
      %p80 = scmp.ne.s32.totalorder %s71, %s72
      %p81 = scmp.eq.s32.totalorder %s19, 0
      %p82 = por %p80, %p81
      %p83 = scmp.ne.s32.totalorder %s71, %s72
      %p84 = scmp.eq.s32.totalorder %s20, 1
      %p85 = por %p83, %p84
      %p87 = scmp.ne.s32.totalorder %s72, %s86
      %p88 = scmp.eq.s32.totalorder %s20, 0
      %p89 = por %p87, %p88
      %s91 = sadd.s32 %s90, 1
      %p94 = scmp.eq.s32.totalorder %s14, 1
      %p95 = scmp.ne.s32.totalorder %s90, %s92
      %p96 = scmp.eq.s32.totalorder %s14, 0
      %p97 = por %p95, %p96
      %p98 = scmp.ne.s32.totalorder %s90, %s92
      %p99 = scmp.eq.s32.totalorder %s19, 1
      %p100 = por %p98, %p99
      %p101 = scmp.ne.s32.totalorder %s92, %s93
      %p102 = scmp.eq.s32.totalorder %s19, 0
      %p103 = por %p101, %p102
      %p104 = scmp.ne.s32.totalorder %s92, %s93
      %p105 = scmp.eq.s32.totalorder %s20, 1
      %p106 = por %p104, %p105
      %p108 = scmp.ne.s32.totalorder %s93, %s107
      %p109 = scmp.eq.s32.totalorder %s20, 0
      %p110 = por %p108, %p109
      %s112 = sadd.s32 %s111, 1
      %p115 = scmp.eq.s32.totalorder %s14, 1
      %p116 = scmp.ne.s32.totalorder %s111, %s113
      %p117 = scmp.eq.s32.totalorder %s14, 0
      %p118 = por %p116, %p117
      %p119 = scmp.ne.s32.totalorder %s111, %s113
      %p120 = scmp.eq.s32.totalorder %s19, 1
      %p121 = por %p119, %p120
      %p122 = scmp.ne.s32.totalorder %s113, %s114
      %p123 = scmp.eq.s32.totalorder %s19, 0
      %p124 = por %p122, %p123
      %p125 = scmp.ne.s32.totalorder %s113, %s114
      %p126 = scmp.eq.s32.totalorder %s20, 1
      %p127 = por %p125, %p126
      %p129 = scmp.ne.s32.totalorder %s114, %s128
      %p130 = scmp.eq.s32.totalorder %s20, 0
      %p131 = por %p129, %p130
      %s132 = ssub.s32 %s14, %s21
      %p133 = scmp.eq.s32.totalorder %s132, 0
      %s135 = sadd.s32 %s134, 1
      %s136 = scalar_select %p133, %s134, %s135
      %p139 = pneg %p133
      %p140 = scmp.eq.s32.totalorder %s14, 1
      %p141 = por %p139, %p140
      %p142 = scmp.ne.s32.totalorder %s134, %s137
      %p143 = scmp.eq.s32.totalorder %s14, 0
      %p144 = por %p142, %p143
      %p145 = scmp.ne.s32.totalorder %s134, %s137
      %p146 = scmp.eq.s32.totalorder %s19, 1
      %p147 = por %p145, %p146
      %p148 = scmp.ne.s32.totalorder %s137, %s138
      %p149 = scmp.eq.s32.totalorder %s19, 0
      %p150 = por %p148, %p149
      %p151 = scmp.ne.s32.totalorder %s137, %s138
      %p152 = scmp.eq.s32.totalorder %s20, 1
      %p153 = por %p151, %p152
      %p155 = scmp.ne.s32.totalorder %s138, %s154
      %p156 = scmp.eq.s32.totalorder %s20, 0
      %p157 = por %p155, %p156
      %p158 = scmp.le.s32.totalorder 1, %s14
      %p159 = scmp.lt.s32.totalorder %s14, 3
      %p160 = pnand %p158, %p159
      %p161 = pneg %p160
      // Predicated region
      $region9: #{reformer_lm.7} parent=5 // pred_check
        _
      $region10: #{reformer_lm.7} parent=5 // pred_check_branch
        %163 = sbr.rel (%p160) target = $region12
      $region11: #{reformer_lm.7} parent=5 // pred_region
        %s164 = ssub.s32 %s14, 1
        // Predicated region
        $region13: #{reformer_lm.7} parent=11 // pred_check
          %p165 = pneg %p61
        $region14: #{reformer_lm.7} parent=11 // pred_check_branch
          %167 = sbr.rel (%p165) target = $region16
        $region15: #{reformer_lm.7} parent=11 // pred_region
          _
        $region16: #{reformer_lm.7} parent=11 // pred_fallthru
          _
        // Predicated region
        $region17: #{reformer_lm.7} parent=11 // pred_check
          %p168 = pneg %p82
        $region18: #{reformer_lm.7} parent=11 // pred_check_branch
          %170 = sbr.rel (%p168) target = $region20
        $region19: #{reformer_lm.7} parent=11 // pred_region
          _
        $region20: #{reformer_lm.7} parent=11 // pred_fallthru
          _
        // Predicated region
        $region21: #{reformer_lm.7} parent=11 // pred_check
          %p171 = pneg %p103
        $region22: #{reformer_lm.7} parent=11 // pred_check_branch
          %173 = sbr.rel (%p171) target = $region24
        $region23: #{reformer_lm.7} parent=11 // pred_region
          _
        $region24: #{reformer_lm.7} parent=11 // pred_fallthru
          _
        // Predicated region
        $region25: #{reformer_lm.7} parent=11 // pred_check
          %p174 = pneg %p124
        $region26: #{reformer_lm.7} parent=11 // pred_check_branch
          %176 = sbr.rel (%p174) target = $region28
        $region27: #{reformer_lm.7} parent=11 // pred_region
          _
        $region28: #{reformer_lm.7} parent=11 // pred_fallthru
          _
      $region12: #{reformer_lm.7} parent=5 // pred_fallthru
        _
      %p177 = scmp.lt.s32.totalorder %s14, 2
      // Predicated region
      $region29: #{reformer_lm.7} parent=5 // pred_check
        %p178 = pneg %p177
      $region30: #{reformer_lm.7} parent=5 // pred_check_branch
        %180 = sbr.rel (%p178) target = $region32
      $region31: #{reformer_lm.7} parent=5 // pred_region
        // Predicated region
        $region33: #{reformer_lm.7} parent=31 // pred_check
          %p181 = pneg %p34
        $region34: #{reformer_lm.7} parent=31 // pred_check_branch
          %183 = sbr.rel (%p181) target = $region36
        $region35: #{reformer_lm.7} parent=31 // pred_region
          %p184 = scmp.lt.s32.totalorder %s14, 1
          %s185 = scalar_select %p184, %s14, 1
          %s186 = smul.addr %s185, 16
          %s187 = smul.addr %s186, 8
          %s188 = scalar_lea.vmem %s0, %s187
        $region36: #{reformer_lm.7} parent=31 // pred_fallthru
          _
      $region32: #{reformer_lm.7} parent=5 // pred_fallthru
        _
      %p189 = scmp.le.s32.totalorder 1, %s14
      %p190 = scmp.lt.s32.totalorder %s14, 3
      %p191 = pnand %p189, %p190
      %p192 = pneg %p191
      // Predicated region
      $region37: #{reformer_lm.7} parent=5 // pred_check
        _
      $region38: #{reformer_lm.7} parent=5 // pred_check_branch
        %194 = sbr.rel (%p191) target = $region40
      $region39: #{reformer_lm.7} parent=5 // pred_region
        %s195 = ssub.s32 %s14, 1
        %p196 = scmp.lt.s32.totalorder %s19, 1
        %s197 = scalar_select %p196, %s19, 1
        %s198 = smul.addr %s197, 16
        %s199 = smul.addr %s198, 8
        %s200 = scalar_lea.vmem %s0, %s199
        %p201 = pneg %p40
        %p202 = pneg %p37
        %p203 = pneg %p61
        %p204 = pneg %p58
        %p205 = pneg %p82
        %p206 = pneg %p79
        %p207 = pneg %p103
        %p208 = pneg %p100
        %p209 = pneg %p124
        %p210 = pneg %p121
        %p211 = pneg %p150
        %p212 = pneg %p147
        %s213 = sand.u32 %s137, 1
        %s214 = scalar_lea.sflag [#allocation3], %s213
        %s215 = sand.u32 %s137, 1
        %s216 = smul.addr %s215, 256
        %s217 = scalar_lea.vmem [#allocation2], %s216
        %p218 = scmp.lt.s32.totalorder %s19, 1
        %s219 = scalar_select %p218, %s19, 1
        %s220 = smul.addr %s219, 16
        %s221 = smul.addr %s220, 8
        %s222 = scalar_lea.vmem %s0, %s221
        %v223 = vld [vmem:[%s222] sm:$0xff]
        %v224 = vld [vmem:[%s222 + $0x8] sm:$0xff]
        %v225 = vld [vmem:[%s222 + $0x10] sm:$0xff]
        %v226 = vld [vmem:[%s222 + $0x18] sm:$0xff]
        %v227 = vld [vmem:[%s222 + $0x20] sm:$0xff]
        %v228 = vld [vmem:[%s222 + $0x28] sm:$0xff]
        %v229 = vld [vmem:[%s222 + $0x30] sm:$0xff]
        %v230 = vld [vmem:[%s222 + $0x38] sm:$0xff]
        %v231 = vld [vmem:[%s222 + $0x40] sm:$0xff]
        %v232 = vld [vmem:[%s222 + $0x48] sm:$0xff]
        %v233 = vld [vmem:[%s222 + $0x50] sm:$0xff]
        %v234 = vld [vmem:[%s222 + $0x58] sm:$0xff]
        %v235 = vld [vmem:[%s222 + $0x60] sm:$0xff]
        %v236 = vld [vmem:[%s222 + $0x68] sm:$0xff]
        %v237 = vld [vmem:[%s222 + $0x70] sm:$0xff]
        %v238 = vld [vmem:[%s222 + $0x78] sm:$0xff]
        %v239 = vld [vmem:[%s1] sm:$0x1]
        %v240 = vld [vmem:[%s2] sm:$0x1]
        %241 = vadd.xlane.f32.xlu0 %v223
        %v242 = vpop.xlane.xlu0 %241
        %243 = vadd.xlane.f32.xlu0 %v224
        %v244 = vpop.xlane.xlu0 %243
        %245 = vadd.xlane.f32.xlu0 %v225
        %v246 = vpop.xlane.xlu0 %245
        %247 = vadd.xlane.f32.xlu0 %v226
        %v248 = vpop.xlane.xlu0 %247
        %249 = vadd.xlane.f32.xlu0 %v227
        %v250 = vpop.xlane.xlu0 %249
        %251 = vadd.xlane.f32.xlu0 %v228
        %v252 = vpop.xlane.xlu0 %251
        %253 = vadd.xlane.f32.xlu0 %v229
        %v254 = vpop.xlane.xlu0 %253
        %255 = vadd.xlane.f32.xlu0 %v230
        %v256 = vpop.xlane.xlu0 %255
        %257 = vadd.xlane.f32.xlu0 %v231
        %v258 = vpop.xlane.xlu0 %257
        %259 = vadd.xlane.f32.xlu0 %v232
        %v260 = vpop.xlane.xlu0 %259
        %261 = vadd.xlane.f32.xlu0 %v233
        %v262 = vpop.xlane.xlu0 %261
        %263 = vadd.xlane.f32.xlu0 %v234
        %v264 = vpop.xlane.xlu0 %263
        %265 = vadd.xlane.f32.xlu0 %v235
        %v266 = vpop.xlane.xlu0 %265
        %267 = vadd.xlane.f32.xlu0 %v236
        %v268 = vpop.xlane.xlu0 %267
        %269 = vadd.xlane.f32.xlu0 %v237
        %v270 = vpop.xlane.xlu0 %269
        %271 = vadd.xlane.f32.xlu0 %v238
        %v272 = vpop.xlane.xlu0 %271
        %v273 = vrcp.pop 128.0
        %v274 = vmul.f32 128.0, %v273
        %v275 = vsub.f32 1.0, %v274
        %v276 = vmul.f32 %v273, %v275
        %v277 = vadd.f32 %v273, %v276
        %vm278 = vweird.f32 %v273
        %v279 = vsel %vm278, %v273, %v277
        %v280 = vmul.f32 %v242, %v279
        %v281 = vmul.f32 %v244, %v279
        %v282 = vmul.f32 %v246, %v279
        %v283 = vmul.f32 %v248, %v279
        %v284 = vmul.f32 %v250, %v279
        %v285 = vmul.f32 %v252, %v279
        %v286 = vmul.f32 %v254, %v279
        %v287 = vmul.f32 %v256, %v279
        %v288 = vmul.f32 %v258, %v279
        %v289 = vmul.f32 %v260, %v279
        %v290 = vmul.f32 %v262, %v279
        %v291 = vmul.f32 %v264, %v279
        %v292 = vmul.f32 %v266, %v279
        %v293 = vmul.f32 %v268, %v279
        %v294 = vmul.f32 %v270, %v279
        %v295 = vmul.f32 %v272, %v279
        %v296 = vsub.f32 %v223, %v280
        %v297 = vsub.f32 %v224, %v281
        %v298 = vsub.f32 %v225, %v282
        %v299 = vsub.f32 %v226, %v283
        %v300 = vsub.f32 %v227, %v284
        %v301 = vsub.f32 %v228, %v285
        %v302 = vsub.f32 %v229, %v286
        %v303 = vsub.f32 %v230, %v287
        %v304 = vsub.f32 %v231, %v288
        %v305 = vsub.f32 %v232, %v289
        %v306 = vsub.f32 %v233, %v290
        %v307 = vsub.f32 %v234, %v291
        %v308 = vsub.f32 %v235, %v292
        %v309 = vsub.f32 %v236, %v293
        %v310 = vsub.f32 %v237, %v294
        %v311 = vsub.f32 %v238, %v295
        %v312 = vmul.f32 %v296, %v296
        %v313 = vmul.f32 %v297, %v297
        %v314 = vmul.f32 %v298, %v298
        %v315 = vmul.f32 %v299, %v299
        %v316 = vmul.f32 %v300, %v300
        %v317 = vmul.f32 %v301, %v301
        %v318 = vmul.f32 %v302, %v302
        %v319 = vmul.f32 %v303, %v303
        %v320 = vmul.f32 %v304, %v304
        %v321 = vmul.f32 %v305, %v305
        %v322 = vmul.f32 %v306, %v306
        %v323 = vmul.f32 %v307, %v307
        %v324 = vmul.f32 %v308, %v308
        %v325 = vmul.f32 %v309, %v309
        %v326 = vmul.f32 %v310, %v310
        %v327 = vmul.f32 %v311, %v311
        %328 = vadd.xlane.f32.xlu0 %v312
        %v329 = vpop.xlane.xlu0 %328
        %330 = vadd.xlane.f32.xlu0 %v313
        %v331 = vpop.xlane.xlu0 %330
        %332 = vadd.xlane.f32.xlu0 %v314
        %v333 = vpop.xlane.xlu0 %332
        %334 = vadd.xlane.f32.xlu0 %v315
        %v335 = vpop.xlane.xlu0 %334
        %336 = vadd.xlane.f32.xlu0 %v316
        %v337 = vpop.xlane.xlu0 %336
        %338 = vadd.xlane.f32.xlu0 %v317
        %v339 = vpop.xlane.xlu0 %338
        %340 = vadd.xlane.f32.xlu0 %v318
        %v341 = vpop.xlane.xlu0 %340
        %342 = vadd.xlane.f32.xlu0 %v319
        %v343 = vpop.xlane.xlu0 %342
        %344 = vadd.xlane.f32.xlu0 %v320
        %v345 = vpop.xlane.xlu0 %344
        %346 = vadd.xlane.f32.xlu0 %v321
        %v347 = vpop.xlane.xlu0 %346
        %348 = vadd.xlane.f32.xlu0 %v322
        %v349 = vpop.xlane.xlu0 %348
        %350 = vadd.xlane.f32.xlu0 %v323
        %v351 = vpop.xlane.xlu0 %350
        %352 = vadd.xlane.f32.xlu0 %v324
        %v353 = vpop.xlane.xlu0 %352
        %354 = vadd.xlane.f32.xlu0 %v325
        %v355 = vpop.xlane.xlu0 %354
        %356 = vadd.xlane.f32.xlu0 %v326
        %v357 = vpop.xlane.xlu0 %356
        %358 = vadd.xlane.f32.xlu0 %v327
        %v359 = vpop.xlane.xlu0 %358
        %v360 = vmul.f32 %v329, %v279
        %v361 = vmul.f32 %v331, %v279
        %v362 = vmul.f32 %v333, %v279
        %v363 = vmul.f32 %v335, %v279
        %v364 = vmul.f32 %v337, %v279
        %v365 = vmul.f32 %v339, %v279
        %v366 = vmul.f32 %v341, %v279
        %v367 = vmul.f32 %v343, %v279
        %v368 = vmul.f32 %v345, %v279
        %v369 = vmul.f32 %v347, %v279
        %v370 = vmul.f32 %v349, %v279
        %v371 = vmul.f32 %v351, %v279
        %v372 = vmul.f32 %v353, %v279
        %v373 = vmul.f32 %v355, %v279
        %v374 = vmul.f32 %v357, %v279
        %v375 = vmul.f32 %v359, %v279
        %v376 = vadd.f32 %v360, 1e-05
        %v377 = vadd.f32 %v361, 1e-05
        %v378 = vadd.f32 %v362, 1e-05
        %v379 = vadd.f32 %v363, 1e-05
        %v380 = vadd.f32 %v364, 1e-05
        %v381 = vadd.f32 %v365, 1e-05
        %v382 = vadd.f32 %v366, 1e-05
        %v383 = vadd.f32 %v367, 1e-05
        %v384 = vadd.f32 %v368, 1e-05
        %v385 = vadd.f32 %v369, 1e-05
        %v386 = vadd.f32 %v370, 1e-05
        %v387 = vadd.f32 %v371, 1e-05
        %v388 = vadd.f32 %v372, 1e-05
        %v389 = vadd.f32 %v373, 1e-05
        %v390 = vadd.f32 %v374, 1e-05
        %v391 = vadd.f32 %v375, 1e-05
        %v392 = vrsqrt.pop %v376
        %v393 = vmul.f32 %v392, %v376
        %v394 = vmul.f32 %v393, %v392
        %v395 = vmul.f32 0.5, %v394
        %v396 = vsub.f32 1.5, %v395
        %v397 = vmul.f32 %v392, %v396
        %vm398 = vweird.f32 %v376
        %vm399 = vweird.f32 %v392
        %vm400 = vmor %vm398, %vm399
        %v401 = vsel %vm400, %v392, %v397
        %v402 = vrsqrt.pop %v377
        %v403 = vmul.f32 %v402, %v377
        %v404 = vmul.f32 %v403, %v402
        %v405 = vmul.f32 0.5, %v404
        %v406 = vsub.f32 1.5, %v405
        %v407 = vmul.f32 %v402, %v406
        %vm408 = vweird.f32 %v377
        %vm409 = vweird.f32 %v402
        %vm410 = vmor %vm408, %vm409
        %v411 = vsel %vm410, %v402, %v407
        %v412 = vrsqrt.pop %v378
        %v413 = vmul.f32 %v412, %v378
        %v414 = vmul.f32 %v413, %v412
        %v415 = vmul.f32 0.5, %v414
        %v416 = vsub.f32 1.5, %v415
        %v417 = vmul.f32 %v412, %v416
        %vm418 = vweird.f32 %v378
        %vm419 = vweird.f32 %v412
        %vm420 = vmor %vm418, %vm419
        %v421 = vsel %vm420, %v412, %v417
        %v422 = vrsqrt.pop %v379
        %v423 = vmul.f32 %v422, %v379
        %v424 = vmul.f32 %v423, %v422
        %v425 = vmul.f32 0.5, %v424
        %v426 = vsub.f32 1.5, %v425
        %v427 = vmul.f32 %v422, %v426
        %vm428 = vweird.f32 %v379
        %vm429 = vweird.f32 %v422
        %vm430 = vmor %vm428, %vm429
        %v431 = vsel %vm430, %v422, %v427
        %v432 = vrsqrt.pop %v380
        %v433 = vmul.f32 %v432, %v380
        %v434 = vmul.f32 %v433, %v432
        %v435 = vmul.f32 0.5, %v434
        %v436 = vsub.f32 1.5, %v435
        %v437 = vmul.f32 %v432, %v436
        %vm438 = vweird.f32 %v380
        %vm439 = vweird.f32 %v432
        %vm440 = vmor %vm438, %vm439
        %v441 = vsel %vm440, %v432, %v437
        %v442 = vrsqrt.pop %v381
        %v443 = vmul.f32 %v442, %v381
        %v444 = vmul.f32 %v443, %v442
        %v445 = vmul.f32 0.5, %v444
        %v446 = vsub.f32 1.5, %v445
        %v447 = vmul.f32 %v442, %v446
        %vm448 = vweird.f32 %v381
        %vm449 = vweird.f32 %v442
        %vm450 = vmor %vm448, %vm449
        %v451 = vsel %vm450, %v442, %v447
        %v452 = vrsqrt.pop %v382
        %v453 = vmul.f32 %v452, %v382
        %v454 = vmul.f32 %v453, %v452
        %v455 = vmul.f32 0.5, %v454
        %v456 = vsub.f32 1.5, %v455
        %v457 = vmul.f32 %v452, %v456
        %vm458 = vweird.f32 %v382
        %vm459 = vweird.f32 %v452
        %vm460 = vmor %vm458, %vm459
        %v461 = vsel %vm460, %v452, %v457
        %v462 = vrsqrt.pop %v383
        %v463 = vmul.f32 %v462, %v383
        %v464 = vmul.f32 %v463, %v462
        %v465 = vmul.f32 0.5, %v464
        %v466 = vsub.f32 1.5, %v465
        %v467 = vmul.f32 %v462, %v466
        %vm468 = vweird.f32 %v383
        %vm469 = vweird.f32 %v462
        %vm470 = vmor %vm468, %vm469
        %v471 = vsel %vm470, %v462, %v467
        %v472 = vrsqrt.pop %v384
        %v473 = vmul.f32 %v472, %v384
        %v474 = vmul.f32 %v473, %v472
        %v475 = vmul.f32 0.5, %v474
        %v476 = vsub.f32 1.5, %v475
        %v477 = vmul.f32 %v472, %v476
        %vm478 = vweird.f32 %v384
        %vm479 = vweird.f32 %v472
        %vm480 = vmor %vm478, %vm479
        %v481 = vsel %vm480, %v472, %v477
        %v482 = vrsqrt.pop %v385
        %v483 = vmul.f32 %v482, %v385
        %v484 = vmul.f32 %v483, %v482
        %v485 = vmul.f32 0.5, %v484
        %v486 = vsub.f32 1.5, %v485
        %v487 = vmul.f32 %v482, %v486
        %vm488 = vweird.f32 %v385
        %vm489 = vweird.f32 %v482
        %vm490 = vmor %vm488, %vm489
        %v491 = vsel %vm490, %v482, %v487
        %v492 = vrsqrt.pop %v386
        %v493 = vmul.f32 %v492, %v386
        %v494 = vmul.f32 %v493, %v492
        %v495 = vmul.f32 0.5, %v494
        %v496 = vsub.f32 1.5, %v495
        %v497 = vmul.f32 %v492, %v496
        %vm498 = vweird.f32 %v386
        %vm499 = vweird.f32 %v492
        %vm500 = vmor %vm498, %vm499
        %v501 = vsel %vm500, %v492, %v497
        %v502 = vrsqrt.pop %v387
        %v503 = vmul.f32 %v502, %v387
        %v504 = vmul.f32 %v503, %v502
        %v505 = vmul.f32 0.5, %v504
        %v506 = vsub.f32 1.5, %v505
        %v507 = vmul.f32 %v502, %v506
        %vm508 = vweird.f32 %v387
        %vm509 = vweird.f32 %v502
        %vm510 = vmor %vm508, %vm509
        %v511 = vsel %vm510, %v502, %v507
        %v512 = vrsqrt.pop %v388
        %v513 = vmul.f32 %v512, %v388
        %v514 = vmul.f32 %v513, %v512
        %v515 = vmul.f32 0.5, %v514
        %v516 = vsub.f32 1.5, %v515
        %v517 = vmul.f32 %v512, %v516
        %vm518 = vweird.f32 %v388
        %vm519 = vweird.f32 %v512
        %vm520 = vmor %vm518, %vm519
        %v521 = vsel %vm520, %v512, %v517
        %v522 = vrsqrt.pop %v389
        %v523 = vmul.f32 %v522, %v389
        %v524 = vmul.f32 %v523, %v522
        %v525 = vmul.f32 0.5, %v524
        %v526 = vsub.f32 1.5, %v525
        %v527 = vmul.f32 %v522, %v526
        %vm528 = vweird.f32 %v389
        %vm529 = vweird.f32 %v522
        %vm530 = vmor %vm528, %vm529
        %v531 = vsel %vm530, %v522, %v527
        %v532 = vrsqrt.pop %v390
        %v533 = vmul.f32 %v532, %v390
        %v534 = vmul.f32 %v533, %v532
        %v535 = vmul.f32 0.5, %v534
        %v536 = vsub.f32 1.5, %v535
        %v537 = vmul.f32 %v532, %v536
        %vm538 = vweird.f32 %v390
        %vm539 = vweird.f32 %v532
        %vm540 = vmor %vm538, %vm539
        %v541 = vsel %vm540, %v532, %v537
        %v542 = vrsqrt.pop %v391
        %v543 = vmul.f32 %v542, %v391
        %v544 = vmul.f32 %v543, %v542
        %v545 = vmul.f32 0.5, %v544
        %v546 = vsub.f32 1.5, %v545
        %v547 = vmul.f32 %v542, %v546
        %vm548 = vweird.f32 %v391
        %vm549 = vweird.f32 %v542
        %vm550 = vmor %vm548, %vm549
        %v551 = vsel %vm550, %v542, %v547
        %v552 = vmul.f32 %v296, %v401
        %v553 = vmul.f32 %v297, %v411
        %v554 = vmul.f32 %v298, %v421
        %v555 = vmul.f32 %v299, %v431
        %v556 = vmul.f32 %v300, %v441
        %v557 = vmul.f32 %v301, %v451
        %v558 = vmul.f32 %v302, %v461
        %v559 = vmul.f32 %v303, %v471
        %v560 = vmul.f32 %v304, %v481
        %v561 = vmul.f32 %v305, %v491
        %v562 = vmul.f32 %v306, %v501
        %v563 = vmul.f32 %v307, %v511
        %v564 = vmul.f32 %v308, %v521
        %v565 = vmul.f32 %v309, %v531
        %v566 = vmul.f32 %v310, %v541
        %v567 = vmul.f32 %v311, %v551
        %v569 = vperm.slane %v239, 0
        %v571 = vmul.f32 %v552, %v569
        %v572 = vmul.f32 %v553, %v569
        %v573 = vmul.f32 %v554, %v569
        %v574 = vmul.f32 %v555, %v569
        %v575 = vmul.f32 %v556, %v569
        %v576 = vmul.f32 %v557, %v569
        %v577 = vmul.f32 %v558, %v569
        %v578 = vmul.f32 %v559, %v569
        %v579 = vmul.f32 %v560, %v569
        %v580 = vmul.f32 %v561, %v569
        %v581 = vmul.f32 %v562, %v569
        %v582 = vmul.f32 %v563, %v569
        %v583 = vmul.f32 %v564, %v569
        %v584 = vmul.f32 %v565, %v569
        %v585 = vmul.f32 %v566, %v569
        %v586 = vmul.f32 %v567, %v569
        %v588 = vperm.slane %v240, 0
        %v590 = vadd.f32 %v571, %v588
        %v591 = vadd.f32 %v572, %v588
        %v592 = vadd.f32 %v573, %v588
        %v593 = vadd.f32 %v574, %v588
        %v594 = vadd.f32 %v575, %v588
        %v595 = vadd.f32 %v576, %v588
        %v596 = vadd.f32 %v577, %v588
        %v597 = vadd.f32 %v578, %v588
        %v598 = vadd.f32 %v579, %v588
        %v599 = vadd.f32 %v580, %v588
        %v600 = vadd.f32 %v581, %v588
        %v601 = vadd.f32 %v582, %v588
        %v602 = vadd.f32 %v583, %v588
        %v603 = vadd.f32 %v584, %v588
        %v604 = vadd.f32 %v585, %v588
        %v605 = vadd.f32 %v586, %v588
        %v606 = vld [vmem:[%s3] sm:$0xff]
        %v607 = vld [vmem:[%s3 + $0x8] sm:$0xff]
        %v608 = vld [vmem:[%s3 + $0x10] sm:$0xff]
        %v609 = vld [vmem:[%s3 + $0x18] sm:$0xff]
        %v610 = vld [vmem:[%s3 + $0x20] sm:$0xff]
        %v611 = vld [vmem:[%s3 + $0x28] sm:$0xff]
        %v612 = vld [vmem:[%s3 + $0x30] sm:$0xff]
        %v613 = vld [vmem:[%s3 + $0x38] sm:$0xff]
        %v614 = vld [vmem:[%s3 + $0x40] sm:$0xff]
        %v615 = vld [vmem:[%s3 + $0x48] sm:$0xff]
        %v616 = vld [vmem:[%s3 + $0x50] sm:$0xff]
        %v617 = vld [vmem:[%s3 + $0x58] sm:$0xff]
        %v618 = vld [vmem:[%s3 + $0x60] sm:$0xff]
        %v619 = vld [vmem:[%s3 + $0x68] sm:$0xff]
        %v620 = vld [vmem:[%s3 + $0x70] sm:$0xff]
        %v621 = vld [vmem:[%s3 + $0x78] sm:$0xff]
        %v622 = vld [vmem:[%s3 + $0x80] sm:$0xff]
        %v623 = vld [vmem:[%s3 + $0x88] sm:$0xff]
        %v624 = vld [vmem:[%s3 + $0x90] sm:$0xff]
        %v625 = vld [vmem:[%s3 + $0x98] sm:$0xff]
        %v626 = vld [vmem:[%s3 + $0xa0] sm:$0xff]
        %v627 = vld [vmem:[%s3 + $0xa8] sm:$0xff]
        %v628 = vld [vmem:[%s3 + $0xb0] sm:$0xff]
        %v629 = vld [vmem:[%s3 + $0xb8] sm:$0xff]
        %v630 = vld [vmem:[%s3 + $0xc0] sm:$0xff]
        %v631 = vld [vmem:[%s3 + $0xc8] sm:$0xff]
        %v632 = vld [vmem:[%s3 + $0xd0] sm:$0xff]
        %v633 = vld [vmem:[%s3 + $0xd8] sm:$0xff]
        %v634 = vld [vmem:[%s3 + $0xe0] sm:$0xff]
        %v635 = vld [vmem:[%s3 + $0xe8] sm:$0xff]
        %v636 = vld [vmem:[%s3 + $0xf0] sm:$0xff]
        %v637 = vld [vmem:[%s3 + $0xf8] sm:$0xff]
        %v638 = vld [vmem:[%s4] sm:$0x3]
        %v640 = vperm.slane %v638, 0
        %v641 = vperm.slane %v638, 1
        %644 = vmatpush.msra.mxu0 %v636
        %645 = vmatpush.msra.mxu0 %v634
        %646 = vmatpush.msra.mxu0 %v632
        %647 = vmatpush.msra.mxu0 %v630
        %648 = vmatpush.msra.mxu0 %v628
        %649 = vmatpush.msra.mxu0 %v626
        %650 = vmatpush.msra.mxu0 %v624
        %651 = vmatpush.msra.mxu0 %v622
        %652 = vmatpush.msra.mxu0 %v620
        %653 = vmatpush.msra.mxu0 %v618
        %654 = vmatpush.msra.mxu0 %v616
        %655 = vmatpush.msra.mxu0 %v614
        %656 = vmatpush.msra.mxu0 %v612
        %657 = vmatpush.msra.mxu0 %v610
        %658 = vmatpush.msra.mxu0 %v608
        %659 = vmatpush.msra.mxu0 %v606
        %660 = vmatmul.f32.gmra.mxu0 %v590
        %v661 = vpop.f32.mrf.mxu0
        %v662 = vadd.f32 %v640, %v661
        %663 = vmatmul.f32.gmra.mxu0 %v591
        %v664 = vpop.f32.mrf.mxu0
        %v665 = vadd.f32 %v640, %v664
        %666 = vmatmul.f32.gmra.mxu0 %v592
        %v667 = vpop.f32.mrf.mxu0
        %v668 = vadd.f32 %v640, %v667
        %669 = vmatmul.f32.gmra.mxu0 %v593
        %v670 = vpop.f32.mrf.mxu0
        %v671 = vadd.f32 %v640, %v670
        %672 = vmatmul.f32.gmra.mxu0 %v594
        %v673 = vpop.f32.mrf.mxu0
        %v674 = vadd.f32 %v640, %v673
        %675 = vmatmul.f32.gmra.mxu0 %v595
        %v676 = vpop.f32.mrf.mxu0
        %v677 = vadd.f32 %v640, %v676
        %678 = vmatmul.f32.gmra.mxu0 %v596
        %v679 = vpop.f32.mrf.mxu0
        %v680 = vadd.f32 %v640, %v679
        %681 = vmatmul.f32.gmra.mxu0 %v597
        %v682 = vpop.f32.mrf.mxu0
        %v683 = vadd.f32 %v640, %v682
        %684 = vmatmul.f32.gmra.mxu0 %v598
        %v685 = vpop.f32.mrf.mxu0
        %v686 = vadd.f32 %v640, %v685
        %687 = vmatmul.f32.gmra.mxu0 %v599
        %v688 = vpop.f32.mrf.mxu0
        %v689 = vadd.f32 %v640, %v688
        %690 = vmatmul.f32.gmra.mxu0 %v600
        %v691 = vpop.f32.mrf.mxu0
        %v692 = vadd.f32 %v640, %v691
        %693 = vmatmul.f32.gmra.mxu0 %v601
        %v694 = vpop.f32.mrf.mxu0
        %v695 = vadd.f32 %v640, %v694
        %696 = vmatmul.f32.gmra.mxu0 %v602
        %v697 = vpop.f32.mrf.mxu0
        %v698 = vadd.f32 %v640, %v697
        %699 = vmatmul.f32.gmra.mxu0 %v603
        %v700 = vpop.f32.mrf.mxu0
        %v701 = vadd.f32 %v640, %v700
        %702 = vmatmul.f32.gmra.mxu0 %v604
        %v703 = vpop.f32.mrf.mxu0
        %v704 = vadd.f32 %v640, %v703
        %705 = vmatmul.f32.gmra.mxu0 %v605
        %v706 = vpop.f32.mrf.mxu0
        %v707 = vadd.f32 %v640, %v706
        %708 = vdwg.mxu0
        %709 = vmatpush.msra.mxu0 %v637
        %710 = vmatpush.msra.mxu0 %v635
        %711 = vmatpush.msra.mxu0 %v633
        %712 = vmatpush.msra.mxu0 %v631
        %713 = vmatpush.msra.mxu0 %v629
        %714 = vmatpush.msra.mxu0 %v627
        %715 = vmatpush.msra.mxu0 %v625
        %716 = vmatpush.msra.mxu0 %v623
        %717 = vmatpush.msra.mxu0 %v621
        %718 = vmatpush.msra.mxu0 %v619
        %719 = vmatpush.msra.mxu0 %v617
        %720 = vmatpush.msra.mxu0 %v615
        %721 = vmatpush.msra.mxu0 %v613
        %722 = vmatpush.msra.mxu0 %v611
        %723 = vmatpush.msra.mxu0 %v609
        %724 = vmatpush.msra.mxu0 %v607
        %725 = vmatmul.f32.gmra.mxu0 %v590
        %v726 = vpop.f32.mrf.mxu0
        %v727 = vadd.f32 %v641, %v726
        %728 = vmatmul.f32.gmra.mxu0 %v591
        %v729 = vpop.f32.mrf.mxu0
        %v730 = vadd.f32 %v641, %v729
        %731 = vmatmul.f32.gmra.mxu0 %v592
        %v732 = vpop.f32.mrf.mxu0
        %v733 = vadd.f32 %v641, %v732
        %734 = vmatmul.f32.gmra.mxu0 %v593
        %v735 = vpop.f32.mrf.mxu0
        %v736 = vadd.f32 %v641, %v735
        %737 = vmatmul.f32.gmra.mxu0 %v594
        %v738 = vpop.f32.mrf.mxu0
        %v739 = vadd.f32 %v641, %v738
        %740 = vmatmul.f32.gmra.mxu0 %v595
        %v741 = vpop.f32.mrf.mxu0
        %v742 = vadd.f32 %v641, %v741
        %743 = vmatmul.f32.gmra.mxu0 %v596
        %v744 = vpop.f32.mrf.mxu0
        %v745 = vadd.f32 %v641, %v744
        %746 = vmatmul.f32.gmra.mxu0 %v597
        %v747 = vpop.f32.mrf.mxu0
        %v748 = vadd.f32 %v641, %v747
        %749 = vmatmul.f32.gmra.mxu0 %v598
        %v750 = vpop.f32.mrf.mxu0
        %v751 = vadd.f32 %v641, %v750
        %752 = vmatmul.f32.gmra.mxu0 %v599
        %v753 = vpop.f32.mrf.mxu0
        %v754 = vadd.f32 %v641, %v753
        %755 = vmatmul.f32.gmra.mxu0 %v600
        %v756 = vpop.f32.mrf.mxu0
        %v757 = vadd.f32 %v641, %v756
        %758 = vmatmul.f32.gmra.mxu0 %v601
        %v759 = vpop.f32.mrf.mxu0
        %v760 = vadd.f32 %v641, %v759
        %761 = vmatmul.f32.gmra.mxu0 %v602
        %v762 = vpop.f32.mrf.mxu0
        %v763 = vadd.f32 %v641, %v762
        %764 = vmatmul.f32.gmra.mxu0 %v603
        %v765 = vpop.f32.mrf.mxu0
        %v766 = vadd.f32 %v641, %v765
        %767 = vmatmul.f32.gmra.mxu0 %v604
        %v768 = vpop.f32.mrf.mxu0
        %v769 = vadd.f32 %v641, %v768
        %770 = vmatmul.f32.gmra.mxu0 %v605
        %v771 = vpop.f32.mrf.mxu0
        %v772 = vadd.f32 %v641, %v771
        %773 = vdwg.mxu0
        %774 = vst [vmem:[%s217] sm:$0xff] %v662
        %775 = vst [vmem:[%s217 + $0x8] sm:$0xff] %v727
        %776 = vst [vmem:[%s217 + $0x10] sm:$0xff] %v665
        %777 = vst [vmem:[%s217 + $0x18] sm:$0xff] %v730
        %778 = vst [vmem:[%s217 + $0x20] sm:$0xff] %v668
        %779 = vst [vmem:[%s217 + $0x28] sm:$0xff] %v733
        %780 = vst [vmem:[%s217 + $0x30] sm:$0xff] %v671
        %781 = vst [vmem:[%s217 + $0x38] sm:$0xff] %v736
        %782 = vst [vmem:[%s217 + $0x40] sm:$0xff] %v674
        %783 = vst [vmem:[%s217 + $0x48] sm:$0xff] %v739
        %784 = vst [vmem:[%s217 + $0x50] sm:$0xff] %v677
        %785 = vst [vmem:[%s217 + $0x58] sm:$0xff] %v742
        %786 = vst [vmem:[%s217 + $0x60] sm:$0xff] %v680
        %787 = vst [vmem:[%s217 + $0x68] sm:$0xff] %v745
        %788 = vst [vmem:[%s217 + $0x70] sm:$0xff] %v683
        %789 = vst [vmem:[%s217 + $0x78] sm:$0xff] %v748
        %790 = vst [vmem:[%s217 + $0x80] sm:$0xff] %v686
        %791 = vst [vmem:[%s217 + $0x88] sm:$0xff] %v751
        %792 = vst [vmem:[%s217 + $0x90] sm:$0xff] %v689
        %793 = vst [vmem:[%s217 + $0x98] sm:$0xff] %v754
        %794 = vst [vmem:[%s217 + $0xa0] sm:$0xff] %v692
        %795 = vst [vmem:[%s217 + $0xa8] sm:$0xff] %v757
        %796 = vst [vmem:[%s217 + $0xb0] sm:$0xff] %v695
        %797 = vst [vmem:[%s217 + $0xb8] sm:$0xff] %v760
        %798 = vst [vmem:[%s217 + $0xc0] sm:$0xff] %v698
        %799 = vst [vmem:[%s217 + $0xc8] sm:$0xff] %v763
        %800 = vst [vmem:[%s217 + $0xd0] sm:$0xff] %v701
        %801 = vst [vmem:[%s217 + $0xd8] sm:$0xff] %v766
        %802 = vst [vmem:[%s217 + $0xe0] sm:$0xff] %v704
        %803 = vst [vmem:[%s217 + $0xe8] sm:$0xff] %v769
        %804 = vst [vmem:[%s217 + $0xf0] sm:$0xff] %v707
        %805 = vst [vmem:[%s217 + $0xf8] sm:$0xff] %v772
        %s806 = sand.u32 %s137, 1
        %s807 = scalar_lea.sflag [#allocation3], %s806
        %s808 = sand.u32 %s137, 1
        %s809 = smul.addr %s808, 256
        %s810 = scalar_lea.vmem [#allocation2], %s809
        // Predicated region
        $region41: #{reformer_lm.7} parent=39 // pred_check
          %p811 = pneg %p147
        $region42: #{reformer_lm.7} parent=39 // pred_check_branch
          %813 = sbr.rel (%p811) target = $region44
        $region43: #{reformer_lm.7} parent=39 // pred_region
          %815 = vsyncadd %s807, 0
          %s816 = smul.addr %s19, 32
          %s817 = smul.addr %s816, 8
          %s818 = scalar_lea.hbm %s5, %s817
          %s819 = sshll.u32 %s810, 4
          %s820 = int_to_ptr.vmem [resolvable:$true] %s819
          %s821 = sshll.u32 %s818, 4
          %s822 = int_to_ptr.hbm [resolvable:$true] %s821
          %827 = dma.vmem_to_hbm [thread:$0]  %s820, 4096, %s822, %s807, 256, 256, 16
        $region44: #{reformer_lm.7} parent=39 // pred_fallthru
          _
      $region40: #{reformer_lm.7} parent=5 // pred_fallthru
        _
      %p828 = scmp.le.s32.totalorder 2, %s14
      // Predicated region
      $region45: #{reformer_lm.7} parent=5 // pred_check
        %p829 = pneg %p828
      $region46: #{reformer_lm.7} parent=5 // pred_check_branch
        %831 = sbr.rel (%p829) target = $region48
      $region47: #{reformer_lm.7} parent=5 // pred_region
        %s832 = ssub.s32 %s14, 2
        // Predicated region
        $region49: #{reformer_lm.7} parent=47 // pred_check
          %p833 = pneg %p153
        $region50: #{reformer_lm.7} parent=47 // pred_check_branch
          %835 = sbr.rel (%p833) target = $region52
        $region51: #{reformer_lm.7} parent=47 // pred_region
          %s836 = sand.u32 %s138, 1
          %s837 = scalar_lea.sflag [#allocation3], %s836
          %s838 = sand.u32 %s138, 1
          %s839 = smul.addr %s838, 256
          %s840 = scalar_lea.vmem [#allocation2], %s839
          %842 = dma.done %s837, 4096
        $region52: #{reformer_lm.7} parent=47 // pred_fallthru
          _
      $region48: #{reformer_lm.7} parent=5 // pred_fallthru
        _
    $region6: #{reformer_lm.7} parent=1 // loop_footer
      %s18 = sadd.s32 1, %s14
    $region7: #{reformer_lm.7} parent=1 // loop_footer_branch
      %13 = sbr.rel target = $region3
    $region8: #{reformer_lm.7} parent=1 // loop_exit
      _
    %843 = vsyncpa [#allocation3], 1
    %s844 = scalar_lea.sflag [#allocation3], 1
    %845 = vsyncpa %s844, 1

// kernel: reformer_lm.5
$region0: #{reformer_lm.5}
  #allocation0 [shape = 'u32[]', space=smem, size = 0x4, offset = 0x4, fixed_abs, tag = 'smem constant byte address 0x4 - core index']
  #allocation1 [shape = 'u32[72,128]{1,0:T(1,128)}', space=vmem, size = 0x9000, scoped, tag = 'internal scratch']
  %s0 = inlined_call_operand.vmem [shape: f32[2,128,128], index: 0, kind: input, shape index: {}]
  %s1 = inlined_call_operand.vmem [shape: f32[1,128], index: 1, kind: input, shape index: {}]
  %s2 = inlined_call_operand.hbm [shape: f32[1,128], index: 2, kind: input, shape index: {}]
  %s3 = inlined_call_operand.vmem [shape: f32[128,128], index: 3, kind: input, shape index: {}]
  %s4 = inlined_call_operand.vmem [shape: f32[1,128], index: 4, kind: input, shape index: {}]
  %s5 = inlined_call_operand.vmem [shape: f32[128,128], index: 5, kind: input, shape index: {}]
  %s6 = inlined_call_operand.vmem [shape: f32[1,128], index: 6, kind: input, shape index: {}]
  %s7 = inlined_call_operand.hbm [shape: f32[128,128], index: 7, kind: input, shape index: {}]
  %s8 = inlined_call_operand.vmem [shape: f32[1,128], index: 8, kind: input, shape index: {}]
  %s9 = inlined_call_operand.vmem [shape: f32[1,128], index: 9, kind: input, shape index: {}]
  %s10 = inlined_call_operand.hbm [shape: f32[1,128], index: 10, kind: input, shape index: {}]
  %s11 = inlined_call_operand.hbm [shape: f32[128,512], index: 11, kind: input, shape index: {}]
  %s12 = inlined_call_operand.vmem [shape: f32[1,512], index: 12, kind: input, shape index: {}]
  %s13 = inlined_call_operand.hbm [shape: f32[512,128], index: 13, kind: input, shape index: {}]
  %s14 = inlined_call_operand.hbm [shape: f32[1,128], index: 14, kind: input, shape index: {}]
  %s15 = inlined_call_operand.vmem [shape: f32[2,128,128], index: 15, kind: output, shape index: {}]
  %s16 = sld [smem:[#allocation0]]
  $region117: #{reformer_lm.5} parent=0
    _
  %s18 = ssub.s32 1, %s16
  %s19 = scalar_select 0, %s18, %s16
  $region1: #{reformer_lm.5} parent=0
    #allocation2 [shape = 'u8[512]{0}', space=vmem, size = 0x400, scoped, tag = 'input window, operand 2, single buffered']
    #allocation3 [shape = 's32[2]{0}', space=sflag, size = 0x8, scoped, tag = 'scoped memory for reformer_lm.5']
    #allocation4 [shape = 'u8[65536]{0}', space=vmem, size = 0x10000, scoped, tag = 'input window, operand 7, single buffered']
    #allocation5 [shape = 's32[1]{0}', space=sflag, size = 0x4, scoped, tag = 'scoped memory for reformer_lm.5']
    #allocation6 [shape = 'u8[512]{0}', space=vmem, size = 0x400, scoped, tag = 'input window, operand 10, single buffered']
    #allocation7 [shape = 'u8[262144]{0}', space=vmem, size = 0x40000, scoped, tag = 'input window, operand 11, single buffered']
    #allocation8 [shape = 's32[1]{0}', space=sflag, size = 0x4, scoped, tag = 'scoped memory for reformer_lm.5']
    #allocation9 [shape = 'u8[262144]{0}', space=vmem, size = 0x40000, scoped, tag = 'input window, operand 13, single buffered']
    #allocation10 [shape = 'u8[512]{0}', space=vmem, size = 0x400, scoped, tag = 'input window, operand 14, single buffered']
    #allocation11 [shape = 's32[1]{0}', space=sflag, size = 0x4, scoped, tag = 'scoped memory for reformer_lm.5']
    %20 = vsyncpa [#allocation3], 0
    %21 = vsyncpa [#allocation5], 0
    %22 = vsyncpa [#allocation8], 0
    %23 = vsyncpa [#allocation11], 0
    loop: start=0, step=1, limit=4
    $region2: #{reformer_lm.5} parent=1 // loop_pre_header
      _
    $region3: #{reformer_lm.5} parent=1 // loop_header
      %s25 = sphi 0, %s29
      %p26 = scmp.ge.s32.totalorder %s25, 4
      %s35 = sphi 0, %s37
      %s38 = sphi 0, %s35
      %s39 = sphi 0, %s38
      %s55 = sphi 0, %s39
      %s59 = sphi 0, %s59
      %s61 = sphi 0, %s59
      %s62 = sphi 0, %s61
      %s76 = sphi 0, %s62
      %s80 = sphi 0, %s80
      %s82 = sphi 0, %s80
      %s83 = sphi 0, %s82
      %s97 = sphi 0, %s83
      %s101 = sphi 0, %s101
      %s103 = sphi 0, %s101
      %s104 = sphi 0, %s103
      %s118 = sphi 0, %s104
      %s122 = sphi 0, %s122
      %s124 = sphi 0, %s122
      %s125 = sphi 0, %s124
      %s139 = sphi 0, %s125
      %s143 = sphi 0, %s143
      %s145 = sphi 0, %s143
      %s146 = sphi 0, %s145
      %s160 = sphi 0, %s146
      %s164 = sphi 0, %s164
      %s166 = sphi 0, %s164
      %s167 = sphi 0, %s166
      %s181 = sphi 0, %s167
      %s185 = sphi 0, %s185
      %s187 = sphi 0, %s185
      %s188 = sphi 0, %s187
      %s202 = sphi 0, %s188
      %s206 = sphi 0, %s206
      %s208 = sphi 0, %s206
      %s209 = sphi 0, %s208
      %s223 = sphi 0, %s209
      %s227 = sphi 0, %s227
      %s229 = sphi 0, %s227
      %s230 = sphi 0, %s229
      %s244 = sphi 0, %s230
      %s248 = sphi 0, %s248
      %s250 = sphi 0, %s248
      %s251 = sphi 0, %s250
      %s265 = sphi 0, %s251
      %s269 = sphi 0, %s269
      %s271 = sphi 0, %s269
      %s272 = sphi 0, %s271
      %s286 = sphi 0, %s272
      %s290 = sphi 0, %s290
      %s292 = sphi 0, %s290
      %s293 = sphi 0, %s292
      %s307 = sphi 0, %s293
      %s311 = sphi 0, %s311
      %s313 = sphi 0, %s311
      %s314 = sphi 0, %s313
      %s328 = sphi 0, %s314
      %s332 = sphi 0, %s332
      %s334 = sphi 0, %s332
      %s335 = sphi 0, %s334
      %s349 = sphi 0, %s335
      %s355 = sphi 0, %s357
      %s358 = sphi 0, %s355
      %s359 = sphi 0, %s358
      %s375 = sphi 0, %s359
    $region4: #{reformer_lm.5} parent=1 // loop_header_branch
      %28 = sbr.rel (%p26) target = $region8
    $region5: #{reformer_lm.5} parent=1 // loop_body
      %s30 = ssub.s32 %s25, 1
      %s31 = ssub.s32 %s25, 2
      %s32 = sadd.s32 %s25, 1
      %s33 = ssub.s32 %s25, %s32
      %p34 = scmp.eq.s32.totalorder %s33, 0
      %s36 = sadd.s32 %s35, 1
      %s37 = scalar_select %p34, %s35, %s36
      %p40 = pneg %p34
      %p41 = scmp.eq.s32.totalorder %s25, 1
      %p42 = por %p40, %p41
      %p43 = scmp.ne.s32.totalorder %s35, %s38
      %p44 = scmp.eq.s32.totalorder %s25, 0
      %p45 = por %p43, %p44
      %p46 = scmp.ne.s32.totalorder %s35, %s38
      %p47 = scmp.eq.s32.totalorder %s30, 1
      %p48 = por %p46, %p47
      %p49 = scmp.ne.s32.totalorder %s38, %s39
      %p50 = scmp.eq.s32.totalorder %s30, 0
      %p51 = por %p49, %p50
      %p52 = scmp.ne.s32.totalorder %s38, %s39
      %p53 = scmp.eq.s32.totalorder %s31, 1
      %p54 = por %p52, %p53
      %p56 = scmp.ne.s32.totalorder %s39, %s55
      %p57 = scmp.eq.s32.totalorder %s31, 0
      %p58 = por %p56, %p57
      %s60 = sadd.s32 %s59, 1
      %p63 = scmp.eq.s32.totalorder %s25, 1
      %p64 = scmp.ne.s32.totalorder %s59, %s61
      %p65 = scmp.eq.s32.totalorder %s25, 0
      %p66 = por %p64, %p65
      %p67 = scmp.ne.s32.totalorder %s59, %s61
      %p68 = scmp.eq.s32.totalorder %s30, 1
      %p69 = por %p67, %p68
      %p70 = scmp.ne.s32.totalorder %s61, %s62
      %p71 = scmp.eq.s32.totalorder %s30, 0
      %p72 = por %p70, %p71
      %p73 = scmp.ne.s32.totalorder %s61, %s62
      %p74 = scmp.eq.s32.totalorder %s31, 1
      %p75 = por %p73, %p74
      %p77 = scmp.ne.s32.totalorder %s62, %s76
      %p78 = scmp.eq.s32.totalorder %s31, 0
      %p79 = por %p77, %p78
      %s81 = sadd.s32 %s80, 1
      %p84 = scmp.eq.s32.totalorder %s25, 1
      %p85 = scmp.ne.s32.totalorder %s80, %s82
      %p86 = scmp.eq.s32.totalorder %s25, 0
      %p87 = por %p85, %p86
      %p88 = scmp.ne.s32.totalorder %s80, %s82
      %p89 = scmp.eq.s32.totalorder %s30, 1
      %p90 = por %p88, %p89
      %p91 = scmp.ne.s32.totalorder %s82, %s83
      %p92 = scmp.eq.s32.totalorder %s30, 0
      %p93 = por %p91, %p92
      %p94 = scmp.ne.s32.totalorder %s82, %s83
      %p95 = scmp.eq.s32.totalorder %s31, 1
      %p96 = por %p94, %p95
      %p98 = scmp.ne.s32.totalorder %s83, %s97
      %p99 = scmp.eq.s32.totalorder %s31, 0
      %p100 = por %p98, %p99
      %s102 = sadd.s32 %s101, 1
      %p105 = scmp.eq.s32.totalorder %s25, 1
      %p106 = scmp.ne.s32.totalorder %s101, %s103
      %p107 = scmp.eq.s32.totalorder %s25, 0
      %p108 = por %p106, %p107
      %p109 = scmp.ne.s32.totalorder %s101, %s103
      %p110 = scmp.eq.s32.totalorder %s30, 1
      %p111 = por %p109, %p110
      %p112 = scmp.ne.s32.totalorder %s103, %s104
      %p113 = scmp.eq.s32.totalorder %s30, 0
      %p114 = por %p112, %p113
      %p115 = scmp.ne.s32.totalorder %s103, %s104
      %p116 = scmp.eq.s32.totalorder %s31, 1
      %p117 = por %p115, %p116
      %p119 = scmp.ne.s32.totalorder %s104, %s118
      %p120 = scmp.eq.s32.totalorder %s31, 0
      %p121 = por %p119, %p120
      %s123 = sadd.s32 %s122, 1
      %p126 = scmp.eq.s32.totalorder %s25, 1
      %p127 = scmp.ne.s32.totalorder %s122, %s124
      %p128 = scmp.eq.s32.totalorder %s25, 0
      %p129 = por %p127, %p128
      %p130 = scmp.ne.s32.totalorder %s122, %s124
      %p131 = scmp.eq.s32.totalorder %s30, 1
      %p132 = por %p130, %p131
      %p133 = scmp.ne.s32.totalorder %s124, %s125
      %p134 = scmp.eq.s32.totalorder %s30, 0
      %p135 = por %p133, %p134
      %p136 = scmp.ne.s32.totalorder %s124, %s125
      %p137 = scmp.eq.s32.totalorder %s31, 1
      %p138 = por %p136, %p137
      %p140 = scmp.ne.s32.totalorder %s125, %s139
      %p141 = scmp.eq.s32.totalorder %s31, 0
      %p142 = por %p140, %p141
      %s144 = sadd.s32 %s143, 1
      %p147 = scmp.eq.s32.totalorder %s25, 1
      %p148 = scmp.ne.s32.totalorder %s143, %s145
      %p149 = scmp.eq.s32.totalorder %s25, 0
      %p150 = por %p148, %p149
      %p151 = scmp.ne.s32.totalorder %s143, %s145
      %p152 = scmp.eq.s32.totalorder %s30, 1
      %p153 = por %p151, %p152
      %p154 = scmp.ne.s32.totalorder %s145, %s146
      %p155 = scmp.eq.s32.totalorder %s30, 0
      %p156 = por %p154, %p155
      %p157 = scmp.ne.s32.totalorder %s145, %s146
      %p158 = scmp.eq.s32.totalorder %s31, 1
      %p159 = por %p157, %p158
      %p161 = scmp.ne.s32.totalorder %s146, %s160
      %p162 = scmp.eq.s32.totalorder %s31, 0
      %p163 = por %p161, %p162
      %s165 = sadd.s32 %s164, 1
      %p168 = scmp.eq.s32.totalorder %s25, 1
      %p169 = scmp.ne.s32.totalorder %s164, %s166
      %p170 = scmp.eq.s32.totalorder %s25, 0
      %p171 = por %p169, %p170
      %p172 = scmp.ne.s32.totalorder %s164, %s166
      %p173 = scmp.eq.s32.totalorder %s30, 1
      %p174 = por %p172, %p173
      %p175 = scmp.ne.s32.totalorder %s166, %s167
      %p176 = scmp.eq.s32.totalorder %s30, 0
      %p177 = por %p175, %p176
      %p178 = scmp.ne.s32.totalorder %s166, %s167
      %p179 = scmp.eq.s32.totalorder %s31, 1
      %p180 = por %p178, %p179
      %p182 = scmp.ne.s32.totalorder %s167, %s181
      %p183 = scmp.eq.s32.totalorder %s31, 0
      %p184 = por %p182, %p183
      %s186 = sadd.s32 %s185, 1
      %p189 = scmp.eq.s32.totalorder %s25, 1
      %p190 = scmp.ne.s32.totalorder %s185, %s187
      %p191 = scmp.eq.s32.totalorder %s25, 0
      %p192 = por %p190, %p191
      %p193 = scmp.ne.s32.totalorder %s185, %s187
      %p194 = scmp.eq.s32.totalorder %s30, 1
      %p195 = por %p193, %p194
      %p196 = scmp.ne.s32.totalorder %s187, %s188
      %p197 = scmp.eq.s32.totalorder %s30, 0
      %p198 = por %p196, %p197
      %p199 = scmp.ne.s32.totalorder %s187, %s188
      %p200 = scmp.eq.s32.totalorder %s31, 1
      %p201 = por %p199, %p200
      %p203 = scmp.ne.s32.totalorder %s188, %s202
      %p204 = scmp.eq.s32.totalorder %s31, 0
      %p205 = por %p203, %p204
      %s207 = sadd.s32 %s206, 1
      %p210 = scmp.eq.s32.totalorder %s25, 1
      %p211 = scmp.ne.s32.totalorder %s206, %s208
      %p212 = scmp.eq.s32.totalorder %s25, 0
      %p213 = por %p211, %p212
      %p214 = scmp.ne.s32.totalorder %s206, %s208
      %p215 = scmp.eq.s32.totalorder %s30, 1
      %p216 = por %p214, %p215
      %p217 = scmp.ne.s32.totalorder %s208, %s209
      %p218 = scmp.eq.s32.totalorder %s30, 0
      %p219 = por %p217, %p218
      %p220 = scmp.ne.s32.totalorder %s208, %s209
      %p221 = scmp.eq.s32.totalorder %s31, 1
      %p222 = por %p220, %p221
      %p224 = scmp.ne.s32.totalorder %s209, %s223
      %p225 = scmp.eq.s32.totalorder %s31, 0
      %p226 = por %p224, %p225
      %s228 = sadd.s32 %s227, 1
      %p231 = scmp.eq.s32.totalorder %s25, 1
      %p232 = scmp.ne.s32.totalorder %s227, %s229
      %p233 = scmp.eq.s32.totalorder %s25, 0
      %p234 = por %p232, %p233
      %p235 = scmp.ne.s32.totalorder %s227, %s229
      %p236 = scmp.eq.s32.totalorder %s30, 1
      %p237 = por %p235, %p236
      %p238 = scmp.ne.s32.totalorder %s229, %s230
      %p239 = scmp.eq.s32.totalorder %s30, 0
      %p240 = por %p238, %p239
      %p241 = scmp.ne.s32.totalorder %s229, %s230
      %p242 = scmp.eq.s32.totalorder %s31, 1
      %p243 = por %p241, %p242
      %p245 = scmp.ne.s32.totalorder %s230, %s244
      %p246 = scmp.eq.s32.totalorder %s31, 0
      %p247 = por %p245, %p246
      %s249 = sadd.s32 %s248, 1
      %p252 = scmp.eq.s32.totalorder %s25, 1
      %p253 = scmp.ne.s32.totalorder %s248, %s250
      %p254 = scmp.eq.s32.totalorder %s25, 0
      %p255 = por %p253, %p254
      %p256 = scmp.ne.s32.totalorder %s248, %s250
      %p257 = scmp.eq.s32.totalorder %s30, 1
      %p258 = por %p256, %p257
      %p259 = scmp.ne.s32.totalorder %s250, %s251
      %p260 = scmp.eq.s32.totalorder %s30, 0
      %p261 = por %p259, %p260
      %p262 = scmp.ne.s32.totalorder %s250, %s251
      %p263 = scmp.eq.s32.totalorder %s31, 1
      %p264 = por %p262, %p263
      %p266 = scmp.ne.s32.totalorder %s251, %s265
      %p267 = scmp.eq.s32.totalorder %s31, 0
      %p268 = por %p266, %p267
      %s270 = sadd.s32 %s269, 1
      %p273 = scmp.eq.s32.totalorder %s25, 1
      %p274 = scmp.ne.s32.totalorder %s269, %s271
      %p275 = scmp.eq.s32.totalorder %s25, 0
      %p276 = por %p274, %p275
      %p277 = scmp.ne.s32.totalorder %s269, %s271
      %p278 = scmp.eq.s32.totalorder %s30, 1
      %p279 = por %p277, %p278
      %p280 = scmp.ne.s32.totalorder %s271, %s272
      %p281 = scmp.eq.s32.totalorder %s30, 0
      %p282 = por %p280, %p281
      %p283 = scmp.ne.s32.totalorder %s271, %s272
      %p284 = scmp.eq.s32.totalorder %s31, 1
      %p285 = por %p283, %p284
      %p287 = scmp.ne.s32.totalorder %s272, %s286
      %p288 = scmp.eq.s32.totalorder %s31, 0
      %p289 = por %p287, %p288
      %s291 = sadd.s32 %s290, 1
      %p294 = scmp.eq.s32.totalorder %s25, 1
      %p295 = scmp.ne.s32.totalorder %s290, %s292
      %p296 = scmp.eq.s32.totalorder %s25, 0
      %p297 = por %p295, %p296
      %p298 = scmp.ne.s32.totalorder %s290, %s292
      %p299 = scmp.eq.s32.totalorder %s30, 1
      %p300 = por %p298, %p299
      %p301 = scmp.ne.s32.totalorder %s292, %s293
      %p302 = scmp.eq.s32.totalorder %s30, 0
      %p303 = por %p301, %p302
      %p304 = scmp.ne.s32.totalorder %s292, %s293
      %p305 = scmp.eq.s32.totalorder %s31, 1
      %p306 = por %p304, %p305
      %p308 = scmp.ne.s32.totalorder %s293, %s307
      %p309 = scmp.eq.s32.totalorder %s31, 0
      %p310 = por %p308, %p309
      %s312 = sadd.s32 %s311, 1
      %p315 = scmp.eq.s32.totalorder %s25, 1
      %p316 = scmp.ne.s32.totalorder %s311, %s313
      %p317 = scmp.eq.s32.totalorder %s25, 0
      %p318 = por %p316, %p317
      %p319 = scmp.ne.s32.totalorder %s311, %s313
      %p320 = scmp.eq.s32.totalorder %s30, 1
      %p321 = por %p319, %p320
      %p322 = scmp.ne.s32.totalorder %s313, %s314
      %p323 = scmp.eq.s32.totalorder %s30, 0
      %p324 = por %p322, %p323
      %p325 = scmp.ne.s32.totalorder %s313, %s314
      %p326 = scmp.eq.s32.totalorder %s31, 1
      %p327 = por %p325, %p326
      %p329 = scmp.ne.s32.totalorder %s314, %s328
      %p330 = scmp.eq.s32.totalorder %s31, 0
      %p331 = por %p329, %p330
      %s333 = sadd.s32 %s332, 1
      %p336 = scmp.eq.s32.totalorder %s25, 1
      %p337 = scmp.ne.s32.totalorder %s332, %s334
      %p338 = scmp.eq.s32.totalorder %s25, 0
      %p339 = por %p337, %p338
      %p340 = scmp.ne.s32.totalorder %s332, %s334
      %p341 = scmp.eq.s32.totalorder %s30, 1
      %p342 = por %p340, %p341
      %p343 = scmp.ne.s32.totalorder %s334, %s335
      %p344 = scmp.eq.s32.totalorder %s30, 0
      %p345 = por %p343, %p344
      %p346 = scmp.ne.s32.totalorder %s334, %s335
      %p347 = scmp.eq.s32.totalorder %s31, 1
      %p348 = por %p346, %p347
      %p350 = scmp.ne.s32.totalorder %s335, %s349
      %p351 = scmp.eq.s32.totalorder %s31, 0
      %p352 = por %p350, %p351
      %s353 = ssub.s32 %s25, %s32
      %p354 = scmp.eq.s32.totalorder %s353, 0
      %s356 = sadd.s32 %s355, 1
      %s357 = scalar_select %p354, %s355, %s356
      %p360 = pneg %p354
      %p361 = scmp.eq.s32.totalorder %s25, 1
      %p362 = por %p360, %p361
      %p363 = scmp.ne.s32.totalorder %s355, %s358
      %p364 = scmp.eq.s32.totalorder %s25, 0
      %p365 = por %p363, %p364
      %p366 = scmp.ne.s32.totalorder %s355, %s358
      %p367 = scmp.eq.s32.totalorder %s30, 1
      %p368 = por %p366, %p367
      %p369 = scmp.ne.s32.totalorder %s358, %s359
      %p370 = scmp.eq.s32.totalorder %s30, 0
      %p371 = por %p369, %p370
      %p372 = scmp.ne.s32.totalorder %s358, %s359
      %p373 = scmp.eq.s32.totalorder %s31, 1
      %p374 = por %p372, %p373
      %p376 = scmp.ne.s32.totalorder %s359, %s375
      %p377 = scmp.eq.s32.totalorder %s31, 0
      %p378 = por %p376, %p377
      %p379 = scmp.le.s32.totalorder 1, %s25
      %p380 = scmp.lt.s32.totalorder %s25, 3
      %p381 = pnand %p379, %p380
      %p382 = pneg %p381
      // Predicated region
      $region9: #{reformer_lm.5} parent=5 // pred_check
        _
      $region10: #{reformer_lm.5} parent=5 // pred_check_branch
        %384 = sbr.rel (%p381) target = $region12
      $region11: #{reformer_lm.5} parent=5 // pred_region
        %s385 = ssub.s32 %s25, 1
        // Predicated region
        $region13: #{reformer_lm.5} parent=11 // pred_check
          %p386 = pneg %p72
        $region14: #{reformer_lm.5} parent=11 // pred_check_branch
          %388 = sbr.rel (%p386) target = $region16
        $region15: #{reformer_lm.5} parent=11 // pred_region
          _
        $region16: #{reformer_lm.5} parent=11 // pred_fallthru
          _
        // Predicated region
        $region17: #{reformer_lm.5} parent=11 // pred_check
          %p389 = pneg %p93
        $region18: #{reformer_lm.5} parent=11 // pred_check_branch
          %391 = sbr.rel (%p389) target = $region20
        $region19: #{reformer_lm.5} parent=11 // pred_region
          %393 = vsyncadd [#allocation3], 0
          %s395 = sshll.u32 %s2, 4
          %s396 = int_to_ptr.hbm [resolvable:$true] %s395
          %s397 = sshll.u32 [#allocation2], 4
          %s398 = int_to_ptr.vmem [resolvable:$true] %s397
          %400 = dma.hbm_to_vmem [thread:$0]  %s396, 16, %s398, [#allocation3]
        $region20: #{reformer_lm.5} parent=11 // pred_fallthru
          _
        // Predicated region
        $region21: #{reformer_lm.5} parent=11 // pred_check
          %p401 = pneg %p114
        $region22: #{reformer_lm.5} parent=11 // pred_check_branch
          %403 = sbr.rel (%p401) target = $region24
        $region23: #{reformer_lm.5} parent=11 // pred_region
          _
        $region24: #{reformer_lm.5} parent=11 // pred_fallthru
          _
        // Predicated region
        $region25: #{reformer_lm.5} parent=11 // pred_check
          %p404 = pneg %p135
        $region26: #{reformer_lm.5} parent=11 // pred_check_branch
          %406 = sbr.rel (%p404) target = $region28
        $region27: #{reformer_lm.5} parent=11 // pred_region
          _
        $region28: #{reformer_lm.5} parent=11 // pred_fallthru
          _
        // Predicated region
        $region29: #{reformer_lm.5} parent=11 // pred_check
          %p407 = pneg %p156
        $region30: #{reformer_lm.5} parent=11 // pred_check_branch
          %409 = sbr.rel (%p407) target = $region32
        $region31: #{reformer_lm.5} parent=11 // pred_region
          _
        $region32: #{reformer_lm.5} parent=11 // pred_fallthru
          _
        // Predicated region
        $region33: #{reformer_lm.5} parent=11 // pred_check
          %p410 = pneg %p177
        $region34: #{reformer_lm.5} parent=11 // pred_check_branch
          %412 = sbr.rel (%p410) target = $region36
        $region35: #{reformer_lm.5} parent=11 // pred_region
          _
        $region36: #{reformer_lm.5} parent=11 // pred_fallthru
          _
        // Predicated region
        $region37: #{reformer_lm.5} parent=11 // pred_check
          %p413 = pneg %p198
        $region38: #{reformer_lm.5} parent=11 // pred_check_branch
          %415 = sbr.rel (%p413) target = $region40
        $region39: #{reformer_lm.5} parent=11 // pred_region
          %417 = vsyncadd [#allocation5], 0
          %s418 = sshll.u32 %s7, 4
          %s419 = int_to_ptr.hbm [resolvable:$true] %s418
          %s420 = sshll.u32 [#allocation4], 4
          %s421 = int_to_ptr.vmem [resolvable:$true] %s420
          %426 = dma.hbm_to_vmem [thread:$0]  %s419, 2048, %s421, [#allocation5], 128, 128, 8
        $region40: #{reformer_lm.5} parent=11 // pred_fallthru
          _
        // Predicated region
        $region41: #{reformer_lm.5} parent=11 // pred_check
          %p427 = pneg %p219
        $region42: #{reformer_lm.5} parent=11 // pred_check_branch
          %429 = sbr.rel (%p427) target = $region44
        $region43: #{reformer_lm.5} parent=11 // pred_region
          _
        $region44: #{reformer_lm.5} parent=11 // pred_fallthru
          _
        // Predicated region
        $region45: #{reformer_lm.5} parent=11 // pred_check
          %p430 = pneg %p240
        $region46: #{reformer_lm.5} parent=11 // pred_check_branch
          %432 = sbr.rel (%p430) target = $region48
        $region47: #{reformer_lm.5} parent=11 // pred_region
          _
        $region48: #{reformer_lm.5} parent=11 // pred_fallthru
          _
        // Predicated region
        $region49: #{reformer_lm.5} parent=11 // pred_check
          %p433 = pneg %p261
        $region50: #{reformer_lm.5} parent=11 // pred_check_branch
          %435 = sbr.rel (%p433) target = $region52
        $region51: #{reformer_lm.5} parent=11 // pred_region
          %437 = vsyncadd [#allocation5], 0
          %s439 = sshll.u32 %s10, 4
          %s440 = int_to_ptr.hbm [resolvable:$true] %s439
          %s441 = sshll.u32 [#allocation6], 4
          %s442 = int_to_ptr.vmem [resolvable:$true] %s441
          %444 = dma.hbm_to_vmem [thread:$0]  %s440, 16, %s442, [#allocation5]
        $region52: #{reformer_lm.5} parent=11 // pred_fallthru
          _
        // Predicated region
        $region53: #{reformer_lm.5} parent=11 // pred_check
          %p445 = pneg %p282
        $region54: #{reformer_lm.5} parent=11 // pred_check_branch
          %447 = sbr.rel (%p445) target = $region56
        $region55: #{reformer_lm.5} parent=11 // pred_region
          %449 = vsyncadd [#allocation8], 0
          %s450 = sshll.u32 %s11, 4
          %s451 = int_to_ptr.hbm [resolvable:$true] %s450
          %s452 = sshll.u32 [#allocation7], 4
          %s453 = int_to_ptr.vmem [resolvable:$true] %s452
          %458 = dma.hbm_to_vmem [thread:$0]  %s451, 8192, %s453, [#allocation8], 512, 512, 32
        $region56: #{reformer_lm.5} parent=11 // pred_fallthru
          _
        // Predicated region
        $region57: #{reformer_lm.5} parent=11 // pred_check
          %p459 = pneg %p303
        $region58: #{reformer_lm.5} parent=11 // pred_check_branch
          %461 = sbr.rel (%p459) target = $region60
        $region59: #{reformer_lm.5} parent=11 // pred_region
          _
        $region60: #{reformer_lm.5} parent=11 // pred_fallthru
          _
        // Predicated region
        $region61: #{reformer_lm.5} parent=11 // pred_check
          %p462 = pneg %p324
        $region62: #{reformer_lm.5} parent=11 // pred_check_branch
          %464 = sbr.rel (%p462) target = $region64
        $region63: #{reformer_lm.5} parent=11 // pred_region
          %466 = vsyncadd [#allocation8], 0
          %s467 = sshll.u32 %s13, 4
          %s468 = int_to_ptr.hbm [resolvable:$true] %s467
          %s469 = sshll.u32 [#allocation9], 4
          %s470 = int_to_ptr.vmem [resolvable:$true] %s469
          %475 = dma.hbm_to_vmem [thread:$0]  %s468, 8192, %s470, [#allocation8], 128, 128, 8
        $region64: #{reformer_lm.5} parent=11 // pred_fallthru
          _
        // Predicated region
        $region65: #{reformer_lm.5} parent=11 // pred_check
          %p476 = pneg %p345
        $region66: #{reformer_lm.5} parent=11 // pred_check_branch
          %478 = sbr.rel (%p476) target = $region68
        $region67: #{reformer_lm.5} parent=11 // pred_region
          %480 = vsyncadd [#allocation11], 0
          %s482 = sshll.u32 %s14, 4
          %s483 = int_to_ptr.hbm [resolvable:$true] %s482
          %s484 = sshll.u32 [#allocation10], 4
          %s485 = int_to_ptr.vmem [resolvable:$true] %s484
          %487 = dma.hbm_to_vmem [thread:$0]  %s483, 16, %s485, [#allocation11]
        $region68: #{reformer_lm.5} parent=11 // pred_fallthru
          _
      $region12: #{reformer_lm.5} parent=5 // pred_fallthru
        _
      %p488 = scmp.lt.s32.totalorder %s25, 2
      // Predicated region
      $region69: #{reformer_lm.5} parent=5 // pred_check
        %p489 = pneg %p488
      $region70: #{reformer_lm.5} parent=5 // pred_check_branch
        %491 = sbr.rel (%p489) target = $region72
      $region71: #{reformer_lm.5} parent=5 // pred_region
        // Predicated region
        $region73: #{reformer_lm.5} parent=71 // pred_check
          %p492 = pneg %p45
        $region74: #{reformer_lm.5} parent=71 // pred_check_branch
          %494 = sbr.rel (%p492) target = $region76
        $region75: #{reformer_lm.5} parent=71 // pred_region
          %p495 = scmp.lt.s32.totalorder %s25, 1
          %s496 = scalar_select %p495, %s25, 1
          %s497 = smul.addr %s496, 16
          %s498 = smul.addr %s497, 8
          %s499 = scalar_lea.vmem %s0, %s498
        $region76: #{reformer_lm.5} parent=71 // pred_fallthru
          _
      $region72: #{reformer_lm.5} parent=5 // pred_fallthru
        _
      %p500 = scmp.le.s32.totalorder 1, %s25
      %p501 = scmp.lt.s32.totalorder %s25, 3
      %p502 = pnand %p500, %p501
      %p503 = pneg %p502
      // Predicated region
      $region77: #{reformer_lm.5} parent=5 // pred_check
        _
      $region78: #{reformer_lm.5} parent=5 // pred_check_branch
        %505 = sbr.rel (%p502) target = $region80
      $region79: #{reformer_lm.5} parent=5 // pred_region
        %s506 = ssub.s32 %s25, 1
        // Predicated region
        $region81: #{reformer_lm.5} parent=79 // pred_check
          %p507 = pneg %p93
        $region82: #{reformer_lm.5} parent=79 // pred_check_branch
          %509 = sbr.rel (%p507) target = $region84
        $region83: #{reformer_lm.5} parent=79 // pred_region
          %511 = dma.done [#allocation3], 16
        $region84: #{reformer_lm.5} parent=79 // pred_fallthru
          _
        // Predicated region
        $region85: #{reformer_lm.5} parent=79 // pred_check
          %p512 = pneg %p198
        $region86: #{reformer_lm.5} parent=79 // pred_check_branch
          %514 = sbr.rel (%p512) target = $region88
        $region87: #{reformer_lm.5} parent=79 // pred_region
          %516 = dma.done [#allocation5], 2048
        $region88: #{reformer_lm.5} parent=79 // pred_fallthru
          _
        // Predicated region
        $region89: #{reformer_lm.5} parent=79 // pred_check
          %p517 = pneg %p261
        $region90: #{reformer_lm.5} parent=79 // pred_check_branch
          %519 = sbr.rel (%p517) target = $region92
        $region91: #{reformer_lm.5} parent=79 // pred_region
          %521 = dma.done [#allocation5], 16
        $region92: #{reformer_lm.5} parent=79 // pred_fallthru
          _
        // Predicated region
        $region93: #{reformer_lm.5} parent=79 // pred_check
          %p522 = pneg %p282
        $region94: #{reformer_lm.5} parent=79 // pred_check_branch
          %524 = sbr.rel (%p522) target = $region96
        $region95: #{reformer_lm.5} parent=79 // pred_region
          %526 = dma.done [#allocation8], 8192
        $region96: #{reformer_lm.5} parent=79 // pred_fallthru
          _
        // Predicated region
        $region97: #{reformer_lm.5} parent=79 // pred_check
          %p527 = pneg %p324
        $region98: #{reformer_lm.5} parent=79 // pred_check_branch
          %529 = sbr.rel (%p527) target = $region100
        $region99: #{reformer_lm.5} parent=79 // pred_region
          %531 = dma.done [#allocation8], 8192
        $region100: #{reformer_lm.5} parent=79 // pred_fallthru
          _
        // Predicated region
        $region101: #{reformer_lm.5} parent=79 // pred_check
          %p532 = pneg %p345
        $region102: #{reformer_lm.5} parent=79 // pred_check_branch
          %534 = sbr.rel (%p532) target = $region104
        $region103: #{reformer_lm.5} parent=79 // pred_region
          %536 = dma.done [#allocation11], 16
        $region104: #{reformer_lm.5} parent=79 // pred_fallthru
          _
        %p537 = scmp.lt.s32.totalorder %s30, 1
        %s538 = scalar_select %p537, %s30, 1
        %s539 = smul.addr %s538, 16
        %s540 = smul.addr %s539, 8
        %s541 = scalar_lea.vmem %s0, %s540
        %p542 = pneg %p51
        %p543 = pneg %p48
        %p544 = pneg %p72
        %p545 = pneg %p69
        %p546 = pneg %p93
        %p547 = pneg %p90
        %p548 = pneg %p114
        %p549 = pneg %p111
        %p550 = pneg %p135
        %p551 = pneg %p132
        %p552 = pneg %p156
        %p553 = pneg %p153
        %p554 = pneg %p177
        %p555 = pneg %p174
        %p556 = pneg %p198
        %p557 = pneg %p195
        %p558 = pneg %p219
        %p559 = pneg %p216
        %p560 = pneg %p240
        %p561 = pneg %p237
        %p562 = pneg %p261
        %p563 = pneg %p258
        %p564 = pneg %p282
        %p565 = pneg %p279
        %p566 = pneg %p303
        %p567 = pneg %p300
        %p568 = pneg %p324
        %p569 = pneg %p321
        %p570 = pneg %p345
        %p571 = pneg %p342
        %p572 = pneg %p371
        %p573 = pneg %p368
        %p574 = scmp.lt.s32.totalorder %s30, 1
        %s575 = scalar_select %p574, %s30, 1
        %s576 = smul.addr %s575, 16
        %s577 = smul.addr %s576, 8
        %s578 = scalar_lea.vmem %s15, %s577
        %p579 = scmp.lt.s32.totalorder %s30, 1
        %s580 = scalar_select %p579, %s30, 1
        %s581 = smul.addr %s580, 16
        %s582 = smul.addr %s581, 8
        %s583 = scalar_lea.vmem %s0, %s582
        %p584 = scmp.lt.s32.totalorder %s30, 1
        %s585 = scalar_select %p584, %s30, 1
        %s586 = smul.addr %s585, 16
        %s587 = smul.addr %s586, 8
        %s588 = scalar_lea.vmem %s15, %s587
        %v589 = vld [vmem:[%s583] sm:$0xff]
        %v590 = vld [vmem:[%s583 + $0x8] sm:$0xff]
        %v591 = vld [vmem:[%s583 + $0x10] sm:$0xff]
        %v592 = vld [vmem:[%s583 + $0x18] sm:$0xff]
        %v593 = vld [vmem:[%s583 + $0x20] sm:$0xff]
        %v594 = vld [vmem:[%s583 + $0x28] sm:$0xff]
        %v595 = vld [vmem:[%s583 + $0x30] sm:$0xff]
        %v596 = vld [vmem:[%s583 + $0x38] sm:$0xff]
        %v597 = vld [vmem:[%s583 + $0x40] sm:$0xff]
        %v598 = vld [vmem:[%s583 + $0x48] sm:$0xff]
        %v599 = vld [vmem:[%s583 + $0x50] sm:$0xff]
        %v600 = vld [vmem:[%s583 + $0x58] sm:$0xff]
        %v601 = vld [vmem:[%s583 + $0x60] sm:$0xff]
        %v602 = vld [vmem:[%s583 + $0x68] sm:$0xff]
        %v603 = vld [vmem:[%s583 + $0x70] sm:$0xff]
        %v604 = vld [vmem:[%s583 + $0x78] sm:$0xff]
        %v605 = vld [vmem:[%s1] sm:$0x1]
        %v606 = vld [vmem:[#allocation2] sm:$0x1]
        %607 = vadd.xlane.f32.xlu0 %v589
        %v608 = vpop.xlane.xlu0 %607
        %609 = vadd.xlane.f32.xlu0 %v590
        %v610 = vpop.xlane.xlu0 %609
        %611 = vadd.xlane.f32.xlu0 %v591
        %v612 = vpop.xlane.xlu0 %611
        %613 = vadd.xlane.f32.xlu0 %v592
        %v614 = vpop.xlane.xlu0 %613
        %615 = vadd.xlane.f32.xlu0 %v593
        %v616 = vpop.xlane.xlu0 %615
        %617 = vadd.xlane.f32.xlu0 %v594
        %v618 = vpop.xlane.xlu0 %617
        %619 = vadd.xlane.f32.xlu0 %v595
        %v620 = vpop.xlane.xlu0 %619
        %621 = vadd.xlane.f32.xlu0 %v596
        %v622 = vpop.xlane.xlu0 %621
        %623 = vadd.xlane.f32.xlu0 %v597
        %v624 = vpop.xlane.xlu0 %623
        %625 = vadd.xlane.f32.xlu0 %v598
        %v626 = vpop.xlane.xlu0 %625
        %627 = vadd.xlane.f32.xlu0 %v599
        %v628 = vpop.xlane.xlu0 %627
        %629 = vadd.xlane.f32.xlu0 %v600
        %v630 = vpop.xlane.xlu0 %629
        %631 = vadd.xlane.f32.xlu0 %v601
        %v632 = vpop.xlane.xlu0 %631
        %633 = vadd.xlane.f32.xlu0 %v602
        %v634 = vpop.xlane.xlu0 %633
        %635 = vadd.xlane.f32.xlu0 %v603
        %v636 = vpop.xlane.xlu0 %635
        %637 = vadd.xlane.f32.xlu0 %v604
        %v638 = vpop.xlane.xlu0 %637
        %v639 = vrcp.pop 128.0
        %v640 = vmul.f32 128.0, %v639
        %v641 = vsub.f32 1.0, %v640
        %v642 = vmul.f32 %v639, %v641
        %v643 = vadd.f32 %v639, %v642
        %vm644 = vweird.f32 %v639
        %v645 = vsel %vm644, %v639, %v643
        %v646 = vmul.f32 %v608, %v645
        %v647 = vmul.f32 %v610, %v645
        %v648 = vmul.f32 %v612, %v645
        %v649 = vmul.f32 %v614, %v645
        %v650 = vmul.f32 %v616, %v645
        %v651 = vmul.f32 %v618, %v645
        %v652 = vmul.f32 %v620, %v645
        %v653 = vmul.f32 %v622, %v645
        %v654 = vmul.f32 %v624, %v645
        %v655 = vmul.f32 %v626, %v645
        %v656 = vmul.f32 %v628, %v645
        %v657 = vmul.f32 %v630, %v645
        %v658 = vmul.f32 %v632, %v645
        %v659 = vmul.f32 %v634, %v645
        %v660 = vmul.f32 %v636, %v645
        %v661 = vmul.f32 %v638, %v645
        %v662 = vsub.f32 %v589, %v646
        %v663 = vsub.f32 %v590, %v647
        %v664 = vsub.f32 %v591, %v648
        %v665 = vsub.f32 %v592, %v649
        %v666 = vsub.f32 %v593, %v650
        %v667 = vsub.f32 %v594, %v651
        %v668 = vsub.f32 %v595, %v652
        %v669 = vsub.f32 %v596, %v653
        %v670 = vsub.f32 %v597, %v654
        %v671 = vsub.f32 %v598, %v655
        %v672 = vsub.f32 %v599, %v656
        %v673 = vsub.f32 %v600, %v657
        %v674 = vsub.f32 %v601, %v658
        %v675 = vsub.f32 %v602, %v659
        %v676 = vsub.f32 %v603, %v660
        %v677 = vsub.f32 %v604, %v661
        %v678 = vmul.f32 %v662, %v662
        %v679 = vmul.f32 %v663, %v663
        %v680 = vmul.f32 %v664, %v664
        %v681 = vmul.f32 %v665, %v665
        %v682 = vmul.f32 %v666, %v666
        %v683 = vmul.f32 %v667, %v667
        %v684 = vmul.f32 %v668, %v668
        %v685 = vmul.f32 %v669, %v669
        %v686 = vmul.f32 %v670, %v670
        %v687 = vmul.f32 %v671, %v671
        %v688 = vmul.f32 %v672, %v672
        %v689 = vmul.f32 %v673, %v673
        %v690 = vmul.f32 %v674, %v674
        %v691 = vmul.f32 %v675, %v675
        %v692 = vmul.f32 %v676, %v676
        %v693 = vmul.f32 %v677, %v677
        %694 = vadd.xlane.f32.xlu0 %v678
        %v695 = vpop.xlane.xlu0 %694
        %696 = vadd.xlane.f32.xlu0 %v679
        %v697 = vpop.xlane.xlu0 %696
        %698 = vadd.xlane.f32.xlu0 %v680
        %v699 = vpop.xlane.xlu0 %698
        %700 = vadd.xlane.f32.xlu0 %v681
        %v701 = vpop.xlane.xlu0 %700
        %702 = vadd.xlane.f32.xlu0 %v682
        %v703 = vpop.xlane.xlu0 %702
        %704 = vadd.xlane.f32.xlu0 %v683
        %v705 = vpop.xlane.xlu0 %704
        %706 = vadd.xlane.f32.xlu0 %v684
        %v707 = vpop.xlane.xlu0 %706
        %708 = vadd.xlane.f32.xlu0 %v685
        %v709 = vpop.xlane.xlu0 %708
        %710 = vadd.xlane.f32.xlu0 %v686
        %v711 = vpop.xlane.xlu0 %710
        %712 = vadd.xlane.f32.xlu0 %v687
        %v713 = vpop.xlane.xlu0 %712
        %714 = vadd.xlane.f32.xlu0 %v688
        %v715 = vpop.xlane.xlu0 %714
        %716 = vadd.xlane.f32.xlu0 %v689
        %v717 = vpop.xlane.xlu0 %716
        %718 = vadd.xlane.f32.xlu0 %v690
        %v719 = vpop.xlane.xlu0 %718
        %720 = vadd.xlane.f32.xlu0 %v691
        %v721 = vpop.xlane.xlu0 %720
        %722 = vadd.xlane.f32.xlu0 %v692
        %v723 = vpop.xlane.xlu0 %722
        %724 = vadd.xlane.f32.xlu0 %v693
        %v725 = vpop.xlane.xlu0 %724
        %v726 = vmul.f32 %v695, %v645
        %v727 = vmul.f32 %v697, %v645
        %v728 = vmul.f32 %v699, %v645
        %v729 = vmul.f32 %v701, %v645
        %v730 = vmul.f32 %v703, %v645
        %v731 = vmul.f32 %v705, %v645
        %v732 = vmul.f32 %v707, %v645
        %v733 = vmul.f32 %v709, %v645
        %v734 = vmul.f32 %v711, %v645
        %v735 = vmul.f32 %v713, %v645
        %v736 = vmul.f32 %v715, %v645
        %v737 = vmul.f32 %v717, %v645
        %v738 = vmul.f32 %v719, %v645
        %v739 = vmul.f32 %v721, %v645
        %v740 = vmul.f32 %v723, %v645
        %v741 = vmul.f32 %v725, %v645
        %v742 = vadd.f32 %v726, 1e-05
        %v743 = vadd.f32 %v727, 1e-05
        %v744 = vadd.f32 %v728, 1e-05
        %v745 = vadd.f32 %v729, 1e-05
        %v746 = vadd.f32 %v730, 1e-05
        %v747 = vadd.f32 %v731, 1e-05
        %v748 = vadd.f32 %v732, 1e-05
        %v749 = vadd.f32 %v733, 1e-05
        %v750 = vadd.f32 %v734, 1e-05
        %v751 = vadd.f32 %v735, 1e-05
        %v752 = vadd.f32 %v736, 1e-05
        %v753 = vadd.f32 %v737, 1e-05
        %v754 = vadd.f32 %v738, 1e-05
        %v755 = vadd.f32 %v739, 1e-05
        %v756 = vadd.f32 %v740, 1e-05
        %v757 = vadd.f32 %v741, 1e-05
        %v758 = vrsqrt.pop %v742
        %v759 = vmul.f32 %v758, %v742
        %v760 = vmul.f32 %v759, %v758
        %v761 = vmul.f32 0.5, %v760
        %v762 = vsub.f32 1.5, %v761
        %v763 = vmul.f32 %v758, %v762
        %vm764 = vweird.f32 %v742
        %vm765 = vweird.f32 %v758
        %vm766 = vmor %vm764, %vm765
        %v767 = vsel %vm766, %v758, %v763
        %v768 = vrsqrt.pop %v743
        %v769 = vmul.f32 %v768, %v743
        %v770 = vmul.f32 %v769, %v768
        %v771 = vmul.f32 0.5, %v770
        %v772 = vsub.f32 1.5, %v771
        %v773 = vmul.f32 %v768, %v772
        %vm774 = vweird.f32 %v743
        %vm775 = vweird.f32 %v768
        %vm776 = vmor %vm774, %vm775
        %v777 = vsel %vm776, %v768, %v773
        %v778 = vrsqrt.pop %v744
        %v779 = vmul.f32 %v778, %v744
        %v780 = vmul.f32 %v779, %v778
        %v781 = vmul.f32 0.5, %v780
        %v782 = vsub.f32 1.5, %v781
        %v783 = vmul.f32 %v778, %v782
        %vm784 = vweird.f32 %v744
        %vm785 = vweird.f32 %v778
        %vm786 = vmor %vm784, %vm785
        %v787 = vsel %vm786, %v778, %v783
        %v788 = vrsqrt.pop %v745
        %v789 = vmul.f32 %v788, %v745
        %v790 = vmul.f32 %v789, %v788
        %v791 = vmul.f32 0.5, %v790
        %v792 = vsub.f32 1.5, %v791
        %v793 = vmul.f32 %v788, %v792
        %vm794 = vweird.f32 %v745
        %vm795 = vweird.f32 %v788
        %vm796 = vmor %vm794, %vm795
        %v797 = vsel %vm796, %v788, %v793
        %v798 = vrsqrt.pop %v746
        %v799 = vmul.f32 %v798, %v746
        %v800 = vmul.f32 %v799, %v798
        %v801 = vmul.f32 0.5, %v800
        %v802 = vsub.f32 1.5, %v801
        %v803 = vmul.f32 %v798, %v802
        %vm804 = vweird.f32 %v746
        %vm805 = vweird.f32 %v798
        %vm806 = vmor %vm804, %vm805
        %v807 = vsel %vm806, %v798, %v803
        %v808 = vrsqrt.pop %v747
        %v809 = vmul.f32 %v808, %v747
        %v810 = vmul.f32 %v809, %v808
        %v811 = vmul.f32 0.5, %v810
        %v812 = vsub.f32 1.5, %v811
        %v813 = vmul.f32 %v808, %v812
        %vm814 = vweird.f32 %v747
        %vm815 = vweird.f32 %v808
        %vm816 = vmor %vm814, %vm815
        %v817 = vsel %vm816, %v808, %v813
        %v818 = vrsqrt.pop %v748
        %v819 = vmul.f32 %v818, %v748
        %v820 = vmul.f32 %v819, %v818
        %v821 = vmul.f32 0.5, %v820
        %v822 = vsub.f32 1.5, %v821
        %v823 = vmul.f32 %v818, %v822
        %vm824 = vweird.f32 %v748
        %vm825 = vweird.f32 %v818
        %vm826 = vmor %vm824, %vm825
        %v827 = vsel %vm826, %v818, %v823
        %v828 = vrsqrt.pop %v749
        %v829 = vmul.f32 %v828, %v749
        %v830 = vmul.f32 %v829, %v828
        %v831 = vmul.f32 0.5, %v830
        %v832 = vsub.f32 1.5, %v831
        %v833 = vmul.f32 %v828, %v832
        %vm834 = vweird.f32 %v749
        %vm835 = vweird.f32 %v828
        %vm836 = vmor %vm834, %vm835
        %v837 = vsel %vm836, %v828, %v833
        %v838 = vrsqrt.pop %v750
        %v839 = vmul.f32 %v838, %v750
        %v840 = vmul.f32 %v839, %v838
        %v841 = vmul.f32 0.5, %v840
        %v842 = vsub.f32 1.5, %v841
        %v843 = vmul.f32 %v838, %v842
        %vm844 = vweird.f32 %v750
        %vm845 = vweird.f32 %v838
        %vm846 = vmor %vm844, %vm845
        %v847 = vsel %vm846, %v838, %v843
        %v848 = vrsqrt.pop %v751
        %v849 = vmul.f32 %v848, %v751
        %v850 = vmul.f32 %v849, %v848
        %v851 = vmul.f32 0.5, %v850
        %v852 = vsub.f32 1.5, %v851
        %v853 = vmul.f32 %v848, %v852
        %vm854 = vweird.f32 %v751
        %vm855 = vweird.f32 %v848
        %vm856 = vmor %vm854, %vm855
        %v857 = vsel %vm856, %v848, %v853
        %v858 = vrsqrt.pop %v752
        %v859 = vmul.f32 %v858, %v752
        %v860 = vmul.f32 %v859, %v858
        %v861 = vmul.f32 0.5, %v860
        %v862 = vsub.f32 1.5, %v861
        %v863 = vmul.f32 %v858, %v862
        %vm864 = vweird.f32 %v752
        %vm865 = vweird.f32 %v858
        %vm866 = vmor %vm864, %vm865
        %v867 = vsel %vm866, %v858, %v863
        %v868 = vrsqrt.pop %v753
        %v869 = vmul.f32 %v868, %v753
        %v870 = vmul.f32 %v869, %v868
        %v871 = vmul.f32 0.5, %v870
        %v872 = vsub.f32 1.5, %v871
        %v873 = vmul.f32 %v868, %v872
        %vm874 = vweird.f32 %v753
        %vm875 = vweird.f32 %v868
        %vm876 = vmor %vm874, %vm875
        %v877 = vsel %vm876, %v868, %v873
        %v878 = vrsqrt.pop %v754
        %v879 = vmul.f32 %v878, %v754
        %v880 = vmul.f32 %v879, %v878
        %v881 = vmul.f32 0.5, %v880
        %v882 = vsub.f32 1.5, %v881
        %v883 = vmul.f32 %v878, %v882
        %vm884 = vweird.f32 %v754
        %vm885 = vweird.f32 %v878
        %vm886 = vmor %vm884, %vm885
        %v887 = vsel %vm886, %v878, %v883
        %v888 = vrsqrt.pop %v755
        %v889 = vmul.f32 %v888, %v755
        %v890 = vmul.f32 %v889, %v888
        %v891 = vmul.f32 0.5, %v890
        %v892 = vsub.f32 1.5, %v891
        %v893 = vmul.f32 %v888, %v892
        %vm894 = vweird.f32 %v755
        %vm895 = vweird.f32 %v888
        %vm896 = vmor %vm894, %vm895
        %v897 = vsel %vm896, %v888, %v893
        %v898 = vrsqrt.pop %v756
        %v899 = vmul.f32 %v898, %v756
        %v900 = vmul.f32 %v899, %v898
        %v901 = vmul.f32 0.5, %v900
        %v902 = vsub.f32 1.5, %v901
        %v903 = vmul.f32 %v898, %v902
        %vm904 = vweird.f32 %v756
        %vm905 = vweird.f32 %v898
        %vm906 = vmor %vm904, %vm905
        %v907 = vsel %vm906, %v898, %v903
        %v908 = vrsqrt.pop %v757
        %v909 = vmul.f32 %v908, %v757
        %v910 = vmul.f32 %v909, %v908
        %v911 = vmul.f32 0.5, %v910
        %v912 = vsub.f32 1.5, %v911
        %v913 = vmul.f32 %v908, %v912
        %vm914 = vweird.f32 %v757
        %vm915 = vweird.f32 %v908
        %vm916 = vmor %vm914, %vm915
        %v917 = vsel %vm916, %v908, %v913
        %v918 = vmul.f32 %v662, %v767
        %v919 = vmul.f32 %v663, %v777
        %v920 = vmul.f32 %v664, %v787
        %v921 = vmul.f32 %v665, %v797
        %v922 = vmul.f32 %v666, %v807
        %v923 = vmul.f32 %v667, %v817
        %v924 = vmul.f32 %v668, %v827
        %v925 = vmul.f32 %v669, %v837
        %v926 = vmul.f32 %v670, %v847
        %v927 = vmul.f32 %v671, %v857
        %v928 = vmul.f32 %v672, %v867
        %v929 = vmul.f32 %v673, %v877
        %v930 = vmul.f32 %v674, %v887
        %v931 = vmul.f32 %v675, %v897
        %v932 = vmul.f32 %v676, %v907
        %v933 = vmul.f32 %v677, %v917
        %v935 = vperm.slane %v605, 0
        %v937 = vmul.f32 %v918, %v935
        %v938 = vmul.f32 %v919, %v935
        %v939 = vmul.f32 %v920, %v935
        %v940 = vmul.f32 %v921, %v935
        %v941 = vmul.f32 %v922, %v935
        %v942 = vmul.f32 %v923, %v935
        %v943 = vmul.f32 %v924, %v935
        %v944 = vmul.f32 %v925, %v935
        %v945 = vmul.f32 %v926, %v935
        %v946 = vmul.f32 %v927, %v935
        %v947 = vmul.f32 %v928, %v935
        %v948 = vmul.f32 %v929, %v935
        %v949 = vmul.f32 %v930, %v935
        %v950 = vmul.f32 %v931, %v935
        %v951 = vmul.f32 %v932, %v935
        %v952 = vmul.f32 %v933, %v935
        %v954 = vperm.slane %v606, 0
        %v956 = vadd.f32 %v937, %v954
        %v957 = vadd.f32 %v938, %v954
        %v958 = vadd.f32 %v939, %v954
        %v959 = vadd.f32 %v940, %v954
        %v960 = vadd.f32 %v941, %v954
        %v961 = vadd.f32 %v942, %v954
        %v962 = vadd.f32 %v943, %v954
        %v963 = vadd.f32 %v944, %v954
        %v964 = vadd.f32 %v945, %v954
        %v965 = vadd.f32 %v946, %v954
        %v966 = vadd.f32 %v947, %v954
        %v967 = vadd.f32 %v948, %v954
        %v968 = vadd.f32 %v949, %v954
        %v969 = vadd.f32 %v950, %v954
        %v970 = vadd.f32 %v951, %v954
        %v971 = vadd.f32 %v952, %v954
        %v972 = vld [vmem:[%s3] sm:$0xff]
        %v973 = vld [vmem:[%s3 + $0x8] sm:$0xff]
        %v974 = vld [vmem:[%s3 + $0x10] sm:$0xff]
        %v975 = vld [vmem:[%s3 + $0x18] sm:$0xff]
        %v976 = vld [vmem:[%s3 + $0x20] sm:$0xff]
        %v977 = vld [vmem:[%s3 + $0x28] sm:$0xff]
        %v978 = vld [vmem:[%s3 + $0x30] sm:$0xff]
        %v979 = vld [vmem:[%s3 + $0x38] sm:$0xff]
        %v980 = vld [vmem:[%s3 + $0x40] sm:$0xff]
        %v981 = vld [vmem:[%s3 + $0x48] sm:$0xff]
        %v982 = vld [vmem:[%s3 + $0x50] sm:$0xff]
        %v983 = vld [vmem:[%s3 + $0x58] sm:$0xff]
        %v984 = vld [vmem:[%s3 + $0x60] sm:$0xff]
        %v985 = vld [vmem:[%s3 + $0x68] sm:$0xff]
        %v986 = vld [vmem:[%s3 + $0x70] sm:$0xff]
        %v987 = vld [vmem:[%s3 + $0x78] sm:$0xff]
        %v988 = vld [vmem:[%s4] sm:$0x1]
        %v990 = vperm.slane %v988, 0
        %992 = vmatpush.msra.mxu0 %v987
        %993 = vmatpush.msra.mxu0 %v986
        %994 = vmatpush.msra.mxu0 %v985
        %995 = vmatpush.msra.mxu0 %v984
        %996 = vmatpush.msra.mxu0 %v983
        %997 = vmatpush.msra.mxu0 %v982
        %998 = vmatpush.msra.mxu0 %v981
        %999 = vmatpush.msra.mxu0 %v980
        %1000 = vmatpush.msra.mxu0 %v979
        %1001 = vmatpush.msra.mxu0 %v978
        %1002 = vmatpush.msra.mxu0 %v977
        %1003 = vmatpush.msra.mxu0 %v976
        %1004 = vmatpush.msra.mxu0 %v975
        %1005 = vmatpush.msra.mxu0 %v974
        %1006 = vmatpush.msra.mxu0 %v973
        %1007 = vmatpush.msra.mxu0 %v972
        %1008 = vmatmul.f32.gmra.mxu0 %v956
        %v1009 = vpop.f32.mrf.mxu0
        %v1010 = vadd.f32 %v990, %v1009
        %1011 = vmatmul.f32.gmra.mxu0 %v957
        %v1012 = vpop.f32.mrf.mxu0
        %v1013 = vadd.f32 %v990, %v1012
        %1014 = vmatmul.f32.gmra.mxu0 %v958
        %v1015 = vpop.f32.mrf.mxu0
        %v1016 = vadd.f32 %v990, %v1015
        %1017 = vmatmul.f32.gmra.mxu0 %v959
        %v1018 = vpop.f32.mrf.mxu0
        %v1019 = vadd.f32 %v990, %v1018
        %1020 = vmatmul.f32.gmra.mxu0 %v960
        %v1021 = vpop.f32.mrf.mxu0
        %v1022 = vadd.f32 %v990, %v1021
        %1023 = vmatmul.f32.gmra.mxu0 %v961
        %v1024 = vpop.f32.mrf.mxu0
        %v1025 = vadd.f32 %v990, %v1024
        %1026 = vmatmul.f32.gmra.mxu0 %v962
        %v1027 = vpop.f32.mrf.mxu0
        %v1028 = vadd.f32 %v990, %v1027
        %1029 = vmatmul.f32.gmra.mxu0 %v963
        %v1030 = vpop.f32.mrf.mxu0
        %v1031 = vadd.f32 %v990, %v1030
        %1032 = vmatmul.f32.gmra.mxu0 %v964
        %v1033 = vpop.f32.mrf.mxu0
        %v1034 = vadd.f32 %v990, %v1033
        %1035 = vmatmul.f32.gmra.mxu0 %v965
        %v1036 = vpop.f32.mrf.mxu0
        %v1037 = vadd.f32 %v990, %v1036
        %1038 = vmatmul.f32.gmra.mxu0 %v966
        %v1039 = vpop.f32.mrf.mxu0
        %v1040 = vadd.f32 %v990, %v1039
        %1041 = vmatmul.f32.gmra.mxu0 %v967
        %v1042 = vpop.f32.mrf.mxu0
        %v1043 = vadd.f32 %v990, %v1042
        %1044 = vmatmul.f32.gmra.mxu0 %v968
        %v1045 = vpop.f32.mrf.mxu0
        %v1046 = vadd.f32 %v990, %v1045
        %1047 = vmatmul.f32.gmra.mxu0 %v969
        %v1048 = vpop.f32.mrf.mxu0
        %v1049 = vadd.f32 %v990, %v1048
        %1050 = vmatmul.f32.gmra.mxu0 %v970
        %v1051 = vpop.f32.mrf.mxu0
        %v1052 = vadd.f32 %v990, %v1051
        %1053 = vmatmul.f32.gmra.mxu0 %v971
        %v1054 = vpop.f32.mrf.mxu0
        %v1055 = vadd.f32 %v990, %v1054
        %1056 = vdwg.mxu0
        %v1057 = vld [vmem:[%s5] sm:$0xff]
        %v1058 = vld [vmem:[%s5 + $0x8] sm:$0xff]
        %v1059 = vld [vmem:[%s5 + $0x10] sm:$0xff]
        %v1060 = vld [vmem:[%s5 + $0x18] sm:$0xff]
        %v1061 = vld [vmem:[%s5 + $0x20] sm:$0xff]
        %v1062 = vld [vmem:[%s5 + $0x28] sm:$0xff]
        %v1063 = vld [vmem:[%s5 + $0x30] sm:$0xff]
        %v1064 = vld [vmem:[%s5 + $0x38] sm:$0xff]
        %v1065 = vld [vmem:[%s5 + $0x40] sm:$0xff]
        %v1066 = vld [vmem:[%s5 + $0x48] sm:$0xff]
        %v1067 = vld [vmem:[%s5 + $0x50] sm:$0xff]
        %v1068 = vld [vmem:[%s5 + $0x58] sm:$0xff]
        %v1069 = vld [vmem:[%s5 + $0x60] sm:$0xff]
        %v1070 = vld [vmem:[%s5 + $0x68] sm:$0xff]
        %v1071 = vld [vmem:[%s5 + $0x70] sm:$0xff]
        %v1072 = vld [vmem:[%s5 + $0x78] sm:$0xff]
        %v1073 = vld [vmem:[%s6] sm:$0x1]
        %v1075 = vperm.slane %v1073, 0
        %1077 = vmatpush.msra.mxu0 %v1072
        %1078 = vmatpush.msra.mxu0 %v1071
        %1079 = vmatpush.msra.mxu0 %v1070
        %1080 = vmatpush.msra.mxu0 %v1069
        %1081 = vmatpush.msra.mxu0 %v1068
        %1082 = vmatpush.msra.mxu0 %v1067
        %1083 = vmatpush.msra.mxu0 %v1066
        %1084 = vmatpush.msra.mxu0 %v1065
        %1085 = vmatpush.msra.mxu0 %v1064
        %1086 = vmatpush.msra.mxu0 %v1063
        %1087 = vmatpush.msra.mxu0 %v1062
        %1088 = vmatpush.msra.mxu0 %v1061
        %1089 = vmatpush.msra.mxu0 %v1060
        %1090 = vmatpush.msra.mxu0 %v1059
        %1091 = vmatpush.msra.mxu0 %v1058
        %1092 = vmatpush.msra.mxu0 %v1057
        %1093 = vmatmul.f32.gmra.mxu0 %v956
        %v1094 = vpop.f32.mrf.mxu0
        %v1095 = vadd.f32 %v1075, %v1094
        %1096 = vmatmul.f32.gmra.mxu0 %v957
        %v1097 = vpop.f32.mrf.mxu0
        %v1098 = vadd.f32 %v1075, %v1097
        %1099 = vmatmul.f32.gmra.mxu0 %v958
        %v1100 = vpop.f32.mrf.mxu0
        %v1101 = vadd.f32 %v1075, %v1100
        %1102 = vmatmul.f32.gmra.mxu0 %v959
        %v1103 = vpop.f32.mrf.mxu0
        %v1104 = vadd.f32 %v1075, %v1103
        %1105 = vmatmul.f32.gmra.mxu0 %v960
        %v1106 = vpop.f32.mrf.mxu0
        %v1107 = vadd.f32 %v1075, %v1106
        %1108 = vmatmul.f32.gmra.mxu0 %v961
        %v1109 = vpop.f32.mrf.mxu0
        %v1110 = vadd.f32 %v1075, %v1109
        %1111 = vmatmul.f32.gmra.mxu0 %v962
        %v1112 = vpop.f32.mrf.mxu0
        %v1113 = vadd.f32 %v1075, %v1112
        %1114 = vmatmul.f32.gmra.mxu0 %v963
        %v1115 = vpop.f32.mrf.mxu0
        %v1116 = vadd.f32 %v1075, %v1115
        %1117 = vmatmul.f32.gmra.mxu0 %v964
        %v1118 = vpop.f32.mrf.mxu0
        %v1119 = vadd.f32 %v1075, %v1118
        %1120 = vmatmul.f32.gmra.mxu0 %v965
        %v1121 = vpop.f32.mrf.mxu0
        %v1122 = vadd.f32 %v1075, %v1121
        %1123 = vmatmul.f32.gmra.mxu0 %v966
        %v1124 = vpop.f32.mrf.mxu0
        %v1125 = vadd.f32 %v1075, %v1124
        %1126 = vmatmul.f32.gmra.mxu0 %v967
        %v1127 = vpop.f32.mrf.mxu0
        %v1128 = vadd.f32 %v1075, %v1127
        %1129 = vmatmul.f32.gmra.mxu0 %v968
        %v1130 = vpop.f32.mrf.mxu0
        %v1131 = vadd.f32 %v1075, %v1130
        %1132 = vmatmul.f32.gmra.mxu0 %v969
        %v1133 = vpop.f32.mrf.mxu0
        %v1134 = vadd.f32 %v1075, %v1133
        %1135 = vmatmul.f32.gmra.mxu0 %v970
        %v1136 = vpop.f32.mrf.mxu0
        %v1137 = vadd.f32 %v1075, %v1136
        %1138 = vmatmul.f32.gmra.mxu0 %v971
        %v1139 = vpop.f32.mrf.mxu0
        %v1140 = vadd.f32 %v1075, %v1139
        %1141 = vdwg.mxu0
        %v1142 = vld [vmem:[#allocation4] sm:$0xff]
        %v1143 = vld [vmem:[#allocation4 + $0x8] sm:$0xff]
        %v1144 = vld [vmem:[#allocation4 + $0x10] sm:$0xff]
        %v1145 = vld [vmem:[#allocation4 + $0x18] sm:$0xff]
        %v1146 = vld [vmem:[#allocation4 + $0x20] sm:$0xff]
        %v1147 = vld [vmem:[#allocation4 + $0x28] sm:$0xff]
        %v1148 = vld [vmem:[#allocation4 + $0x30] sm:$0xff]
        %v1149 = vld [vmem:[#allocation4 + $0x38] sm:$0xff]
        %v1150 = vld [vmem:[#allocation4 + $0x40] sm:$0xff]
        %v1151 = vld [vmem:[#allocation4 + $0x48] sm:$0xff]
        %v1152 = vld [vmem:[#allocation4 + $0x50] sm:$0xff]
        %v1153 = vld [vmem:[#allocation4 + $0x58] sm:$0xff]
        %v1154 = vld [vmem:[#allocation4 + $0x60] sm:$0xff]
        %v1155 = vld [vmem:[#allocation4 + $0x68] sm:$0xff]
        %v1156 = vld [vmem:[#allocation4 + $0x70] sm:$0xff]
        %v1157 = vld [vmem:[#allocation4 + $0x78] sm:$0xff]
        %v1158 = vld [vmem:[%s8] sm:$0x1]
        %v1160 = vperm.slane %v1158, 0
        %1162 = vmatpush.msra.mxu0 %v1157
        %1163 = vmatpush.msra.mxu0 %v1156
        %1164 = vmatpush.msra.mxu0 %v1155
        %1165 = vmatpush.msra.mxu0 %v1154
        %1166 = vmatpush.msra.mxu0 %v1153
        %1167 = vmatpush.msra.mxu0 %v1152
        %1168 = vmatpush.msra.mxu0 %v1151
        %1169 = vmatpush.msra.mxu0 %v1150
        %1170 = vmatpush.msra.mxu0 %v1149
        %1171 = vmatpush.msra.mxu0 %v1148
        %1172 = vmatpush.msra.mxu0 %v1147
        %1173 = vmatpush.msra.mxu0 %v1146
        %1174 = vmatpush.msra.mxu0 %v1145
        %1175 = vmatpush.msra.mxu0 %v1144
        %1176 = vmatpush.msra.mxu0 %v1143
        %1177 = vmatpush.msra.mxu0 %v1142
        %1178 = vmatmul.f32.gmra.mxu0 %v956
        %v1179 = vpop.f32.mrf.mxu0
        %v1180 = vadd.f32 %v1160, %v1179
        %1181 = vmatmul.f32.gmra.mxu0 %v957
        %v1182 = vpop.f32.mrf.mxu0
        %v1183 = vadd.f32 %v1160, %v1182
        %1184 = vmatmul.f32.gmra.mxu0 %v958
        %v1185 = vpop.f32.mrf.mxu0
        %v1186 = vadd.f32 %v1160, %v1185
        %1187 = vmatmul.f32.gmra.mxu0 %v959
        %v1188 = vpop.f32.mrf.mxu0
        %v1189 = vadd.f32 %v1160, %v1188
        %1190 = vmatmul.f32.gmra.mxu0 %v960
        %v1191 = vpop.f32.mrf.mxu0
        %v1192 = vadd.f32 %v1160, %v1191
        %1193 = vmatmul.f32.gmra.mxu0 %v961
        %v1194 = vpop.f32.mrf.mxu0
        %v1195 = vadd.f32 %v1160, %v1194
        %1196 = vmatmul.f32.gmra.mxu0 %v962
        %v1197 = vpop.f32.mrf.mxu0
        %v1198 = vadd.f32 %v1160, %v1197
        %1199 = vmatmul.f32.gmra.mxu0 %v963
        %v1200 = vpop.f32.mrf.mxu0
        %v1201 = vadd.f32 %v1160, %v1200
        %1202 = vmatmul.f32.gmra.mxu0 %v964
        %v1203 = vpop.f32.mrf.mxu0
        %v1204 = vadd.f32 %v1160, %v1203
        %1205 = vmatmul.f32.gmra.mxu0 %v965
        %v1206 = vpop.f32.mrf.mxu0
        %v1207 = vadd.f32 %v1160, %v1206
        %1208 = vmatmul.f32.gmra.mxu0 %v966
        %v1209 = vpop.f32.mrf.mxu0
        %v1210 = vadd.f32 %v1160, %v1209
        %1211 = vmatmul.f32.gmra.mxu0 %v967
        %v1212 = vpop.f32.mrf.mxu0
        %v1213 = vadd.f32 %v1160, %v1212
        %1214 = vmatmul.f32.gmra.mxu0 %v968
        %v1215 = vpop.f32.mrf.mxu0
        %v1216 = vadd.f32 %v1160, %v1215
        %1217 = vmatmul.f32.gmra.mxu0 %v969
        %v1218 = vpop.f32.mrf.mxu0
        %v1219 = vadd.f32 %v1160, %v1218
        %1220 = vmatmul.f32.gmra.mxu0 %v970
        %v1221 = vpop.f32.mrf.mxu0
        %v1222 = vadd.f32 %v1160, %v1221
        %1223 = vmatmul.f32.gmra.mxu0 %v971
        %v1224 = vpop.f32.mrf.mxu0
        %v1225 = vadd.f32 %v1160, %v1224
        %1226 = vdwg.mxu0
        %1227 = vmatpush.xpose.msra.mxu0 %v1140
        %1228 = vmatpush.xpose.msra.mxu0 %v1137
        %1229 = vmatpush.xpose.msra.mxu0 %v1134
        %1230 = vmatpush.xpose.msra.mxu0 %v1131
        %1231 = vmatpush.xpose.msra.mxu0 %v1128
        %1232 = vmatpush.xpose.msra.mxu0 %v1125
        %1233 = vmatpush.xpose.msra.mxu0 %v1122
        %1234 = vmatpush.xpose.msra.mxu0 %v1119
        %1235 = vmatpush.xpose.msra.mxu0 %v1116
        %1236 = vmatpush.xpose.msra.mxu0 %v1113
        %1237 = vmatpush.xpose.msra.mxu0 %v1110
        %1238 = vmatpush.xpose.msra.mxu0 %v1107
        %1239 = vmatpush.xpose.msra.mxu0 %v1104
        %1240 = vmatpush.xpose.msra.mxu0 %v1101
        %1241 = vmatpush.xpose.msra.mxu0 %v1098
        %1242 = vmatpush.xpose.msra.mxu0 %v1095
        %1243 = vmatmul.f32.gmra.mxu0 %v1010
        %v1244 = vpop.f32.mrf.mxu0
        %v1245 = vadd.f32 0.0, %v1244
        %1246 = vmatmul.f32.gmra.mxu0 %v1013
        %v1247 = vpop.f32.mrf.mxu0
        %v1248 = vadd.f32 0.0, %v1247
        %1249 = vmatmul.f32.gmra.mxu0 %v1016
        %v1250 = vpop.f32.mrf.mxu0
        %v1251 = vadd.f32 0.0, %v1250
        %1252 = vmatmul.f32.gmra.mxu0 %v1019
        %v1253 = vpop.f32.mrf.mxu0
        %v1254 = vadd.f32 0.0, %v1253
        %1255 = vmatmul.f32.gmra.mxu0 %v1022
        %v1256 = vpop.f32.mrf.mxu0
        %v1257 = vadd.f32 0.0, %v1256
        %1258 = vmatmul.f32.gmra.mxu0 %v1025
        %v1259 = vpop.f32.mrf.mxu0
        %v1260 = vadd.f32 0.0, %v1259
        %1261 = vmatmul.f32.gmra.mxu0 %v1028
        %v1262 = vpop.f32.mrf.mxu0
        %v1263 = vadd.f32 0.0, %v1262
        %1264 = vmatmul.f32.gmra.mxu0 %v1031
        %v1265 = vpop.f32.mrf.mxu0
        %v1266 = vadd.f32 0.0, %v1265
        %1267 = vmatmul.f32.gmra.mxu0 %v1034
        %v1268 = vpop.f32.mrf.mxu0
        %v1269 = vadd.f32 0.0, %v1268
        %1270 = vmatmul.f32.gmra.mxu0 %v1037
        %v1271 = vpop.f32.mrf.mxu0
        %v1272 = vadd.f32 0.0, %v1271
        %1273 = vmatmul.f32.gmra.mxu0 %v1040
        %v1274 = vpop.f32.mrf.mxu0
        %v1275 = vadd.f32 0.0, %v1274
        %1276 = vmatmul.f32.gmra.mxu0 %v1043
        %v1277 = vpop.f32.mrf.mxu0
        %v1278 = vadd.f32 0.0, %v1277
        %1279 = vmatmul.f32.gmra.mxu0 %v1046
        %v1280 = vpop.f32.mrf.mxu0
        %v1281 = vadd.f32 0.0, %v1280
        %1282 = vmatmul.f32.gmra.mxu0 %v1049
        %v1283 = vpop.f32.mrf.mxu0
        %v1284 = vadd.f32 0.0, %v1283
        %1285 = vmatmul.f32.gmra.mxu0 %v1052
        %v1286 = vpop.f32.mrf.mxu0
        %v1287 = vadd.f32 0.0, %v1286
        %1288 = vmatmul.f32.gmra.mxu0 %v1055
        %v1289 = vpop.f32.mrf.mxu0
        %v1290 = vadd.f32 0.0, %v1289
        %1291 = vdwg.mxu0
        %v1292 = vmul.f32 %v1245, 0.088388346
        %v1293 = vmul.f32 %v1248, 0.088388346
        %v1294 = vmul.f32 %v1251, 0.088388346
        %v1295 = vmul.f32 %v1254, 0.088388346
        %v1296 = vmul.f32 %v1257, 0.088388346
        %v1297 = vmul.f32 %v1260, 0.088388346
        %v1298 = vmul.f32 %v1263, 0.088388346
        %v1299 = vmul.f32 %v1266, 0.088388346
        %v1300 = vmul.f32 %v1269, 0.088388346
        %v1301 = vmul.f32 %v1272, 0.088388346
        %v1302 = vmul.f32 %v1275, 0.088388346
        %v1303 = vmul.f32 %v1278, 0.088388346
        %v1304 = vmul.f32 %v1281, 0.088388346
        %v1305 = vmul.f32 %v1284, 0.088388346
        %v1306 = vmul.f32 %v1287, 0.088388346
        %v1307 = vmul.f32 %v1290, 0.088388346
        %1308 = vmax.xlane.f32.xlu0 %v1292
        %v1309 = vpop.xlane.xlu0 %1308
        %1310 = vmax.xlane.f32.xlu0 %v1293
        %v1311 = vpop.xlane.xlu0 %1310
        %1312 = vmax.xlane.f32.xlu0 %v1294
        %v1313 = vpop.xlane.xlu0 %1312
        %1314 = vmax.xlane.f32.xlu0 %v1295
        %v1315 = vpop.xlane.xlu0 %1314
        %1316 = vmax.xlane.f32.xlu0 %v1296
        %v1317 = vpop.xlane.xlu0 %1316
        %1318 = vmax.xlane.f32.xlu0 %v1297
        %v1319 = vpop.xlane.xlu0 %1318
        %1320 = vmax.xlane.f32.xlu0 %v1298
        %v1321 = vpop.xlane.xlu0 %1320
        %1322 = vmax.xlane.f32.xlu0 %v1299
        %v1323 = vpop.xlane.xlu0 %1322
        %1324 = vmax.xlane.f32.xlu0 %v1300
        %v1325 = vpop.xlane.xlu0 %1324
        %1326 = vmax.xlane.f32.xlu0 %v1301
        %v1327 = vpop.xlane.xlu0 %1326
        %1328 = vmax.xlane.f32.xlu0 %v1302
        %v1329 = vpop.xlane.xlu0 %1328
        %1330 = vmax.xlane.f32.xlu0 %v1303
        %v1331 = vpop.xlane.xlu0 %1330
        %1332 = vmax.xlane.f32.xlu0 %v1304
        %v1333 = vpop.xlane.xlu0 %1332
        %1334 = vmax.xlane.f32.xlu0 %v1305
        %v1335 = vpop.xlane.xlu0 %1334
        %1336 = vmax.xlane.f32.xlu0 %v1306
        %v1337 = vpop.xlane.xlu0 %1336
        %1338 = vmax.xlane.f32.xlu0 %v1307
        %v1339 = vpop.xlane.xlu0 %1338
        %v1340 = vsub.f32 %v1292, %v1309
        %v1341 = vsub.f32 %v1293, %v1311
        %v1342 = vsub.f32 %v1294, %v1313
        %v1343 = vsub.f32 %v1295, %v1315
        %v1344 = vsub.f32 %v1296, %v1317
        %v1345 = vsub.f32 %v1297, %v1319
        %v1346 = vsub.f32 %v1298, %v1321
        %v1347 = vsub.f32 %v1299, %v1323
        %v1348 = vsub.f32 %v1300, %v1325
        %v1349 = vsub.f32 %v1301, %v1327
        %v1350 = vsub.f32 %v1302, %v1329
        %v1351 = vsub.f32 %v1303, %v1331
        %v1352 = vsub.f32 %v1304, %v1333
        %v1353 = vsub.f32 %v1305, %v1335
        %v1354 = vsub.f32 %v1306, %v1337
        %v1355 = vsub.f32 %v1307, %v1339
        %v1356 = vmul.f32 %v1340, 1.442695
        %v1357 = vpow.pop %v1356
        %v1358 = vmul.f32 %v1341, 1.442695
        %v1359 = vpow.pop %v1358
        %v1360 = vmul.f32 %v1342, 1.442695
        %v1361 = vpow.pop %v1360
        %v1362 = vmul.f32 %v1343, 1.442695
        %v1363 = vpow.pop %v1362
        %v1364 = vmul.f32 %v1344, 1.442695
        %v1365 = vpow.pop %v1364
        %v1366 = vmul.f32 %v1345, 1.442695
        %v1367 = vpow.pop %v1366
        %v1368 = vmul.f32 %v1346, 1.442695
        %v1369 = vpow.pop %v1368
        %v1370 = vmul.f32 %v1347, 1.442695
        %v1371 = vpow.pop %v1370
        %v1372 = vmul.f32 %v1348, 1.442695
        %v1373 = vpow.pop %v1372
        %v1374 = vmul.f32 %v1349, 1.442695
        %v1375 = vpow.pop %v1374
        %v1376 = vmul.f32 %v1350, 1.442695
        %v1377 = vpow.pop %v1376
        %v1378 = vmul.f32 %v1351, 1.442695
        %v1379 = vpow.pop %v1378
        %v1380 = vmul.f32 %v1352, 1.442695
        %v1381 = vpow.pop %v1380
        %v1382 = vmul.f32 %v1353, 1.442695
        %v1383 = vpow.pop %v1382
        %v1384 = vmul.f32 %v1354, 1.442695
        %v1385 = vpow.pop %v1384
        %v1386 = vmul.f32 %v1355, 1.442695
        %v1387 = vpow.pop %v1386
        %1388 = vadd.xlane.f32.xlu0 %v1357
        %v1389 = vpop.xlane.xlu0 %1388
        %1390 = vadd.xlane.f32.xlu0 %v1359
        %v1391 = vpop.xlane.xlu0 %1390
        %1392 = vadd.xlane.f32.xlu0 %v1361
        %v1393 = vpop.xlane.xlu0 %1392
        %1394 = vadd.xlane.f32.xlu0 %v1363
        %v1395 = vpop.xlane.xlu0 %1394
        %1396 = vadd.xlane.f32.xlu0 %v1365
        %v1397 = vpop.xlane.xlu0 %1396
        %1398 = vadd.xlane.f32.xlu0 %v1367
        %v1399 = vpop.xlane.xlu0 %1398
        %1400 = vadd.xlane.f32.xlu0 %v1369
        %v1401 = vpop.xlane.xlu0 %1400
        %1402 = vadd.xlane.f32.xlu0 %v1371
        %v1403 = vpop.xlane.xlu0 %1402
        %1404 = vadd.xlane.f32.xlu0 %v1373
        %v1405 = vpop.xlane.xlu0 %1404
        %1406 = vadd.xlane.f32.xlu0 %v1375
        %v1407 = vpop.xlane.xlu0 %1406
        %1408 = vadd.xlane.f32.xlu0 %v1377
        %v1409 = vpop.xlane.xlu0 %1408
        %1410 = vadd.xlane.f32.xlu0 %v1379
        %v1411 = vpop.xlane.xlu0 %1410
        %1412 = vadd.xlane.f32.xlu0 %v1381
        %v1413 = vpop.xlane.xlu0 %1412
        %1414 = vadd.xlane.f32.xlu0 %v1383
        %v1415 = vpop.xlane.xlu0 %1414
        %1416 = vadd.xlane.f32.xlu0 %v1385
        %v1417 = vpop.xlane.xlu0 %1416
        %1418 = vadd.xlane.f32.xlu0 %v1387
        %v1419 = vpop.xlane.xlu0 %1418
        %v1420 = vrcp.pop %v1389
        %v1421 = vmul.f32 %v1389, %v1420
        %v1422 = vsub.f32 1.0, %v1421
        %v1423 = vmul.f32 %v1420, %v1422
        %v1424 = vadd.f32 %v1420, %v1423
        %vm1425 = vweird.f32 %v1389
        %vm1426 = vweird.f32 %v1420
        %vm1427 = vmor %vm1425, %vm1426
        %v1428 = vsel %vm1427, %v1420, %v1424
        %v1429 = vand.u32 2147483647, %v1389
        %vm1430 = vcmp.eq.f32.partialorder %v1429, 8.507059e+37
        %v1431 = vand.u32 %v1389, 2147483648
        %v1432 = vor.u32 1.1754944e-38, %v1431
        %v1433 = vsel %vm1430, %v1432, %v1428
        %v1434 = vmul.f32 %v1357, %v1433
        %v1435 = vrcp.pop %v1391
        %v1436 = vmul.f32 %v1391, %v1435
        %v1437 = vsub.f32 1.0, %v1436
        %v1438 = vmul.f32 %v1435, %v1437
        %v1439 = vadd.f32 %v1435, %v1438
        %vm1440 = vweird.f32 %v1391
        %vm1441 = vweird.f32 %v1435
        %vm1442 = vmor %vm1440, %vm1441
        %v1443 = vsel %vm1442, %v1435, %v1439
        %v1444 = vand.u32 2147483647, %v1391
        %vm1445 = vcmp.eq.f32.partialorder %v1444, 8.507059e+37
        %v1446 = vand.u32 %v1391, 2147483648
        %v1447 = vor.u32 1.1754944e-38, %v1446
        %v1448 = vsel %vm1445, %v1447, %v1443
        %v1449 = vmul.f32 %v1359, %v1448
        %v1450 = vrcp.pop %v1393
        %v1451 = vmul.f32 %v1393, %v1450
        %v1452 = vsub.f32 1.0, %v1451
        %v1453 = vmul.f32 %v1450, %v1452
        %v1454 = vadd.f32 %v1450, %v1453
        %vm1455 = vweird.f32 %v1393
        %vm1456 = vweird.f32 %v1450
        %vm1457 = vmor %vm1455, %vm1456
        %v1458 = vsel %vm1457, %v1450, %v1454
        %v1459 = vand.u32 2147483647, %v1393
        %vm1460 = vcmp.eq.f32.partialorder %v1459, 8.507059e+37
        %v1461 = vand.u32 %v1393, 2147483648
        %v1462 = vor.u32 1.1754944e-38, %v1461
        %v1463 = vsel %vm1460, %v1462, %v1458
        %v1464 = vmul.f32 %v1361, %v1463
        %v1465 = vrcp.pop %v1395
        %v1466 = vmul.f32 %v1395, %v1465
        %v1467 = vsub.f32 1.0, %v1466
        %v1468 = vmul.f32 %v1465, %v1467
        %v1469 = vadd.f32 %v1465, %v1468
        %vm1470 = vweird.f32 %v1395
        %vm1471 = vweird.f32 %v1465
        %vm1472 = vmor %vm1470, %vm1471
        %v1473 = vsel %vm1472, %v1465, %v1469
        %v1474 = vand.u32 2147483647, %v1395
        %vm1475 = vcmp.eq.f32.partialorder %v1474, 8.507059e+37
        %v1476 = vand.u32 %v1395, 2147483648
        %v1477 = vor.u32 1.1754944e-38, %v1476
        %v1478 = vsel %vm1475, %v1477, %v1473
        %v1479 = vmul.f32 %v1363, %v1478
        %v1480 = vrcp.pop %v1397
        %v1481 = vmul.f32 %v1397, %v1480
        %v1482 = vsub.f32 1.0, %v1481
        %v1483 = vmul.f32 %v1480, %v1482
        %v1484 = vadd.f32 %v1480, %v1483
        %vm1485 = vweird.f32 %v1397
        %vm1486 = vweird.f32 %v1480
        %vm1487 = vmor %vm1485, %vm1486
        %v1488 = vsel %vm1487, %v1480, %v1484
        %v1489 = vand.u32 2147483647, %v1397
        %vm1490 = vcmp.eq.f32.partialorder %v1489, 8.507059e+37
        %v1491 = vand.u32 %v1397, 2147483648
        %v1492 = vor.u32 1.1754944e-38, %v1491
        %v1493 = vsel %vm1490, %v1492, %v1488
        %v1494 = vmul.f32 %v1365, %v1493
        %v1495 = vrcp.pop %v1399
        %v1496 = vmul.f32 %v1399, %v1495
        %v1497 = vsub.f32 1.0, %v1496
        %v1498 = vmul.f32 %v1495, %v1497
        %v1499 = vadd.f32 %v1495, %v1498
        %vm1500 = vweird.f32 %v1399
        %vm1501 = vweird.f32 %v1495
        %vm1502 = vmor %vm1500, %vm1501
        %v1503 = vsel %vm1502, %v1495, %v1499
        %v1504 = vand.u32 2147483647, %v1399
        %vm1505 = vcmp.eq.f32.partialorder %v1504, 8.507059e+37
        %v1506 = vand.u32 %v1399, 2147483648
        %v1507 = vor.u32 1.1754944e-38, %v1506
        %v1508 = vsel %vm1505, %v1507, %v1503
        %v1509 = vmul.f32 %v1367, %v1508
        %v1510 = vrcp.pop %v1401
        %v1511 = vmul.f32 %v1401, %v1510
        %v1512 = vsub.f32 1.0, %v1511
        %v1513 = vmul.f32 %v1510, %v1512
        %v1514 = vadd.f32 %v1510, %v1513
        %vm1515 = vweird.f32 %v1401
        %vm1516 = vweird.f32 %v1510
        %vm1517 = vmor %vm1515, %vm1516
        %v1518 = vsel %vm1517, %v1510, %v1514
        %v1519 = vand.u32 2147483647, %v1401
        %vm1520 = vcmp.eq.f32.partialorder %v1519, 8.507059e+37
        %v1521 = vand.u32 %v1401, 2147483648
        %v1522 = vor.u32 1.1754944e-38, %v1521
        %v1523 = vsel %vm1520, %v1522, %v1518
        %v1524 = vmul.f32 %v1369, %v1523
        %v1525 = vrcp.pop %v1403
        %v1526 = vmul.f32 %v1403, %v1525
        %v1527 = vsub.f32 1.0, %v1526
        %v1528 = vmul.f32 %v1525, %v1527
        %v1529 = vadd.f32 %v1525, %v1528
        %vm1530 = vweird.f32 %v1403
        %vm1531 = vweird.f32 %v1525
        %vm1532 = vmor %vm1530, %vm1531
        %v1533 = vsel %vm1532, %v1525, %v1529
        %v1534 = vand.u32 2147483647, %v1403
        %vm1535 = vcmp.eq.f32.partialorder %v1534, 8.507059e+37
        %v1536 = vand.u32 %v1403, 2147483648
        %v1537 = vor.u32 1.1754944e-38, %v1536
        %v1538 = vsel %vm1535, %v1537, %v1533
        %v1539 = vmul.f32 %v1371, %v1538
        %v1540 = vrcp.pop %v1405
        %v1541 = vmul.f32 %v1405, %v1540
        %v1542 = vsub.f32 1.0, %v1541
        %v1543 = vmul.f32 %v1540, %v1542
        %v1544 = vadd.f32 %v1540, %v1543
        %vm1545 = vweird.f32 %v1405
        %vm1546 = vweird.f32 %v1540
        %vm1547 = vmor %vm1545, %vm1546
        %v1548 = vsel %vm1547, %v1540, %v1544
        %v1549 = vand.u32 2147483647, %v1405
        %vm1550 = vcmp.eq.f32.partialorder %v1549, 8.507059e+37
        %v1551 = vand.u32 %v1405, 2147483648
        %v1552 = vor.u32 1.1754944e-38, %v1551
        %v1553 = vsel %vm1550, %v1552, %v1548
        %v1554 = vmul.f32 %v1373, %v1553
        %v1555 = vrcp.pop %v1407
        %v1556 = vmul.f32 %v1407, %v1555
        %v1557 = vsub.f32 1.0, %v1556
        %v1558 = vmul.f32 %v1555, %v1557
        %v1559 = vadd.f32 %v1555, %v1558
        %vm1560 = vweird.f32 %v1407
        %vm1561 = vweird.f32 %v1555
        %vm1562 = vmor %vm1560, %vm1561
        %v1563 = vsel %vm1562, %v1555, %v1559
        %v1564 = vand.u32 2147483647, %v1407
        %vm1565 = vcmp.eq.f32.partialorder %v1564, 8.507059e+37
        %v1566 = vand.u32 %v1407, 2147483648
        %v1567 = vor.u32 1.1754944e-38, %v1566
        %v1568 = vsel %vm1565, %v1567, %v1563
        %v1569 = vmul.f32 %v1375, %v1568
        %v1570 = vrcp.pop %v1409
        %v1571 = vmul.f32 %v1409, %v1570
        %v1572 = vsub.f32 1.0, %v1571
        %v1573 = vmul.f32 %v1570, %v1572
        %v1574 = vadd.f32 %v1570, %v1573
        %vm1575 = vweird.f32 %v1409
        %vm1576 = vweird.f32 %v1570
        %vm1577 = vmor %vm1575, %vm1576
        %v1578 = vsel %vm1577, %v1570, %v1574
        %v1579 = vand.u32 2147483647, %v1409
        %vm1580 = vcmp.eq.f32.partialorder %v1579, 8.507059e+37
        %v1581 = vand.u32 %v1409, 2147483648
        %v1582 = vor.u32 1.1754944e-38, %v1581
        %v1583 = vsel %vm1580, %v1582, %v1578
        %v1584 = vmul.f32 %v1377, %v1583
        %v1585 = vrcp.pop %v1411
        %v1586 = vmul.f32 %v1411, %v1585
        %v1587 = vsub.f32 1.0, %v1586
        %v1588 = vmul.f32 %v1585, %v1587
        %v1589 = vadd.f32 %v1585, %v1588
        %vm1590 = vweird.f32 %v1411
        %vm1591 = vweird.f32 %v1585
        %vm1592 = vmor %vm1590, %vm1591
        %v1593 = vsel %vm1592, %v1585, %v1589
        %v1594 = vand.u32 2147483647, %v1411
        %vm1595 = vcmp.eq.f32.partialorder %v1594, 8.507059e+37
        %v1596 = vand.u32 %v1411, 2147483648
        %v1597 = vor.u32 1.1754944e-38, %v1596
        %v1598 = vsel %vm1595, %v1597, %v1593
        %v1599 = vmul.f32 %v1379, %v1598
        %v1600 = vrcp.pop %v1413
        %v1601 = vmul.f32 %v1413, %v1600
        %v1602 = vsub.f32 1.0, %v1601
        %v1603 = vmul.f32 %v1600, %v1602
        %v1604 = vadd.f32 %v1600, %v1603
        %vm1605 = vweird.f32 %v1413
        %vm1606 = vweird.f32 %v1600
        %vm1607 = vmor %vm1605, %vm1606
        %v1608 = vsel %vm1607, %v1600, %v1604
        %v1609 = vand.u32 2147483647, %v1413
        %vm1610 = vcmp.eq.f32.partialorder %v1609, 8.507059e+37
        %v1611 = vand.u32 %v1413, 2147483648
        %v1612 = vor.u32 1.1754944e-38, %v1611
        %v1613 = vsel %vm1610, %v1612, %v1608
        %v1614 = vmul.f32 %v1381, %v1613
        %v1615 = vrcp.pop %v1415
        %v1616 = vmul.f32 %v1415, %v1615
        %v1617 = vsub.f32 1.0, %v1616
        %v1618 = vmul.f32 %v1615, %v1617
        %v1619 = vadd.f32 %v1615, %v1618
        %vm1620 = vweird.f32 %v1415
        %vm1621 = vweird.f32 %v1615
        %vm1622 = vmor %vm1620, %vm1621
        %v1623 = vsel %vm1622, %v1615, %v1619
        %v1624 = vand.u32 2147483647, %v1415
        %vm1625 = vcmp.eq.f32.partialorder %v1624, 8.507059e+37
        %v1626 = vand.u32 %v1415, 2147483648
        %v1627 = vor.u32 1.1754944e-38, %v1626
        %v1628 = vsel %vm1625, %v1627, %v1623
        %v1629 = vmul.f32 %v1383, %v1628
        %v1630 = vrcp.pop %v1417
        %v1631 = vmul.f32 %v1417, %v1630
        %v1632 = vsub.f32 1.0, %v1631
        %v1633 = vmul.f32 %v1630, %v1632
        %v1634 = vadd.f32 %v1630, %v1633
        %vm1635 = vweird.f32 %v1417
        %vm1636 = vweird.f32 %v1630
        %vm1637 = vmor %vm1635, %vm1636
        %v1638 = vsel %vm1637, %v1630, %v1634
        %v1639 = vand.u32 2147483647, %v1417
        %vm1640 = vcmp.eq.f32.partialorder %v1639, 8.507059e+37
        %v1641 = vand.u32 %v1417, 2147483648
        %v1642 = vor.u32 1.1754944e-38, %v1641
        %v1643 = vsel %vm1640, %v1642, %v1638
        %v1644 = vmul.f32 %v1385, %v1643
        %v1645 = vrcp.pop %v1419
        %v1646 = vmul.f32 %v1419, %v1645
        %v1647 = vsub.f32 1.0, %v1646
        %v1648 = vmul.f32 %v1645, %v1647
        %v1649 = vadd.f32 %v1645, %v1648
        %vm1650 = vweird.f32 %v1419
        %vm1651 = vweird.f32 %v1645
        %vm1652 = vmor %vm1650, %vm1651
        %v1653 = vsel %vm1652, %v1645, %v1649
        %v1654 = vand.u32 2147483647, %v1419
        %vm1655 = vcmp.eq.f32.partialorder %v1654, 8.507059e+37
        %v1656 = vand.u32 %v1419, 2147483648
        %v1657 = vor.u32 1.1754944e-38, %v1656
        %v1658 = vsel %vm1655, %v1657, %v1653
        %v1659 = vmul.f32 %v1387, %v1658
        %1660 = vmatpush.msra.mxu0 %v1225
        %1661 = vmatpush.msra.mxu0 %v1222
        %1662 = vmatpush.msra.mxu0 %v1219
        %1663 = vmatpush.msra.mxu0 %v1216
        %1664 = vmatpush.msra.mxu0 %v1213
        %1665 = vmatpush.msra.mxu0 %v1210
        %1666 = vmatpush.msra.mxu0 %v1207
        %1667 = vmatpush.msra.mxu0 %v1204
        %1668 = vmatpush.msra.mxu0 %v1201
        %1669 = vmatpush.msra.mxu0 %v1198
        %1670 = vmatpush.msra.mxu0 %v1195
        %1671 = vmatpush.msra.mxu0 %v1192
        %1672 = vmatpush.msra.mxu0 %v1189
        %1673 = vmatpush.msra.mxu0 %v1186
        %1674 = vmatpush.msra.mxu0 %v1183
        %1675 = vmatpush.msra.mxu0 %v1180
        %1676 = vmatmul.f32.gmra.mxu0 %v1434
        %v1677 = vpop.f32.mrf.mxu0
        %v1678 = vadd.f32 %v589, %v1677
        %1679 = vmatmul.f32.gmra.mxu0 %v1449
        %v1680 = vpop.f32.mrf.mxu0
        %v1681 = vadd.f32 %v590, %v1680
        %1682 = vmatmul.f32.gmra.mxu0 %v1464
        %v1683 = vpop.f32.mrf.mxu0
        %v1684 = vadd.f32 %v591, %v1683
        %1685 = vmatmul.f32.gmra.mxu0 %v1479
        %v1686 = vpop.f32.mrf.mxu0
        %v1687 = vadd.f32 %v592, %v1686
        %1688 = vmatmul.f32.gmra.mxu0 %v1494
        %v1689 = vpop.f32.mrf.mxu0
        %v1690 = vadd.f32 %v593, %v1689
        %1691 = vmatmul.f32.gmra.mxu0 %v1509
        %v1692 = vpop.f32.mrf.mxu0
        %v1693 = vadd.f32 %v594, %v1692
        %1694 = vmatmul.f32.gmra.mxu0 %v1524
        %v1695 = vpop.f32.mrf.mxu0
        %v1696 = vadd.f32 %v595, %v1695
        %1697 = vmatmul.f32.gmra.mxu0 %v1539
        %v1698 = vpop.f32.mrf.mxu0
        %v1699 = vadd.f32 %v596, %v1698
        %1700 = vmatmul.f32.gmra.mxu0 %v1554
        %v1701 = vpop.f32.mrf.mxu0
        %v1702 = vadd.f32 %v597, %v1701
        %1703 = vmatmul.f32.gmra.mxu0 %v1569
        %v1704 = vpop.f32.mrf.mxu0
        %v1705 = vadd.f32 %v598, %v1704
        %1706 = vmatmul.f32.gmra.mxu0 %v1584
        %v1707 = vpop.f32.mrf.mxu0
        %v1708 = vadd.f32 %v599, %v1707
        %1709 = vmatmul.f32.gmra.mxu0 %v1599
        %v1710 = vpop.f32.mrf.mxu0
        %v1711 = vadd.f32 %v600, %v1710
        %1712 = vmatmul.f32.gmra.mxu0 %v1614
        %v1713 = vpop.f32.mrf.mxu0
        %v1714 = vadd.f32 %v601, %v1713
        %1715 = vmatmul.f32.gmra.mxu0 %v1629
        %v1716 = vpop.f32.mrf.mxu0
        %v1717 = vadd.f32 %v602, %v1716
        %1718 = vmatmul.f32.gmra.mxu0 %v1644
        %v1719 = vpop.f32.mrf.mxu0
        %v1720 = vadd.f32 %v603, %v1719
        %1721 = vmatmul.f32.gmra.mxu0 %v1659
        %v1722 = vpop.f32.mrf.mxu0
        %v1723 = vadd.f32 %v604, %v1722
        %1724 = vdwg.mxu0
        %v1725 = vld [vmem:[%s9] sm:$0x1]
        %v1726 = vld [vmem:[#allocation6] sm:$0x1]
        %1727 = vadd.xlane.f32.xlu0 %v1678
        %v1728 = vpop.xlane.xlu0 %1727
        %1729 = vadd.xlane.f32.xlu0 %v1681
        %v1730 = vpop.xlane.xlu0 %1729
        %1731 = vadd.xlane.f32.xlu0 %v1684
        %v1732 = vpop.xlane.xlu0 %1731
        %1733 = vadd.xlane.f32.xlu0 %v1687
        %v1734 = vpop.xlane.xlu0 %1733
        %1735 = vadd.xlane.f32.xlu0 %v1690
        %v1736 = vpop.xlane.xlu0 %1735
        %1737 = vadd.xlane.f32.xlu0 %v1693
        %v1738 = vpop.xlane.xlu0 %1737
        %1739 = vadd.xlane.f32.xlu0 %v1696
        %v1740 = vpop.xlane.xlu0 %1739
        %1741 = vadd.xlane.f32.xlu0 %v1699
        %v1742 = vpop.xlane.xlu0 %1741
        %1743 = vadd.xlane.f32.xlu0 %v1702
        %v1744 = vpop.xlane.xlu0 %1743
        %1745 = vadd.xlane.f32.xlu0 %v1705
        %v1746 = vpop.xlane.xlu0 %1745
        %1747 = vadd.xlane.f32.xlu0 %v1708
        %v1748 = vpop.xlane.xlu0 %1747
        %1749 = vadd.xlane.f32.xlu0 %v1711
        %v1750 = vpop.xlane.xlu0 %1749
        %1751 = vadd.xlane.f32.xlu0 %v1714
        %v1752 = vpop.xlane.xlu0 %1751
        %1753 = vadd.xlane.f32.xlu0 %v1717
        %v1754 = vpop.xlane.xlu0 %1753
        %1755 = vadd.xlane.f32.xlu0 %v1720
        %v1756 = vpop.xlane.xlu0 %1755
        %1757 = vadd.xlane.f32.xlu0 %v1723
        %v1758 = vpop.xlane.xlu0 %1757
        %v1759 = vmul.f32 %v1728, %v645
        %v1760 = vmul.f32 %v1730, %v645
        %v1761 = vmul.f32 %v1732, %v645
        %v1762 = vmul.f32 %v1734, %v645
        %v1763 = vmul.f32 %v1736, %v645
        %v1764 = vmul.f32 %v1738, %v645
        %v1765 = vmul.f32 %v1740, %v645
        %v1766 = vmul.f32 %v1742, %v645
        %v1767 = vmul.f32 %v1744, %v645
        %v1768 = vmul.f32 %v1746, %v645
        %v1769 = vmul.f32 %v1748, %v645
        %v1770 = vmul.f32 %v1750, %v645
        %v1771 = vmul.f32 %v1752, %v645
        %v1772 = vmul.f32 %v1754, %v645
        %v1773 = vmul.f32 %v1756, %v645
        %v1774 = vmul.f32 %v1758, %v645
        %v1775 = vsub.f32 %v1678, %v1759
        %v1776 = vsub.f32 %v1681, %v1760
        %v1777 = vsub.f32 %v1684, %v1761
        %v1778 = vsub.f32 %v1687, %v1762
        %v1779 = vsub.f32 %v1690, %v1763
        %v1780 = vsub.f32 %v1693, %v1764
        %v1781 = vsub.f32 %v1696, %v1765
        %v1782 = vsub.f32 %v1699, %v1766
        %v1783 = vsub.f32 %v1702, %v1767
        %v1784 = vsub.f32 %v1705, %v1768
        %v1785 = vsub.f32 %v1708, %v1769
        %v1786 = vsub.f32 %v1711, %v1770
        %v1787 = vsub.f32 %v1714, %v1771
        %v1788 = vsub.f32 %v1717, %v1772
        %v1789 = vsub.f32 %v1720, %v1773
        %v1790 = vsub.f32 %v1723, %v1774
        %v1791 = vmul.f32 %v1775, %v1775
        %v1792 = vmul.f32 %v1776, %v1776
        %v1793 = vmul.f32 %v1777, %v1777
        %v1794 = vmul.f32 %v1778, %v1778
        %v1795 = vmul.f32 %v1779, %v1779
        %v1796 = vmul.f32 %v1780, %v1780
        %v1797 = vmul.f32 %v1781, %v1781
        %v1798 = vmul.f32 %v1782, %v1782
        %v1799 = vmul.f32 %v1783, %v1783
        %v1800 = vmul.f32 %v1784, %v1784
        %v1801 = vmul.f32 %v1785, %v1785
        %v1802 = vmul.f32 %v1786, %v1786
        %v1803 = vmul.f32 %v1787, %v1787
        %v1804 = vmul.f32 %v1788, %v1788
        %v1805 = vmul.f32 %v1789, %v1789
        %v1806 = vmul.f32 %v1790, %v1790
        %1807 = vadd.xlane.f32.xlu0 %v1791
        %v1808 = vpop.xlane.xlu0 %1807
        %1809 = vadd.xlane.f32.xlu0 %v1792
        %v1810 = vpop.xlane.xlu0 %1809
        %1811 = vadd.xlane.f32.xlu0 %v1793
        %v1812 = vpop.xlane.xlu0 %1811
        %1813 = vadd.xlane.f32.xlu0 %v1794
        %v1814 = vpop.xlane.xlu0 %1813
        %1815 = vadd.xlane.f32.xlu0 %v1795
        %v1816 = vpop.xlane.xlu0 %1815
        %1817 = vadd.xlane.f32.xlu0 %v1796
        %v1818 = vpop.xlane.xlu0 %1817
        %1819 = vadd.xlane.f32.xlu0 %v1797
        %v1820 = vpop.xlane.xlu0 %1819
        %1821 = vadd.xlane.f32.xlu0 %v1798
        %v1822 = vpop.xlane.xlu0 %1821
        %1823 = vadd.xlane.f32.xlu0 %v1799
        %v1824 = vpop.xlane.xlu0 %1823
        %1825 = vadd.xlane.f32.xlu0 %v1800
        %v1826 = vpop.xlane.xlu0 %1825
        %1827 = vadd.xlane.f32.xlu0 %v1801
        %v1828 = vpop.xlane.xlu0 %1827
        %1829 = vadd.xlane.f32.xlu0 %v1802
        %v1830 = vpop.xlane.xlu0 %1829
        %1831 = vadd.xlane.f32.xlu0 %v1803
        %v1832 = vpop.xlane.xlu0 %1831
        %1833 = vadd.xlane.f32.xlu0 %v1804
        %v1834 = vpop.xlane.xlu0 %1833
        %1835 = vadd.xlane.f32.xlu0 %v1805
        %v1836 = vpop.xlane.xlu0 %1835
        %1837 = vadd.xlane.f32.xlu0 %v1806
        %v1838 = vpop.xlane.xlu0 %1837
        %v1839 = vmul.f32 %v1808, %v645
        %v1840 = vmul.f32 %v1810, %v645
        %v1841 = vmul.f32 %v1812, %v645
        %v1842 = vmul.f32 %v1814, %v645
        %v1843 = vmul.f32 %v1816, %v645
        %v1844 = vmul.f32 %v1818, %v645
        %v1845 = vmul.f32 %v1820, %v645
        %v1846 = vmul.f32 %v1822, %v645
        %v1847 = vmul.f32 %v1824, %v645
        %v1848 = vmul.f32 %v1826, %v645
        %v1849 = vmul.f32 %v1828, %v645
        %v1850 = vmul.f32 %v1830, %v645
        %v1851 = vmul.f32 %v1832, %v645
        %v1852 = vmul.f32 %v1834, %v645
        %v1853 = vmul.f32 %v1836, %v645
        %v1854 = vmul.f32 %v1838, %v645
        %v1855 = vadd.f32 %v1839, 1e-05
        %v1856 = vadd.f32 %v1840, 1e-05
        %v1857 = vadd.f32 %v1841, 1e-05
        %v1858 = vadd.f32 %v1842, 1e-05
        %v1859 = vadd.f32 %v1843, 1e-05
        %v1860 = vadd.f32 %v1844, 1e-05
        %v1861 = vadd.f32 %v1845, 1e-05
        %v1862 = vadd.f32 %v1846, 1e-05
        %v1863 = vadd.f32 %v1847, 1e-05
        %v1864 = vadd.f32 %v1848, 1e-05
        %v1865 = vadd.f32 %v1849, 1e-05
        %v1866 = vadd.f32 %v1850, 1e-05
        %v1867 = vadd.f32 %v1851, 1e-05
        %v1868 = vadd.f32 %v1852, 1e-05
        %v1869 = vadd.f32 %v1853, 1e-05
        %v1870 = vadd.f32 %v1854, 1e-05
        %v1871 = vrsqrt.pop %v1855
        %v1872 = vmul.f32 %v1871, %v1855
        %v1873 = vmul.f32 %v1872, %v1871
        %v1874 = vmul.f32 0.5, %v1873
        %v1875 = vsub.f32 1.5, %v1874
        %v1876 = vmul.f32 %v1871, %v1875
        %vm1877 = vweird.f32 %v1855
        %vm1878 = vweird.f32 %v1871
        %vm1879 = vmor %vm1877, %vm1878
        %v1880 = vsel %vm1879, %v1871, %v1876
        %v1881 = vrsqrt.pop %v1856
        %v1882 = vmul.f32 %v1881, %v1856
        %v1883 = vmul.f32 %v1882, %v1881
        %v1884 = vmul.f32 0.5, %v1883
        %v1885 = vsub.f32 1.5, %v1884
        %v1886 = vmul.f32 %v1881, %v1885
        %vm1887 = vweird.f32 %v1856
        %vm1888 = vweird.f32 %v1881
        %vm1889 = vmor %vm1887, %vm1888
        %v1890 = vsel %vm1889, %v1881, %v1886
        %v1891 = vrsqrt.pop %v1857
        %v1892 = vmul.f32 %v1891, %v1857
        %v1893 = vmul.f32 %v1892, %v1891
        %v1894 = vmul.f32 0.5, %v1893
        %v1895 = vsub.f32 1.5, %v1894
        %v1896 = vmul.f32 %v1891, %v1895
        %vm1897 = vweird.f32 %v1857
        %vm1898 = vweird.f32 %v1891
        %vm1899 = vmor %vm1897, %vm1898
        %v1900 = vsel %vm1899, %v1891, %v1896
        %v1901 = vrsqrt.pop %v1858
        %v1902 = vmul.f32 %v1901, %v1858
        %v1903 = vmul.f32 %v1902, %v1901
        %v1904 = vmul.f32 0.5, %v1903
        %v1905 = vsub.f32 1.5, %v1904
        %v1906 = vmul.f32 %v1901, %v1905
        %vm1907 = vweird.f32 %v1858
        %vm1908 = vweird.f32 %v1901
        %vm1909 = vmor %vm1907, %vm1908
        %v1910 = vsel %vm1909, %v1901, %v1906
        %v1911 = vrsqrt.pop %v1859
        %v1912 = vmul.f32 %v1911, %v1859
        %v1913 = vmul.f32 %v1912, %v1911
        %v1914 = vmul.f32 0.5, %v1913
        %v1915 = vsub.f32 1.5, %v1914
        %v1916 = vmul.f32 %v1911, %v1915
        %vm1917 = vweird.f32 %v1859
        %vm1918 = vweird.f32 %v1911
        %vm1919 = vmor %vm1917, %vm1918
        %v1920 = vsel %vm1919, %v1911, %v1916
        %v1921 = vrsqrt.pop %v1860
        %v1922 = vmul.f32 %v1921, %v1860
        %v1923 = vmul.f32 %v1922, %v1921
        %v1924 = vmul.f32 0.5, %v1923
        %v1925 = vsub.f32 1.5, %v1924
        %v1926 = vmul.f32 %v1921, %v1925
        %vm1927 = vweird.f32 %v1860
        %vm1928 = vweird.f32 %v1921
        %vm1929 = vmor %vm1927, %vm1928
        %v1930 = vsel %vm1929, %v1921, %v1926
        %v1931 = vrsqrt.pop %v1861
        %v1932 = vmul.f32 %v1931, %v1861
        %v1933 = vmul.f32 %v1932, %v1931
        %v1934 = vmul.f32 0.5, %v1933
        %v1935 = vsub.f32 1.5, %v1934
        %v1936 = vmul.f32 %v1931, %v1935
        %vm1937 = vweird.f32 %v1861
        %vm1938 = vweird.f32 %v1931
        %vm1939 = vmor %vm1937, %vm1938
        %v1940 = vsel %vm1939, %v1931, %v1936
        %v1941 = vrsqrt.pop %v1862
        %v1942 = vmul.f32 %v1941, %v1862
        %v1943 = vmul.f32 %v1942, %v1941
        %v1944 = vmul.f32 0.5, %v1943
        %v1945 = vsub.f32 1.5, %v1944
        %v1946 = vmul.f32 %v1941, %v1945
        %vm1947 = vweird.f32 %v1862
        %vm1948 = vweird.f32 %v1941
        %vm1949 = vmor %vm1947, %vm1948
        %v1950 = vsel %vm1949, %v1941, %v1946
        %v1951 = vrsqrt.pop %v1863
        %v1952 = vmul.f32 %v1951, %v1863
        %v1953 = vmul.f32 %v1952, %v1951
        %v1954 = vmul.f32 0.5, %v1953
        %v1955 = vsub.f32 1.5, %v1954
        %v1956 = vmul.f32 %v1951, %v1955
        %vm1957 = vweird.f32 %v1863
        %vm1958 = vweird.f32 %v1951
        %vm1959 = vmor %vm1957, %vm1958
        %v1960 = vsel %vm1959, %v1951, %v1956
        %v1961 = vrsqrt.pop %v1864
        %v1962 = vmul.f32 %v1961, %v1864
        %v1963 = vmul.f32 %v1962, %v1961
        %v1964 = vmul.f32 0.5, %v1963
        %v1965 = vsub.f32 1.5, %v1964
        %v1966 = vmul.f32 %v1961, %v1965
        %vm1967 = vweird.f32 %v1864
        %vm1968 = vweird.f32 %v1961
        %vm1969 = vmor %vm1967, %vm1968
        %v1970 = vsel %vm1969, %v1961, %v1966
        %v1971 = vrsqrt.pop %v1865
        %v1972 = vmul.f32 %v1971, %v1865
        %v1973 = vmul.f32 %v1972, %v1971
        %v1974 = vmul.f32 0.5, %v1973
        %v1975 = vsub.f32 1.5, %v1974
        %v1976 = vmul.f32 %v1971, %v1975
        %vm1977 = vweird.f32 %v1865
        %vm1978 = vweird.f32 %v1971
        %vm1979 = vmor %vm1977, %vm1978
        %v1980 = vsel %vm1979, %v1971, %v1976
        %v1981 = vrsqrt.pop %v1866
        %v1982 = vmul.f32 %v1981, %v1866
        %v1983 = vmul.f32 %v1982, %v1981
        %v1984 = vmul.f32 0.5, %v1983
        %v1985 = vsub.f32 1.5, %v1984
        %v1986 = vmul.f32 %v1981, %v1985
        %vm1987 = vweird.f32 %v1866
        %vm1988 = vweird.f32 %v1981
        %vm1989 = vmor %vm1987, %vm1988
        %v1990 = vsel %vm1989, %v1981, %v1986
        %v1991 = vrsqrt.pop %v1867
        %v1992 = vmul.f32 %v1991, %v1867
        %v1993 = vmul.f32 %v1992, %v1991
        %v1994 = vmul.f32 0.5, %v1993
        %v1995 = vsub.f32 1.5, %v1994
        %v1996 = vmul.f32 %v1991, %v1995
        %vm1997 = vweird.f32 %v1867
        %vm1998 = vweird.f32 %v1991
        %vm1999 = vmor %vm1997, %vm1998
        %v2000 = vsel %vm1999, %v1991, %v1996
        %v2001 = vrsqrt.pop %v1868
        %v2002 = vmul.f32 %v2001, %v1868
        %v2003 = vmul.f32 %v2002, %v2001
        %v2004 = vmul.f32 0.5, %v2003
        %v2005 = vsub.f32 1.5, %v2004
        %v2006 = vmul.f32 %v2001, %v2005
        %vm2007 = vweird.f32 %v1868
        %vm2008 = vweird.f32 %v2001
        %vm2009 = vmor %vm2007, %vm2008
        %v2010 = vsel %vm2009, %v2001, %v2006
        %v2011 = vrsqrt.pop %v1869
        %v2012 = vmul.f32 %v2011, %v1869
        %v2013 = vmul.f32 %v2012, %v2011
        %v2014 = vmul.f32 0.5, %v2013
        %v2015 = vsub.f32 1.5, %v2014
        %v2016 = vmul.f32 %v2011, %v2015
        %vm2017 = vweird.f32 %v1869
        %vm2018 = vweird.f32 %v2011
        %vm2019 = vmor %vm2017, %vm2018
        %v2020 = vsel %vm2019, %v2011, %v2016
        %v2021 = vrsqrt.pop %v1870
        %v2022 = vmul.f32 %v2021, %v1870
        %v2023 = vmul.f32 %v2022, %v2021
        %v2024 = vmul.f32 0.5, %v2023
        %v2025 = vsub.f32 1.5, %v2024
        %v2026 = vmul.f32 %v2021, %v2025
        %vm2027 = vweird.f32 %v1870
        %vm2028 = vweird.f32 %v2021
        %vm2029 = vmor %vm2027, %vm2028
        %v2030 = vsel %vm2029, %v2021, %v2026
        %v2031 = vmul.f32 %v1775, %v1880
        %v2032 = vmul.f32 %v1776, %v1890
        %v2033 = vmul.f32 %v1777, %v1900
        %v2034 = vmul.f32 %v1778, %v1910
        %v2035 = vmul.f32 %v1779, %v1920
        %v2036 = vmul.f32 %v1780, %v1930
        %v2037 = vmul.f32 %v1781, %v1940
        %v2038 = vmul.f32 %v1782, %v1950
        %v2039 = vmul.f32 %v1783, %v1960
        %v2040 = vmul.f32 %v1784, %v1970
        %v2041 = vmul.f32 %v1785, %v1980
        %v2042 = vmul.f32 %v1786, %v1990
        %v2043 = vmul.f32 %v1787, %v2000
        %v2044 = vmul.f32 %v1788, %v2010
        %v2045 = vmul.f32 %v1789, %v2020
        %v2046 = vmul.f32 %v1790, %v2030
        %v2048 = vperm.slane %v1725, 0
        %v2050 = vmul.f32 %v2031, %v2048
        %v2051 = vmul.f32 %v2032, %v2048
        %v2052 = vmul.f32 %v2033, %v2048
        %v2053 = vmul.f32 %v2034, %v2048
        %v2054 = vmul.f32 %v2035, %v2048
        %v2055 = vmul.f32 %v2036, %v2048
        %v2056 = vmul.f32 %v2037, %v2048
        %v2057 = vmul.f32 %v2038, %v2048
        %v2058 = vmul.f32 %v2039, %v2048
        %v2059 = vmul.f32 %v2040, %v2048
        %v2060 = vmul.f32 %v2041, %v2048
        %v2061 = vmul.f32 %v2042, %v2048
        %v2062 = vmul.f32 %v2043, %v2048
        %v2063 = vmul.f32 %v2044, %v2048
        %v2064 = vmul.f32 %v2045, %v2048
        %v2065 = vmul.f32 %v2046, %v2048
        %v2067 = vperm.slane %v1726, 0
        %v2069 = vadd.f32 %v2050, %v2067
        %v2070 = vadd.f32 %v2051, %v2067
        %v2071 = vadd.f32 %v2052, %v2067
        %v2072 = vadd.f32 %v2053, %v2067
        %v2073 = vadd.f32 %v2054, %v2067
        %v2074 = vadd.f32 %v2055, %v2067
        %v2075 = vadd.f32 %v2056, %v2067
        %v2076 = vadd.f32 %v2057, %v2067
        %v2077 = vadd.f32 %v2058, %v2067
        %v2078 = vadd.f32 %v2059, %v2067
        %v2079 = vadd.f32 %v2060, %v2067
        %v2080 = vadd.f32 %v2061, %v2067
        %v2081 = vadd.f32 %v2062, %v2067
        %v2082 = vadd.f32 %v2063, %v2067
        %v2083 = vadd.f32 %v2064, %v2067
        %v2084 = vadd.f32 %v2065, %v2067
        %v2085 = vld [vmem:[#allocation7] sm:$0xff]
        %v2086 = vld [vmem:[#allocation7 + $0x8] sm:$0xff]
        %v2087 = vld [vmem:[#allocation7 + $0x10] sm:$0xff]
        %v2088 = vld [vmem:[#allocation7 + $0x18] sm:$0xff]
        %v2089 = vld [vmem:[#allocation7 + $0x20] sm:$0xff]
        %v2090 = vld [vmem:[#allocation7 + $0x28] sm:$0xff]
        %v2091 = vld [vmem:[#allocation7 + $0x30] sm:$0xff]
        %v2092 = vld [vmem:[#allocation7 + $0x38] sm:$0xff]
        %v2093 = vld [vmem:[#allocation7 + $0x40] sm:$0xff]
        %v2094 = vld [vmem:[#allocation7 + $0x48] sm:$0xff]
        %v2095 = vld [vmem:[#allocation7 + $0x50] sm:$0xff]
        %v2096 = vld [vmem:[#allocation7 + $0x58] sm:$0xff]
        %v2097 = vld [vmem:[#allocation7 + $0x60] sm:$0xff]
        %v2098 = vld [vmem:[#allocation7 + $0x68] sm:$0xff]
        %v2099 = vld [vmem:[#allocation7 + $0x70] sm:$0xff]
        %v2100 = vld [vmem:[#allocation7 + $0x78] sm:$0xff]
        %v2101 = vld [vmem:[#allocation7 + $0x80] sm:$0xff]
        %v2102 = vld [vmem:[#allocation7 + $0x88] sm:$0xff]
        %v2103 = vld [vmem:[#allocation7 + $0x90] sm:$0xff]
        %v2104 = vld [vmem:[#allocation7 + $0x98] sm:$0xff]
        %v2105 = vld [vmem:[#allocation7 + $0xa0] sm:$0xff]
        %v2106 = vld [vmem:[#allocation7 + $0xa8] sm:$0xff]
        %v2107 = vld [vmem:[#allocation7 + $0xb0] sm:$0xff]
        %v2108 = vld [vmem:[#allocation7 + $0xb8] sm:$0xff]
        %v2109 = vld [vmem:[#allocation7 + $0xc0] sm:$0xff]
        %v2110 = vld [vmem:[#allocation7 + $0xc8] sm:$0xff]
        %v2111 = vld [vmem:[#allocation7 + $0xd0] sm:$0xff]
        %v2112 = vld [vmem:[#allocation7 + $0xd8] sm:$0xff]
        %v2113 = vld [vmem:[#allocation7 + $0xe0] sm:$0xff]
        %v2114 = vld [vmem:[#allocation7 + $0xe8] sm:$0xff]
        %v2115 = vld [vmem:[#allocation7 + $0xf0] sm:$0xff]
        %v2116 = vld [vmem:[#allocation7 + $0xf8] sm:$0xff]
        %v2117 = vld [vmem:[#allocation7 + $0x100] sm:$0xff]
        %v2118 = vld [vmem:[#allocation7 + $0x108] sm:$0xff]
        %v2119 = vld [vmem:[#allocation7 + $0x110] sm:$0xff]
        %v2120 = vld [vmem:[#allocation7 + $0x118] sm:$0xff]
        %v2121 = vld [vmem:[#allocation7 + $0x120] sm:$0xff]
        %v2122 = vld [vmem:[#allocation7 + $0x128] sm:$0xff]
        %v2123 = vld [vmem:[#allocation7 + $0x130] sm:$0xff]
        %v2124 = vld [vmem:[#allocation7 + $0x138] sm:$0xff]
        %v2125 = vld [vmem:[#allocation7 + $0x140] sm:$0xff]
        %v2126 = vld [vmem:[#allocation7 + $0x148] sm:$0xff]
        %v2127 = vld [vmem:[#allocation7 + $0x150] sm:$0xff]
        %v2128 = vld [vmem:[#allocation7 + $0x158] sm:$0xff]
        %v2129 = vld [vmem:[#allocation7 + $0x160] sm:$0xff]
        %v2130 = vld [vmem:[#allocation7 + $0x168] sm:$0xff]
        %v2131 = vld [vmem:[#allocation7 + $0x170] sm:$0xff]
        %v2132 = vld [vmem:[#allocation7 + $0x178] sm:$0xff]
        %v2133 = vld [vmem:[#allocation7 + $0x180] sm:$0xff]
        %v2134 = vld [vmem:[#allocation7 + $0x188] sm:$0xff]
        %v2135 = vld [vmem:[#allocation7 + $0x190] sm:$0xff]
        %v2136 = vld [vmem:[#allocation7 + $0x198] sm:$0xff]
        %v2137 = vld [vmem:[#allocation7 + $0x1a0] sm:$0xff]
        %v2138 = vld [vmem:[#allocation7 + $0x1a8] sm:$0xff]
        %v2139 = vld [vmem:[#allocation7 + $0x1b0] sm:$0xff]
        %v2140 = vld [vmem:[#allocation7 + $0x1b8] sm:$0xff]
        %v2141 = vld [vmem:[#allocation7 + $0x1c0] sm:$0xff]
        %v2142 = vld [vmem:[#allocation7 + $0x1c8] sm:$0xff]
        %v2143 = vld [vmem:[#allocation7 + $0x1d0] sm:$0xff]
        %v2144 = vld [vmem:[#allocation7 + $0x1d8] sm:$0xff]
        %v2145 = vld [vmem:[#allocation7 + $0x1e0] sm:$0xff]
        %v2146 = vld [vmem:[#allocation7 + $0x1e8] sm:$0xff]
        %v2147 = vld [vmem:[#allocation7 + $0x1f0] sm:$0xff]
        %v2148 = vld [vmem:[#allocation7 + $0x1f8] sm:$0xff]
        %v2149 = vld [vmem:[%s12] sm:$0xf]
        %v2151 = vperm.slane %v2149, 0
        %v2152 = vperm.slane %v2149, 1
        %v2153 = vperm.slane %v2149, 2
        %v2154 = vperm.slane %v2149, 3
        %2159 = vmatpush.msra.mxu0 %v2145
        %2160 = vmatpush.msra.mxu0 %v2141
        %2161 = vmatpush.msra.mxu0 %v2137
        %2162 = vmatpush.msra.mxu0 %v2133
        %2163 = vmatpush.msra.mxu0 %v2129
        %2164 = vmatpush.msra.mxu0 %v2125
        %2165 = vmatpush.msra.mxu0 %v2121
        %2166 = vmatpush.msra.mxu0 %v2117
        %2167 = vmatpush.msra.mxu0 %v2113
        %2168 = vmatpush.msra.mxu0 %v2109
        %2169 = vmatpush.msra.mxu0 %v2105
        %2170 = vmatpush.msra.mxu0 %v2101
        %2171 = vmatpush.msra.mxu0 %v2097
        %2172 = vmatpush.msra.mxu0 %v2093
        %2173 = vmatpush.msra.mxu0 %v2089
        %2174 = vmatpush.msra.mxu0 %v2085
        %2175 = vmatmul.f32.gmra.mxu0 %v2069
        %v2176 = vpop.f32.mrf.mxu0
        %v2177 = vadd.f32 %v2151, %v2176
        %2178 = vmatmul.f32.gmra.mxu0 %v2070
        %v2179 = vpop.f32.mrf.mxu0
        %v2180 = vadd.f32 %v2151, %v2179
        %2181 = vmatmul.f32.gmra.mxu0 %v2071
        %v2182 = vpop.f32.mrf.mxu0
        %v2183 = vadd.f32 %v2151, %v2182
        %2184 = vmatmul.f32.gmra.mxu0 %v2072
        %v2185 = vpop.f32.mrf.mxu0
        %v2186 = vadd.f32 %v2151, %v2185
        %2187 = vmatmul.f32.gmra.mxu0 %v2073
        %v2188 = vpop.f32.mrf.mxu0
        %v2189 = vadd.f32 %v2151, %v2188
        %2190 = vmatmul.f32.gmra.mxu0 %v2074
        %v2191 = vpop.f32.mrf.mxu0
        %v2192 = vadd.f32 %v2151, %v2191
        %2193 = vmatmul.f32.gmra.mxu0 %v2075
        %v2194 = vpop.f32.mrf.mxu0
        %v2195 = vadd.f32 %v2151, %v2194
        %2196 = vmatmul.f32.gmra.mxu0 %v2076
        %v2197 = vpop.f32.mrf.mxu0
        %v2198 = vadd.f32 %v2151, %v2197
        %2199 = vmatmul.f32.gmra.mxu0 %v2077
        %v2200 = vpop.f32.mrf.mxu0
        %v2201 = vadd.f32 %v2151, %v2200
        %2202 = vmatmul.f32.gmra.mxu0 %v2078
        %v2203 = vpop.f32.mrf.mxu0
        %v2204 = vadd.f32 %v2151, %v2203
        %2205 = vmatmul.f32.gmra.mxu0 %v2079
        %v2206 = vpop.f32.mrf.mxu0
        %v2207 = vadd.f32 %v2151, %v2206
        %2208 = vmatmul.f32.gmra.mxu0 %v2080
        %v2209 = vpop.f32.mrf.mxu0
        %v2210 = vadd.f32 %v2151, %v2209
        %2211 = vmatmul.f32.gmra.mxu0 %v2081
        %v2212 = vpop.f32.mrf.mxu0
        %v2213 = vadd.f32 %v2151, %v2212
        %2214 = vmatmul.f32.gmra.mxu0 %v2082
        %v2215 = vpop.f32.mrf.mxu0
        %v2216 = vadd.f32 %v2151, %v2215
        %2217 = vmatmul.f32.gmra.mxu0 %v2083
        %v2218 = vpop.f32.mrf.mxu0
        %v2219 = vadd.f32 %v2151, %v2218
        %2220 = vmatmul.f32.gmra.mxu0 %v2084
        %v2221 = vpop.f32.mrf.mxu0
        %v2222 = vadd.f32 %v2151, %v2221
        %2223 = vdwg.mxu0
        %2224 = vmatpush.msra.mxu0 %v2146
        %2225 = vmatpush.msra.mxu0 %v2142
        %2226 = vmatpush.msra.mxu0 %v2138
        %2227 = vmatpush.msra.mxu0 %v2134
        %2228 = vmatpush.msra.mxu0 %v2130
        %2229 = vmatpush.msra.mxu0 %v2126
        %2230 = vmatpush.msra.mxu0 %v2122
        %2231 = vmatpush.msra.mxu0 %v2118
        %2232 = vmatpush.msra.mxu0 %v2114
        %2233 = vmatpush.msra.mxu0 %v2110
        %2234 = vmatpush.msra.mxu0 %v2106
        %2235 = vmatpush.msra.mxu0 %v2102
        %2236 = vmatpush.msra.mxu0 %v2098
        %2237 = vmatpush.msra.mxu0 %v2094
        %2238 = vmatpush.msra.mxu0 %v2090
        %2239 = vmatpush.msra.mxu0 %v2086
        %2240 = vmatmul.f32.gmra.mxu0 %v2069
        %v2241 = vpop.f32.mrf.mxu0
        %v2242 = vadd.f32 %v2152, %v2241
        %2243 = vmatmul.f32.gmra.mxu0 %v2070
        %v2244 = vpop.f32.mrf.mxu0
        %v2245 = vadd.f32 %v2152, %v2244
        %2246 = vmatmul.f32.gmra.mxu0 %v2071
        %v2247 = vpop.f32.mrf.mxu0
        %v2248 = vadd.f32 %v2152, %v2247
        %2249 = vmatmul.f32.gmra.mxu0 %v2072
        %v2250 = vpop.f32.mrf.mxu0
        %v2251 = vadd.f32 %v2152, %v2250
        %2252 = vmatmul.f32.gmra.mxu0 %v2073
        %v2253 = vpop.f32.mrf.mxu0
        %v2254 = vadd.f32 %v2152, %v2253
        %2255 = vmatmul.f32.gmra.mxu0 %v2074
        %v2256 = vpop.f32.mrf.mxu0
        %v2257 = vadd.f32 %v2152, %v2256
        %2258 = vmatmul.f32.gmra.mxu0 %v2075
        %v2259 = vpop.f32.mrf.mxu0
        %v2260 = vadd.f32 %v2152, %v2259
        %2261 = vmatmul.f32.gmra.mxu0 %v2076
        %v2262 = vpop.f32.mrf.mxu0
        %v2263 = vadd.f32 %v2152, %v2262
        %2264 = vmatmul.f32.gmra.mxu0 %v2077
        %v2265 = vpop.f32.mrf.mxu0
        %v2266 = vadd.f32 %v2152, %v2265
        %2267 = vmatmul.f32.gmra.mxu0 %v2078
        %v2268 = vpop.f32.mrf.mxu0
        %v2269 = vadd.f32 %v2152, %v2268
        %2270 = vmatmul.f32.gmra.mxu0 %v2079
        %v2271 = vpop.f32.mrf.mxu0
        %v2272 = vadd.f32 %v2152, %v2271
        %2273 = vmatmul.f32.gmra.mxu0 %v2080
        %v2274 = vpop.f32.mrf.mxu0
        %v2275 = vadd.f32 %v2152, %v2274
        %2276 = vmatmul.f32.gmra.mxu0 %v2081
        %v2277 = vpop.f32.mrf.mxu0
        %v2278 = vadd.f32 %v2152, %v2277
        %2279 = vmatmul.f32.gmra.mxu0 %v2082
        %v2280 = vpop.f32.mrf.mxu0
        %v2281 = vadd.f32 %v2152, %v2280
        %2282 = vmatmul.f32.gmra.mxu0 %v2083
        %v2283 = vpop.f32.mrf.mxu0
        %v2284 = vadd.f32 %v2152, %v2283
        %2285 = vmatmul.f32.gmra.mxu0 %v2084
        %v2286 = vpop.f32.mrf.mxu0
        %v2287 = vadd.f32 %v2152, %v2286
        %2288 = vdwg.mxu0
        %2289 = vmatpush.msra.mxu0 %v2147
        %2290 = vmatpush.msra.mxu0 %v2143
        %2291 = vmatpush.msra.mxu0 %v2139
        %2292 = vmatpush.msra.mxu0 %v2135
        %2293 = vmatpush.msra.mxu0 %v2131
        %2294 = vmatpush.msra.mxu0 %v2127
        %2295 = vmatpush.msra.mxu0 %v2123
        %2296 = vmatpush.msra.mxu0 %v2119
        %2297 = vmatpush.msra.mxu0 %v2115
        %2298 = vmatpush.msra.mxu0 %v2111
        %2299 = vmatpush.msra.mxu0 %v2107
        %2300 = vmatpush.msra.mxu0 %v2103
        %2301 = vmatpush.msra.mxu0 %v2099
        %2302 = vmatpush.msra.mxu0 %v2095
        %2303 = vmatpush.msra.mxu0 %v2091
        %2304 = vmatpush.msra.mxu0 %v2087
        %2305 = vmatmul.f32.gmra.mxu0 %v2069
        %v2306 = vpop.f32.mrf.mxu0
        %v2307 = vadd.f32 %v2153, %v2306
        %2308 = vmatmul.f32.gmra.mxu0 %v2070
        %v2309 = vpop.f32.mrf.mxu0
        %v2310 = vadd.f32 %v2153, %v2309
        %2311 = vmatmul.f32.gmra.mxu0 %v2071
        %v2312 = vpop.f32.mrf.mxu0
        %v2313 = vadd.f32 %v2153, %v2312
        %2314 = vmatmul.f32.gmra.mxu0 %v2072
        %v2315 = vpop.f32.mrf.mxu0
        %v2316 = vadd.f32 %v2153, %v2315
        %2317 = vmatmul.f32.gmra.mxu0 %v2073
        %v2318 = vpop.f32.mrf.mxu0
        %v2319 = vadd.f32 %v2153, %v2318
        %2320 = vmatmul.f32.gmra.mxu0 %v2074
        %v2321 = vpop.f32.mrf.mxu0
        %v2322 = vadd.f32 %v2153, %v2321
        %2323 = vmatmul.f32.gmra.mxu0 %v2075
        %v2324 = vpop.f32.mrf.mxu0
        %v2325 = vadd.f32 %v2153, %v2324
        %2326 = vmatmul.f32.gmra.mxu0 %v2076
        %v2327 = vpop.f32.mrf.mxu0
        %v2328 = vadd.f32 %v2153, %v2327
        %2329 = vmatmul.f32.gmra.mxu0 %v2077
        %v2330 = vpop.f32.mrf.mxu0
        %v2331 = vadd.f32 %v2153, %v2330
        %2332 = vmatmul.f32.gmra.mxu0 %v2078
        %v2333 = vpop.f32.mrf.mxu0
        %v2334 = vadd.f32 %v2153, %v2333
        %2335 = vmatmul.f32.gmra.mxu0 %v2079
        %v2336 = vpop.f32.mrf.mxu0
        %v2337 = vadd.f32 %v2153, %v2336
        %2338 = vmatmul.f32.gmra.mxu0 %v2080
        %v2339 = vpop.f32.mrf.mxu0
        %v2340 = vadd.f32 %v2153, %v2339
        %2341 = vmatmul.f32.gmra.mxu0 %v2081
        %v2342 = vpop.f32.mrf.mxu0
        %v2343 = vadd.f32 %v2153, %v2342
        %2344 = vmatmul.f32.gmra.mxu0 %v2082
        %v2345 = vpop.f32.mrf.mxu0
        %v2346 = vadd.f32 %v2153, %v2345
        %2347 = vmatmul.f32.gmra.mxu0 %v2083
        %v2348 = vpop.f32.mrf.mxu0
        %v2349 = vadd.f32 %v2153, %v2348
        %2350 = vmatmul.f32.gmra.mxu0 %v2084
        %v2351 = vpop.f32.mrf.mxu0
        %v2352 = vadd.f32 %v2153, %v2351
        %2353 = vdwg.mxu0
        %2354 = vmatpush.msra.mxu0 %v2148
        %2355 = vmatpush.msra.mxu0 %v2144
        %2356 = vmatpush.msra.mxu0 %v2140
        %2357 = vmatpush.msra.mxu0 %v2136
        %2358 = vmatpush.msra.mxu0 %v2132
        %2359 = vmatpush.msra.mxu0 %v2128
        %2360 = vmatpush.msra.mxu0 %v2124
        %2361 = vmatpush.msra.mxu0 %v2120
        %2362 = vmatpush.msra.mxu0 %v2116
        %2363 = vmatpush.msra.mxu0 %v2112
        %2364 = vmatpush.msra.mxu0 %v2108
        %2365 = vmatpush.msra.mxu0 %v2104
        %2366 = vmatpush.msra.mxu0 %v2100
        %2367 = vmatpush.msra.mxu0 %v2096
        %2368 = vmatpush.msra.mxu0 %v2092
        %2369 = vmatpush.msra.mxu0 %v2088
        %2370 = vmatmul.f32.gmra.mxu0 %v2069
        %v2371 = vpop.f32.mrf.mxu0
        %v2372 = vadd.f32 %v2154, %v2371
        %2373 = vmatmul.f32.gmra.mxu0 %v2070
        %v2374 = vpop.f32.mrf.mxu0
        %v2375 = vadd.f32 %v2154, %v2374
        %2376 = vmatmul.f32.gmra.mxu0 %v2071
        %v2377 = vpop.f32.mrf.mxu0
        %v2378 = vadd.f32 %v2154, %v2377
        %2379 = vmatmul.f32.gmra.mxu0 %v2072
        %v2380 = vpop.f32.mrf.mxu0
        %v2381 = vadd.f32 %v2154, %v2380
        %2382 = vmatmul.f32.gmra.mxu0 %v2073
        %v2383 = vpop.f32.mrf.mxu0
        %v2384 = vadd.f32 %v2154, %v2383
        %2385 = vmatmul.f32.gmra.mxu0 %v2074
        %v2386 = vpop.f32.mrf.mxu0
        %v2387 = vadd.f32 %v2154, %v2386
        %2388 = vmatmul.f32.gmra.mxu0 %v2075
        %v2389 = vpop.f32.mrf.mxu0
        %v2390 = vadd.f32 %v2154, %v2389
        %2391 = vmatmul.f32.gmra.mxu0 %v2076
        %v2392 = vpop.f32.mrf.mxu0
        %v2393 = vadd.f32 %v2154, %v2392
        %2394 = vmatmul.f32.gmra.mxu0 %v2077
        %v2395 = vpop.f32.mrf.mxu0
        %v2396 = vadd.f32 %v2154, %v2395
        %2397 = vmatmul.f32.gmra.mxu0 %v2078
        %v2398 = vpop.f32.mrf.mxu0
        %v2399 = vadd.f32 %v2154, %v2398
        %2400 = vmatmul.f32.gmra.mxu0 %v2079
        %v2401 = vpop.f32.mrf.mxu0
        %v2402 = vadd.f32 %v2154, %v2401
        %2403 = vmatmul.f32.gmra.mxu0 %v2080
        %v2404 = vpop.f32.mrf.mxu0
        %v2405 = vadd.f32 %v2154, %v2404
        %2406 = vmatmul.f32.gmra.mxu0 %v2081
        %v2407 = vpop.f32.mrf.mxu0
        %v2408 = vadd.f32 %v2154, %v2407
        %2409 = vmatmul.f32.gmra.mxu0 %v2082
        %v2410 = vpop.f32.mrf.mxu0
        %v2411 = vadd.f32 %v2154, %v2410
        %2412 = vmatmul.f32.gmra.mxu0 %v2083
        %v2413 = vpop.f32.mrf.mxu0
        %v2414 = vadd.f32 %v2154, %v2413
        %2415 = vmatmul.f32.gmra.mxu0 %v2084
        %v2416 = vpop.f32.mrf.mxu0
        %v2417 = vadd.f32 %v2154, %v2416
        %2418 = vdwg.mxu0
        %v2419 = vmax.f32 %v2177, 0.0
        %v2420 = vmax.f32 %v2242, 0.0
        %v2421 = vmax.f32 %v2307, 0.0
        %v2422 = vmax.f32 %v2372, 0.0
        %v2423 = vmax.f32 %v2180, 0.0
        %v2424 = vmax.f32 %v2245, 0.0
        %v2425 = vmax.f32 %v2310, 0.0
        %v2426 = vmax.f32 %v2375, 0.0
        %v2427 = vmax.f32 %v2183, 0.0
        %v2428 = vmax.f32 %v2248, 0.0
        %v2429 = vmax.f32 %v2313, 0.0
        %v2430 = vmax.f32 %v2378, 0.0
        %v2431 = vmax.f32 %v2186, 0.0
        %v2432 = vmax.f32 %v2251, 0.0
        %v2433 = vmax.f32 %v2316, 0.0
        %v2434 = vmax.f32 %v2381, 0.0
        %v2435 = vmax.f32 %v2189, 0.0
        %v2436 = vmax.f32 %v2254, 0.0
        %v2437 = vmax.f32 %v2319, 0.0
        %v2438 = vmax.f32 %v2384, 0.0
        %v2439 = vmax.f32 %v2192, 0.0
        %v2440 = vmax.f32 %v2257, 0.0
        %v2441 = vmax.f32 %v2322, 0.0
        %v2442 = vmax.f32 %v2387, 0.0
        %v2443 = vmax.f32 %v2195, 0.0
        %v2444 = vmax.f32 %v2260, 0.0
        %v2445 = vmax.f32 %v2325, 0.0
        %v2446 = vmax.f32 %v2390, 0.0
        %v2447 = vmax.f32 %v2198, 0.0
        %v2448 = vmax.f32 %v2263, 0.0
        %v2449 = vmax.f32 %v2328, 0.0
        %v2450 = vmax.f32 %v2393, 0.0
        %v2451 = vmax.f32 %v2201, 0.0
        %v2452 = vmax.f32 %v2266, 0.0
        %v2453 = vmax.f32 %v2331, 0.0
        %v2454 = vmax.f32 %v2396, 0.0
        %v2455 = vmax.f32 %v2204, 0.0
        %v2456 = vmax.f32 %v2269, 0.0
        %v2457 = vmax.f32 %v2334, 0.0
        %v2458 = vmax.f32 %v2399, 0.0
        %v2459 = vmax.f32 %v2207, 0.0
        %v2460 = vmax.f32 %v2272, 0.0
        %v2461 = vmax.f32 %v2337, 0.0
        %v2462 = vmax.f32 %v2402, 0.0
        %v2463 = vmax.f32 %v2210, 0.0
        %v2464 = vmax.f32 %v2275, 0.0
        %v2465 = vmax.f32 %v2340, 0.0
        %v2466 = vmax.f32 %v2405, 0.0
        %v2467 = vmax.f32 %v2213, 0.0
        %v2468 = vmax.f32 %v2278, 0.0
        %v2469 = vmax.f32 %v2343, 0.0
        %v2470 = vmax.f32 %v2408, 0.0
        %v2471 = vmax.f32 %v2216, 0.0
        %v2472 = vmax.f32 %v2281, 0.0
        %v2473 = vmax.f32 %v2346, 0.0
        %v2474 = vmax.f32 %v2411, 0.0
        %v2475 = vmax.f32 %v2219, 0.0
        %v2476 = vmax.f32 %v2284, 0.0
        %v2477 = vmax.f32 %v2349, 0.0
        %v2478 = vmax.f32 %v2414, 0.0
        %v2479 = vmax.f32 %v2222, 0.0
        %v2480 = vmax.f32 %v2287, 0.0
        %v2481 = vmax.f32 %v2352, 0.0
        %v2482 = vmax.f32 %v2417, 0.0
        %v2483 = vld [vmem:[#allocation9] sm:$0xff]
        %v2484 = vld [vmem:[#allocation9 + $0x8] sm:$0xff]
        %v2485 = vld [vmem:[#allocation9 + $0x10] sm:$0xff]
        %v2486 = vld [vmem:[#allocation9 + $0x18] sm:$0xff]
        %v2487 = vld [vmem:[#allocation9 + $0x20] sm:$0xff]
        %v2488 = vld [vmem:[#allocation9 + $0x28] sm:$0xff]
        %v2489 = vld [vmem:[#allocation9 + $0x30] sm:$0xff]
        %v2490 = vld [vmem:[#allocation9 + $0x38] sm:$0xff]
        %v2491 = vld [vmem:[#allocation9 + $0x40] sm:$0xff]
        %v2492 = vld [vmem:[#allocation9 + $0x48] sm:$0xff]
        %v2493 = vld [vmem:[#allocation9 + $0x50] sm:$0xff]
        %v2494 = vld [vmem:[#allocation9 + $0x58] sm:$0xff]
        %v2495 = vld [vmem:[#allocation9 + $0x60] sm:$0xff]
        %v2496 = vld [vmem:[#allocation9 + $0x68] sm:$0xff]
        %v2497 = vld [vmem:[#allocation9 + $0x70] sm:$0xff]
        %v2498 = vld [vmem:[#allocation9 + $0x78] sm:$0xff]
        %v2499 = vld [vmem:[#allocation9 + $0x80] sm:$0xff]
        %v2500 = vld [vmem:[#allocation9 + $0x88] sm:$0xff]
        %v2501 = vld [vmem:[#allocation9 + $0x90] sm:$0xff]
        %v2502 = vld [vmem:[#allocation9 + $0x98] sm:$0xff]
        %v2503 = vld [vmem:[#allocation9 + $0xa0] sm:$0xff]
        %v2504 = vld [vmem:[#allocation9 + $0xa8] sm:$0xff]
        %v2505 = vld [vmem:[#allocation9 + $0xb0] sm:$0xff]
        %v2506 = vld [vmem:[#allocation9 + $0xb8] sm:$0xff]
        %v2507 = vld [vmem:[#allocation9 + $0xc0] sm:$0xff]
        %v2508 = vld [vmem:[#allocation9 + $0xc8] sm:$0xff]
        %v2509 = vld [vmem:[#allocation9 + $0xd0] sm:$0xff]
        %v2510 = vld [vmem:[#allocation9 + $0xd8] sm:$0xff]
        %v2511 = vld [vmem:[#allocation9 + $0xe0] sm:$0xff]
        %v2512 = vld [vmem:[#allocation9 + $0xe8] sm:$0xff]
        %v2513 = vld [vmem:[#allocation9 + $0xf0] sm:$0xff]
        %v2514 = vld [vmem:[#allocation9 + $0xf8] sm:$0xff]
        %v2515 = vld [vmem:[#allocation9 + $0x100] sm:$0xff]
        %v2516 = vld [vmem:[#allocation9 + $0x108] sm:$0xff]
        %v2517 = vld [vmem:[#allocation9 + $0x110] sm:$0xff]
        %v2518 = vld [vmem:[#allocation9 + $0x118] sm:$0xff]
        %v2519 = vld [vmem:[#allocation9 + $0x120] sm:$0xff]
        %v2520 = vld [vmem:[#allocation9 + $0x128] sm:$0xff]
        %v2521 = vld [vmem:[#allocation9 + $0x130] sm:$0xff]
        %v2522 = vld [vmem:[#allocation9 + $0x138] sm:$0xff]
        %v2523 = vld [vmem:[#allocation9 + $0x140] sm:$0xff]
        %v2524 = vld [vmem:[#allocation9 + $0x148] sm:$0xff]
        %v2525 = vld [vmem:[#allocation9 + $0x150] sm:$0xff]
        %v2526 = vld [vmem:[#allocation9 + $0x158] sm:$0xff]
        %v2527 = vld [vmem:[#allocation9 + $0x160] sm:$0xff]
        %v2528 = vld [vmem:[#allocation9 + $0x168] sm:$0xff]
        %v2529 = vld [vmem:[#allocation9 + $0x170] sm:$0xff]
        %v2530 = vld [vmem:[#allocation9 + $0x178] sm:$0xff]
        %v2531 = vld [vmem:[#allocation9 + $0x180] sm:$0xff]
        %v2532 = vld [vmem:[#allocation9 + $0x188] sm:$0xff]
        %v2533 = vld [vmem:[#allocation9 + $0x190] sm:$0xff]
        %v2534 = vld [vmem:[#allocation9 + $0x198] sm:$0xff]
        %v2535 = vld [vmem:[#allocation9 + $0x1a0] sm:$0xff]
        %v2536 = vld [vmem:[#allocation9 + $0x1a8] sm:$0xff]
        %v2537 = vld [vmem:[#allocation9 + $0x1b0] sm:$0xff]
        %v2538 = vld [vmem:[#allocation9 + $0x1b8] sm:$0xff]
        %v2539 = vld [vmem:[#allocation9 + $0x1c0] sm:$0xff]
        %v2540 = vld [vmem:[#allocation9 + $0x1c8] sm:$0xff]
        %v2541 = vld [vmem:[#allocation9 + $0x1d0] sm:$0xff]
        %v2542 = vld [vmem:[#allocation9 + $0x1d8] sm:$0xff]
        %v2543 = vld [vmem:[#allocation9 + $0x1e0] sm:$0xff]
        %v2544 = vld [vmem:[#allocation9 + $0x1e8] sm:$0xff]
        %v2545 = vld [vmem:[#allocation9 + $0x1f0] sm:$0xff]
        %v2546 = vld [vmem:[#allocation9 + $0x1f8] sm:$0xff]
        %v2547 = vld [vmem:[#allocation10] sm:$0x1]
        %v2549 = vperm.slane %v2547, 0
        %2551 = vmatpush.msra.mxu0 %v2498
        %2552 = vmatpush.msra.mxu0 %v2497
        %2553 = vmatpush.msra.mxu0 %v2496
        %2554 = vmatpush.msra.mxu0 %v2495
        %2555 = vmatpush.msra.mxu0 %v2494
        %2556 = vmatpush.msra.mxu0 %v2493
        %2557 = vmatpush.msra.mxu0 %v2492
        %2558 = vmatpush.msra.mxu0 %v2491
        %2559 = vmatpush.msra.mxu0 %v2490
        %2560 = vmatpush.msra.mxu0 %v2489
        %2561 = vmatpush.msra.mxu0 %v2488
        %2562 = vmatpush.msra.mxu0 %v2487
        %2563 = vmatpush.msra.mxu0 %v2486
        %2564 = vmatpush.msra.mxu0 %v2485
        %2565 = vmatpush.msra.mxu0 %v2484
        %2566 = vmatpush.msra.mxu0 %v2483
        %2567 = vmatmul.f32.gmra.mxu0 %v2419
        %v2568 = vpop.f32.mrf.mxu0
        %v2569 = vadd.f32 %v2549, %v2568
        %2570 = vmatmul.f32.gmra.mxu0 %v2423
        %v2571 = vpop.f32.mrf.mxu0
        %v2572 = vadd.f32 %v2549, %v2571
        %2573 = vmatmul.f32.gmra.mxu0 %v2427
        %v2574 = vpop.f32.mrf.mxu0
        %v2575 = vadd.f32 %v2549, %v2574
        %2576 = vmatmul.f32.gmra.mxu0 %v2431
        %v2577 = vpop.f32.mrf.mxu0
        %v2578 = vadd.f32 %v2549, %v2577
        %2579 = vmatmul.f32.gmra.mxu0 %v2435
        %v2580 = vpop.f32.mrf.mxu0
        %v2581 = vadd.f32 %v2549, %v2580
        %2582 = vmatmul.f32.gmra.mxu0 %v2439
        %v2583 = vpop.f32.mrf.mxu0
        %v2584 = vadd.f32 %v2549, %v2583
        %2585 = vmatmul.f32.gmra.mxu0 %v2443
        %v2586 = vpop.f32.mrf.mxu0
        %v2587 = vadd.f32 %v2549, %v2586
        %2588 = vmatmul.f32.gmra.mxu0 %v2447
        %v2589 = vpop.f32.mrf.mxu0
        %v2590 = vadd.f32 %v2549, %v2589
        %2591 = vmatmul.f32.gmra.mxu0 %v2451
        %v2592 = vpop.f32.mrf.mxu0
        %v2593 = vadd.f32 %v2549, %v2592
        %2594 = vmatmul.f32.gmra.mxu0 %v2455
        %v2595 = vpop.f32.mrf.mxu0
        %v2596 = vadd.f32 %v2549, %v2595
        %2597 = vmatmul.f32.gmra.mxu0 %v2459
        %v2598 = vpop.f32.mrf.mxu0
        %v2599 = vadd.f32 %v2549, %v2598
        %2600 = vmatmul.f32.gmra.mxu0 %v2463
        %v2601 = vpop.f32.mrf.mxu0
        %v2602 = vadd.f32 %v2549, %v2601
        %2603 = vmatmul.f32.gmra.mxu0 %v2467
        %v2604 = vpop.f32.mrf.mxu0
        %v2605 = vadd.f32 %v2549, %v2604
        %2606 = vmatmul.f32.gmra.mxu0 %v2471
        %v2607 = vpop.f32.mrf.mxu0
        %v2608 = vadd.f32 %v2549, %v2607
        %2609 = vmatmul.f32.gmra.mxu0 %v2475
        %v2610 = vpop.f32.mrf.mxu0
        %v2611 = vadd.f32 %v2549, %v2610
        %2612 = vmatmul.f32.gmra.mxu0 %v2479
        %v2613 = vpop.f32.mrf.mxu0
        %v2614 = vadd.f32 %v2549, %v2613
        %2615 = vdwg.mxu0
        %2616 = vmatpush.msra.mxu0 %v2514
        %2617 = vmatpush.msra.mxu0 %v2513
        %2618 = vmatpush.msra.mxu0 %v2512
        %2619 = vmatpush.msra.mxu0 %v2511
        %2620 = vmatpush.msra.mxu0 %v2510
        %2621 = vmatpush.msra.mxu0 %v2509
        %2622 = vmatpush.msra.mxu0 %v2508
        %2623 = vmatpush.msra.mxu0 %v2507
        %2624 = vmatpush.msra.mxu0 %v2506
        %2625 = vmatpush.msra.mxu0 %v2505
        %2626 = vmatpush.msra.mxu0 %v2504
        %2627 = vmatpush.msra.mxu0 %v2503
        %2628 = vmatpush.msra.mxu0 %v2502
        %2629 = vmatpush.msra.mxu0 %v2501
        %2630 = vmatpush.msra.mxu0 %v2500
        %2631 = vmatpush.msra.mxu0 %v2499
        %2632 = vmatmul.f32.gmra.mxu0 %v2420
        %v2633 = vpop.f32.mrf.mxu0
        %v2634 = vadd.f32 %v2569, %v2633
        %2635 = vmatmul.f32.gmra.mxu0 %v2424
        %v2636 = vpop.f32.mrf.mxu0
        %v2637 = vadd.f32 %v2572, %v2636
        %2638 = vmatmul.f32.gmra.mxu0 %v2428
        %v2639 = vpop.f32.mrf.mxu0
        %v2640 = vadd.f32 %v2575, %v2639
        %2641 = vmatmul.f32.gmra.mxu0 %v2432
        %v2642 = vpop.f32.mrf.mxu0
        %v2643 = vadd.f32 %v2578, %v2642
        %2644 = vmatmul.f32.gmra.mxu0 %v2436
        %v2645 = vpop.f32.mrf.mxu0
        %v2646 = vadd.f32 %v2581, %v2645
        %2647 = vmatmul.f32.gmra.mxu0 %v2440
        %v2648 = vpop.f32.mrf.mxu0
        %v2649 = vadd.f32 %v2584, %v2648
        %2650 = vmatmul.f32.gmra.mxu0 %v2444
        %v2651 = vpop.f32.mrf.mxu0
        %v2652 = vadd.f32 %v2587, %v2651
        %2653 = vmatmul.f32.gmra.mxu0 %v2448
        %v2654 = vpop.f32.mrf.mxu0
        %v2655 = vadd.f32 %v2590, %v2654
        %2656 = vmatmul.f32.gmra.mxu0 %v2452
        %v2657 = vpop.f32.mrf.mxu0
        %v2658 = vadd.f32 %v2593, %v2657
        %2659 = vmatmul.f32.gmra.mxu0 %v2456
        %v2660 = vpop.f32.mrf.mxu0
        %v2661 = vadd.f32 %v2596, %v2660
        %2662 = vmatmul.f32.gmra.mxu0 %v2460
        %v2663 = vpop.f32.mrf.mxu0
        %v2664 = vadd.f32 %v2599, %v2663
        %2665 = vmatmul.f32.gmra.mxu0 %v2464
        %v2666 = vpop.f32.mrf.mxu0
        %v2667 = vadd.f32 %v2602, %v2666
        %2668 = vmatmul.f32.gmra.mxu0 %v2468
        %v2669 = vpop.f32.mrf.mxu0
        %v2670 = vadd.f32 %v2605, %v2669
        %2671 = vmatmul.f32.gmra.mxu0 %v2472
        %v2672 = vpop.f32.mrf.mxu0
        %v2673 = vadd.f32 %v2608, %v2672
        %2674 = vmatmul.f32.gmra.mxu0 %v2476
        %v2675 = vpop.f32.mrf.mxu0
        %v2676 = vadd.f32 %v2611, %v2675
        %2677 = vmatmul.f32.gmra.mxu0 %v2480
        %v2678 = vpop.f32.mrf.mxu0
        %v2679 = vadd.f32 %v2614, %v2678
        %2680 = vdwg.mxu0
        %2681 = vmatpush.msra.mxu0 %v2530
        %2682 = vmatpush.msra.mxu0 %v2529
        %2683 = vmatpush.msra.mxu0 %v2528
        %2684 = vmatpush.msra.mxu0 %v2527
        %2685 = vmatpush.msra.mxu0 %v2526
        %2686 = vmatpush.msra.mxu0 %v2525
        %2687 = vmatpush.msra.mxu0 %v2524
        %2688 = vmatpush.msra.mxu0 %v2523
        %2689 = vmatpush.msra.mxu0 %v2522
        %2690 = vmatpush.msra.mxu0 %v2521
        %2691 = vmatpush.msra.mxu0 %v2520
        %2692 = vmatpush.msra.mxu0 %v2519
        %2693 = vmatpush.msra.mxu0 %v2518
        %2694 = vmatpush.msra.mxu0 %v2517
        %2695 = vmatpush.msra.mxu0 %v2516
        %2696 = vmatpush.msra.mxu0 %v2515
        %2697 = vmatmul.f32.gmra.mxu0 %v2421
        %v2698 = vpop.f32.mrf.mxu0
        %v2699 = vadd.f32 %v2634, %v2698
        %2700 = vmatmul.f32.gmra.mxu0 %v2425
        %v2701 = vpop.f32.mrf.mxu0
        %v2702 = vadd.f32 %v2637, %v2701
        %2703 = vmatmul.f32.gmra.mxu0 %v2429
        %v2704 = vpop.f32.mrf.mxu0
        %v2705 = vadd.f32 %v2640, %v2704
        %2706 = vmatmul.f32.gmra.mxu0 %v2433
        %v2707 = vpop.f32.mrf.mxu0
        %v2708 = vadd.f32 %v2643, %v2707
        %2709 = vmatmul.f32.gmra.mxu0 %v2437
        %v2710 = vpop.f32.mrf.mxu0
        %v2711 = vadd.f32 %v2646, %v2710
        %2712 = vmatmul.f32.gmra.mxu0 %v2441
        %v2713 = vpop.f32.mrf.mxu0
        %v2714 = vadd.f32 %v2649, %v2713
        %2715 = vmatmul.f32.gmra.mxu0 %v2445
        %v2716 = vpop.f32.mrf.mxu0
        %v2717 = vadd.f32 %v2652, %v2716
        %2718 = vmatmul.f32.gmra.mxu0 %v2449
        %v2719 = vpop.f32.mrf.mxu0
        %v2720 = vadd.f32 %v2655, %v2719
        %2721 = vmatmul.f32.gmra.mxu0 %v2453
        %v2722 = vpop.f32.mrf.mxu0
        %v2723 = vadd.f32 %v2658, %v2722
        %2724 = vmatmul.f32.gmra.mxu0 %v2457
        %v2725 = vpop.f32.mrf.mxu0
        %v2726 = vadd.f32 %v2661, %v2725
        %2727 = vmatmul.f32.gmra.mxu0 %v2461
        %v2728 = vpop.f32.mrf.mxu0
        %v2729 = vadd.f32 %v2664, %v2728
        %2730 = vmatmul.f32.gmra.mxu0 %v2465
        %v2731 = vpop.f32.mrf.mxu0
        %v2732 = vadd.f32 %v2667, %v2731
        %2733 = vmatmul.f32.gmra.mxu0 %v2469
        %v2734 = vpop.f32.mrf.mxu0
        %v2735 = vadd.f32 %v2670, %v2734
        %2736 = vmatmul.f32.gmra.mxu0 %v2473
        %v2737 = vpop.f32.mrf.mxu0
        %v2738 = vadd.f32 %v2673, %v2737
        %2739 = vmatmul.f32.gmra.mxu0 %v2477
        %v2740 = vpop.f32.mrf.mxu0
        %v2741 = vadd.f32 %v2676, %v2740
        %2742 = vmatmul.f32.gmra.mxu0 %v2481
        %v2743 = vpop.f32.mrf.mxu0
        %v2744 = vadd.f32 %v2679, %v2743
        %2745 = vdwg.mxu0
        %2746 = vmatpush.msra.mxu0 %v2546
        %2747 = vmatpush.msra.mxu0 %v2545
        %2748 = vmatpush.msra.mxu0 %v2544
        %2749 = vmatpush.msra.mxu0 %v2543
        %2750 = vmatpush.msra.mxu0 %v2542
        %2751 = vmatpush.msra.mxu0 %v2541
        %2752 = vmatpush.msra.mxu0 %v2540
        %2753 = vmatpush.msra.mxu0 %v2539
        %2754 = vmatpush.msra.mxu0 %v2538
        %2755 = vmatpush.msra.mxu0 %v2537
        %2756 = vmatpush.msra.mxu0 %v2536
        %2757 = vmatpush.msra.mxu0 %v2535
        %2758 = vmatpush.msra.mxu0 %v2534
        %2759 = vmatpush.msra.mxu0 %v2533
        %2760 = vmatpush.msra.mxu0 %v2532
        %2761 = vmatpush.msra.mxu0 %v2531
        %2762 = vmatmul.f32.gmra.mxu0 %v2422
        %v2763 = vpop.f32.mrf.mxu0
        %v2764 = vadd.f32 %v2699, %v2763
        %2765 = vmatmul.f32.gmra.mxu0 %v2426
        %v2766 = vpop.f32.mrf.mxu0
        %v2767 = vadd.f32 %v2702, %v2766
        %2768 = vmatmul.f32.gmra.mxu0 %v2430
        %v2769 = vpop.f32.mrf.mxu0
        %v2770 = vadd.f32 %v2705, %v2769
        %2771 = vmatmul.f32.gmra.mxu0 %v2434
        %v2772 = vpop.f32.mrf.mxu0
        %v2773 = vadd.f32 %v2708, %v2772
        %2774 = vmatmul.f32.gmra.mxu0 %v2438
        %v2775 = vpop.f32.mrf.mxu0
        %v2776 = vadd.f32 %v2711, %v2775
        %2777 = vmatmul.f32.gmra.mxu0 %v2442
        %v2778 = vpop.f32.mrf.mxu0
        %v2779 = vadd.f32 %v2714, %v2778
        %2780 = vmatmul.f32.gmra.mxu0 %v2446
        %v2781 = vpop.f32.mrf.mxu0
        %v2782 = vadd.f32 %v2717, %v2781
        %2783 = vmatmul.f32.gmra.mxu0 %v2450
        %v2784 = vpop.f32.mrf.mxu0
        %v2785 = vadd.f32 %v2720, %v2784
        %2786 = vmatmul.f32.gmra.mxu0 %v2454
        %v2787 = vpop.f32.mrf.mxu0
        %v2788 = vadd.f32 %v2723, %v2787
        %2789 = vmatmul.f32.gmra.mxu0 %v2458
        %v2790 = vpop.f32.mrf.mxu0
        %v2791 = vadd.f32 %v2726, %v2790
        %2792 = vmatmul.f32.gmra.mxu0 %v2462
        %v2793 = vpop.f32.mrf.mxu0
        %v2794 = vadd.f32 %v2729, %v2793
        %2795 = vmatmul.f32.gmra.mxu0 %v2466
        %v2796 = vpop.f32.mrf.mxu0
        %v2797 = vadd.f32 %v2732, %v2796
        %2798 = vmatmul.f32.gmra.mxu0 %v2470
        %v2799 = vpop.f32.mrf.mxu0
        %v2800 = vadd.f32 %v2735, %v2799
        %2801 = vmatmul.f32.gmra.mxu0 %v2474
        %v2802 = vpop.f32.mrf.mxu0
        %v2803 = vadd.f32 %v2738, %v2802
        %2804 = vmatmul.f32.gmra.mxu0 %v2478
        %v2805 = vpop.f32.mrf.mxu0
        %v2806 = vadd.f32 %v2741, %v2805
        %2807 = vmatmul.f32.gmra.mxu0 %v2482
        %v2808 = vpop.f32.mrf.mxu0
        %v2809 = vadd.f32 %v2744, %v2808
        %2810 = vdwg.mxu0
        %v2811 = vadd.f32 %v2764, %v2069
        %v2812 = vadd.f32 %v2767, %v2070
        %v2813 = vadd.f32 %v2770, %v2071
        %v2814 = vadd.f32 %v2773, %v2072
        %v2815 = vadd.f32 %v2776, %v2073
        %v2816 = vadd.f32 %v2779, %v2074
        %v2817 = vadd.f32 %v2782, %v2075
        %v2818 = vadd.f32 %v2785, %v2076
        %v2819 = vadd.f32 %v2788, %v2077
        %v2820 = vadd.f32 %v2791, %v2078
        %v2821 = vadd.f32 %v2794, %v2079
        %v2822 = vadd.f32 %v2797, %v2080
        %v2823 = vadd.f32 %v2800, %v2081
        %v2824 = vadd.f32 %v2803, %v2082
        %v2825 = vadd.f32 %v2806, %v2083
        %v2826 = vadd.f32 %v2809, %v2084
        %2827 = vst [vmem:[%s588] sm:$0xff] %v2811
        %2828 = vst [vmem:[%s588 + $0x8] sm:$0xff] %v2812
        %2829 = vst [vmem:[%s588 + $0x10] sm:$0xff] %v2813
        %2830 = vst [vmem:[%s588 + $0x18] sm:$0xff] %v2814
        %2831 = vst [vmem:[%s588 + $0x20] sm:$0xff] %v2815
        %2832 = vst [vmem:[%s588 + $0x28] sm:$0xff] %v2816
        %2833 = vst [vmem:[%s588 + $0x30] sm:$0xff] %v2817
        %2834 = vst [vmem:[%s588 + $0x38] sm:$0xff] %v2818
        %2835 = vst [vmem:[%s588 + $0x40] sm:$0xff] %v2819
        %2836 = vst [vmem:[%s588 + $0x48] sm:$0xff] %v2820
        %2837 = vst [vmem:[%s588 + $0x50] sm:$0xff] %v2821
        %2838 = vst [vmem:[%s588 + $0x58] sm:$0xff] %v2822
        %2839 = vst [vmem:[%s588 + $0x60] sm:$0xff] %v2823
        %2840 = vst [vmem:[%s588 + $0x68] sm:$0xff] %v2824
        %2841 = vst [vmem:[%s588 + $0x70] sm:$0xff] %v2825
        %2842 = vst [vmem:[%s588 + $0x78] sm:$0xff] %v2826
        %p2843 = scmp.lt.s32.totalorder %s30, 1
        %s2844 = scalar_select %p2843, %s30, 1
        %s2845 = smul.addr %s2844, 16
        %s2846 = smul.addr %s2845, 8
        %s2847 = scalar_lea.vmem %s15, %s2846
        // Predicated region
        $region105: #{reformer_lm.5} parent=79 // pred_check
          %p2848 = pneg %p368
        $region106: #{reformer_lm.5} parent=79 // pred_check_branch
          %2850 = sbr.rel (%p2848) target = $region108
        $region107: #{reformer_lm.5} parent=79 // pred_region
          _
        $region108: #{reformer_lm.5} parent=79 // pred_fallthru
          _
      $region80: #{reformer_lm.5} parent=5 // pred_fallthru
        _
      %p2851 = scmp.le.s32.totalorder 2, %s25
      // Predicated region
      $region109: #{reformer_lm.5} parent=5 // pred_check
        %p2852 = pneg %p2851
      $region110: #{reformer_lm.5} parent=5 // pred_check_branch
        %2854 = sbr.rel (%p2852) target = $region112
      $region111: #{reformer_lm.5} parent=5 // pred_region
        %s2855 = ssub.s32 %s25, 2
        // Predicated region
        $region113: #{reformer_lm.5} parent=111 // pred_check
          %p2856 = pneg %p374
        $region114: #{reformer_lm.5} parent=111 // pred_check_branch
          %2858 = sbr.rel (%p2856) target = $region116
        $region115: #{reformer_lm.5} parent=111 // pred_region
          %p2859 = scmp.lt.s32.totalorder %s31, 1
          %s2860 = scalar_select %p2859, %s31, 1
          %s2861 = smul.addr %s2860, 16
          %s2862 = smul.addr %s2861, 8
          %s2863 = scalar_lea.vmem %s15, %s2862
        $region116: #{reformer_lm.5} parent=111 // pred_fallthru
          _
      $region112: #{reformer_lm.5} parent=5 // pred_fallthru
        _
    $region6: #{reformer_lm.5} parent=1 // loop_footer
      %s29 = sadd.s32 1, %s25
    $region7: #{reformer_lm.5} parent=1 // loop_footer_branch
      %24 = sbr.rel target = $region3
    $region8: #{reformer_lm.5} parent=1 // loop_exit
      _
    %2864 = vsyncpa [#allocation3], 1
    %s2865 = scalar_lea.sflag [#allocation3], 1
    %2866 = vsyncpa %s2865, 1
    %2867 = vsyncpa [#allocation5], 1
    %2868 = vsyncpa [#allocation8], 1
    %2869 = vsyncpa [#allocation11], 1

// kernel: reformer_lm.6
$region0: #{reformer_lm.6}
  #allocation0 [shape = 'u32[]', space=smem, size = 0x4, offset = 0x4, fixed_abs, tag = 'smem constant byte address 0x4 - core index']
  #allocation1 [shape = 'u32[72,128]{1,0:T(1,128)}', space=vmem, size = 0x9000, scoped, tag = 'internal scratch']
  %s0 = inlined_call_operand.vmem [shape: f32[2,128,128], index: 0, kind: input, shape index: {}]
  %s1 = inlined_call_operand.vmem [shape: f32[1,128], index: 1, kind: input, shape index: {}]
  %s2 = inlined_call_operand.vmem [shape: f32[1,128], index: 2, kind: input, shape index: {}]
  %s3 = inlined_call_operand.vmem [shape: f32[128,128], index: 3, kind: input, shape index: {}]
  %s4 = inlined_call_operand.vmem [shape: f32[1,128], index: 4, kind: input, shape index: {}]
  %s5 = inlined_call_operand.vmem [shape: f32[128,128], index: 5, kind: input, shape index: {}]
  %s6 = inlined_call_operand.vmem [shape: f32[1,128], index: 6, kind: input, shape index: {}]
  %s7 = inlined_call_operand.vmem [shape: f32[128,128], index: 7, kind: input, shape index: {}]
  %s8 = inlined_call_operand.vmem [shape: f32[1,128], index: 8, kind: input, shape index: {}]
  %s9 = inlined_call_operand.vmem [shape: f32[1,128], index: 9, kind: input, shape index: {}]
  %s10 = inlined_call_operand.vmem [shape: f32[1,128], index: 10, kind: input, shape index: {}]
  %s11 = inlined_call_operand.vmem [shape: f32[128,512], index: 11, kind: input, shape index: {}]
  %s12 = inlined_call_operand.vmem [shape: f32[1,512], index: 12, kind: input, shape index: {}]
  %s13 = inlined_call_operand.vmem [shape: f32[512,128], index: 13, kind: input, shape index: {}]
  %s14 = inlined_call_operand.vmem [shape: f32[1,128], index: 14, kind: input, shape index: {}]
  %s15 = inlined_call_operand.vmem [shape: f32[2,128,128], index: 15, kind: output, shape index: {}]
  %s16 = sld [smem:[#allocation0]]
  $region93: #{reformer_lm.6} parent=0
    _
  %s18 = ssub.s32 1, %s16
  %s19 = scalar_select 0, %s18, %s16
  loop: start=0, step=1, limit=4
  $region2: #{reformer_lm.6} parent=0 // loop_pre_header
    _
  $region3: #{reformer_lm.6} parent=0 // loop_header
    %s21 = sphi 0, %s25
    %p22 = scmp.ge.s32.totalorder %s21, 4
    %s31 = sphi 0, %s33
    %s34 = sphi 0, %s31
    %s35 = sphi 0, %s34
    %s51 = sphi 0, %s35
    %s55 = sphi 0, %s55
    %s57 = sphi 0, %s55
    %s58 = sphi 0, %s57
    %s72 = sphi 0, %s58
    %s76 = sphi 0, %s76
    %s78 = sphi 0, %s76
    %s79 = sphi 0, %s78
    %s93 = sphi 0, %s79
    %s97 = sphi 0, %s97
    %s99 = sphi 0, %s97
    %s100 = sphi 0, %s99
    %s114 = sphi 0, %s100
    %s118 = sphi 0, %s118
    %s120 = sphi 0, %s118
    %s121 = sphi 0, %s120
    %s135 = sphi 0, %s121
    %s139 = sphi 0, %s139
    %s141 = sphi 0, %s139
    %s142 = sphi 0, %s141
    %s156 = sphi 0, %s142
    %s160 = sphi 0, %s160
    %s162 = sphi 0, %s160
    %s163 = sphi 0, %s162
    %s177 = sphi 0, %s163
    %s181 = sphi 0, %s181
    %s183 = sphi 0, %s181
    %s184 = sphi 0, %s183
    %s198 = sphi 0, %s184
    %s202 = sphi 0, %s202
    %s204 = sphi 0, %s202
    %s205 = sphi 0, %s204
    %s219 = sphi 0, %s205
    %s223 = sphi 0, %s223
    %s225 = sphi 0, %s223
    %s226 = sphi 0, %s225
    %s240 = sphi 0, %s226
    %s244 = sphi 0, %s244
    %s246 = sphi 0, %s244
    %s247 = sphi 0, %s246
    %s261 = sphi 0, %s247
    %s265 = sphi 0, %s265
    %s267 = sphi 0, %s265
    %s268 = sphi 0, %s267
    %s282 = sphi 0, %s268
    %s286 = sphi 0, %s286
    %s288 = sphi 0, %s286
    %s289 = sphi 0, %s288
    %s303 = sphi 0, %s289
    %s307 = sphi 0, %s307
    %s309 = sphi 0, %s307
    %s310 = sphi 0, %s309
    %s324 = sphi 0, %s310
    %s328 = sphi 0, %s328
    %s330 = sphi 0, %s328
    %s331 = sphi 0, %s330
    %s345 = sphi 0, %s331
    %s351 = sphi 0, %s353
    %s354 = sphi 0, %s351
    %s355 = sphi 0, %s354
    %s371 = sphi 0, %s355
  $region4: #{reformer_lm.6} parent=0 // loop_header_branch
    %24 = sbr.rel (%p22) target = $region8
  $region5: #{reformer_lm.6} parent=0 // loop_body
    %s26 = ssub.s32 %s21, 1
    %s27 = ssub.s32 %s21, 2
    %s28 = sadd.s32 %s21, 1
    %s29 = ssub.s32 %s21, %s28
    %p30 = scmp.eq.s32.totalorder %s29, 0
    %s32 = sadd.s32 %s31, 1
    %s33 = scalar_select %p30, %s31, %s32
    %p36 = pneg %p30
    %p37 = scmp.eq.s32.totalorder %s21, 1
    %p38 = por %p36, %p37
    %p39 = scmp.ne.s32.totalorder %s31, %s34
    %p40 = scmp.eq.s32.totalorder %s21, 0
    %p41 = por %p39, %p40
    %p42 = scmp.ne.s32.totalorder %s31, %s34
    %p43 = scmp.eq.s32.totalorder %s26, 1
    %p44 = por %p42, %p43
    %p45 = scmp.ne.s32.totalorder %s34, %s35
    %p46 = scmp.eq.s32.totalorder %s26, 0
    %p47 = por %p45, %p46
    %p48 = scmp.ne.s32.totalorder %s34, %s35
    %p49 = scmp.eq.s32.totalorder %s27, 1
    %p50 = por %p48, %p49
    %p52 = scmp.ne.s32.totalorder %s35, %s51
    %p53 = scmp.eq.s32.totalorder %s27, 0
    %p54 = por %p52, %p53
    %s56 = sadd.s32 %s55, 1
    %p59 = scmp.eq.s32.totalorder %s21, 1
    %p60 = scmp.ne.s32.totalorder %s55, %s57
    %p61 = scmp.eq.s32.totalorder %s21, 0
    %p62 = por %p60, %p61
    %p63 = scmp.ne.s32.totalorder %s55, %s57
    %p64 = scmp.eq.s32.totalorder %s26, 1
    %p65 = por %p63, %p64
    %p66 = scmp.ne.s32.totalorder %s57, %s58
    %p67 = scmp.eq.s32.totalorder %s26, 0
    %p68 = por %p66, %p67
    %p69 = scmp.ne.s32.totalorder %s57, %s58
    %p70 = scmp.eq.s32.totalorder %s27, 1
    %p71 = por %p69, %p70
    %p73 = scmp.ne.s32.totalorder %s58, %s72
    %p74 = scmp.eq.s32.totalorder %s27, 0
    %p75 = por %p73, %p74
    %s77 = sadd.s32 %s76, 1
    %p80 = scmp.eq.s32.totalorder %s21, 1
    %p81 = scmp.ne.s32.totalorder %s76, %s78
    %p82 = scmp.eq.s32.totalorder %s21, 0
    %p83 = por %p81, %p82
    %p84 = scmp.ne.s32.totalorder %s76, %s78
    %p85 = scmp.eq.s32.totalorder %s26, 1
    %p86 = por %p84, %p85
    %p87 = scmp.ne.s32.totalorder %s78, %s79
    %p88 = scmp.eq.s32.totalorder %s26, 0
    %p89 = por %p87, %p88
    %p90 = scmp.ne.s32.totalorder %s78, %s79
    %p91 = scmp.eq.s32.totalorder %s27, 1
    %p92 = por %p90, %p91
    %p94 = scmp.ne.s32.totalorder %s79, %s93
    %p95 = scmp.eq.s32.totalorder %s27, 0
    %p96 = por %p94, %p95
    %s98 = sadd.s32 %s97, 1
    %p101 = scmp.eq.s32.totalorder %s21, 1
    %p102 = scmp.ne.s32.totalorder %s97, %s99
    %p103 = scmp.eq.s32.totalorder %s21, 0
    %p104 = por %p102, %p103
    %p105 = scmp.ne.s32.totalorder %s97, %s99
    %p106 = scmp.eq.s32.totalorder %s26, 1
    %p107 = por %p105, %p106
    %p108 = scmp.ne.s32.totalorder %s99, %s100
    %p109 = scmp.eq.s32.totalorder %s26, 0
    %p110 = por %p108, %p109
    %p111 = scmp.ne.s32.totalorder %s99, %s100
    %p112 = scmp.eq.s32.totalorder %s27, 1
    %p113 = por %p111, %p112
    %p115 = scmp.ne.s32.totalorder %s100, %s114
    %p116 = scmp.eq.s32.totalorder %s27, 0
    %p117 = por %p115, %p116
    %s119 = sadd.s32 %s118, 1
    %p122 = scmp.eq.s32.totalorder %s21, 1
    %p123 = scmp.ne.s32.totalorder %s118, %s120
    %p124 = scmp.eq.s32.totalorder %s21, 0
    %p125 = por %p123, %p124
    %p126 = scmp.ne.s32.totalorder %s118, %s120
    %p127 = scmp.eq.s32.totalorder %s26, 1
    %p128 = por %p126, %p127
    %p129 = scmp.ne.s32.totalorder %s120, %s121
    %p130 = scmp.eq.s32.totalorder %s26, 0
    %p131 = por %p129, %p130
    %p132 = scmp.ne.s32.totalorder %s120, %s121
    %p133 = scmp.eq.s32.totalorder %s27, 1
    %p134 = por %p132, %p133
    %p136 = scmp.ne.s32.totalorder %s121, %s135
    %p137 = scmp.eq.s32.totalorder %s27, 0
    %p138 = por %p136, %p137
    %s140 = sadd.s32 %s139, 1
    %p143 = scmp.eq.s32.totalorder %s21, 1
    %p144 = scmp.ne.s32.totalorder %s139, %s141
    %p145 = scmp.eq.s32.totalorder %s21, 0
    %p146 = por %p144, %p145
    %p147 = scmp.ne.s32.totalorder %s139, %s141
    %p148 = scmp.eq.s32.totalorder %s26, 1
    %p149 = por %p147, %p148
    %p150 = scmp.ne.s32.totalorder %s141, %s142
    %p151 = scmp.eq.s32.totalorder %s26, 0
    %p152 = por %p150, %p151
    %p153 = scmp.ne.s32.totalorder %s141, %s142
    %p154 = scmp.eq.s32.totalorder %s27, 1
    %p155 = por %p153, %p154
    %p157 = scmp.ne.s32.totalorder %s142, %s156
    %p158 = scmp.eq.s32.totalorder %s27, 0
    %p159 = por %p157, %p158
    %s161 = sadd.s32 %s160, 1
    %p164 = scmp.eq.s32.totalorder %s21, 1
    %p165 = scmp.ne.s32.totalorder %s160, %s162
    %p166 = scmp.eq.s32.totalorder %s21, 0
    %p167 = por %p165, %p166
    %p168 = scmp.ne.s32.totalorder %s160, %s162
    %p169 = scmp.eq.s32.totalorder %s26, 1
    %p170 = por %p168, %p169
    %p171 = scmp.ne.s32.totalorder %s162, %s163
    %p172 = scmp.eq.s32.totalorder %s26, 0
    %p173 = por %p171, %p172
    %p174 = scmp.ne.s32.totalorder %s162, %s163
    %p175 = scmp.eq.s32.totalorder %s27, 1
    %p176 = por %p174, %p175
    %p178 = scmp.ne.s32.totalorder %s163, %s177
    %p179 = scmp.eq.s32.totalorder %s27, 0
    %p180 = por %p178, %p179
    %s182 = sadd.s32 %s181, 1
    %p185 = scmp.eq.s32.totalorder %s21, 1
    %p186 = scmp.ne.s32.totalorder %s181, %s183
    %p187 = scmp.eq.s32.totalorder %s21, 0
    %p188 = por %p186, %p187
    %p189 = scmp.ne.s32.totalorder %s181, %s183
    %p190 = scmp.eq.s32.totalorder %s26, 1
    %p191 = por %p189, %p190
    %p192 = scmp.ne.s32.totalorder %s183, %s184
    %p193 = scmp.eq.s32.totalorder %s26, 0
    %p194 = por %p192, %p193
    %p195 = scmp.ne.s32.totalorder %s183, %s184
    %p196 = scmp.eq.s32.totalorder %s27, 1
    %p197 = por %p195, %p196
    %p199 = scmp.ne.s32.totalorder %s184, %s198
    %p200 = scmp.eq.s32.totalorder %s27, 0
    %p201 = por %p199, %p200
    %s203 = sadd.s32 %s202, 1
    %p206 = scmp.eq.s32.totalorder %s21, 1
    %p207 = scmp.ne.s32.totalorder %s202, %s204
    %p208 = scmp.eq.s32.totalorder %s21, 0
    %p209 = por %p207, %p208
    %p210 = scmp.ne.s32.totalorder %s202, %s204
    %p211 = scmp.eq.s32.totalorder %s26, 1
    %p212 = por %p210, %p211
    %p213 = scmp.ne.s32.totalorder %s204, %s205
    %p214 = scmp.eq.s32.totalorder %s26, 0
    %p215 = por %p213, %p214
    %p216 = scmp.ne.s32.totalorder %s204, %s205
    %p217 = scmp.eq.s32.totalorder %s27, 1
    %p218 = por %p216, %p217
    %p220 = scmp.ne.s32.totalorder %s205, %s219
    %p221 = scmp.eq.s32.totalorder %s27, 0
    %p222 = por %p220, %p221
    %s224 = sadd.s32 %s223, 1
    %p227 = scmp.eq.s32.totalorder %s21, 1
    %p228 = scmp.ne.s32.totalorder %s223, %s225
    %p229 = scmp.eq.s32.totalorder %s21, 0
    %p230 = por %p228, %p229
    %p231 = scmp.ne.s32.totalorder %s223, %s225
    %p232 = scmp.eq.s32.totalorder %s26, 1
    %p233 = por %p231, %p232
    %p234 = scmp.ne.s32.totalorder %s225, %s226
    %p235 = scmp.eq.s32.totalorder %s26, 0
    %p236 = por %p234, %p235
    %p237 = scmp.ne.s32.totalorder %s225, %s226
    %p238 = scmp.eq.s32.totalorder %s27, 1
    %p239 = por %p237, %p238
    %p241 = scmp.ne.s32.totalorder %s226, %s240
    %p242 = scmp.eq.s32.totalorder %s27, 0
    %p243 = por %p241, %p242
    %s245 = sadd.s32 %s244, 1
    %p248 = scmp.eq.s32.totalorder %s21, 1
    %p249 = scmp.ne.s32.totalorder %s244, %s246
    %p250 = scmp.eq.s32.totalorder %s21, 0
    %p251 = por %p249, %p250
    %p252 = scmp.ne.s32.totalorder %s244, %s246
    %p253 = scmp.eq.s32.totalorder %s26, 1
    %p254 = por %p252, %p253
    %p255 = scmp.ne.s32.totalorder %s246, %s247
    %p256 = scmp.eq.s32.totalorder %s26, 0
    %p257 = por %p255, %p256
    %p258 = scmp.ne.s32.totalorder %s246, %s247
    %p259 = scmp.eq.s32.totalorder %s27, 1
    %p260 = por %p258, %p259
    %p262 = scmp.ne.s32.totalorder %s247, %s261
    %p263 = scmp.eq.s32.totalorder %s27, 0
    %p264 = por %p262, %p263
    %s266 = sadd.s32 %s265, 1
    %p269 = scmp.eq.s32.totalorder %s21, 1
    %p270 = scmp.ne.s32.totalorder %s265, %s267
    %p271 = scmp.eq.s32.totalorder %s21, 0
    %p272 = por %p270, %p271
    %p273 = scmp.ne.s32.totalorder %s265, %s267
    %p274 = scmp.eq.s32.totalorder %s26, 1
    %p275 = por %p273, %p274
    %p276 = scmp.ne.s32.totalorder %s267, %s268
    %p277 = scmp.eq.s32.totalorder %s26, 0
    %p278 = por %p276, %p277
    %p279 = scmp.ne.s32.totalorder %s267, %s268
    %p280 = scmp.eq.s32.totalorder %s27, 1
    %p281 = por %p279, %p280
    %p283 = scmp.ne.s32.totalorder %s268, %s282
    %p284 = scmp.eq.s32.totalorder %s27, 0
    %p285 = por %p283, %p284
    %s287 = sadd.s32 %s286, 1
    %p290 = scmp.eq.s32.totalorder %s21, 1
    %p291 = scmp.ne.s32.totalorder %s286, %s288
    %p292 = scmp.eq.s32.totalorder %s21, 0
    %p293 = por %p291, %p292
    %p294 = scmp.ne.s32.totalorder %s286, %s288
    %p295 = scmp.eq.s32.totalorder %s26, 1
    %p296 = por %p294, %p295
    %p297 = scmp.ne.s32.totalorder %s288, %s289
    %p298 = scmp.eq.s32.totalorder %s26, 0
    %p299 = por %p297, %p298
    %p300 = scmp.ne.s32.totalorder %s288, %s289
    %p301 = scmp.eq.s32.totalorder %s27, 1
    %p302 = por %p300, %p301
    %p304 = scmp.ne.s32.totalorder %s289, %s303
    %p305 = scmp.eq.s32.totalorder %s27, 0
    %p306 = por %p304, %p305
    %s308 = sadd.s32 %s307, 1
    %p311 = scmp.eq.s32.totalorder %s21, 1
    %p312 = scmp.ne.s32.totalorder %s307, %s309
    %p313 = scmp.eq.s32.totalorder %s21, 0
    %p314 = por %p312, %p313
    %p315 = scmp.ne.s32.totalorder %s307, %s309
    %p316 = scmp.eq.s32.totalorder %s26, 1
    %p317 = por %p315, %p316
    %p318 = scmp.ne.s32.totalorder %s309, %s310
    %p319 = scmp.eq.s32.totalorder %s26, 0
    %p320 = por %p318, %p319
    %p321 = scmp.ne.s32.totalorder %s309, %s310
    %p322 = scmp.eq.s32.totalorder %s27, 1
    %p323 = por %p321, %p322
    %p325 = scmp.ne.s32.totalorder %s310, %s324
    %p326 = scmp.eq.s32.totalorder %s27, 0
    %p327 = por %p325, %p326
    %s329 = sadd.s32 %s328, 1
    %p332 = scmp.eq.s32.totalorder %s21, 1
    %p333 = scmp.ne.s32.totalorder %s328, %s330
    %p334 = scmp.eq.s32.totalorder %s21, 0
    %p335 = por %p333, %p334
    %p336 = scmp.ne.s32.totalorder %s328, %s330
    %p337 = scmp.eq.s32.totalorder %s26, 1
    %p338 = por %p336, %p337
    %p339 = scmp.ne.s32.totalorder %s330, %s331
    %p340 = scmp.eq.s32.totalorder %s26, 0
    %p341 = por %p339, %p340
    %p342 = scmp.ne.s32.totalorder %s330, %s331
    %p343 = scmp.eq.s32.totalorder %s27, 1
    %p344 = por %p342, %p343
    %p346 = scmp.ne.s32.totalorder %s331, %s345
    %p347 = scmp.eq.s32.totalorder %s27, 0
    %p348 = por %p346, %p347
    %s349 = ssub.s32 %s21, %s28
    %p350 = scmp.eq.s32.totalorder %s349, 0
    %s352 = sadd.s32 %s351, 1
    %s353 = scalar_select %p350, %s351, %s352
    %p356 = pneg %p350
    %p357 = scmp.eq.s32.totalorder %s21, 1
    %p358 = por %p356, %p357
    %p359 = scmp.ne.s32.totalorder %s351, %s354
    %p360 = scmp.eq.s32.totalorder %s21, 0
    %p361 = por %p359, %p360
    %p362 = scmp.ne.s32.totalorder %s351, %s354
    %p363 = scmp.eq.s32.totalorder %s26, 1
    %p364 = por %p362, %p363
    %p365 = scmp.ne.s32.totalorder %s354, %s355
    %p366 = scmp.eq.s32.totalorder %s26, 0
    %p367 = por %p365, %p366
    %p368 = scmp.ne.s32.totalorder %s354, %s355
    %p369 = scmp.eq.s32.totalorder %s27, 1
    %p370 = por %p368, %p369
    %p372 = scmp.ne.s32.totalorder %s355, %s371
    %p373 = scmp.eq.s32.totalorder %s27, 0
    %p374 = por %p372, %p373
    %p375 = scmp.le.s32.totalorder 1, %s21
    %p376 = scmp.lt.s32.totalorder %s21, 3
    %p377 = pnand %p375, %p376
    %p378 = pneg %p377
    // Predicated region
    $region9: #{reformer_lm.6} parent=5 // pred_check
      _
    $region10: #{reformer_lm.6} parent=5 // pred_check_branch
      %380 = sbr.rel (%p377) target = $region12
    $region11: #{reformer_lm.6} parent=5 // pred_region
      %s381 = ssub.s32 %s21, 1
      // Predicated region
      $region13: #{reformer_lm.6} parent=11 // pred_check
        %p382 = pneg %p68
      $region14: #{reformer_lm.6} parent=11 // pred_check_branch
        %384 = sbr.rel (%p382) target = $region16
      $region15: #{reformer_lm.6} parent=11 // pred_region
        _
      $region16: #{reformer_lm.6} parent=11 // pred_fallthru
        _
      // Predicated region
      $region17: #{reformer_lm.6} parent=11 // pred_check
        %p385 = pneg %p89
      $region18: #{reformer_lm.6} parent=11 // pred_check_branch
        %387 = sbr.rel (%p385) target = $region20
      $region19: #{reformer_lm.6} parent=11 // pred_region
        _
      $region20: #{reformer_lm.6} parent=11 // pred_fallthru
        _
      // Predicated region
      $region21: #{reformer_lm.6} parent=11 // pred_check
        %p388 = pneg %p110
      $region22: #{reformer_lm.6} parent=11 // pred_check_branch
        %390 = sbr.rel (%p388) target = $region24
      $region23: #{reformer_lm.6} parent=11 // pred_region
        _
      $region24: #{reformer_lm.6} parent=11 // pred_fallthru
        _
      // Predicated region
      $region25: #{reformer_lm.6} parent=11 // pred_check
        %p391 = pneg %p131
      $region26: #{reformer_lm.6} parent=11 // pred_check_branch
        %393 = sbr.rel (%p391) target = $region28
      $region27: #{reformer_lm.6} parent=11 // pred_region
        _
      $region28: #{reformer_lm.6} parent=11 // pred_fallthru
        _
      // Predicated region
      $region29: #{reformer_lm.6} parent=11 // pred_check
        %p394 = pneg %p152
      $region30: #{reformer_lm.6} parent=11 // pred_check_branch
        %396 = sbr.rel (%p394) target = $region32
      $region31: #{reformer_lm.6} parent=11 // pred_region
        _
      $region32: #{reformer_lm.6} parent=11 // pred_fallthru
        _
      // Predicated region
      $region33: #{reformer_lm.6} parent=11 // pred_check
        %p397 = pneg %p173
      $region34: #{reformer_lm.6} parent=11 // pred_check_branch
        %399 = sbr.rel (%p397) target = $region36
      $region35: #{reformer_lm.6} parent=11 // pred_region
        _
      $region36: #{reformer_lm.6} parent=11 // pred_fallthru
        _
      // Predicated region
      $region37: #{reformer_lm.6} parent=11 // pred_check
        %p400 = pneg %p194
      $region38: #{reformer_lm.6} parent=11 // pred_check_branch
        %402 = sbr.rel (%p400) target = $region40
      $region39: #{reformer_lm.6} parent=11 // pred_region
        _
      $region40: #{reformer_lm.6} parent=11 // pred_fallthru
        _
      // Predicated region
      $region41: #{reformer_lm.6} parent=11 // pred_check
        %p403 = pneg %p215
      $region42: #{reformer_lm.6} parent=11 // pred_check_branch
        %405 = sbr.rel (%p403) target = $region44
      $region43: #{reformer_lm.6} parent=11 // pred_region
        _
      $region44: #{reformer_lm.6} parent=11 // pred_fallthru
        _
      // Predicated region
      $region45: #{reformer_lm.6} parent=11 // pred_check
        %p406 = pneg %p236
      $region46: #{reformer_lm.6} parent=11 // pred_check_branch
        %408 = sbr.rel (%p406) target = $region48
      $region47: #{reformer_lm.6} parent=11 // pred_region
        _
      $region48: #{reformer_lm.6} parent=11 // pred_fallthru
        _
      // Predicated region
      $region49: #{reformer_lm.6} parent=11 // pred_check
        %p409 = pneg %p257
      $region50: #{reformer_lm.6} parent=11 // pred_check_branch
        %411 = sbr.rel (%p409) target = $region52
      $region51: #{reformer_lm.6} parent=11 // pred_region
        _
      $region52: #{reformer_lm.6} parent=11 // pred_fallthru
        _
      // Predicated region
      $region53: #{reformer_lm.6} parent=11 // pred_check
        %p412 = pneg %p278
      $region54: #{reformer_lm.6} parent=11 // pred_check_branch
        %414 = sbr.rel (%p412) target = $region56
      $region55: #{reformer_lm.6} parent=11 // pred_region
        _
      $region56: #{reformer_lm.6} parent=11 // pred_fallthru
        _
      // Predicated region
      $region57: #{reformer_lm.6} parent=11 // pred_check
        %p415 = pneg %p299
      $region58: #{reformer_lm.6} parent=11 // pred_check_branch
        %417 = sbr.rel (%p415) target = $region60
      $region59: #{reformer_lm.6} parent=11 // pred_region
        _
      $region60: #{reformer_lm.6} parent=11 // pred_fallthru
        _
      // Predicated region
      $region61: #{reformer_lm.6} parent=11 // pred_check
        %p418 = pneg %p320
      $region62: #{reformer_lm.6} parent=11 // pred_check_branch
        %420 = sbr.rel (%p418) target = $region64
      $region63: #{reformer_lm.6} parent=11 // pred_region
        _
      $region64: #{reformer_lm.6} parent=11 // pred_fallthru
        _
      // Predicated region
      $region65: #{reformer_lm.6} parent=11 // pred_check
        %p421 = pneg %p341
      $region66: #{reformer_lm.6} parent=11 // pred_check_branch
        %423 = sbr.rel (%p421) target = $region68
      $region67: #{reformer_lm.6} parent=11 // pred_region
        _
      $region68: #{reformer_lm.6} parent=11 // pred_fallthru
        _
    $region12: #{reformer_lm.6} parent=5 // pred_fallthru
      _
    %p424 = scmp.lt.s32.totalorder %s21, 2
    // Predicated region
    $region69: #{reformer_lm.6} parent=5 // pred_check
      %p425 = pneg %p424
    $region70: #{reformer_lm.6} parent=5 // pred_check_branch
      %427 = sbr.rel (%p425) target = $region72
    $region71: #{reformer_lm.6} parent=5 // pred_region
      // Predicated region
      $region73: #{reformer_lm.6} parent=71 // pred_check
        %p428 = pneg %p41
      $region74: #{reformer_lm.6} parent=71 // pred_check_branch
        %430 = sbr.rel (%p428) target = $region76
      $region75: #{reformer_lm.6} parent=71 // pred_region
        %p431 = scmp.lt.s32.totalorder %s21, 1
        %s432 = scalar_select %p431, %s21, 1
        %s433 = smul.addr %s432, 16
        %s434 = smul.addr %s433, 8
        %s435 = scalar_lea.vmem %s0, %s434
      $region76: #{reformer_lm.6} parent=71 // pred_fallthru
        _
    $region72: #{reformer_lm.6} parent=5 // pred_fallthru
      _
    %p436 = scmp.le.s32.totalorder 1, %s21
    %p437 = scmp.lt.s32.totalorder %s21, 3
    %p438 = pnand %p436, %p437
    %p439 = pneg %p438
    // Predicated region
    $region77: #{reformer_lm.6} parent=5 // pred_check
      _
    $region78: #{reformer_lm.6} parent=5 // pred_check_branch
      %441 = sbr.rel (%p438) target = $region80
    $region79: #{reformer_lm.6} parent=5 // pred_region
      %s442 = ssub.s32 %s21, 1
      %p443 = scmp.lt.s32.totalorder %s26, 1
      %s444 = scalar_select %p443, %s26, 1
      %s445 = smul.addr %s444, 16
      %s446 = smul.addr %s445, 8
      %s447 = scalar_lea.vmem %s0, %s446
      %p448 = pneg %p47
      %p449 = pneg %p44
      %p450 = pneg %p68
      %p451 = pneg %p65
      %p452 = pneg %p89
      %p453 = pneg %p86
      %p454 = pneg %p110
      %p455 = pneg %p107
      %p456 = pneg %p131
      %p457 = pneg %p128
      %p458 = pneg %p152
      %p459 = pneg %p149
      %p460 = pneg %p173
      %p461 = pneg %p170
      %p462 = pneg %p194
      %p463 = pneg %p191
      %p464 = pneg %p215
      %p465 = pneg %p212
      %p466 = pneg %p236
      %p467 = pneg %p233
      %p468 = pneg %p257
      %p469 = pneg %p254
      %p470 = pneg %p278
      %p471 = pneg %p275
      %p472 = pneg %p299
      %p473 = pneg %p296
      %p474 = pneg %p320
      %p475 = pneg %p317
      %p476 = pneg %p341
      %p477 = pneg %p338
      %p478 = pneg %p367
      %p479 = pneg %p364
      %p480 = scmp.lt.s32.totalorder %s26, 1
      %s481 = scalar_select %p480, %s26, 1
      %s482 = smul.addr %s481, 16
      %s483 = smul.addr %s482, 8
      %s484 = scalar_lea.vmem %s15, %s483
      %p485 = scmp.lt.s32.totalorder %s26, 1
      %s486 = scalar_select %p485, %s26, 1
      %s487 = smul.addr %s486, 16
      %s488 = smul.addr %s487, 8
      %s489 = scalar_lea.vmem %s0, %s488
      %p490 = scmp.lt.s32.totalorder %s26, 1
      %s491 = scalar_select %p490, %s26, 1
      %s492 = smul.addr %s491, 16
      %s493 = smul.addr %s492, 8
      %s494 = scalar_lea.vmem %s15, %s493
      %v495 = vld [vmem:[%s489] sm:$0xff]
      %v496 = vld [vmem:[%s489 + $0x8] sm:$0xff]
      %v497 = vld [vmem:[%s489 + $0x10] sm:$0xff]
      %v498 = vld [vmem:[%s489 + $0x18] sm:$0xff]
      %v499 = vld [vmem:[%s489 + $0x20] sm:$0xff]
      %v500 = vld [vmem:[%s489 + $0x28] sm:$0xff]
      %v501 = vld [vmem:[%s489 + $0x30] sm:$0xff]
      %v502 = vld [vmem:[%s489 + $0x38] sm:$0xff]
      %v503 = vld [vmem:[%s489 + $0x40] sm:$0xff]
      %v504 = vld [vmem:[%s489 + $0x48] sm:$0xff]
      %v505 = vld [vmem:[%s489 + $0x50] sm:$0xff]
      %v506 = vld [vmem:[%s489 + $0x58] sm:$0xff]
      %v507 = vld [vmem:[%s489 + $0x60] sm:$0xff]
      %v508 = vld [vmem:[%s489 + $0x68] sm:$0xff]
      %v509 = vld [vmem:[%s489 + $0x70] sm:$0xff]
      %v510 = vld [vmem:[%s489 + $0x78] sm:$0xff]
      %v511 = vld [vmem:[%s1] sm:$0x1]
      %v512 = vld [vmem:[%s2] sm:$0x1]
      %513 = vadd.xlane.f32.xlu0 %v495
      %v514 = vpop.xlane.xlu0 %513
      %515 = vadd.xlane.f32.xlu0 %v496
      %v516 = vpop.xlane.xlu0 %515
      %517 = vadd.xlane.f32.xlu0 %v497
      %v518 = vpop.xlane.xlu0 %517
      %519 = vadd.xlane.f32.xlu0 %v498
      %v520 = vpop.xlane.xlu0 %519
      %521 = vadd.xlane.f32.xlu0 %v499
      %v522 = vpop.xlane.xlu0 %521
      %523 = vadd.xlane.f32.xlu0 %v500
      %v524 = vpop.xlane.xlu0 %523
      %525 = vadd.xlane.f32.xlu0 %v501
      %v526 = vpop.xlane.xlu0 %525
      %527 = vadd.xlane.f32.xlu0 %v502
      %v528 = vpop.xlane.xlu0 %527
      %529 = vadd.xlane.f32.xlu0 %v503
      %v530 = vpop.xlane.xlu0 %529
      %531 = vadd.xlane.f32.xlu0 %v504
      %v532 = vpop.xlane.xlu0 %531
      %533 = vadd.xlane.f32.xlu0 %v505
      %v534 = vpop.xlane.xlu0 %533
      %535 = vadd.xlane.f32.xlu0 %v506
      %v536 = vpop.xlane.xlu0 %535
      %537 = vadd.xlane.f32.xlu0 %v507
      %v538 = vpop.xlane.xlu0 %537
      %539 = vadd.xlane.f32.xlu0 %v508
      %v540 = vpop.xlane.xlu0 %539
      %541 = vadd.xlane.f32.xlu0 %v509
      %v542 = vpop.xlane.xlu0 %541
      %543 = vadd.xlane.f32.xlu0 %v510
      %v544 = vpop.xlane.xlu0 %543
      %v545 = vrcp.pop 128.0
      %v546 = vmul.f32 128.0, %v545
      %v547 = vsub.f32 1.0, %v546
      %v548 = vmul.f32 %v545, %v547
      %v549 = vadd.f32 %v545, %v548
      %vm550 = vweird.f32 %v545
      %v551 = vsel %vm550, %v545, %v549
      %v552 = vmul.f32 %v514, %v551
      %v553 = vmul.f32 %v516, %v551
      %v554 = vmul.f32 %v518, %v551
      %v555 = vmul.f32 %v520, %v551
      %v556 = vmul.f32 %v522, %v551
      %v557 = vmul.f32 %v524, %v551
      %v558 = vmul.f32 %v526, %v551
      %v559 = vmul.f32 %v528, %v551
      %v560 = vmul.f32 %v530, %v551
      %v561 = vmul.f32 %v532, %v551
      %v562 = vmul.f32 %v534, %v551
      %v563 = vmul.f32 %v536, %v551
      %v564 = vmul.f32 %v538, %v551
      %v565 = vmul.f32 %v540, %v551
      %v566 = vmul.f32 %v542, %v551
      %v567 = vmul.f32 %v544, %v551
      %v568 = vsub.f32 %v495, %v552
      %v569 = vsub.f32 %v496, %v553
      %v570 = vsub.f32 %v497, %v554
      %v571 = vsub.f32 %v498, %v555
      %v572 = vsub.f32 %v499, %v556
      %v573 = vsub.f32 %v500, %v557
      %v574 = vsub.f32 %v501, %v558
      %v575 = vsub.f32 %v502, %v559
      %v576 = vsub.f32 %v503, %v560
      %v577 = vsub.f32 %v504, %v561
      %v578 = vsub.f32 %v505, %v562
      %v579 = vsub.f32 %v506, %v563
      %v580 = vsub.f32 %v507, %v564
      %v581 = vsub.f32 %v508, %v565
      %v582 = vsub.f32 %v509, %v566
      %v583 = vsub.f32 %v510, %v567
      %v584 = vmul.f32 %v568, %v568
      %v585 = vmul.f32 %v569, %v569
      %v586 = vmul.f32 %v570, %v570
      %v587 = vmul.f32 %v571, %v571
      %v588 = vmul.f32 %v572, %v572
      %v589 = vmul.f32 %v573, %v573
      %v590 = vmul.f32 %v574, %v574
      %v591 = vmul.f32 %v575, %v575
      %v592 = vmul.f32 %v576, %v576
      %v593 = vmul.f32 %v577, %v577
      %v594 = vmul.f32 %v578, %v578
      %v595 = vmul.f32 %v579, %v579
      %v596 = vmul.f32 %v580, %v580
      %v597 = vmul.f32 %v581, %v581
      %v598 = vmul.f32 %v582, %v582
      %v599 = vmul.f32 %v583, %v583
      %600 = vadd.xlane.f32.xlu0 %v584
      %v601 = vpop.xlane.xlu0 %600
      %602 = vadd.xlane.f32.xlu0 %v585
      %v603 = vpop.xlane.xlu0 %602
      %604 = vadd.xlane.f32.xlu0 %v586
      %v605 = vpop.xlane.xlu0 %604
      %606 = vadd.xlane.f32.xlu0 %v587
      %v607 = vpop.xlane.xlu0 %606
      %608 = vadd.xlane.f32.xlu0 %v588
      %v609 = vpop.xlane.xlu0 %608
      %610 = vadd.xlane.f32.xlu0 %v589
      %v611 = vpop.xlane.xlu0 %610
      %612 = vadd.xlane.f32.xlu0 %v590
      %v613 = vpop.xlane.xlu0 %612
      %614 = vadd.xlane.f32.xlu0 %v591
      %v615 = vpop.xlane.xlu0 %614
      %616 = vadd.xlane.f32.xlu0 %v592
      %v617 = vpop.xlane.xlu0 %616
      %618 = vadd.xlane.f32.xlu0 %v593
      %v619 = vpop.xlane.xlu0 %618
      %620 = vadd.xlane.f32.xlu0 %v594
      %v621 = vpop.xlane.xlu0 %620
      %622 = vadd.xlane.f32.xlu0 %v595
      %v623 = vpop.xlane.xlu0 %622
      %624 = vadd.xlane.f32.xlu0 %v596
      %v625 = vpop.xlane.xlu0 %624
      %626 = vadd.xlane.f32.xlu0 %v597
      %v627 = vpop.xlane.xlu0 %626
      %628 = vadd.xlane.f32.xlu0 %v598
      %v629 = vpop.xlane.xlu0 %628
      %630 = vadd.xlane.f32.xlu0 %v599
      %v631 = vpop.xlane.xlu0 %630
      %v632 = vmul.f32 %v601, %v551
      %v633 = vmul.f32 %v603, %v551
      %v634 = vmul.f32 %v605, %v551
      %v635 = vmul.f32 %v607, %v551
      %v636 = vmul.f32 %v609, %v551
      %v637 = vmul.f32 %v611, %v551
      %v638 = vmul.f32 %v613, %v551
      %v639 = vmul.f32 %v615, %v551
      %v640 = vmul.f32 %v617, %v551
      %v641 = vmul.f32 %v619, %v551
      %v642 = vmul.f32 %v621, %v551
      %v643 = vmul.f32 %v623, %v551
      %v644 = vmul.f32 %v625, %v551
      %v645 = vmul.f32 %v627, %v551
      %v646 = vmul.f32 %v629, %v551
      %v647 = vmul.f32 %v631, %v551
      %v648 = vadd.f32 %v632, 1e-05
      %v649 = vadd.f32 %v633, 1e-05
      %v650 = vadd.f32 %v634, 1e-05
      %v651 = vadd.f32 %v635, 1e-05
      %v652 = vadd.f32 %v636, 1e-05
      %v653 = vadd.f32 %v637, 1e-05
      %v654 = vadd.f32 %v638, 1e-05
      %v655 = vadd.f32 %v639, 1e-05
      %v656 = vadd.f32 %v640, 1e-05
      %v657 = vadd.f32 %v641, 1e-05
      %v658 = vadd.f32 %v642, 1e-05
      %v659 = vadd.f32 %v643, 1e-05
      %v660 = vadd.f32 %v644, 1e-05
      %v661 = vadd.f32 %v645, 1e-05
      %v662 = vadd.f32 %v646, 1e-05
      %v663 = vadd.f32 %v647, 1e-05
      %v664 = vrsqrt.pop %v648
      %v665 = vmul.f32 %v664, %v648
      %v666 = vmul.f32 %v665, %v664
      %v667 = vmul.f32 0.5, %v666
      %v668 = vsub.f32 1.5, %v667
      %v669 = vmul.f32 %v664, %v668
      %vm670 = vweird.f32 %v648
      %vm671 = vweird.f32 %v664
      %vm672 = vmor %vm670, %vm671
      %v673 = vsel %vm672, %v664, %v669
      %v674 = vrsqrt.pop %v649
      %v675 = vmul.f32 %v674, %v649
      %v676 = vmul.f32 %v675, %v674
      %v677 = vmul.f32 0.5, %v676
      %v678 = vsub.f32 1.5, %v677
      %v679 = vmul.f32 %v674, %v678
      %vm680 = vweird.f32 %v649
      %vm681 = vweird.f32 %v674
      %vm682 = vmor %vm680, %vm681
      %v683 = vsel %vm682, %v674, %v679
      %v684 = vrsqrt.pop %v650
      %v685 = vmul.f32 %v684, %v650
      %v686 = vmul.f32 %v685, %v684
      %v687 = vmul.f32 0.5, %v686
      %v688 = vsub.f32 1.5, %v687
      %v689 = vmul.f32 %v684, %v688
      %vm690 = vweird.f32 %v650
      %vm691 = vweird.f32 %v684
      %vm692 = vmor %vm690, %vm691
      %v693 = vsel %vm692, %v684, %v689
      %v694 = vrsqrt.pop %v651
      %v695 = vmul.f32 %v694, %v651
      %v696 = vmul.f32 %v695, %v694
      %v697 = vmul.f32 0.5, %v696
      %v698 = vsub.f32 1.5, %v697
      %v699 = vmul.f32 %v694, %v698
      %vm700 = vweird.f32 %v651
      %vm701 = vweird.f32 %v694
      %vm702 = vmor %vm700, %vm701
      %v703 = vsel %vm702, %v694, %v699
      %v704 = vrsqrt.pop %v652
      %v705 = vmul.f32 %v704, %v652
      %v706 = vmul.f32 %v705, %v704
      %v707 = vmul.f32 0.5, %v706
      %v708 = vsub.f32 1.5, %v707
      %v709 = vmul.f32 %v704, %v708
      %vm710 = vweird.f32 %v652
      %vm711 = vweird.f32 %v704
      %vm712 = vmor %vm710, %vm711
      %v713 = vsel %vm712, %v704, %v709
      %v714 = vrsqrt.pop %v653
      %v715 = vmul.f32 %v714, %v653
      %v716 = vmul.f32 %v715, %v714
      %v717 = vmul.f32 0.5, %v716
      %v718 = vsub.f32 1.5, %v717
      %v719 = vmul.f32 %v714, %v718
      %vm720 = vweird.f32 %v653
      %vm721 = vweird.f32 %v714
      %vm722 = vmor %vm720, %vm721
      %v723 = vsel %vm722, %v714, %v719
      %v724 = vrsqrt.pop %v654
      %v725 = vmul.f32 %v724, %v654
      %v726 = vmul.f32 %v725, %v724
      %v727 = vmul.f32 0.5, %v726
      %v728 = vsub.f32 1.5, %v727
      %v729 = vmul.f32 %v724, %v728
      %vm730 = vweird.f32 %v654
      %vm731 = vweird.f32 %v724
      %vm732 = vmor %vm730, %vm731
      %v733 = vsel %vm732, %v724, %v729
      %v734 = vrsqrt.pop %v655
      %v735 = vmul.f32 %v734, %v655
      %v736 = vmul.f32 %v735, %v734
      %v737 = vmul.f32 0.5, %v736
      %v738 = vsub.f32 1.5, %v737
      %v739 = vmul.f32 %v734, %v738
      %vm740 = vweird.f32 %v655
      %vm741 = vweird.f32 %v734
      %vm742 = vmor %vm740, %vm741
      %v743 = vsel %vm742, %v734, %v739
      %v744 = vrsqrt.pop %v656
      %v745 = vmul.f32 %v744, %v656
      %v746 = vmul.f32 %v745, %v744
      %v747 = vmul.f32 0.5, %v746
      %v748 = vsub.f32 1.5, %v747
      %v749 = vmul.f32 %v744, %v748
      %vm750 = vweird.f32 %v656
      %vm751 = vweird.f32 %v744
      %vm752 = vmor %vm750, %vm751
      %v753 = vsel %vm752, %v744, %v749
      %v754 = vrsqrt.pop %v657
      %v755 = vmul.f32 %v754, %v657
      %v756 = vmul.f32 %v755, %v754
      %v757 = vmul.f32 0.5, %v756
      %v758 = vsub.f32 1.5, %v757
      %v759 = vmul.f32 %v754, %v758
      %vm760 = vweird.f32 %v657
      %vm761 = vweird.f32 %v754
      %vm762 = vmor %vm760, %vm761
      %v763 = vsel %vm762, %v754, %v759
      %v764 = vrsqrt.pop %v658
      %v765 = vmul.f32 %v764, %v658
      %v766 = vmul.f32 %v765, %v764
      %v767 = vmul.f32 0.5, %v766
      %v768 = vsub.f32 1.5, %v767
      %v769 = vmul.f32 %v764, %v768
      %vm770 = vweird.f32 %v658
      %vm771 = vweird.f32 %v764
      %vm772 = vmor %vm770, %vm771
      %v773 = vsel %vm772, %v764, %v769
      %v774 = vrsqrt.pop %v659
      %v775 = vmul.f32 %v774, %v659
      %v776 = vmul.f32 %v775, %v774
      %v777 = vmul.f32 0.5, %v776
      %v778 = vsub.f32 1.5, %v777
      %v779 = vmul.f32 %v774, %v778
      %vm780 = vweird.f32 %v659
      %vm781 = vweird.f32 %v774
      %vm782 = vmor %vm780, %vm781
      %v783 = vsel %vm782, %v774, %v779
      %v784 = vrsqrt.pop %v660
      %v785 = vmul.f32 %v784, %v660
      %v786 = vmul.f32 %v785, %v784
      %v787 = vmul.f32 0.5, %v786
      %v788 = vsub.f32 1.5, %v787
      %v789 = vmul.f32 %v784, %v788
      %vm790 = vweird.f32 %v660
      %vm791 = vweird.f32 %v784
      %vm792 = vmor %vm790, %vm791
      %v793 = vsel %vm792, %v784, %v789
      %v794 = vrsqrt.pop %v661
      %v795 = vmul.f32 %v794, %v661
      %v796 = vmul.f32 %v795, %v794
      %v797 = vmul.f32 0.5, %v796
      %v798 = vsub.f32 1.5, %v797
      %v799 = vmul.f32 %v794, %v798
      %vm800 = vweird.f32 %v661
      %vm801 = vweird.f32 %v794
      %vm802 = vmor %vm800, %vm801
      %v803 = vsel %vm802, %v794, %v799
      %v804 = vrsqrt.pop %v662
      %v805 = vmul.f32 %v804, %v662
      %v806 = vmul.f32 %v805, %v804
      %v807 = vmul.f32 0.5, %v806
      %v808 = vsub.f32 1.5, %v807
      %v809 = vmul.f32 %v804, %v808
      %vm810 = vweird.f32 %v662
      %vm811 = vweird.f32 %v804
      %vm812 = vmor %vm810, %vm811
      %v813 = vsel %vm812, %v804, %v809
      %v814 = vrsqrt.pop %v663
      %v815 = vmul.f32 %v814, %v663
      %v816 = vmul.f32 %v815, %v814
      %v817 = vmul.f32 0.5, %v816
      %v818 = vsub.f32 1.5, %v817
      %v819 = vmul.f32 %v814, %v818
      %vm820 = vweird.f32 %v663
      %vm821 = vweird.f32 %v814
      %vm822 = vmor %vm820, %vm821
      %v823 = vsel %vm822, %v814, %v819
      %v824 = vmul.f32 %v568, %v673
      %v825 = vmul.f32 %v569, %v683
      %v826 = vmul.f32 %v570, %v693
      %v827 = vmul.f32 %v571, %v703
      %v828 = vmul.f32 %v572, %v713
      %v829 = vmul.f32 %v573, %v723
      %v830 = vmul.f32 %v574, %v733
      %v831 = vmul.f32 %v575, %v743
      %v832 = vmul.f32 %v576, %v753
      %v833 = vmul.f32 %v577, %v763
      %v834 = vmul.f32 %v578, %v773
      %v835 = vmul.f32 %v579, %v783
      %v836 = vmul.f32 %v580, %v793
      %v837 = vmul.f32 %v581, %v803
      %v838 = vmul.f32 %v582, %v813
      %v839 = vmul.f32 %v583, %v823
      %v841 = vperm.slane %v511, 0
      %v843 = vmul.f32 %v824, %v841
      %v844 = vmul.f32 %v825, %v841
      %v845 = vmul.f32 %v826, %v841
      %v846 = vmul.f32 %v827, %v841
      %v847 = vmul.f32 %v828, %v841
      %v848 = vmul.f32 %v829, %v841
      %v849 = vmul.f32 %v830, %v841
      %v850 = vmul.f32 %v831, %v841
      %v851 = vmul.f32 %v832, %v841
      %v852 = vmul.f32 %v833, %v841
      %v853 = vmul.f32 %v834, %v841
      %v854 = vmul.f32 %v835, %v841
      %v855 = vmul.f32 %v836, %v841
      %v856 = vmul.f32 %v837, %v841
      %v857 = vmul.f32 %v838, %v841
      %v858 = vmul.f32 %v839, %v841
      %v860 = vperm.slane %v512, 0
      %v862 = vadd.f32 %v843, %v860
      %v863 = vadd.f32 %v844, %v860
      %v864 = vadd.f32 %v845, %v860
      %v865 = vadd.f32 %v846, %v860
      %v866 = vadd.f32 %v847, %v860
      %v867 = vadd.f32 %v848, %v860
      %v868 = vadd.f32 %v849, %v860
      %v869 = vadd.f32 %v850, %v860
      %v870 = vadd.f32 %v851, %v860
      %v871 = vadd.f32 %v852, %v860
      %v872 = vadd.f32 %v853, %v860
      %v873 = vadd.f32 %v854, %v860
      %v874 = vadd.f32 %v855, %v860
      %v875 = vadd.f32 %v856, %v860
      %v876 = vadd.f32 %v857, %v860
      %v877 = vadd.f32 %v858, %v860
      %v878 = vld [vmem:[%s3] sm:$0xff]
      %v879 = vld [vmem:[%s3 + $0x8] sm:$0xff]
      %v880 = vld [vmem:[%s3 + $0x10] sm:$0xff]
      %v881 = vld [vmem:[%s3 + $0x18] sm:$0xff]
      %v882 = vld [vmem:[%s3 + $0x20] sm:$0xff]
      %v883 = vld [vmem:[%s3 + $0x28] sm:$0xff]
      %v884 = vld [vmem:[%s3 + $0x30] sm:$0xff]
      %v885 = vld [vmem:[%s3 + $0x38] sm:$0xff]
      %v886 = vld [vmem:[%s3 + $0x40] sm:$0xff]
      %v887 = vld [vmem:[%s3 + $0x48] sm:$0xff]
      %v888 = vld [vmem:[%s3 + $0x50] sm:$0xff]
      %v889 = vld [vmem:[%s3 + $0x58] sm:$0xff]
      %v890 = vld [vmem:[%s3 + $0x60] sm:$0xff]
      %v891 = vld [vmem:[%s3 + $0x68] sm:$0xff]
      %v892 = vld [vmem:[%s3 + $0x70] sm:$0xff]
      %v893 = vld [vmem:[%s3 + $0x78] sm:$0xff]
      %v894 = vld [vmem:[%s4] sm:$0x1]
      %v896 = vperm.slane %v894, 0
      %898 = vmatpush.msra.mxu0 %v893
      %899 = vmatpush.msra.mxu0 %v892
      %900 = vmatpush.msra.mxu0 %v891
      %901 = vmatpush.msra.mxu0 %v890
      %902 = vmatpush.msra.mxu0 %v889
      %903 = vmatpush.msra.mxu0 %v888
      %904 = vmatpush.msra.mxu0 %v887
      %905 = vmatpush.msra.mxu0 %v886
      %906 = vmatpush.msra.mxu0 %v885
      %907 = vmatpush.msra.mxu0 %v884
      %908 = vmatpush.msra.mxu0 %v883
      %909 = vmatpush.msra.mxu0 %v882
      %910 = vmatpush.msra.mxu0 %v881
      %911 = vmatpush.msra.mxu0 %v880
      %912 = vmatpush.msra.mxu0 %v879
      %913 = vmatpush.msra.mxu0 %v878
      %914 = vmatmul.f32.gmra.mxu0 %v862
      %v915 = vpop.f32.mrf.mxu0
      %v916 = vadd.f32 %v896, %v915
      %917 = vmatmul.f32.gmra.mxu0 %v863
      %v918 = vpop.f32.mrf.mxu0
      %v919 = vadd.f32 %v896, %v918
      %920 = vmatmul.f32.gmra.mxu0 %v864
      %v921 = vpop.f32.mrf.mxu0
      %v922 = vadd.f32 %v896, %v921
      %923 = vmatmul.f32.gmra.mxu0 %v865
      %v924 = vpop.f32.mrf.mxu0
      %v925 = vadd.f32 %v896, %v924
      %926 = vmatmul.f32.gmra.mxu0 %v866
      %v927 = vpop.f32.mrf.mxu0
      %v928 = vadd.f32 %v896, %v927
      %929 = vmatmul.f32.gmra.mxu0 %v867
      %v930 = vpop.f32.mrf.mxu0
      %v931 = vadd.f32 %v896, %v930
      %932 = vmatmul.f32.gmra.mxu0 %v868
      %v933 = vpop.f32.mrf.mxu0
      %v934 = vadd.f32 %v896, %v933
      %935 = vmatmul.f32.gmra.mxu0 %v869
      %v936 = vpop.f32.mrf.mxu0
      %v937 = vadd.f32 %v896, %v936
      %938 = vmatmul.f32.gmra.mxu0 %v870
      %v939 = vpop.f32.mrf.mxu0
      %v940 = vadd.f32 %v896, %v939
      %941 = vmatmul.f32.gmra.mxu0 %v871
      %v942 = vpop.f32.mrf.mxu0
      %v943 = vadd.f32 %v896, %v942
      %944 = vmatmul.f32.gmra.mxu0 %v872
      %v945 = vpop.f32.mrf.mxu0
      %v946 = vadd.f32 %v896, %v945
      %947 = vmatmul.f32.gmra.mxu0 %v873
      %v948 = vpop.f32.mrf.mxu0
      %v949 = vadd.f32 %v896, %v948
      %950 = vmatmul.f32.gmra.mxu0 %v874
      %v951 = vpop.f32.mrf.mxu0
      %v952 = vadd.f32 %v896, %v951
      %953 = vmatmul.f32.gmra.mxu0 %v875
      %v954 = vpop.f32.mrf.mxu0
      %v955 = vadd.f32 %v896, %v954
      %956 = vmatmul.f32.gmra.mxu0 %v876
      %v957 = vpop.f32.mrf.mxu0
      %v958 = vadd.f32 %v896, %v957
      %959 = vmatmul.f32.gmra.mxu0 %v877
      %v960 = vpop.f32.mrf.mxu0
      %v961 = vadd.f32 %v896, %v960
      %962 = vdwg.mxu0
      %v963 = vld [vmem:[%s5] sm:$0xff]
      %v964 = vld [vmem:[%s5 + $0x8] sm:$0xff]
      %v965 = vld [vmem:[%s5 + $0x10] sm:$0xff]
      %v966 = vld [vmem:[%s5 + $0x18] sm:$0xff]
      %v967 = vld [vmem:[%s5 + $0x20] sm:$0xff]
      %v968 = vld [vmem:[%s5 + $0x28] sm:$0xff]
      %v969 = vld [vmem:[%s5 + $0x30] sm:$0xff]
      %v970 = vld [vmem:[%s5 + $0x38] sm:$0xff]
      %v971 = vld [vmem:[%s5 + $0x40] sm:$0xff]
      %v972 = vld [vmem:[%s5 + $0x48] sm:$0xff]
      %v973 = vld [vmem:[%s5 + $0x50] sm:$0xff]
      %v974 = vld [vmem:[%s5 + $0x58] sm:$0xff]
      %v975 = vld [vmem:[%s5 + $0x60] sm:$0xff]
      %v976 = vld [vmem:[%s5 + $0x68] sm:$0xff]
      %v977 = vld [vmem:[%s5 + $0x70] sm:$0xff]
      %v978 = vld [vmem:[%s5 + $0x78] sm:$0xff]
      %v979 = vld [vmem:[%s6] sm:$0x1]
      %v981 = vperm.slane %v979, 0
      %983 = vmatpush.msra.mxu0 %v978
      %984 = vmatpush.msra.mxu0 %v977
      %985 = vmatpush.msra.mxu0 %v976
      %986 = vmatpush.msra.mxu0 %v975
      %987 = vmatpush.msra.mxu0 %v974
      %988 = vmatpush.msra.mxu0 %v973
      %989 = vmatpush.msra.mxu0 %v972
      %990 = vmatpush.msra.mxu0 %v971
      %991 = vmatpush.msra.mxu0 %v970
      %992 = vmatpush.msra.mxu0 %v969
      %993 = vmatpush.msra.mxu0 %v968
      %994 = vmatpush.msra.mxu0 %v967
      %995 = vmatpush.msra.mxu0 %v966
      %996 = vmatpush.msra.mxu0 %v965
      %997 = vmatpush.msra.mxu0 %v964
      %998 = vmatpush.msra.mxu0 %v963
      %999 = vmatmul.f32.gmra.mxu0 %v862
      %v1000 = vpop.f32.mrf.mxu0
      %v1001 = vadd.f32 %v981, %v1000
      %1002 = vmatmul.f32.gmra.mxu0 %v863
      %v1003 = vpop.f32.mrf.mxu0
      %v1004 = vadd.f32 %v981, %v1003
      %1005 = vmatmul.f32.gmra.mxu0 %v864
      %v1006 = vpop.f32.mrf.mxu0
      %v1007 = vadd.f32 %v981, %v1006
      %1008 = vmatmul.f32.gmra.mxu0 %v865
      %v1009 = vpop.f32.mrf.mxu0
      %v1010 = vadd.f32 %v981, %v1009
      %1011 = vmatmul.f32.gmra.mxu0 %v866
      %v1012 = vpop.f32.mrf.mxu0
      %v1013 = vadd.f32 %v981, %v1012
      %1014 = vmatmul.f32.gmra.mxu0 %v867
      %v1015 = vpop.f32.mrf.mxu0
      %v1016 = vadd.f32 %v981, %v1015
      %1017 = vmatmul.f32.gmra.mxu0 %v868
      %v1018 = vpop.f32.mrf.mxu0
      %v1019 = vadd.f32 %v981, %v1018
      %1020 = vmatmul.f32.gmra.mxu0 %v869
      %v1021 = vpop.f32.mrf.mxu0
      %v1022 = vadd.f32 %v981, %v1021
      %1023 = vmatmul.f32.gmra.mxu0 %v870
      %v1024 = vpop.f32.mrf.mxu0
      %v1025 = vadd.f32 %v981, %v1024
      %1026 = vmatmul.f32.gmra.mxu0 %v871
      %v1027 = vpop.f32.mrf.mxu0
      %v1028 = vadd.f32 %v981, %v1027
      %1029 = vmatmul.f32.gmra.mxu0 %v872
      %v1030 = vpop.f32.mrf.mxu0
      %v1031 = vadd.f32 %v981, %v1030
      %1032 = vmatmul.f32.gmra.mxu0 %v873
      %v1033 = vpop.f32.mrf.mxu0
      %v1034 = vadd.f32 %v981, %v1033
      %1035 = vmatmul.f32.gmra.mxu0 %v874
      %v1036 = vpop.f32.mrf.mxu0
      %v1037 = vadd.f32 %v981, %v1036
      %1038 = vmatmul.f32.gmra.mxu0 %v875
      %v1039 = vpop.f32.mrf.mxu0
      %v1040 = vadd.f32 %v981, %v1039
      %1041 = vmatmul.f32.gmra.mxu0 %v876
      %v1042 = vpop.f32.mrf.mxu0
      %v1043 = vadd.f32 %v981, %v1042
      %1044 = vmatmul.f32.gmra.mxu0 %v877
      %v1045 = vpop.f32.mrf.mxu0
      %v1046 = vadd.f32 %v981, %v1045
      %1047 = vdwg.mxu0
      %v1048 = vld [vmem:[%s7] sm:$0xff]
      %v1049 = vld [vmem:[%s7 + $0x8] sm:$0xff]
      %v1050 = vld [vmem:[%s7 + $0x10] sm:$0xff]
      %v1051 = vld [vmem:[%s7 + $0x18] sm:$0xff]
      %v1052 = vld [vmem:[%s7 + $0x20] sm:$0xff]
      %v1053 = vld [vmem:[%s7 + $0x28] sm:$0xff]
      %v1054 = vld [vmem:[%s7 + $0x30] sm:$0xff]
      %v1055 = vld [vmem:[%s7 + $0x38] sm:$0xff]
      %v1056 = vld [vmem:[%s7 + $0x40] sm:$0xff]
      %v1057 = vld [vmem:[%s7 + $0x48] sm:$0xff]
      %v1058 = vld [vmem:[%s7 + $0x50] sm:$0xff]
      %v1059 = vld [vmem:[%s7 + $0x58] sm:$0xff]
      %v1060 = vld [vmem:[%s7 + $0x60] sm:$0xff]
      %v1061 = vld [vmem:[%s7 + $0x68] sm:$0xff]
      %v1062 = vld [vmem:[%s7 + $0x70] sm:$0xff]
      %v1063 = vld [vmem:[%s7 + $0x78] sm:$0xff]
      %v1064 = vld [vmem:[%s8] sm:$0x1]
      %v1066 = vperm.slane %v1064, 0
      %1068 = vmatpush.msra.mxu0 %v1063
      %1069 = vmatpush.msra.mxu0 %v1062
      %1070 = vmatpush.msra.mxu0 %v1061
      %1071 = vmatpush.msra.mxu0 %v1060
      %1072 = vmatpush.msra.mxu0 %v1059
      %1073 = vmatpush.msra.mxu0 %v1058
      %1074 = vmatpush.msra.mxu0 %v1057
      %1075 = vmatpush.msra.mxu0 %v1056
      %1076 = vmatpush.msra.mxu0 %v1055
      %1077 = vmatpush.msra.mxu0 %v1054
      %1078 = vmatpush.msra.mxu0 %v1053
      %1079 = vmatpush.msra.mxu0 %v1052
      %1080 = vmatpush.msra.mxu0 %v1051
      %1081 = vmatpush.msra.mxu0 %v1050
      %1082 = vmatpush.msra.mxu0 %v1049
      %1083 = vmatpush.msra.mxu0 %v1048
      %1084 = vmatmul.f32.gmra.mxu0 %v862
      %v1085 = vpop.f32.mrf.mxu0
      %v1086 = vadd.f32 %v1066, %v1085
      %1087 = vmatmul.f32.gmra.mxu0 %v863
      %v1088 = vpop.f32.mrf.mxu0
      %v1089 = vadd.f32 %v1066, %v1088
      %1090 = vmatmul.f32.gmra.mxu0 %v864
      %v1091 = vpop.f32.mrf.mxu0
      %v1092 = vadd.f32 %v1066, %v1091
      %1093 = vmatmul.f32.gmra.mxu0 %v865
      %v1094 = vpop.f32.mrf.mxu0
      %v1095 = vadd.f32 %v1066, %v1094
      %1096 = vmatmul.f32.gmra.mxu0 %v866
      %v1097 = vpop.f32.mrf.mxu0
      %v1098 = vadd.f32 %v1066, %v1097
      %1099 = vmatmul.f32.gmra.mxu0 %v867
      %v1100 = vpop.f32.mrf.mxu0
      %v1101 = vadd.f32 %v1066, %v1100
      %1102 = vmatmul.f32.gmra.mxu0 %v868
      %v1103 = vpop.f32.mrf.mxu0
      %v1104 = vadd.f32 %v1066, %v1103
      %1105 = vmatmul.f32.gmra.mxu0 %v869
      %v1106 = vpop.f32.mrf.mxu0
      %v1107 = vadd.f32 %v1066, %v1106
      %1108 = vmatmul.f32.gmra.mxu0 %v870
      %v1109 = vpop.f32.mrf.mxu0
      %v1110 = vadd.f32 %v1066, %v1109
      %1111 = vmatmul.f32.gmra.mxu0 %v871
      %v1112 = vpop.f32.mrf.mxu0
      %v1113 = vadd.f32 %v1066, %v1112
      %1114 = vmatmul.f32.gmra.mxu0 %v872
      %v1115 = vpop.f32.mrf.mxu0
      %v1116 = vadd.f32 %v1066, %v1115
      %1117 = vmatmul.f32.gmra.mxu0 %v873
      %v1118 = vpop.f32.mrf.mxu0
      %v1119 = vadd.f32 %v1066, %v1118
      %1120 = vmatmul.f32.gmra.mxu0 %v874
      %v1121 = vpop.f32.mrf.mxu0
      %v1122 = vadd.f32 %v1066, %v1121
      %1123 = vmatmul.f32.gmra.mxu0 %v875
      %v1124 = vpop.f32.mrf.mxu0
      %v1125 = vadd.f32 %v1066, %v1124
      %1126 = vmatmul.f32.gmra.mxu0 %v876
      %v1127 = vpop.f32.mrf.mxu0
      %v1128 = vadd.f32 %v1066, %v1127
      %1129 = vmatmul.f32.gmra.mxu0 %v877
      %v1130 = vpop.f32.mrf.mxu0
      %v1131 = vadd.f32 %v1066, %v1130
      %1132 = vdwg.mxu0
      %1133 = vmatpush.xpose.msra.mxu0 %v1046
      %1134 = vmatpush.xpose.msra.mxu0 %v1043
      %1135 = vmatpush.xpose.msra.mxu0 %v1040
      %1136 = vmatpush.xpose.msra.mxu0 %v1037
      %1137 = vmatpush.xpose.msra.mxu0 %v1034
      %1138 = vmatpush.xpose.msra.mxu0 %v1031
      %1139 = vmatpush.xpose.msra.mxu0 %v1028
      %1140 = vmatpush.xpose.msra.mxu0 %v1025
      %1141 = vmatpush.xpose.msra.mxu0 %v1022
      %1142 = vmatpush.xpose.msra.mxu0 %v1019
      %1143 = vmatpush.xpose.msra.mxu0 %v1016
      %1144 = vmatpush.xpose.msra.mxu0 %v1013
      %1145 = vmatpush.xpose.msra.mxu0 %v1010
      %1146 = vmatpush.xpose.msra.mxu0 %v1007
      %1147 = vmatpush.xpose.msra.mxu0 %v1004
      %1148 = vmatpush.xpose.msra.mxu0 %v1001
      %1149 = vmatmul.f32.gmra.mxu0 %v916
      %v1150 = vpop.f32.mrf.mxu0
      %v1151 = vadd.f32 0.0, %v1150
      %1152 = vmatmul.f32.gmra.mxu0 %v919
      %v1153 = vpop.f32.mrf.mxu0
      %v1154 = vadd.f32 0.0, %v1153
      %1155 = vmatmul.f32.gmra.mxu0 %v922
      %v1156 = vpop.f32.mrf.mxu0
      %v1157 = vadd.f32 0.0, %v1156
      %1158 = vmatmul.f32.gmra.mxu0 %v925
      %v1159 = vpop.f32.mrf.mxu0
      %v1160 = vadd.f32 0.0, %v1159
      %1161 = vmatmul.f32.gmra.mxu0 %v928
      %v1162 = vpop.f32.mrf.mxu0
      %v1163 = vadd.f32 0.0, %v1162
      %1164 = vmatmul.f32.gmra.mxu0 %v931
      %v1165 = vpop.f32.mrf.mxu0
      %v1166 = vadd.f32 0.0, %v1165
      %1167 = vmatmul.f32.gmra.mxu0 %v934
      %v1168 = vpop.f32.mrf.mxu0
      %v1169 = vadd.f32 0.0, %v1168
      %1170 = vmatmul.f32.gmra.mxu0 %v937
      %v1171 = vpop.f32.mrf.mxu0
      %v1172 = vadd.f32 0.0, %v1171
      %1173 = vmatmul.f32.gmra.mxu0 %v940
      %v1174 = vpop.f32.mrf.mxu0
      %v1175 = vadd.f32 0.0, %v1174
      %1176 = vmatmul.f32.gmra.mxu0 %v943
      %v1177 = vpop.f32.mrf.mxu0
      %v1178 = vadd.f32 0.0, %v1177
      %1179 = vmatmul.f32.gmra.mxu0 %v946
      %v1180 = vpop.f32.mrf.mxu0
      %v1181 = vadd.f32 0.0, %v1180
      %1182 = vmatmul.f32.gmra.mxu0 %v949
      %v1183 = vpop.f32.mrf.mxu0
      %v1184 = vadd.f32 0.0, %v1183
      %1185 = vmatmul.f32.gmra.mxu0 %v952
      %v1186 = vpop.f32.mrf.mxu0
      %v1187 = vadd.f32 0.0, %v1186
      %1188 = vmatmul.f32.gmra.mxu0 %v955
      %v1189 = vpop.f32.mrf.mxu0
      %v1190 = vadd.f32 0.0, %v1189
      %1191 = vmatmul.f32.gmra.mxu0 %v958
      %v1192 = vpop.f32.mrf.mxu0
      %v1193 = vadd.f32 0.0, %v1192
      %1194 = vmatmul.f32.gmra.mxu0 %v961
      %v1195 = vpop.f32.mrf.mxu0
      %v1196 = vadd.f32 0.0, %v1195
      %1197 = vdwg.mxu0
      %v1198 = vmul.f32 %v1151, 0.088388346
      %v1199 = vmul.f32 %v1154, 0.088388346
      %v1200 = vmul.f32 %v1157, 0.088388346
      %v1201 = vmul.f32 %v1160, 0.088388346
      %v1202 = vmul.f32 %v1163, 0.088388346
      %v1203 = vmul.f32 %v1166, 0.088388346
      %v1204 = vmul.f32 %v1169, 0.088388346
      %v1205 = vmul.f32 %v1172, 0.088388346
      %v1206 = vmul.f32 %v1175, 0.088388346
      %v1207 = vmul.f32 %v1178, 0.088388346
      %v1208 = vmul.f32 %v1181, 0.088388346
      %v1209 = vmul.f32 %v1184, 0.088388346
      %v1210 = vmul.f32 %v1187, 0.088388346
      %v1211 = vmul.f32 %v1190, 0.088388346
      %v1212 = vmul.f32 %v1193, 0.088388346
      %v1213 = vmul.f32 %v1196, 0.088388346
      %1214 = vmax.xlane.f32.xlu0 %v1198
      %v1215 = vpop.xlane.xlu0 %1214
      %1216 = vmax.xlane.f32.xlu0 %v1199
      %v1217 = vpop.xlane.xlu0 %1216
      %1218 = vmax.xlane.f32.xlu0 %v1200
      %v1219 = vpop.xlane.xlu0 %1218
      %1220 = vmax.xlane.f32.xlu0 %v1201
      %v1221 = vpop.xlane.xlu0 %1220
      %1222 = vmax.xlane.f32.xlu0 %v1202
      %v1223 = vpop.xlane.xlu0 %1222
      %1224 = vmax.xlane.f32.xlu0 %v1203
      %v1225 = vpop.xlane.xlu0 %1224
      %1226 = vmax.xlane.f32.xlu0 %v1204
      %v1227 = vpop.xlane.xlu0 %1226
      %1228 = vmax.xlane.f32.xlu0 %v1205
      %v1229 = vpop.xlane.xlu0 %1228
      %1230 = vmax.xlane.f32.xlu0 %v1206
      %v1231 = vpop.xlane.xlu0 %1230
      %1232 = vmax.xlane.f32.xlu0 %v1207
      %v1233 = vpop.xlane.xlu0 %1232
      %1234 = vmax.xlane.f32.xlu0 %v1208
      %v1235 = vpop.xlane.xlu0 %1234
      %1236 = vmax.xlane.f32.xlu0 %v1209
      %v1237 = vpop.xlane.xlu0 %1236
      %1238 = vmax.xlane.f32.xlu0 %v1210
      %v1239 = vpop.xlane.xlu0 %1238
      %1240 = vmax.xlane.f32.xlu0 %v1211
      %v1241 = vpop.xlane.xlu0 %1240
      %1242 = vmax.xlane.f32.xlu0 %v1212
      %v1243 = vpop.xlane.xlu0 %1242
      %1244 = vmax.xlane.f32.xlu0 %v1213
      %v1245 = vpop.xlane.xlu0 %1244
      %v1246 = vsub.f32 %v1198, %v1215
      %v1247 = vsub.f32 %v1199, %v1217
      %v1248 = vsub.f32 %v1200, %v1219
      %v1249 = vsub.f32 %v1201, %v1221
      %v1250 = vsub.f32 %v1202, %v1223
      %v1251 = vsub.f32 %v1203, %v1225
      %v1252 = vsub.f32 %v1204, %v1227
      %v1253 = vsub.f32 %v1205, %v1229
      %v1254 = vsub.f32 %v1206, %v1231
      %v1255 = vsub.f32 %v1207, %v1233
      %v1256 = vsub.f32 %v1208, %v1235
      %v1257 = vsub.f32 %v1209, %v1237
      %v1258 = vsub.f32 %v1210, %v1239
      %v1259 = vsub.f32 %v1211, %v1241
      %v1260 = vsub.f32 %v1212, %v1243
      %v1261 = vsub.f32 %v1213, %v1245
      %v1262 = vmul.f32 %v1246, 1.442695
      %v1263 = vpow.pop %v1262
      %v1264 = vmul.f32 %v1247, 1.442695
      %v1265 = vpow.pop %v1264
      %v1266 = vmul.f32 %v1248, 1.442695
      %v1267 = vpow.pop %v1266
      %v1268 = vmul.f32 %v1249, 1.442695
      %v1269 = vpow.pop %v1268
      %v1270 = vmul.f32 %v1250, 1.442695
      %v1271 = vpow.pop %v1270
      %v1272 = vmul.f32 %v1251, 1.442695
      %v1273 = vpow.pop %v1272
      %v1274 = vmul.f32 %v1252, 1.442695
      %v1275 = vpow.pop %v1274
      %v1276 = vmul.f32 %v1253, 1.442695
      %v1277 = vpow.pop %v1276
      %v1278 = vmul.f32 %v1254, 1.442695
      %v1279 = vpow.pop %v1278
      %v1280 = vmul.f32 %v1255, 1.442695
      %v1281 = vpow.pop %v1280
      %v1282 = vmul.f32 %v1256, 1.442695
      %v1283 = vpow.pop %v1282
      %v1284 = vmul.f32 %v1257, 1.442695
      %v1285 = vpow.pop %v1284
      %v1286 = vmul.f32 %v1258, 1.442695
      %v1287 = vpow.pop %v1286
      %v1288 = vmul.f32 %v1259, 1.442695
      %v1289 = vpow.pop %v1288
      %v1290 = vmul.f32 %v1260, 1.442695
      %v1291 = vpow.pop %v1290
      %v1292 = vmul.f32 %v1261, 1.442695
      %v1293 = vpow.pop %v1292
      %1294 = vadd.xlane.f32.xlu0 %v1263
      %v1295 = vpop.xlane.xlu0 %1294
      %1296 = vadd.xlane.f32.xlu0 %v1265
      %v1297 = vpop.xlane.xlu0 %1296
      %1298 = vadd.xlane.f32.xlu0 %v1267
      %v1299 = vpop.xlane.xlu0 %1298
      %1300 = vadd.xlane.f32.xlu0 %v1269
      %v1301 = vpop.xlane.xlu0 %1300
      %1302 = vadd.xlane.f32.xlu0 %v1271
      %v1303 = vpop.xlane.xlu0 %1302
      %1304 = vadd.xlane.f32.xlu0 %v1273
      %v1305 = vpop.xlane.xlu0 %1304
      %1306 = vadd.xlane.f32.xlu0 %v1275
      %v1307 = vpop.xlane.xlu0 %1306
      %1308 = vadd.xlane.f32.xlu0 %v1277
      %v1309 = vpop.xlane.xlu0 %1308
      %1310 = vadd.xlane.f32.xlu0 %v1279
      %v1311 = vpop.xlane.xlu0 %1310
      %1312 = vadd.xlane.f32.xlu0 %v1281
      %v1313 = vpop.xlane.xlu0 %1312
      %1314 = vadd.xlane.f32.xlu0 %v1283
      %v1315 = vpop.xlane.xlu0 %1314
      %1316 = vadd.xlane.f32.xlu0 %v1285
      %v1317 = vpop.xlane.xlu0 %1316
      %1318 = vadd.xlane.f32.xlu0 %v1287
      %v1319 = vpop.xlane.xlu0 %1318
      %1320 = vadd.xlane.f32.xlu0 %v1289
      %v1321 = vpop.xlane.xlu0 %1320
      %1322 = vadd.xlane.f32.xlu0 %v1291
      %v1323 = vpop.xlane.xlu0 %1322
      %1324 = vadd.xlane.f32.xlu0 %v1293
      %v1325 = vpop.xlane.xlu0 %1324
      %v1326 = vrcp.pop %v1295
      %v1327 = vmul.f32 %v1295, %v1326
      %v1328 = vsub.f32 1.0, %v1327
      %v1329 = vmul.f32 %v1326, %v1328
      %v1330 = vadd.f32 %v1326, %v1329
      %vm1331 = vweird.f32 %v1295
      %vm1332 = vweird.f32 %v1326
      %vm1333 = vmor %vm1331, %vm1332
      %v1334 = vsel %vm1333, %v1326, %v1330
      %v1335 = vand.u32 2147483647, %v1295
      %vm1336 = vcmp.eq.f32.partialorder %v1335, 8.507059e+37
      %v1337 = vand.u32 %v1295, 2147483648
      %v1338 = vor.u32 1.1754944e-38, %v1337
      %v1339 = vsel %vm1336, %v1338, %v1334
      %v1340 = vmul.f32 %v1263, %v1339
      %v1341 = vrcp.pop %v1297
      %v1342 = vmul.f32 %v1297, %v1341
      %v1343 = vsub.f32 1.0, %v1342
      %v1344 = vmul.f32 %v1341, %v1343
      %v1345 = vadd.f32 %v1341, %v1344
      %vm1346 = vweird.f32 %v1297
      %vm1347 = vweird.f32 %v1341
      %vm1348 = vmor %vm1346, %vm1347
      %v1349 = vsel %vm1348, %v1341, %v1345
      %v1350 = vand.u32 2147483647, %v1297
      %vm1351 = vcmp.eq.f32.partialorder %v1350, 8.507059e+37
      %v1352 = vand.u32 %v1297, 2147483648
      %v1353 = vor.u32 1.1754944e-38, %v1352
      %v1354 = vsel %vm1351, %v1353, %v1349
      %v1355 = vmul.f32 %v1265, %v1354
      %v1356 = vrcp.pop %v1299
      %v1357 = vmul.f32 %v1299, %v1356
      %v1358 = vsub.f32 1.0, %v1357
      %v1359 = vmul.f32 %v1356, %v1358
      %v1360 = vadd.f32 %v1356, %v1359
      %vm1361 = vweird.f32 %v1299
      %vm1362 = vweird.f32 %v1356
      %vm1363 = vmor %vm1361, %vm1362
      %v1364 = vsel %vm1363, %v1356, %v1360
      %v1365 = vand.u32 2147483647, %v1299
      %vm1366 = vcmp.eq.f32.partialorder %v1365, 8.507059e+37
      %v1367 = vand.u32 %v1299, 2147483648
      %v1368 = vor.u32 1.1754944e-38, %v1367
      %v1369 = vsel %vm1366, %v1368, %v1364
      %v1370 = vmul.f32 %v1267, %v1369
      %v1371 = vrcp.pop %v1301
      %v1372 = vmul.f32 %v1301, %v1371
      %v1373 = vsub.f32 1.0, %v1372
      %v1374 = vmul.f32 %v1371, %v1373
      %v1375 = vadd.f32 %v1371, %v1374
      %vm1376 = vweird.f32 %v1301
      %vm1377 = vweird.f32 %v1371
      %vm1378 = vmor %vm1376, %vm1377
      %v1379 = vsel %vm1378, %v1371, %v1375
      %v1380 = vand.u32 2147483647, %v1301
      %vm1381 = vcmp.eq.f32.partialorder %v1380, 8.507059e+37
      %v1382 = vand.u32 %v1301, 2147483648
      %v1383 = vor.u32 1.1754944e-38, %v1382
      %v1384 = vsel %vm1381, %v1383, %v1379
      %v1385 = vmul.f32 %v1269, %v1384
      %v1386 = vrcp.pop %v1303
      %v1387 = vmul.f32 %v1303, %v1386
      %v1388 = vsub.f32 1.0, %v1387
      %v1389 = vmul.f32 %v1386, %v1388
      %v1390 = vadd.f32 %v1386, %v1389
      %vm1391 = vweird.f32 %v1303
      %vm1392 = vweird.f32 %v1386
      %vm1393 = vmor %vm1391, %vm1392
      %v1394 = vsel %vm1393, %v1386, %v1390
      %v1395 = vand.u32 2147483647, %v1303
      %vm1396 = vcmp.eq.f32.partialorder %v1395, 8.507059e+37
      %v1397 = vand.u32 %v1303, 2147483648
      %v1398 = vor.u32 1.1754944e-38, %v1397
      %v1399 = vsel %vm1396, %v1398, %v1394
      %v1400 = vmul.f32 %v1271, %v1399
      %v1401 = vrcp.pop %v1305
      %v1402 = vmul.f32 %v1305, %v1401
      %v1403 = vsub.f32 1.0, %v1402
      %v1404 = vmul.f32 %v1401, %v1403
      %v1405 = vadd.f32 %v1401, %v1404
      %vm1406 = vweird.f32 %v1305
      %vm1407 = vweird.f32 %v1401
      %vm1408 = vmor %vm1406, %vm1407
      %v1409 = vsel %vm1408, %v1401, %v1405
      %v1410 = vand.u32 2147483647, %v1305
      %vm1411 = vcmp.eq.f32.partialorder %v1410, 8.507059e+37
      %v1412 = vand.u32 %v1305, 2147483648
      %v1413 = vor.u32 1.1754944e-38, %v1412
      %v1414 = vsel %vm1411, %v1413, %v1409
      %v1415 = vmul.f32 %v1273, %v1414
      %v1416 = vrcp.pop %v1307
      %v1417 = vmul.f32 %v1307, %v1416
      %v1418 = vsub.f32 1.0, %v1417
      %v1419 = vmul.f32 %v1416, %v1418
      %v1420 = vadd.f32 %v1416, %v1419
      %vm1421 = vweird.f32 %v1307
      %vm1422 = vweird.f32 %v1416
      %vm1423 = vmor %vm1421, %vm1422
      %v1424 = vsel %vm1423, %v1416, %v1420
      %v1425 = vand.u32 2147483647, %v1307
      %vm1426 = vcmp.eq.f32.partialorder %v1425, 8.507059e+37
      %v1427 = vand.u32 %v1307, 2147483648
      %v1428 = vor.u32 1.1754944e-38, %v1427
      %v1429 = vsel %vm1426, %v1428, %v1424
      %v1430 = vmul.f32 %v1275, %v1429
      %v1431 = vrcp.pop %v1309
      %v1432 = vmul.f32 %v1309, %v1431
      %v1433 = vsub.f32 1.0, %v1432
      %v1434 = vmul.f32 %v1431, %v1433
      %v1435 = vadd.f32 %v1431, %v1434
      %vm1436 = vweird.f32 %v1309
      %vm1437 = vweird.f32 %v1431
      %vm1438 = vmor %vm1436, %vm1437
      %v1439 = vsel %vm1438, %v1431, %v1435
      %v1440 = vand.u32 2147483647, %v1309
      %vm1441 = vcmp.eq.f32.partialorder %v1440, 8.507059e+37
      %v1442 = vand.u32 %v1309, 2147483648
      %v1443 = vor.u32 1.1754944e-38, %v1442
      %v1444 = vsel %vm1441, %v1443, %v1439
      %v1445 = vmul.f32 %v1277, %v1444
      %v1446 = vrcp.pop %v1311
      %v1447 = vmul.f32 %v1311, %v1446
      %v1448 = vsub.f32 1.0, %v1447
      %v1449 = vmul.f32 %v1446, %v1448
      %v1450 = vadd.f32 %v1446, %v1449
      %vm1451 = vweird.f32 %v1311
      %vm1452 = vweird.f32 %v1446
      %vm1453 = vmor %vm1451, %vm1452
      %v1454 = vsel %vm1453, %v1446, %v1450
      %v1455 = vand.u32 2147483647, %v1311
      %vm1456 = vcmp.eq.f32.partialorder %v1455, 8.507059e+37
      %v1457 = vand.u32 %v1311, 2147483648
      %v1458 = vor.u32 1.1754944e-38, %v1457
      %v1459 = vsel %vm1456, %v1458, %v1454
      %v1460 = vmul.f32 %v1279, %v1459
      %v1461 = vrcp.pop %v1313
      %v1462 = vmul.f32 %v1313, %v1461
      %v1463 = vsub.f32 1.0, %v1462
      %v1464 = vmul.f32 %v1461, %v1463
      %v1465 = vadd.f32 %v1461, %v1464
      %vm1466 = vweird.f32 %v1313
      %vm1467 = vweird.f32 %v1461
      %vm1468 = vmor %vm1466, %vm1467
      %v1469 = vsel %vm1468, %v1461, %v1465
      %v1470 = vand.u32 2147483647, %v1313
      %vm1471 = vcmp.eq.f32.partialorder %v1470, 8.507059e+37
      %v1472 = vand.u32 %v1313, 2147483648
      %v1473 = vor.u32 1.1754944e-38, %v1472
      %v1474 = vsel %vm1471, %v1473, %v1469
      %v1475 = vmul.f32 %v1281, %v1474
      %v1476 = vrcp.pop %v1315
      %v1477 = vmul.f32 %v1315, %v1476
      %v1478 = vsub.f32 1.0, %v1477
      %v1479 = vmul.f32 %v1476, %v1478
      %v1480 = vadd.f32 %v1476, %v1479
      %vm1481 = vweird.f32 %v1315
      %vm1482 = vweird.f32 %v1476
      %vm1483 = vmor %vm1481, %vm1482
      %v1484 = vsel %vm1483, %v1476, %v1480
      %v1485 = vand.u32 2147483647, %v1315
      %vm1486 = vcmp.eq.f32.partialorder %v1485, 8.507059e+37
      %v1487 = vand.u32 %v1315, 2147483648
      %v1488 = vor.u32 1.1754944e-38, %v1487
      %v1489 = vsel %vm1486, %v1488, %v1484
      %v1490 = vmul.f32 %v1283, %v1489
      %v1491 = vrcp.pop %v1317
      %v1492 = vmul.f32 %v1317, %v1491
      %v1493 = vsub.f32 1.0, %v1492
      %v1494 = vmul.f32 %v1491, %v1493
      %v1495 = vadd.f32 %v1491, %v1494
      %vm1496 = vweird.f32 %v1317
      %vm1497 = vweird.f32 %v1491
      %vm1498 = vmor %vm1496, %vm1497
      %v1499 = vsel %vm1498, %v1491, %v1495
      %v1500 = vand.u32 2147483647, %v1317
      %vm1501 = vcmp.eq.f32.partialorder %v1500, 8.507059e+37
      %v1502 = vand.u32 %v1317, 2147483648
      %v1503 = vor.u32 1.1754944e-38, %v1502
      %v1504 = vsel %vm1501, %v1503, %v1499
      %v1505 = vmul.f32 %v1285, %v1504
      %v1506 = vrcp.pop %v1319
      %v1507 = vmul.f32 %v1319, %v1506
      %v1508 = vsub.f32 1.0, %v1507
      %v1509 = vmul.f32 %v1506, %v1508
      %v1510 = vadd.f32 %v1506, %v1509
      %vm1511 = vweird.f32 %v1319
      %vm1512 = vweird.f32 %v1506
      %vm1513 = vmor %vm1511, %vm1512
      %v1514 = vsel %vm1513, %v1506, %v1510
      %v1515 = vand.u32 2147483647, %v1319
      %vm1516 = vcmp.eq.f32.partialorder %v1515, 8.507059e+37
      %v1517 = vand.u32 %v1319, 2147483648
      %v1518 = vor.u32 1.1754944e-38, %v1517
      %v1519 = vsel %vm1516, %v1518, %v1514
      %v1520 = vmul.f32 %v1287, %v1519
      %v1521 = vrcp.pop %v1321
      %v1522 = vmul.f32 %v1321, %v1521
      %v1523 = vsub.f32 1.0, %v1522
      %v1524 = vmul.f32 %v1521, %v1523
      %v1525 = vadd.f32 %v1521, %v1524
      %vm1526 = vweird.f32 %v1321
      %vm1527 = vweird.f32 %v1521
      %vm1528 = vmor %vm1526, %vm1527
      %v1529 = vsel %vm1528, %v1521, %v1525
      %v1530 = vand.u32 2147483647, %v1321
      %vm1531 = vcmp.eq.f32.partialorder %v1530, 8.507059e+37
      %v1532 = vand.u32 %v1321, 2147483648
      %v1533 = vor.u32 1.1754944e-38, %v1532
      %v1534 = vsel %vm1531, %v1533, %v1529
      %v1535 = vmul.f32 %v1289, %v1534
      %v1536 = vrcp.pop %v1323
      %v1537 = vmul.f32 %v1323, %v1536
      %v1538 = vsub.f32 1.0, %v1537
      %v1539 = vmul.f32 %v1536, %v1538
      %v1540 = vadd.f32 %v1536, %v1539
      %vm1541 = vweird.f32 %v1323
      %vm1542 = vweird.f32 %v1536
      %vm1543 = vmor %vm1541, %vm1542
      %v1544 = vsel %vm1543, %v1536, %v1540
      %v1545 = vand.u32 2147483647, %v1323
      %vm1546 = vcmp.eq.f32.partialorder %v1545, 8.507059e+37
      %v1547 = vand.u32 %v1323, 2147483648
      %v1548 = vor.u32 1.1754944e-38, %v1547
      %v1549 = vsel %vm1546, %v1548, %v1544
      %v1550 = vmul.f32 %v1291, %v1549
      %v1551 = vrcp.pop %v1325
      %v1552 = vmul.f32 %v1325, %v1551
      %v1553 = vsub.f32 1.0, %v1552
      %v1554 = vmul.f32 %v1551, %v1553
      %v1555 = vadd.f32 %v1551, %v1554
      %vm1556 = vweird.f32 %v1325
      %vm1557 = vweird.f32 %v1551
      %vm1558 = vmor %vm1556, %vm1557
      %v1559 = vsel %vm1558, %v1551, %v1555
      %v1560 = vand.u32 2147483647, %v1325
      %vm1561 = vcmp.eq.f32.partialorder %v1560, 8.507059e+37
      %v1562 = vand.u32 %v1325, 2147483648
      %v1563 = vor.u32 1.1754944e-38, %v1562
      %v1564 = vsel %vm1561, %v1563, %v1559
      %v1565 = vmul.f32 %v1293, %v1564
      %1566 = vmatpush.msra.mxu0 %v1131
      %1567 = vmatpush.msra.mxu0 %v1128
      %1568 = vmatpush.msra.mxu0 %v1125
      %1569 = vmatpush.msra.mxu0 %v1122
      %1570 = vmatpush.msra.mxu0 %v1119
      %1571 = vmatpush.msra.mxu0 %v1116
      %1572 = vmatpush.msra.mxu0 %v1113
      %1573 = vmatpush.msra.mxu0 %v1110
      %1574 = vmatpush.msra.mxu0 %v1107
      %1575 = vmatpush.msra.mxu0 %v1104
      %1576 = vmatpush.msra.mxu0 %v1101
      %1577 = vmatpush.msra.mxu0 %v1098
      %1578 = vmatpush.msra.mxu0 %v1095
      %1579 = vmatpush.msra.mxu0 %v1092
      %1580 = vmatpush.msra.mxu0 %v1089
      %1581 = vmatpush.msra.mxu0 %v1086
      %1582 = vmatmul.f32.gmra.mxu0 %v1340
      %v1583 = vpop.f32.mrf.mxu0
      %v1584 = vadd.f32 %v495, %v1583
      %1585 = vmatmul.f32.gmra.mxu0 %v1355
      %v1586 = vpop.f32.mrf.mxu0
      %v1587 = vadd.f32 %v496, %v1586
      %1588 = vmatmul.f32.gmra.mxu0 %v1370
      %v1589 = vpop.f32.mrf.mxu0
      %v1590 = vadd.f32 %v497, %v1589
      %1591 = vmatmul.f32.gmra.mxu0 %v1385
      %v1592 = vpop.f32.mrf.mxu0
      %v1593 = vadd.f32 %v498, %v1592
      %1594 = vmatmul.f32.gmra.mxu0 %v1400
      %v1595 = vpop.f32.mrf.mxu0
      %v1596 = vadd.f32 %v499, %v1595
      %1597 = vmatmul.f32.gmra.mxu0 %v1415
      %v1598 = vpop.f32.mrf.mxu0
      %v1599 = vadd.f32 %v500, %v1598
      %1600 = vmatmul.f32.gmra.mxu0 %v1430
      %v1601 = vpop.f32.mrf.mxu0
      %v1602 = vadd.f32 %v501, %v1601
      %1603 = vmatmul.f32.gmra.mxu0 %v1445
      %v1604 = vpop.f32.mrf.mxu0
      %v1605 = vadd.f32 %v502, %v1604
      %1606 = vmatmul.f32.gmra.mxu0 %v1460
      %v1607 = vpop.f32.mrf.mxu0
      %v1608 = vadd.f32 %v503, %v1607
      %1609 = vmatmul.f32.gmra.mxu0 %v1475
      %v1610 = vpop.f32.mrf.mxu0
      %v1611 = vadd.f32 %v504, %v1610
      %1612 = vmatmul.f32.gmra.mxu0 %v1490
      %v1613 = vpop.f32.mrf.mxu0
      %v1614 = vadd.f32 %v505, %v1613
      %1615 = vmatmul.f32.gmra.mxu0 %v1505
      %v1616 = vpop.f32.mrf.mxu0
      %v1617 = vadd.f32 %v506, %v1616
      %1618 = vmatmul.f32.gmra.mxu0 %v1520
      %v1619 = vpop.f32.mrf.mxu0
      %v1620 = vadd.f32 %v507, %v1619
      %1621 = vmatmul.f32.gmra.mxu0 %v1535
      %v1622 = vpop.f32.mrf.mxu0
      %v1623 = vadd.f32 %v508, %v1622
      %1624 = vmatmul.f32.gmra.mxu0 %v1550
      %v1625 = vpop.f32.mrf.mxu0
      %v1626 = vadd.f32 %v509, %v1625
      %1627 = vmatmul.f32.gmra.mxu0 %v1565
      %v1628 = vpop.f32.mrf.mxu0
      %v1629 = vadd.f32 %v510, %v1628
      %1630 = vdwg.mxu0
      %v1631 = vld [vmem:[%s9] sm:$0x1]
      %v1632 = vld [vmem:[%s10] sm:$0x1]
      %1633 = vadd.xlane.f32.xlu0 %v1584
      %v1634 = vpop.xlane.xlu0 %1633
      %1635 = vadd.xlane.f32.xlu0 %v1587
      %v1636 = vpop.xlane.xlu0 %1635
      %1637 = vadd.xlane.f32.xlu0 %v1590
      %v1638 = vpop.xlane.xlu0 %1637
      %1639 = vadd.xlane.f32.xlu0 %v1593
      %v1640 = vpop.xlane.xlu0 %1639
      %1641 = vadd.xlane.f32.xlu0 %v1596
      %v1642 = vpop.xlane.xlu0 %1641
      %1643 = vadd.xlane.f32.xlu0 %v1599
      %v1644 = vpop.xlane.xlu0 %1643
      %1645 = vadd.xlane.f32.xlu0 %v1602
      %v1646 = vpop.xlane.xlu0 %1645
      %1647 = vadd.xlane.f32.xlu0 %v1605
      %v1648 = vpop.xlane.xlu0 %1647
      %1649 = vadd.xlane.f32.xlu0 %v1608
      %v1650 = vpop.xlane.xlu0 %1649
      %1651 = vadd.xlane.f32.xlu0 %v1611
      %v1652 = vpop.xlane.xlu0 %1651
      %1653 = vadd.xlane.f32.xlu0 %v1614
      %v1654 = vpop.xlane.xlu0 %1653
      %1655 = vadd.xlane.f32.xlu0 %v1617
      %v1656 = vpop.xlane.xlu0 %1655
      %1657 = vadd.xlane.f32.xlu0 %v1620
      %v1658 = vpop.xlane.xlu0 %1657
      %1659 = vadd.xlane.f32.xlu0 %v1623
      %v1660 = vpop.xlane.xlu0 %1659
      %1661 = vadd.xlane.f32.xlu0 %v1626
      %v1662 = vpop.xlane.xlu0 %1661
      %1663 = vadd.xlane.f32.xlu0 %v1629
      %v1664 = vpop.xlane.xlu0 %1663
      %v1665 = vmul.f32 %v1634, %v551
      %v1666 = vmul.f32 %v1636, %v551
      %v1667 = vmul.f32 %v1638, %v551
      %v1668 = vmul.f32 %v1640, %v551
      %v1669 = vmul.f32 %v1642, %v551
      %v1670 = vmul.f32 %v1644, %v551
      %v1671 = vmul.f32 %v1646, %v551
      %v1672 = vmul.f32 %v1648, %v551
      %v1673 = vmul.f32 %v1650, %v551
      %v1674 = vmul.f32 %v1652, %v551
      %v1675 = vmul.f32 %v1654, %v551
      %v1676 = vmul.f32 %v1656, %v551
      %v1677 = vmul.f32 %v1658, %v551
      %v1678 = vmul.f32 %v1660, %v551
      %v1679 = vmul.f32 %v1662, %v551
      %v1680 = vmul.f32 %v1664, %v551
      %v1681 = vsub.f32 %v1584, %v1665
      %v1682 = vsub.f32 %v1587, %v1666
      %v1683 = vsub.f32 %v1590, %v1667
      %v1684 = vsub.f32 %v1593, %v1668
      %v1685 = vsub.f32 %v1596, %v1669
      %v1686 = vsub.f32 %v1599, %v1670
      %v1687 = vsub.f32 %v1602, %v1671
      %v1688 = vsub.f32 %v1605, %v1672
      %v1689 = vsub.f32 %v1608, %v1673
      %v1690 = vsub.f32 %v1611, %v1674
      %v1691 = vsub.f32 %v1614, %v1675
      %v1692 = vsub.f32 %v1617, %v1676
      %v1693 = vsub.f32 %v1620, %v1677
      %v1694 = vsub.f32 %v1623, %v1678
      %v1695 = vsub.f32 %v1626, %v1679
      %v1696 = vsub.f32 %v1629, %v1680
      %v1697 = vmul.f32 %v1681, %v1681
      %v1698 = vmul.f32 %v1682, %v1682
      %v1699 = vmul.f32 %v1683, %v1683
      %v1700 = vmul.f32 %v1684, %v1684
      %v1701 = vmul.f32 %v1685, %v1685
      %v1702 = vmul.f32 %v1686, %v1686
      %v1703 = vmul.f32 %v1687, %v1687
      %v1704 = vmul.f32 %v1688, %v1688
      %v1705 = vmul.f32 %v1689, %v1689
      %v1706 = vmul.f32 %v1690, %v1690
      %v1707 = vmul.f32 %v1691, %v1691
      %v1708 = vmul.f32 %v1692, %v1692
      %v1709 = vmul.f32 %v1693, %v1693
      %v1710 = vmul.f32 %v1694, %v1694
      %v1711 = vmul.f32 %v1695, %v1695
      %v1712 = vmul.f32 %v1696, %v1696
      %1713 = vadd.xlane.f32.xlu0 %v1697
      %v1714 = vpop.xlane.xlu0 %1713
      %1715 = vadd.xlane.f32.xlu0 %v1698
      %v1716 = vpop.xlane.xlu0 %1715
      %1717 = vadd.xlane.f32.xlu0 %v1699
      %v1718 = vpop.xlane.xlu0 %1717
      %1719 = vadd.xlane.f32.xlu0 %v1700
      %v1720 = vpop.xlane.xlu0 %1719
      %1721 = vadd.xlane.f32.xlu0 %v1701
      %v1722 = vpop.xlane.xlu0 %1721
      %1723 = vadd.xlane.f32.xlu0 %v1702
      %v1724 = vpop.xlane.xlu0 %1723
      %1725 = vadd.xlane.f32.xlu0 %v1703
      %v1726 = vpop.xlane.xlu0 %1725
      %1727 = vadd.xlane.f32.xlu0 %v1704
      %v1728 = vpop.xlane.xlu0 %1727
      %1729 = vadd.xlane.f32.xlu0 %v1705
      %v1730 = vpop.xlane.xlu0 %1729
      %1731 = vadd.xlane.f32.xlu0 %v1706
      %v1732 = vpop.xlane.xlu0 %1731
      %1733 = vadd.xlane.f32.xlu0 %v1707
      %v1734 = vpop.xlane.xlu0 %1733
      %1735 = vadd.xlane.f32.xlu0 %v1708
      %v1736 = vpop.xlane.xlu0 %1735
      %1737 = vadd.xlane.f32.xlu0 %v1709
      %v1738 = vpop.xlane.xlu0 %1737
      %1739 = vadd.xlane.f32.xlu0 %v1710
      %v1740 = vpop.xlane.xlu0 %1739
      %1741 = vadd.xlane.f32.xlu0 %v1711
      %v1742 = vpop.xlane.xlu0 %1741
      %1743 = vadd.xlane.f32.xlu0 %v1712
      %v1744 = vpop.xlane.xlu0 %1743
      %v1745 = vmul.f32 %v1714, %v551
      %v1746 = vmul.f32 %v1716, %v551
      %v1747 = vmul.f32 %v1718, %v551
      %v1748 = vmul.f32 %v1720, %v551
      %v1749 = vmul.f32 %v1722, %v551
      %v1750 = vmul.f32 %v1724, %v551
      %v1751 = vmul.f32 %v1726, %v551
      %v1752 = vmul.f32 %v1728, %v551
      %v1753 = vmul.f32 %v1730, %v551
      %v1754 = vmul.f32 %v1732, %v551
      %v1755 = vmul.f32 %v1734, %v551
      %v1756 = vmul.f32 %v1736, %v551
      %v1757 = vmul.f32 %v1738, %v551
      %v1758 = vmul.f32 %v1740, %v551
      %v1759 = vmul.f32 %v1742, %v551
      %v1760 = vmul.f32 %v1744, %v551
      %v1761 = vadd.f32 %v1745, 1e-05
      %v1762 = vadd.f32 %v1746, 1e-05
      %v1763 = vadd.f32 %v1747, 1e-05
      %v1764 = vadd.f32 %v1748, 1e-05
      %v1765 = vadd.f32 %v1749, 1e-05
      %v1766 = vadd.f32 %v1750, 1e-05
      %v1767 = vadd.f32 %v1751, 1e-05
      %v1768 = vadd.f32 %v1752, 1e-05
      %v1769 = vadd.f32 %v1753, 1e-05
      %v1770 = vadd.f32 %v1754, 1e-05
      %v1771 = vadd.f32 %v1755, 1e-05
      %v1772 = vadd.f32 %v1756, 1e-05
      %v1773 = vadd.f32 %v1757, 1e-05
      %v1774 = vadd.f32 %v1758, 1e-05
      %v1775 = vadd.f32 %v1759, 1e-05
      %v1776 = vadd.f32 %v1760, 1e-05
      %v1777 = vrsqrt.pop %v1761
      %v1778 = vmul.f32 %v1777, %v1761
      %v1779 = vmul.f32 %v1778, %v1777
      %v1780 = vmul.f32 0.5, %v1779
      %v1781 = vsub.f32 1.5, %v1780
      %v1782 = vmul.f32 %v1777, %v1781
      %vm1783 = vweird.f32 %v1761
      %vm1784 = vweird.f32 %v1777
      %vm1785 = vmor %vm1783, %vm1784
      %v1786 = vsel %vm1785, %v1777, %v1782
      %v1787 = vrsqrt.pop %v1762
      %v1788 = vmul.f32 %v1787, %v1762
      %v1789 = vmul.f32 %v1788, %v1787
      %v1790 = vmul.f32 0.5, %v1789
      %v1791 = vsub.f32 1.5, %v1790
      %v1792 = vmul.f32 %v1787, %v1791
      %vm1793 = vweird.f32 %v1762
      %vm1794 = vweird.f32 %v1787
      %vm1795 = vmor %vm1793, %vm1794
      %v1796 = vsel %vm1795, %v1787, %v1792
      %v1797 = vrsqrt.pop %v1763
      %v1798 = vmul.f32 %v1797, %v1763
      %v1799 = vmul.f32 %v1798, %v1797
      %v1800 = vmul.f32 0.5, %v1799
      %v1801 = vsub.f32 1.5, %v1800
      %v1802 = vmul.f32 %v1797, %v1801
      %vm1803 = vweird.f32 %v1763
      %vm1804 = vweird.f32 %v1797
      %vm1805 = vmor %vm1803, %vm1804
      %v1806 = vsel %vm1805, %v1797, %v1802
      %v1807 = vrsqrt.pop %v1764
      %v1808 = vmul.f32 %v1807, %v1764
      %v1809 = vmul.f32 %v1808, %v1807
      %v1810 = vmul.f32 0.5, %v1809
      %v1811 = vsub.f32 1.5, %v1810
      %v1812 = vmul.f32 %v1807, %v1811
      %vm1813 = vweird.f32 %v1764
      %vm1814 = vweird.f32 %v1807
      %vm1815 = vmor %vm1813, %vm1814
      %v1816 = vsel %vm1815, %v1807, %v1812
      %v1817 = vrsqrt.pop %v1765
      %v1818 = vmul.f32 %v1817, %v1765
      %v1819 = vmul.f32 %v1818, %v1817
      %v1820 = vmul.f32 0.5, %v1819
      %v1821 = vsub.f32 1.5, %v1820
      %v1822 = vmul.f32 %v1817, %v1821
      %vm1823 = vweird.f32 %v1765
      %vm1824 = vweird.f32 %v1817
      %vm1825 = vmor %vm1823, %vm1824
      %v1826 = vsel %vm1825, %v1817, %v1822
      %v1827 = vrsqrt.pop %v1766
      %v1828 = vmul.f32 %v1827, %v1766
      %v1829 = vmul.f32 %v1828, %v1827
      %v1830 = vmul.f32 0.5, %v1829
      %v1831 = vsub.f32 1.5, %v1830
      %v1832 = vmul.f32 %v1827, %v1831
      %vm1833 = vweird.f32 %v1766
      %vm1834 = vweird.f32 %v1827
      %vm1835 = vmor %vm1833, %vm1834
      %v1836 = vsel %vm1835, %v1827, %v1832
      %v1837 = vrsqrt.pop %v1767
      %v1838 = vmul.f32 %v1837, %v1767
      %v1839 = vmul.f32 %v1838, %v1837
      %v1840 = vmul.f32 0.5, %v1839
      %v1841 = vsub.f32 1.5, %v1840
      %v1842 = vmul.f32 %v1837, %v1841
      %vm1843 = vweird.f32 %v1767
      %vm1844 = vweird.f32 %v1837
      %vm1845 = vmor %vm1843, %vm1844
      %v1846 = vsel %vm1845, %v1837, %v1842
      %v1847 = vrsqrt.pop %v1768
      %v1848 = vmul.f32 %v1847, %v1768
      %v1849 = vmul.f32 %v1848, %v1847
      %v1850 = vmul.f32 0.5, %v1849
      %v1851 = vsub.f32 1.5, %v1850
      %v1852 = vmul.f32 %v1847, %v1851
      %vm1853 = vweird.f32 %v1768
      %vm1854 = vweird.f32 %v1847
      %vm1855 = vmor %vm1853, %vm1854
      %v1856 = vsel %vm1855, %v1847, %v1852
      %v1857 = vrsqrt.pop %v1769
      %v1858 = vmul.f32 %v1857, %v1769
      %v1859 = vmul.f32 %v1858, %v1857
      %v1860 = vmul.f32 0.5, %v1859
      %v1861 = vsub.f32 1.5, %v1860
      %v1862 = vmul.f32 %v1857, %v1861
      %vm1863 = vweird.f32 %v1769
      %vm1864 = vweird.f32 %v1857
      %vm1865 = vmor %vm1863, %vm1864
      %v1866 = vsel %vm1865, %v1857, %v1862
      %v1867 = vrsqrt.pop %v1770
      %v1868 = vmul.f32 %v1867, %v1770
      %v1869 = vmul.f32 %v1868, %v1867
      %v1870 = vmul.f32 0.5, %v1869
      %v1871 = vsub.f32 1.5, %v1870
      %v1872 = vmul.f32 %v1867, %v1871
      %vm1873 = vweird.f32 %v1770
      %vm1874 = vweird.f32 %v1867
      %vm1875 = vmor %vm1873, %vm1874
      %v1876 = vsel %vm1875, %v1867, %v1872
      %v1877 = vrsqrt.pop %v1771
      %v1878 = vmul.f32 %v1877, %v1771
      %v1879 = vmul.f32 %v1878, %v1877
      %v1880 = vmul.f32 0.5, %v1879
      %v1881 = vsub.f32 1.5, %v1880
      %v1882 = vmul.f32 %v1877, %v1881
      %vm1883 = vweird.f32 %v1771
      %vm1884 = vweird.f32 %v1877
      %vm1885 = vmor %vm1883, %vm1884
      %v1886 = vsel %vm1885, %v1877, %v1882
      %v1887 = vrsqrt.pop %v1772
      %v1888 = vmul.f32 %v1887, %v1772
      %v1889 = vmul.f32 %v1888, %v1887
      %v1890 = vmul.f32 0.5, %v1889
      %v1891 = vsub.f32 1.5, %v1890
      %v1892 = vmul.f32 %v1887, %v1891
      %vm1893 = vweird.f32 %v1772
      %vm1894 = vweird.f32 %v1887
      %vm1895 = vmor %vm1893, %vm1894
      %v1896 = vsel %vm1895, %v1887, %v1892
      %v1897 = vrsqrt.pop %v1773
      %v1898 = vmul.f32 %v1897, %v1773
      %v1899 = vmul.f32 %v1898, %v1897
      %v1900 = vmul.f32 0.5, %v1899
      %v1901 = vsub.f32 1.5, %v1900
      %v1902 = vmul.f32 %v1897, %v1901
      %vm1903 = vweird.f32 %v1773
      %vm1904 = vweird.f32 %v1897
      %vm1905 = vmor %vm1903, %vm1904
      %v1906 = vsel %vm1905, %v1897, %v1902
      %v1907 = vrsqrt.pop %v1774
      %v1908 = vmul.f32 %v1907, %v1774
      %v1909 = vmul.f32 %v1908, %v1907
      %v1910 = vmul.f32 0.5, %v1909
      %v1911 = vsub.f32 1.5, %v1910
      %v1912 = vmul.f32 %v1907, %v1911
      %vm1913 = vweird.f32 %v1774
      %vm1914 = vweird.f32 %v1907
      %vm1915 = vmor %vm1913, %vm1914
      %v1916 = vsel %vm1915, %v1907, %v1912
      %v1917 = vrsqrt.pop %v1775
      %v1918 = vmul.f32 %v1917, %v1775
      %v1919 = vmul.f32 %v1918, %v1917
      %v1920 = vmul.f32 0.5, %v1919
      %v1921 = vsub.f32 1.5, %v1920
      %v1922 = vmul.f32 %v1917, %v1921
      %vm1923 = vweird.f32 %v1775
      %vm1924 = vweird.f32 %v1917
      %vm1925 = vmor %vm1923, %vm1924
      %v1926 = vsel %vm1925, %v1917, %v1922
      %v1927 = vrsqrt.pop %v1776
      %v1928 = vmul.f32 %v1927, %v1776
      %v1929 = vmul.f32 %v1928, %v1927
      %v1930 = vmul.f32 0.5, %v1929
      %v1931 = vsub.f32 1.5, %v1930
      %v1932 = vmul.f32 %v1927, %v1931
      %vm1933 = vweird.f32 %v1776
      %vm1934 = vweird.f32 %v1927
      %vm1935 = vmor %vm1933, %vm1934
      %v1936 = vsel %vm1935, %v1927, %v1932
      %v1937 = vmul.f32 %v1681, %v1786
      %v1938 = vmul.f32 %v1682, %v1796
      %v1939 = vmul.f32 %v1683, %v1806
      %v1940 = vmul.f32 %v1684, %v1816
      %v1941 = vmul.f32 %v1685, %v1826
      %v1942 = vmul.f32 %v1686, %v1836
      %v1943 = vmul.f32 %v1687, %v1846
      %v1944 = vmul.f32 %v1688, %v1856
      %v1945 = vmul.f32 %v1689, %v1866
      %v1946 = vmul.f32 %v1690, %v1876
      %v1947 = vmul.f32 %v1691, %v1886
      %v1948 = vmul.f32 %v1692, %v1896
      %v1949 = vmul.f32 %v1693, %v1906
      %v1950 = vmul.f32 %v1694, %v1916
      %v1951 = vmul.f32 %v1695, %v1926
      %v1952 = vmul.f32 %v1696, %v1936
      %v1954 = vperm.slane %v1631, 0
      %v1956 = vmul.f32 %v1937, %v1954
      %v1957 = vmul.f32 %v1938, %v1954
      %v1958 = vmul.f32 %v1939, %v1954
      %v1959 = vmul.f32 %v1940, %v1954
      %v1960 = vmul.f32 %v1941, %v1954
      %v1961 = vmul.f32 %v1942, %v1954
      %v1962 = vmul.f32 %v1943, %v1954
      %v1963 = vmul.f32 %v1944, %v1954
      %v1964 = vmul.f32 %v1945, %v1954
      %v1965 = vmul.f32 %v1946, %v1954
      %v1966 = vmul.f32 %v1947, %v1954
      %v1967 = vmul.f32 %v1948, %v1954
      %v1968 = vmul.f32 %v1949, %v1954
      %v1969 = vmul.f32 %v1950, %v1954
      %v1970 = vmul.f32 %v1951, %v1954
      %v1971 = vmul.f32 %v1952, %v1954
      %v1973 = vperm.slane %v1632, 0
      %v1975 = vadd.f32 %v1956, %v1973
      %v1976 = vadd.f32 %v1957, %v1973
      %v1977 = vadd.f32 %v1958, %v1973
      %v1978 = vadd.f32 %v1959, %v1973
      %v1979 = vadd.f32 %v1960, %v1973
      %v1980 = vadd.f32 %v1961, %v1973
      %v1981 = vadd.f32 %v1962, %v1973
      %v1982 = vadd.f32 %v1963, %v1973
      %v1983 = vadd.f32 %v1964, %v1973
      %v1984 = vadd.f32 %v1965, %v1973
      %v1985 = vadd.f32 %v1966, %v1973
      %v1986 = vadd.f32 %v1967, %v1973
      %v1987 = vadd.f32 %v1968, %v1973
      %v1988 = vadd.f32 %v1969, %v1973
      %v1989 = vadd.f32 %v1970, %v1973
      %v1990 = vadd.f32 %v1971, %v1973
      %v1991 = vld [vmem:[%s11] sm:$0xff]
      %v1992 = vld [vmem:[%s11 + $0x8] sm:$0xff]
      %v1993 = vld [vmem:[%s11 + $0x10] sm:$0xff]
      %v1994 = vld [vmem:[%s11 + $0x18] sm:$0xff]
      %v1995 = vld [vmem:[%s11 + $0x20] sm:$0xff]
      %v1996 = vld [vmem:[%s11 + $0x28] sm:$0xff]
      %v1997 = vld [vmem:[%s11 + $0x30] sm:$0xff]
      %v1998 = vld [vmem:[%s11 + $0x38] sm:$0xff]
      %v1999 = vld [vmem:[%s11 + $0x40] sm:$0xff]
      %v2000 = vld [vmem:[%s11 + $0x48] sm:$0xff]
      %v2001 = vld [vmem:[%s11 + $0x50] sm:$0xff]
      %v2002 = vld [vmem:[%s11 + $0x58] sm:$0xff]
      %v2003 = vld [vmem:[%s11 + $0x60] sm:$0xff]
      %v2004 = vld [vmem:[%s11 + $0x68] sm:$0xff]
      %v2005 = vld [vmem:[%s11 + $0x70] sm:$0xff]
      %v2006 = vld [vmem:[%s11 + $0x78] sm:$0xff]
      %v2007 = vld [vmem:[%s11 + $0x80] sm:$0xff]
      %v2008 = vld [vmem:[%s11 + $0x88] sm:$0xff]
      %v2009 = vld [vmem:[%s11 + $0x90] sm:$0xff]
      %v2010 = vld [vmem:[%s11 + $0x98] sm:$0xff]
      %v2011 = vld [vmem:[%s11 + $0xa0] sm:$0xff]
      %v2012 = vld [vmem:[%s11 + $0xa8] sm:$0xff]
      %v2013 = vld [vmem:[%s11 + $0xb0] sm:$0xff]
      %v2014 = vld [vmem:[%s11 + $0xb8] sm:$0xff]
      %v2015 = vld [vmem:[%s11 + $0xc0] sm:$0xff]
      %v2016 = vld [vmem:[%s11 + $0xc8] sm:$0xff]
      %v2017 = vld [vmem:[%s11 + $0xd0] sm:$0xff]
      %v2018 = vld [vmem:[%s11 + $0xd8] sm:$0xff]
      %v2019 = vld [vmem:[%s11 + $0xe0] sm:$0xff]
      %v2020 = vld [vmem:[%s11 + $0xe8] sm:$0xff]
      %v2021 = vld [vmem:[%s11 + $0xf0] sm:$0xff]
      %v2022 = vld [vmem:[%s11 + $0xf8] sm:$0xff]
      %v2023 = vld [vmem:[%s11 + $0x100] sm:$0xff]
      %v2024 = vld [vmem:[%s11 + $0x108] sm:$0xff]
      %v2025 = vld [vmem:[%s11 + $0x110] sm:$0xff]
      %v2026 = vld [vmem:[%s11 + $0x118] sm:$0xff]
      %v2027 = vld [vmem:[%s11 + $0x120] sm:$0xff]
      %v2028 = vld [vmem:[%s11 + $0x128] sm:$0xff]
      %v2029 = vld [vmem:[%s11 + $0x130] sm:$0xff]
      %v2030 = vld [vmem:[%s11 + $0x138] sm:$0xff]
      %v2031 = vld [vmem:[%s11 + $0x140] sm:$0xff]
      %v2032 = vld [vmem:[%s11 + $0x148] sm:$0xff]
      %v2033 = vld [vmem:[%s11 + $0x150] sm:$0xff]
      %v2034 = vld [vmem:[%s11 + $0x158] sm:$0xff]
      %v2035 = vld [vmem:[%s11 + $0x160] sm:$0xff]
      %v2036 = vld [vmem:[%s11 + $0x168] sm:$0xff]
      %v2037 = vld [vmem:[%s11 + $0x170] sm:$0xff]
      %v2038 = vld [vmem:[%s11 + $0x178] sm:$0xff]
      %v2039 = vld [vmem:[%s11 + $0x180] sm:$0xff]
      %v2040 = vld [vmem:[%s11 + $0x188] sm:$0xff]
      %v2041 = vld [vmem:[%s11 + $0x190] sm:$0xff]
      %v2042 = vld [vmem:[%s11 + $0x198] sm:$0xff]
      %v2043 = vld [vmem:[%s11 + $0x1a0] sm:$0xff]
      %v2044 = vld [vmem:[%s11 + $0x1a8] sm:$0xff]
      %v2045 = vld [vmem:[%s11 + $0x1b0] sm:$0xff]
      %v2046 = vld [vmem:[%s11 + $0x1b8] sm:$0xff]
      %v2047 = vld [vmem:[%s11 + $0x1c0] sm:$0xff]
      %v2048 = vld [vmem:[%s11 + $0x1c8] sm:$0xff]
      %v2049 = vld [vmem:[%s11 + $0x1d0] sm:$0xff]
      %v2050 = vld [vmem:[%s11 + $0x1d8] sm:$0xff]
      %v2051 = vld [vmem:[%s11 + $0x1e0] sm:$0xff]
      %v2052 = vld [vmem:[%s11 + $0x1e8] sm:$0xff]
      %v2053 = vld [vmem:[%s11 + $0x1f0] sm:$0xff]
      %v2054 = vld [vmem:[%s11 + $0x1f8] sm:$0xff]
      %v2055 = vld [vmem:[%s12] sm:$0xf]
      %v2057 = vperm.slane %v2055, 0
      %v2058 = vperm.slane %v2055, 1
      %v2059 = vperm.slane %v2055, 2
      %v2060 = vperm.slane %v2055, 3
      %2065 = vmatpush.msra.mxu0 %v2051
      %2066 = vmatpush.msra.mxu0 %v2047
      %2067 = vmatpush.msra.mxu0 %v2043
      %2068 = vmatpush.msra.mxu0 %v2039
      %2069 = vmatpush.msra.mxu0 %v2035
      %2070 = vmatpush.msra.mxu0 %v2031
      %2071 = vmatpush.msra.mxu0 %v2027
      %2072 = vmatpush.msra.mxu0 %v2023
      %2073 = vmatpush.msra.mxu0 %v2019
      %2074 = vmatpush.msra.mxu0 %v2015
      %2075 = vmatpush.msra.mxu0 %v2011
      %2076 = vmatpush.msra.mxu0 %v2007
      %2077 = vmatpush.msra.mxu0 %v2003
      %2078 = vmatpush.msra.mxu0 %v1999
      %2079 = vmatpush.msra.mxu0 %v1995
      %2080 = vmatpush.msra.mxu0 %v1991
      %2081 = vmatmul.f32.gmra.mxu0 %v1975
      %v2082 = vpop.f32.mrf.mxu0
      %v2083 = vadd.f32 %v2057, %v2082
      %2084 = vmatmul.f32.gmra.mxu0 %v1976
      %v2085 = vpop.f32.mrf.mxu0
      %v2086 = vadd.f32 %v2057, %v2085
      %2087 = vmatmul.f32.gmra.mxu0 %v1977
      %v2088 = vpop.f32.mrf.mxu0
      %v2089 = vadd.f32 %v2057, %v2088
      %2090 = vmatmul.f32.gmra.mxu0 %v1978
      %v2091 = vpop.f32.mrf.mxu0
      %v2092 = vadd.f32 %v2057, %v2091
      %2093 = vmatmul.f32.gmra.mxu0 %v1979
      %v2094 = vpop.f32.mrf.mxu0
      %v2095 = vadd.f32 %v2057, %v2094
      %2096 = vmatmul.f32.gmra.mxu0 %v1980
      %v2097 = vpop.f32.mrf.mxu0
      %v2098 = vadd.f32 %v2057, %v2097
      %2099 = vmatmul.f32.gmra.mxu0 %v1981
      %v2100 = vpop.f32.mrf.mxu0
      %v2101 = vadd.f32 %v2057, %v2100
      %2102 = vmatmul.f32.gmra.mxu0 %v1982
      %v2103 = vpop.f32.mrf.mxu0
      %v2104 = vadd.f32 %v2057, %v2103
      %2105 = vmatmul.f32.gmra.mxu0 %v1983
      %v2106 = vpop.f32.mrf.mxu0
      %v2107 = vadd.f32 %v2057, %v2106
      %2108 = vmatmul.f32.gmra.mxu0 %v1984
      %v2109 = vpop.f32.mrf.mxu0
      %v2110 = vadd.f32 %v2057, %v2109
      %2111 = vmatmul.f32.gmra.mxu0 %v1985
      %v2112 = vpop.f32.mrf.mxu0
      %v2113 = vadd.f32 %v2057, %v2112
      %2114 = vmatmul.f32.gmra.mxu0 %v1986
      %v2115 = vpop.f32.mrf.mxu0
      %v2116 = vadd.f32 %v2057, %v2115
      %2117 = vmatmul.f32.gmra.mxu0 %v1987
      %v2118 = vpop.f32.mrf.mxu0
      %v2119 = vadd.f32 %v2057, %v2118
      %2120 = vmatmul.f32.gmra.mxu0 %v1988
      %v2121 = vpop.f32.mrf.mxu0
      %v2122 = vadd.f32 %v2057, %v2121
      %2123 = vmatmul.f32.gmra.mxu0 %v1989
      %v2124 = vpop.f32.mrf.mxu0
      %v2125 = vadd.f32 %v2057, %v2124
      %2126 = vmatmul.f32.gmra.mxu0 %v1990
      %v2127 = vpop.f32.mrf.mxu0
      %v2128 = vadd.f32 %v2057, %v2127
      %2129 = vdwg.mxu0
      %2130 = vmatpush.msra.mxu0 %v2052
      %2131 = vmatpush.msra.mxu0 %v2048
      %2132 = vmatpush.msra.mxu0 %v2044
      %2133 = vmatpush.msra.mxu0 %v2040
      %2134 = vmatpush.msra.mxu0 %v2036
      %2135 = vmatpush.msra.mxu0 %v2032
      %2136 = vmatpush.msra.mxu0 %v2028
      %2137 = vmatpush.msra.mxu0 %v2024
      %2138 = vmatpush.msra.mxu0 %v2020
      %2139 = vmatpush.msra.mxu0 %v2016
      %2140 = vmatpush.msra.mxu0 %v2012
      %2141 = vmatpush.msra.mxu0 %v2008
      %2142 = vmatpush.msra.mxu0 %v2004
      %2143 = vmatpush.msra.mxu0 %v2000
      %2144 = vmatpush.msra.mxu0 %v1996
      %2145 = vmatpush.msra.mxu0 %v1992
      %2146 = vmatmul.f32.gmra.mxu0 %v1975
      %v2147 = vpop.f32.mrf.mxu0
      %v2148 = vadd.f32 %v2058, %v2147
      %2149 = vmatmul.f32.gmra.mxu0 %v1976
      %v2150 = vpop.f32.mrf.mxu0
      %v2151 = vadd.f32 %v2058, %v2150
      %2152 = vmatmul.f32.gmra.mxu0 %v1977
      %v2153 = vpop.f32.mrf.mxu0
      %v2154 = vadd.f32 %v2058, %v2153
      %2155 = vmatmul.f32.gmra.mxu0 %v1978
      %v2156 = vpop.f32.mrf.mxu0
      %v2157 = vadd.f32 %v2058, %v2156
      %2158 = vmatmul.f32.gmra.mxu0 %v1979
      %v2159 = vpop.f32.mrf.mxu0
      %v2160 = vadd.f32 %v2058, %v2159
      %2161 = vmatmul.f32.gmra.mxu0 %v1980
      %v2162 = vpop.f32.mrf.mxu0
      %v2163 = vadd.f32 %v2058, %v2162
      %2164 = vmatmul.f32.gmra.mxu0 %v1981
      %v2165 = vpop.f32.mrf.mxu0
      %v2166 = vadd.f32 %v2058, %v2165
      %2167 = vmatmul.f32.gmra.mxu0 %v1982
      %v2168 = vpop.f32.mrf.mxu0
      %v2169 = vadd.f32 %v2058, %v2168
      %2170 = vmatmul.f32.gmra.mxu0 %v1983
      %v2171 = vpop.f32.mrf.mxu0
      %v2172 = vadd.f32 %v2058, %v2171
      %2173 = vmatmul.f32.gmra.mxu0 %v1984
      %v2174 = vpop.f32.mrf.mxu0
      %v2175 = vadd.f32 %v2058, %v2174
      %2176 = vmatmul.f32.gmra.mxu0 %v1985
      %v2177 = vpop.f32.mrf.mxu0
      %v2178 = vadd.f32 %v2058, %v2177
      %2179 = vmatmul.f32.gmra.mxu0 %v1986
      %v2180 = vpop.f32.mrf.mxu0
      %v2181 = vadd.f32 %v2058, %v2180
      %2182 = vmatmul.f32.gmra.mxu0 %v1987
      %v2183 = vpop.f32.mrf.mxu0
      %v2184 = vadd.f32 %v2058, %v2183
      %2185 = vmatmul.f32.gmra.mxu0 %v1988
      %v2186 = vpop.f32.mrf.mxu0
      %v2187 = vadd.f32 %v2058, %v2186
      %2188 = vmatmul.f32.gmra.mxu0 %v1989
      %v2189 = vpop.f32.mrf.mxu0
      %v2190 = vadd.f32 %v2058, %v2189
      %2191 = vmatmul.f32.gmra.mxu0 %v1990
      %v2192 = vpop.f32.mrf.mxu0
      %v2193 = vadd.f32 %v2058, %v2192
      %2194 = vdwg.mxu0
      %2195 = vmatpush.msra.mxu0 %v2053
      %2196 = vmatpush.msra.mxu0 %v2049
      %2197 = vmatpush.msra.mxu0 %v2045
      %2198 = vmatpush.msra.mxu0 %v2041
      %2199 = vmatpush.msra.mxu0 %v2037
      %2200 = vmatpush.msra.mxu0 %v2033
      %2201 = vmatpush.msra.mxu0 %v2029
      %2202 = vmatpush.msra.mxu0 %v2025
      %2203 = vmatpush.msra.mxu0 %v2021
      %2204 = vmatpush.msra.mxu0 %v2017
      %2205 = vmatpush.msra.mxu0 %v2013
      %2206 = vmatpush.msra.mxu0 %v2009
      %2207 = vmatpush.msra.mxu0 %v2005
      %2208 = vmatpush.msra.mxu0 %v2001
      %2209 = vmatpush.msra.mxu0 %v1997
      %2210 = vmatpush.msra.mxu0 %v1993
      %2211 = vmatmul.f32.gmra.mxu0 %v1975
      %v2212 = vpop.f32.mrf.mxu0
      %v2213 = vadd.f32 %v2059, %v2212
      %2214 = vmatmul.f32.gmra.mxu0 %v1976
      %v2215 = vpop.f32.mrf.mxu0
      %v2216 = vadd.f32 %v2059, %v2215
      %2217 = vmatmul.f32.gmra.mxu0 %v1977
      %v2218 = vpop.f32.mrf.mxu0
      %v2219 = vadd.f32 %v2059, %v2218
      %2220 = vmatmul.f32.gmra.mxu0 %v1978
      %v2221 = vpop.f32.mrf.mxu0
      %v2222 = vadd.f32 %v2059, %v2221
      %2223 = vmatmul.f32.gmra.mxu0 %v1979
      %v2224 = vpop.f32.mrf.mxu0
      %v2225 = vadd.f32 %v2059, %v2224
      %2226 = vmatmul.f32.gmra.mxu0 %v1980
      %v2227 = vpop.f32.mrf.mxu0
      %v2228 = vadd.f32 %v2059, %v2227
      %2229 = vmatmul.f32.gmra.mxu0 %v1981
      %v2230 = vpop.f32.mrf.mxu0
      %v2231 = vadd.f32 %v2059, %v2230
      %2232 = vmatmul.f32.gmra.mxu0 %v1982
      %v2233 = vpop.f32.mrf.mxu0
      %v2234 = vadd.f32 %v2059, %v2233
      %2235 = vmatmul.f32.gmra.mxu0 %v1983
      %v2236 = vpop.f32.mrf.mxu0
      %v2237 = vadd.f32 %v2059, %v2236
      %2238 = vmatmul.f32.gmra.mxu0 %v1984
      %v2239 = vpop.f32.mrf.mxu0
      %v2240 = vadd.f32 %v2059, %v2239
      %2241 = vmatmul.f32.gmra.mxu0 %v1985
      %v2242 = vpop.f32.mrf.mxu0
      %v2243 = vadd.f32 %v2059, %v2242
      %2244 = vmatmul.f32.gmra.mxu0 %v1986
      %v2245 = vpop.f32.mrf.mxu0
      %v2246 = vadd.f32 %v2059, %v2245
      %2247 = vmatmul.f32.gmra.mxu0 %v1987
      %v2248 = vpop.f32.mrf.mxu0
      %v2249 = vadd.f32 %v2059, %v2248
      %2250 = vmatmul.f32.gmra.mxu0 %v1988
      %v2251 = vpop.f32.mrf.mxu0
      %v2252 = vadd.f32 %v2059, %v2251
      %2253 = vmatmul.f32.gmra.mxu0 %v1989
      %v2254 = vpop.f32.mrf.mxu0
      %v2255 = vadd.f32 %v2059, %v2254
      %2256 = vmatmul.f32.gmra.mxu0 %v1990
      %v2257 = vpop.f32.mrf.mxu0
      %v2258 = vadd.f32 %v2059, %v2257
      %2259 = vdwg.mxu0
      %2260 = vmatpush.msra.mxu0 %v2054
      %2261 = vmatpush.msra.mxu0 %v2050
      %2262 = vmatpush.msra.mxu0 %v2046
      %2263 = vmatpush.msra.mxu0 %v2042
      %2264 = vmatpush.msra.mxu0 %v2038
      %2265 = vmatpush.msra.mxu0 %v2034
      %2266 = vmatpush.msra.mxu0 %v2030
      %2267 = vmatpush.msra.mxu0 %v2026
      %2268 = vmatpush.msra.mxu0 %v2022
      %2269 = vmatpush.msra.mxu0 %v2018
      %2270 = vmatpush.msra.mxu0 %v2014
      %2271 = vmatpush.msra.mxu0 %v2010
      %2272 = vmatpush.msra.mxu0 %v2006
      %2273 = vmatpush.msra.mxu0 %v2002
      %2274 = vmatpush.msra.mxu0 %v1998
      %2275 = vmatpush.msra.mxu0 %v1994
      %2276 = vmatmul.f32.gmra.mxu0 %v1975
      %v2277 = vpop.f32.mrf.mxu0
      %v2278 = vadd.f32 %v2060, %v2277
      %2279 = vmatmul.f32.gmra.mxu0 %v1976
      %v2280 = vpop.f32.mrf.mxu0
      %v2281 = vadd.f32 %v2060, %v2280
      %2282 = vmatmul.f32.gmra.mxu0 %v1977
      %v2283 = vpop.f32.mrf.mxu0
      %v2284 = vadd.f32 %v2060, %v2283
      %2285 = vmatmul.f32.gmra.mxu0 %v1978
      %v2286 = vpop.f32.mrf.mxu0
      %v2287 = vadd.f32 %v2060, %v2286
      %2288 = vmatmul.f32.gmra.mxu0 %v1979
      %v2289 = vpop.f32.mrf.mxu0
      %v2290 = vadd.f32 %v2060, %v2289
      %2291 = vmatmul.f32.gmra.mxu0 %v1980
      %v2292 = vpop.f32.mrf.mxu0
      %v2293 = vadd.f32 %v2060, %v2292
      %2294 = vmatmul.f32.gmra.mxu0 %v1981
      %v2295 = vpop.f32.mrf.mxu0
      %v2296 = vadd.f32 %v2060, %v2295
      %2297 = vmatmul.f32.gmra.mxu0 %v1982
      %v2298 = vpop.f32.mrf.mxu0
      %v2299 = vadd.f32 %v2060, %v2298
      %2300 = vmatmul.f32.gmra.mxu0 %v1983
      %v2301 = vpop.f32.mrf.mxu0
      %v2302 = vadd.f32 %v2060, %v2301
      %2303 = vmatmul.f32.gmra.mxu0 %v1984
      %v2304 = vpop.f32.mrf.mxu0
      %v2305 = vadd.f32 %v2060, %v2304
      %2306 = vmatmul.f32.gmra.mxu0 %v1985
      %v2307 = vpop.f32.mrf.mxu0
      %v2308 = vadd.f32 %v2060, %v2307
      %2309 = vmatmul.f32.gmra.mxu0 %v1986
      %v2310 = vpop.f32.mrf.mxu0
      %v2311 = vadd.f32 %v2060, %v2310
      %2312 = vmatmul.f32.gmra.mxu0 %v1987
      %v2313 = vpop.f32.mrf.mxu0
      %v2314 = vadd.f32 %v2060, %v2313
      %2315 = vmatmul.f32.gmra.mxu0 %v1988
      %v2316 = vpop.f32.mrf.mxu0
      %v2317 = vadd.f32 %v2060, %v2316
      %2318 = vmatmul.f32.gmra.mxu0 %v1989
      %v2319 = vpop.f32.mrf.mxu0
      %v2320 = vadd.f32 %v2060, %v2319
      %2321 = vmatmul.f32.gmra.mxu0 %v1990
      %v2322 = vpop.f32.mrf.mxu0
      %v2323 = vadd.f32 %v2060, %v2322
      %2324 = vdwg.mxu0
      %v2325 = vmax.f32 %v2083, 0.0
      %v2326 = vmax.f32 %v2148, 0.0
      %v2327 = vmax.f32 %v2213, 0.0
      %v2328 = vmax.f32 %v2278, 0.0
      %v2329 = vmax.f32 %v2086, 0.0
      %v2330 = vmax.f32 %v2151, 0.0
      %v2331 = vmax.f32 %v2216, 0.0
      %v2332 = vmax.f32 %v2281, 0.0
      %v2333 = vmax.f32 %v2089, 0.0
      %v2334 = vmax.f32 %v2154, 0.0
      %v2335 = vmax.f32 %v2219, 0.0
      %v2336 = vmax.f32 %v2284, 0.0
      %v2337 = vmax.f32 %v2092, 0.0
      %v2338 = vmax.f32 %v2157, 0.0
      %v2339 = vmax.f32 %v2222, 0.0
      %v2340 = vmax.f32 %v2287, 0.0
      %v2341 = vmax.f32 %v2095, 0.0
      %v2342 = vmax.f32 %v2160, 0.0
      %v2343 = vmax.f32 %v2225, 0.0
      %v2344 = vmax.f32 %v2290, 0.0
      %v2345 = vmax.f32 %v2098, 0.0
      %v2346 = vmax.f32 %v2163, 0.0
      %v2347 = vmax.f32 %v2228, 0.0
      %v2348 = vmax.f32 %v2293, 0.0
      %v2349 = vmax.f32 %v2101, 0.0
      %v2350 = vmax.f32 %v2166, 0.0
      %v2351 = vmax.f32 %v2231, 0.0
      %v2352 = vmax.f32 %v2296, 0.0
      %v2353 = vmax.f32 %v2104, 0.0
      %v2354 = vmax.f32 %v2169, 0.0
      %v2355 = vmax.f32 %v2234, 0.0
      %v2356 = vmax.f32 %v2299, 0.0
      %v2357 = vmax.f32 %v2107, 0.0
      %v2358 = vmax.f32 %v2172, 0.0
      %v2359 = vmax.f32 %v2237, 0.0
      %v2360 = vmax.f32 %v2302, 0.0
      %v2361 = vmax.f32 %v2110, 0.0
      %v2362 = vmax.f32 %v2175, 0.0
      %v2363 = vmax.f32 %v2240, 0.0
      %v2364 = vmax.f32 %v2305, 0.0
      %v2365 = vmax.f32 %v2113, 0.0
      %v2366 = vmax.f32 %v2178, 0.0
      %v2367 = vmax.f32 %v2243, 0.0
      %v2368 = vmax.f32 %v2308, 0.0
      %v2369 = vmax.f32 %v2116, 0.0
      %v2370 = vmax.f32 %v2181, 0.0
      %v2371 = vmax.f32 %v2246, 0.0
      %v2372 = vmax.f32 %v2311, 0.0
      %v2373 = vmax.f32 %v2119, 0.0
      %v2374 = vmax.f32 %v2184, 0.0
      %v2375 = vmax.f32 %v2249, 0.0
      %v2376 = vmax.f32 %v2314, 0.0
      %v2377 = vmax.f32 %v2122, 0.0
      %v2378 = vmax.f32 %v2187, 0.0
      %v2379 = vmax.f32 %v2252, 0.0
      %v2380 = vmax.f32 %v2317, 0.0
      %v2381 = vmax.f32 %v2125, 0.0
      %v2382 = vmax.f32 %v2190, 0.0
      %v2383 = vmax.f32 %v2255, 0.0
      %v2384 = vmax.f32 %v2320, 0.0
      %v2385 = vmax.f32 %v2128, 0.0
      %v2386 = vmax.f32 %v2193, 0.0
      %v2387 = vmax.f32 %v2258, 0.0
      %v2388 = vmax.f32 %v2323, 0.0
      %v2389 = vld [vmem:[%s13] sm:$0xff]
      %v2390 = vld [vmem:[%s13 + $0x8] sm:$0xff]
      %v2391 = vld [vmem:[%s13 + $0x10] sm:$0xff]
      %v2392 = vld [vmem:[%s13 + $0x18] sm:$0xff]
      %v2393 = vld [vmem:[%s13 + $0x20] sm:$0xff]
      %v2394 = vld [vmem:[%s13 + $0x28] sm:$0xff]
      %v2395 = vld [vmem:[%s13 + $0x30] sm:$0xff]
      %v2396 = vld [vmem:[%s13 + $0x38] sm:$0xff]
      %v2397 = vld [vmem:[%s13 + $0x40] sm:$0xff]
      %v2398 = vld [vmem:[%s13 + $0x48] sm:$0xff]
      %v2399 = vld [vmem:[%s13 + $0x50] sm:$0xff]
      %v2400 = vld [vmem:[%s13 + $0x58] sm:$0xff]
      %v2401 = vld [vmem:[%s13 + $0x60] sm:$0xff]
      %v2402 = vld [vmem:[%s13 + $0x68] sm:$0xff]
      %v2403 = vld [vmem:[%s13 + $0x70] sm:$0xff]
      %v2404 = vld [vmem:[%s13 + $0x78] sm:$0xff]
      %v2405 = vld [vmem:[%s13 + $0x80] sm:$0xff]
      %v2406 = vld [vmem:[%s13 + $0x88] sm:$0xff]
      %v2407 = vld [vmem:[%s13 + $0x90] sm:$0xff]
      %v2408 = vld [vmem:[%s13 + $0x98] sm:$0xff]
      %v2409 = vld [vmem:[%s13 + $0xa0] sm:$0xff]
      %v2410 = vld [vmem:[%s13 + $0xa8] sm:$0xff]
      %v2411 = vld [vmem:[%s13 + $0xb0] sm:$0xff]
      %v2412 = vld [vmem:[%s13 + $0xb8] sm:$0xff]
      %v2413 = vld [vmem:[%s13 + $0xc0] sm:$0xff]
      %v2414 = vld [vmem:[%s13 + $0xc8] sm:$0xff]
      %v2415 = vld [vmem:[%s13 + $0xd0] sm:$0xff]
      %v2416 = vld [vmem:[%s13 + $0xd8] sm:$0xff]
      %v2417 = vld [vmem:[%s13 + $0xe0] sm:$0xff]
      %v2418 = vld [vmem:[%s13 + $0xe8] sm:$0xff]
      %v2419 = vld [vmem:[%s13 + $0xf0] sm:$0xff]
      %v2420 = vld [vmem:[%s13 + $0xf8] sm:$0xff]
      %v2421 = vld [vmem:[%s13 + $0x100] sm:$0xff]
      %v2422 = vld [vmem:[%s13 + $0x108] sm:$0xff]
      %v2423 = vld [vmem:[%s13 + $0x110] sm:$0xff]
      %v2424 = vld [vmem:[%s13 + $0x118] sm:$0xff]
      %v2425 = vld [vmem:[%s13 + $0x120] sm:$0xff]
      %v2426 = vld [vmem:[%s13 + $0x128] sm:$0xff]
      %v2427 = vld [vmem:[%s13 + $0x130] sm:$0xff]
      %v2428 = vld [vmem:[%s13 + $0x138] sm:$0xff]
      %v2429 = vld [vmem:[%s13 + $0x140] sm:$0xff]
      %v2430 = vld [vmem:[%s13 + $0x148] sm:$0xff]
      %v2431 = vld [vmem:[%s13 + $0x150] sm:$0xff]
      %v2432 = vld [vmem:[%s13 + $0x158] sm:$0xff]
      %v2433 = vld [vmem:[%s13 + $0x160] sm:$0xff]
      %v2434 = vld [vmem:[%s13 + $0x168] sm:$0xff]
      %v2435 = vld [vmem:[%s13 + $0x170] sm:$0xff]
      %v2436 = vld [vmem:[%s13 + $0x178] sm:$0xff]
      %v2437 = vld [vmem:[%s13 + $0x180] sm:$0xff]
      %v2438 = vld [vmem:[%s13 + $0x188] sm:$0xff]
      %v2439 = vld [vmem:[%s13 + $0x190] sm:$0xff]
      %v2440 = vld [vmem:[%s13 + $0x198] sm:$0xff]
      %v2441 = vld [vmem:[%s13 + $0x1a0] sm:$0xff]
      %v2442 = vld [vmem:[%s13 + $0x1a8] sm:$0xff]
      %v2443 = vld [vmem:[%s13 + $0x1b0] sm:$0xff]
      %v2444 = vld [vmem:[%s13 + $0x1b8] sm:$0xff]
      %v2445 = vld [vmem:[%s13 + $0x1c0] sm:$0xff]
      %v2446 = vld [vmem:[%s13 + $0x1c8] sm:$0xff]
      %v2447 = vld [vmem:[%s13 + $0x1d0] sm:$0xff]
      %v2448 = vld [vmem:[%s13 + $0x1d8] sm:$0xff]
      %v2449 = vld [vmem:[%s13 + $0x1e0] sm:$0xff]
      %v2450 = vld [vmem:[%s13 + $0x1e8] sm:$0xff]
      %v2451 = vld [vmem:[%s13 + $0x1f0] sm:$0xff]
      %v2452 = vld [vmem:[%s13 + $0x1f8] sm:$0xff]
      %v2453 = vld [vmem:[%s14] sm:$0x1]
      %v2455 = vperm.slane %v2453, 0
      %2457 = vmatpush.msra.mxu0 %v2404
      %2458 = vmatpush.msra.mxu0 %v2403
      %2459 = vmatpush.msra.mxu0 %v2402
      %2460 = vmatpush.msra.mxu0 %v2401
      %2461 = vmatpush.msra.mxu0 %v2400
      %2462 = vmatpush.msra.mxu0 %v2399
      %2463 = vmatpush.msra.mxu0 %v2398
      %2464 = vmatpush.msra.mxu0 %v2397
      %2465 = vmatpush.msra.mxu0 %v2396
      %2466 = vmatpush.msra.mxu0 %v2395
      %2467 = vmatpush.msra.mxu0 %v2394
      %2468 = vmatpush.msra.mxu0 %v2393
      %2469 = vmatpush.msra.mxu0 %v2392
      %2470 = vmatpush.msra.mxu0 %v2391
      %2471 = vmatpush.msra.mxu0 %v2390
      %2472 = vmatpush.msra.mxu0 %v2389
      %2473 = vmatmul.f32.gmra.mxu0 %v2325
      %v2474 = vpop.f32.mrf.mxu0
      %v2475 = vadd.f32 %v2455, %v2474
      %2476 = vmatmul.f32.gmra.mxu0 %v2329
      %v2477 = vpop.f32.mrf.mxu0
      %v2478 = vadd.f32 %v2455, %v2477
      %2479 = vmatmul.f32.gmra.mxu0 %v2333
      %v2480 = vpop.f32.mrf.mxu0
      %v2481 = vadd.f32 %v2455, %v2480
      %2482 = vmatmul.f32.gmra.mxu0 %v2337
      %v2483 = vpop.f32.mrf.mxu0
      %v2484 = vadd.f32 %v2455, %v2483
      %2485 = vmatmul.f32.gmra.mxu0 %v2341
      %v2486 = vpop.f32.mrf.mxu0
      %v2487 = vadd.f32 %v2455, %v2486
      %2488 = vmatmul.f32.gmra.mxu0 %v2345
      %v2489 = vpop.f32.mrf.mxu0
      %v2490 = vadd.f32 %v2455, %v2489
      %2491 = vmatmul.f32.gmra.mxu0 %v2349
      %v2492 = vpop.f32.mrf.mxu0
      %v2493 = vadd.f32 %v2455, %v2492
      %2494 = vmatmul.f32.gmra.mxu0 %v2353
      %v2495 = vpop.f32.mrf.mxu0
      %v2496 = vadd.f32 %v2455, %v2495
      %2497 = vmatmul.f32.gmra.mxu0 %v2357
      %v2498 = vpop.f32.mrf.mxu0
      %v2499 = vadd.f32 %v2455, %v2498
      %2500 = vmatmul.f32.gmra.mxu0 %v2361
      %v2501 = vpop.f32.mrf.mxu0
      %v2502 = vadd.f32 %v2455, %v2501
      %2503 = vmatmul.f32.gmra.mxu0 %v2365
      %v2504 = vpop.f32.mrf.mxu0
      %v2505 = vadd.f32 %v2455, %v2504
      %2506 = vmatmul.f32.gmra.mxu0 %v2369
      %v2507 = vpop.f32.mrf.mxu0
      %v2508 = vadd.f32 %v2455, %v2507
      %2509 = vmatmul.f32.gmra.mxu0 %v2373
      %v2510 = vpop.f32.mrf.mxu0
      %v2511 = vadd.f32 %v2455, %v2510
      %2512 = vmatmul.f32.gmra.mxu0 %v2377
      %v2513 = vpop.f32.mrf.mxu0
      %v2514 = vadd.f32 %v2455, %v2513
      %2515 = vmatmul.f32.gmra.mxu0 %v2381
      %v2516 = vpop.f32.mrf.mxu0
      %v2517 = vadd.f32 %v2455, %v2516
      %2518 = vmatmul.f32.gmra.mxu0 %v2385
      %v2519 = vpop.f32.mrf.mxu0
      %v2520 = vadd.f32 %v2455, %v2519
      %2521 = vdwg.mxu0
      %2522 = vmatpush.msra.mxu0 %v2420
      %2523 = vmatpush.msra.mxu0 %v2419
      %2524 = vmatpush.msra.mxu0 %v2418
      %2525 = vmatpush.msra.mxu0 %v2417
      %2526 = vmatpush.msra.mxu0 %v2416
      %2527 = vmatpush.msra.mxu0 %v2415
      %2528 = vmatpush.msra.mxu0 %v2414
      %2529 = vmatpush.msra.mxu0 %v2413
      %2530 = vmatpush.msra.mxu0 %v2412
      %2531 = vmatpush.msra.mxu0 %v2411
      %2532 = vmatpush.msra.mxu0 %v2410
      %2533 = vmatpush.msra.mxu0 %v2409
      %2534 = vmatpush.msra.mxu0 %v2408
      %2535 = vmatpush.msra.mxu0 %v2407
      %2536 = vmatpush.msra.mxu0 %v2406
      %2537 = vmatpush.msra.mxu0 %v2405
      %2538 = vmatmul.f32.gmra.mxu0 %v2326
      %v2539 = vpop.f32.mrf.mxu0
      %v2540 = vadd.f32 %v2475, %v2539
      %2541 = vmatmul.f32.gmra.mxu0 %v2330
      %v2542 = vpop.f32.mrf.mxu0
      %v2543 = vadd.f32 %v2478, %v2542
      %2544 = vmatmul.f32.gmra.mxu0 %v2334
      %v2545 = vpop.f32.mrf.mxu0
      %v2546 = vadd.f32 %v2481, %v2545
      %2547 = vmatmul.f32.gmra.mxu0 %v2338
      %v2548 = vpop.f32.mrf.mxu0
      %v2549 = vadd.f32 %v2484, %v2548
      %2550 = vmatmul.f32.gmra.mxu0 %v2342
      %v2551 = vpop.f32.mrf.mxu0
      %v2552 = vadd.f32 %v2487, %v2551
      %2553 = vmatmul.f32.gmra.mxu0 %v2346
      %v2554 = vpop.f32.mrf.mxu0
      %v2555 = vadd.f32 %v2490, %v2554
      %2556 = vmatmul.f32.gmra.mxu0 %v2350
      %v2557 = vpop.f32.mrf.mxu0
      %v2558 = vadd.f32 %v2493, %v2557
      %2559 = vmatmul.f32.gmra.mxu0 %v2354
      %v2560 = vpop.f32.mrf.mxu0
      %v2561 = vadd.f32 %v2496, %v2560
      %2562 = vmatmul.f32.gmra.mxu0 %v2358
      %v2563 = vpop.f32.mrf.mxu0
      %v2564 = vadd.f32 %v2499, %v2563
      %2565 = vmatmul.f32.gmra.mxu0 %v2362
      %v2566 = vpop.f32.mrf.mxu0
      %v2567 = vadd.f32 %v2502, %v2566
      %2568 = vmatmul.f32.gmra.mxu0 %v2366
      %v2569 = vpop.f32.mrf.mxu0
      %v2570 = vadd.f32 %v2505, %v2569
      %2571 = vmatmul.f32.gmra.mxu0 %v2370
      %v2572 = vpop.f32.mrf.mxu0
      %v2573 = vadd.f32 %v2508, %v2572
      %2574 = vmatmul.f32.gmra.mxu0 %v2374
      %v2575 = vpop.f32.mrf.mxu0
      %v2576 = vadd.f32 %v2511, %v2575
      %2577 = vmatmul.f32.gmra.mxu0 %v2378
      %v2578 = vpop.f32.mrf.mxu0
      %v2579 = vadd.f32 %v2514, %v2578
      %2580 = vmatmul.f32.gmra.mxu0 %v2382
      %v2581 = vpop.f32.mrf.mxu0
      %v2582 = vadd.f32 %v2517, %v2581
      %2583 = vmatmul.f32.gmra.mxu0 %v2386
      %v2584 = vpop.f32.mrf.mxu0
      %v2585 = vadd.f32 %v2520, %v2584
      %2586 = vdwg.mxu0
      %2587 = vmatpush.msra.mxu0 %v2436
      %2588 = vmatpush.msra.mxu0 %v2435
      %2589 = vmatpush.msra.mxu0 %v2434
      %2590 = vmatpush.msra.mxu0 %v2433
      %2591 = vmatpush.msra.mxu0 %v2432
      %2592 = vmatpush.msra.mxu0 %v2431
      %2593 = vmatpush.msra.mxu0 %v2430
      %2594 = vmatpush.msra.mxu0 %v2429
      %2595 = vmatpush.msra.mxu0 %v2428
      %2596 = vmatpush.msra.mxu0 %v2427
      %2597 = vmatpush.msra.mxu0 %v2426
      %2598 = vmatpush.msra.mxu0 %v2425
      %2599 = vmatpush.msra.mxu0 %v2424
      %2600 = vmatpush.msra.mxu0 %v2423
      %2601 = vmatpush.msra.mxu0 %v2422
      %2602 = vmatpush.msra.mxu0 %v2421
      %2603 = vmatmul.f32.gmra.mxu0 %v2327
      %v2604 = vpop.f32.mrf.mxu0
      %v2605 = vadd.f32 %v2540, %v2604
      %2606 = vmatmul.f32.gmra.mxu0 %v2331
      %v2607 = vpop.f32.mrf.mxu0
      %v2608 = vadd.f32 %v2543, %v2607
      %2609 = vmatmul.f32.gmra.mxu0 %v2335
      %v2610 = vpop.f32.mrf.mxu0
      %v2611 = vadd.f32 %v2546, %v2610
      %2612 = vmatmul.f32.gmra.mxu0 %v2339
      %v2613 = vpop.f32.mrf.mxu0
      %v2614 = vadd.f32 %v2549, %v2613
      %2615 = vmatmul.f32.gmra.mxu0 %v2343
      %v2616 = vpop.f32.mrf.mxu0
      %v2617 = vadd.f32 %v2552, %v2616
      %2618 = vmatmul.f32.gmra.mxu0 %v2347
      %v2619 = vpop.f32.mrf.mxu0
      %v2620 = vadd.f32 %v2555, %v2619
      %2621 = vmatmul.f32.gmra.mxu0 %v2351
      %v2622 = vpop.f32.mrf.mxu0
      %v2623 = vadd.f32 %v2558, %v2622
      %2624 = vmatmul.f32.gmra.mxu0 %v2355
      %v2625 = vpop.f32.mrf.mxu0
      %v2626 = vadd.f32 %v2561, %v2625
      %2627 = vmatmul.f32.gmra.mxu0 %v2359
      %v2628 = vpop.f32.mrf.mxu0
      %v2629 = vadd.f32 %v2564, %v2628
      %2630 = vmatmul.f32.gmra.mxu0 %v2363
      %v2631 = vpop.f32.mrf.mxu0
      %v2632 = vadd.f32 %v2567, %v2631
      %2633 = vmatmul.f32.gmra.mxu0 %v2367
      %v2634 = vpop.f32.mrf.mxu0
      %v2635 = vadd.f32 %v2570, %v2634
      %2636 = vmatmul.f32.gmra.mxu0 %v2371
      %v2637 = vpop.f32.mrf.mxu0
      %v2638 = vadd.f32 %v2573, %v2637
      %2639 = vmatmul.f32.gmra.mxu0 %v2375
      %v2640 = vpop.f32.mrf.mxu0
      %v2641 = vadd.f32 %v2576, %v2640
      %2642 = vmatmul.f32.gmra.mxu0 %v2379
      %v2643 = vpop.f32.mrf.mxu0
      %v2644 = vadd.f32 %v2579, %v2643
      %2645 = vmatmul.f32.gmra.mxu0 %v2383
      %v2646 = vpop.f32.mrf.mxu0
      %v2647 = vadd.f32 %v2582, %v2646
      %2648 = vmatmul.f32.gmra.mxu0 %v2387
      %v2649 = vpop.f32.mrf.mxu0
      %v2650 = vadd.f32 %v2585, %v2649
      %2651 = vdwg.mxu0
      %2652 = vmatpush.msra.mxu0 %v2452
      %2653 = vmatpush.msra.mxu0 %v2451
      %2654 = vmatpush.msra.mxu0 %v2450
      %2655 = vmatpush.msra.mxu0 %v2449
      %2656 = vmatpush.msra.mxu0 %v2448
      %2657 = vmatpush.msra.mxu0 %v2447
      %2658 = vmatpush.msra.mxu0 %v2446
      %2659 = vmatpush.msra.mxu0 %v2445
      %2660 = vmatpush.msra.mxu0 %v2444
      %2661 = vmatpush.msra.mxu0 %v2443
      %2662 = vmatpush.msra.mxu0 %v2442
      %2663 = vmatpush.msra.mxu0 %v2441
      %2664 = vmatpush.msra.mxu0 %v2440
      %2665 = vmatpush.msra.mxu0 %v2439
      %2666 = vmatpush.msra.mxu0 %v2438
      %2667 = vmatpush.msra.mxu0 %v2437
      %2668 = vmatmul.f32.gmra.mxu0 %v2328
      %v2669 = vpop.f32.mrf.mxu0
      %v2670 = vadd.f32 %v2605, %v2669
      %2671 = vmatmul.f32.gmra.mxu0 %v2332
      %v2672 = vpop.f32.mrf.mxu0
      %v2673 = vadd.f32 %v2608, %v2672
      %2674 = vmatmul.f32.gmra.mxu0 %v2336
      %v2675 = vpop.f32.mrf.mxu0
      %v2676 = vadd.f32 %v2611, %v2675
      %2677 = vmatmul.f32.gmra.mxu0 %v2340
      %v2678 = vpop.f32.mrf.mxu0
      %v2679 = vadd.f32 %v2614, %v2678
      %2680 = vmatmul.f32.gmra.mxu0 %v2344
      %v2681 = vpop.f32.mrf.mxu0
      %v2682 = vadd.f32 %v2617, %v2681
      %2683 = vmatmul.f32.gmra.mxu0 %v2348
      %v2684 = vpop.f32.mrf.mxu0
      %v2685 = vadd.f32 %v2620, %v2684
      %2686 = vmatmul.f32.gmra.mxu0 %v2352
      %v2687 = vpop.f32.mrf.mxu0
      %v2688 = vadd.f32 %v2623, %v2687
      %2689 = vmatmul.f32.gmra.mxu0 %v2356
      %v2690 = vpop.f32.mrf.mxu0
      %v2691 = vadd.f32 %v2626, %v2690
      %2692 = vmatmul.f32.gmra.mxu0 %v2360
      %v2693 = vpop.f32.mrf.mxu0
      %v2694 = vadd.f32 %v2629, %v2693
      %2695 = vmatmul.f32.gmra.mxu0 %v2364
      %v2696 = vpop.f32.mrf.mxu0
      %v2697 = vadd.f32 %v2632, %v2696
      %2698 = vmatmul.f32.gmra.mxu0 %v2368
      %v2699 = vpop.f32.mrf.mxu0
      %v2700 = vadd.f32 %v2635, %v2699
      %2701 = vmatmul.f32.gmra.mxu0 %v2372
      %v2702 = vpop.f32.mrf.mxu0
      %v2703 = vadd.f32 %v2638, %v2702
      %2704 = vmatmul.f32.gmra.mxu0 %v2376
      %v2705 = vpop.f32.mrf.mxu0
      %v2706 = vadd.f32 %v2641, %v2705
      %2707 = vmatmul.f32.gmra.mxu0 %v2380
      %v2708 = vpop.f32.mrf.mxu0
      %v2709 = vadd.f32 %v2644, %v2708
      %2710 = vmatmul.f32.gmra.mxu0 %v2384
      %v2711 = vpop.f32.mrf.mxu0
      %v2712 = vadd.f32 %v2647, %v2711
      %2713 = vmatmul.f32.gmra.mxu0 %v2388
      %v2714 = vpop.f32.mrf.mxu0
      %v2715 = vadd.f32 %v2650, %v2714
      %2716 = vdwg.mxu0
      %v2717 = vadd.f32 %v2670, %v1975
      %v2718 = vadd.f32 %v2673, %v1976
      %v2719 = vadd.f32 %v2676, %v1977
      %v2720 = vadd.f32 %v2679, %v1978
      %v2721 = vadd.f32 %v2682, %v1979
      %v2722 = vadd.f32 %v2685, %v1980
      %v2723 = vadd.f32 %v2688, %v1981
      %v2724 = vadd.f32 %v2691, %v1982
      %v2725 = vadd.f32 %v2694, %v1983
      %v2726 = vadd.f32 %v2697, %v1984
      %v2727 = vadd.f32 %v2700, %v1985
      %v2728 = vadd.f32 %v2703, %v1986
      %v2729 = vadd.f32 %v2706, %v1987
      %v2730 = vadd.f32 %v2709, %v1988
      %v2731 = vadd.f32 %v2712, %v1989
      %v2732 = vadd.f32 %v2715, %v1990
      %2733 = vst [vmem:[%s494] sm:$0xff] %v2717
      %2734 = vst [vmem:[%s494 + $0x8] sm:$0xff] %v2718
      %2735 = vst [vmem:[%s494 + $0x10] sm:$0xff] %v2719
      %2736 = vst [vmem:[%s494 + $0x18] sm:$0xff] %v2720
      %2737 = vst [vmem:[%s494 + $0x20] sm:$0xff] %v2721
      %2738 = vst [vmem:[%s494 + $0x28] sm:$0xff] %v2722
      %2739 = vst [vmem:[%s494 + $0x30] sm:$0xff] %v2723
      %2740 = vst [vmem:[%s494 + $0x38] sm:$0xff] %v2724
      %2741 = vst [vmem:[%s494 + $0x40] sm:$0xff] %v2725
      %2742 = vst [vmem:[%s494 + $0x48] sm:$0xff] %v2726
      %2743 = vst [vmem:[%s494 + $0x50] sm:$0xff] %v2727
      %2744 = vst [vmem:[%s494 + $0x58] sm:$0xff] %v2728
      %2745 = vst [vmem:[%s494 + $0x60] sm:$0xff] %v2729
      %2746 = vst [vmem:[%s494 + $0x68] sm:$0xff] %v2730
      %2747 = vst [vmem:[%s494 + $0x70] sm:$0xff] %v2731
      %2748 = vst [vmem:[%s494 + $0x78] sm:$0xff] %v2732
      %p2749 = scmp.lt.s32.totalorder %s26, 1
      %s2750 = scalar_select %p2749, %s26, 1
      %s2751 = smul.addr %s2750, 16
      %s2752 = smul.addr %s2751, 8
      %s2753 = scalar_lea.vmem %s15, %s2752
      // Predicated region
      $region81: #{reformer_lm.6} parent=79 // pred_check
        %p2754 = pneg %p364
      $region82: #{reformer_lm.6} parent=79 // pred_check_branch
        %2756 = sbr.rel (%p2754) target = $region84
      $region83: #{reformer_lm.6} parent=79 // pred_region
        _
      $region84: #{reformer_lm.6} parent=79 // pred_fallthru
        _
    $region80: #{reformer_lm.6} parent=5 // pred_fallthru
      _
    %p2757 = scmp.le.s32.totalorder 2, %s21
    // Predicated region
    $region85: #{reformer_lm.6} parent=5 // pred_check
      %p2758 = pneg %p2757
    $region86: #{reformer_lm.6} parent=5 // pred_check_branch
      %2760 = sbr.rel (%p2758) target = $region88
    $region87: #{reformer_lm.6} parent=5 // pred_region
      %s2761 = ssub.s32 %s21, 2
      // Predicated region
      $region89: #{reformer_lm.6} parent=87 // pred_check
        %p2762 = pneg %p370
      $region90: #{reformer_lm.6} parent=87 // pred_check_branch
        %2764 = sbr.rel (%p2762) target = $region92
      $region91: #{reformer_lm.6} parent=87 // pred_region
        %p2765 = scmp.lt.s32.totalorder %s27, 1
        %s2766 = scalar_select %p2765, %s27, 1
        %s2767 = smul.addr %s2766, 16
        %s2768 = smul.addr %s2767, 8
        %s2769 = scalar_lea.vmem %s15, %s2768
      $region92: #{reformer_lm.6} parent=87 // pred_fallthru
        _
    $region88: #{reformer_lm.6} parent=5 // pred_fallthru
      _
  $region6: #{reformer_lm.6} parent=0 // loop_footer
    %s25 = sadd.s32 1, %s21
  $region7: #{reformer_lm.6} parent=0 // loop_footer_branch
    %20 = sbr.rel target = $region3
  $region8: #{reformer_lm.6} parent=0 // loop_exit
    _

</llo_original>
